<compile_context>
chip_gen: v7x
topology: tpu7x:2x2x1
jax: 0.10.0
libtpu: 0.0.40
codegen_flags: <defaults>
</compile_context>

<pallas_src>
import numpy as np

import jax
import jax.numpy as jnp
from jax import lax
from jax.experimental import pallas as pl
from jax.experimental.pallas import tpu as pltpu

# ---------------------------------------------------------------------------
# Fixed MNIST-like geometry implied by the module (fc expects 64*7*7 => 28x28 input).
# ---------------------------------------------------------------------------
H1, W1 = 28, 28            # conv1 spatial size
WP1 = W1 + 2               # padded width used by the flattened-conv trick
XR1 = (H1 + 3) * WP1       # rows of flattened conv1 input (31*30 = 930, extra pad row)
M1 = H1 * WP1              # rows of conv1's extended output (840)
L1 = M1 - 1 - WP1          # rows after the two pooling maxes (809)

H2, W2 = 14, 14            # conv2 spatial size
WP2 = W2 + 2
R1 = (H2 + 3) * WP2        # conv1 pooled output rows == conv2 flattened padded input (272)
M2 = H2 * WP2              # 224
L2 = M2 - 1 - WP2          # 207
R2 = (H2 // 2) * (W2 // 2)  # 49 pooled positions after layer 2

C1, C2 = 32, 64
K_FC, N_FC, N_PAD = C2 * 7 * 7, 10, 128


# ---------------------------------------------------------------------------
# Static 0/1 pool-selection matrices (baked constants under jit).
#   pooled row -> single 1 at the flat row holding the max of its 2x2 window
#   (the window max already lives at the window's top-left flat row after the
#    two shifted maximums).
# ---------------------------------------------------------------------------
def _build_p1():
    p = np.zeros((R1, L1), np.float32)
    for hp in range(H2):
        for wp in range(W2):
            # write pooled value straight into conv2's zero-padded flat layout
            p[(hp + 1) * WP2 + (wp + 1), (2 * hp) * WP1 + 2 * wp] = 1.0
    return p


def _build_p2():
    p = np.zeros((R2, L2), np.float32)
    for hp in range(H2 // 2):
        for wp in range(W2 // 2):
            p[hp * (W2 // 2) + wp, (2 * hp) * WP2 + 2 * wp] = 1.0
    return p


_P1 = jnp.asarray(_build_p1(), jnp.bfloat16)
_P2 = jnp.asarray(_build_p2(), jnp.bfloat16)


# ---------------------------------------------------------------------------
# Pallas kernels
# ---------------------------------------------------------------------------
def _conv_layers_kernel(x_ref, w1_ref, b1_ref, p1_ref, w2_ref, b2_ref, p2_ref, o_ref):
    """Fused layer1 + layer2: conv(1->32)+bias+ReLU+pool2 -> conv(32->64)+bias+ReLU+pool2.

    x_ref : (1, 930, 1)  f32  flattened zero-padded 31x30 image
    w1_ref: (9, 1, 32)   f32  conv1 taps in (ky, kx) order
    b1_ref: (1, 32)      f32
    p1_ref: (272, 809)   bf16 pool-select matrix (also emits conv2's zero padding)
    w2_ref: (9, 32, 64)  bf16 conv2 taps
    b2_ref: (1, 64)      f32
    p2_ref: (49, 207)    bf16
    o_ref : (1, 49, 64)  bf16 pooled activation, rows in NHWC (h, w) flatten order
    """
    # ----- layer 1: conv(1->32, 3x3, 'same') + bias + ReLU + maxpool2 -----
    x = x_ref[0]                                             # (930, 1)
    acc1 = jnp.zeros((M1, C1), jnp.float32)
    for ky in range(3):                                      # Cin=1 -> VPU tap-accumulate
        for kx in range(3):
            off = ky * WP1 + kx
            acc1 = acc1 + x[off:off + M1] * w1_ref[3 * ky + kx]   # (840,1)*(1,32)
    acc1 = jnp.maximum(acc1 + b1_ref[...], 0.0)              # bias + ReLU (f32)
    n1 = jnp.maximum(acc1[:M1 - 1], acc1[1:])                # horizontal pair max
    n1 = jnp.maximum(n1[:L1], n1[WP1:WP1 + L1])              # vertical pair max
    h1 = jnp.dot(p1_ref[...], n1.astype(jnp.bfloat16),
                 preferred_element_type=jnp.float32)         # (272, 32) select + re-pad

    # ----- layer 2: conv(32->64, 3x3, 'same') + bias + ReLU + maxpool2 -----
    acc2 = jnp.zeros((M2, C2), jnp.float32)
    for ky in range(3):                                      # 9 shifted matmul taps (MXU)
        for kx in range(3):
            off = ky * WP2 + kx
            tap = h1[off:off + M2].astype(jnp.bfloat16)      # (224, 32)
            acc2 = acc2 + jnp.dot(tap, w2_ref[3 * ky + kx],
                                  preferred_element_type=jnp.float32)
    acc2 = jnp.maximum(acc2 + b2_ref[...], 0.0)              # bias + ReLU (f32)
    n2 = jnp.maximum(acc2[:M2 - 1], acc2[1:])
    n2 = jnp.maximum(n2[:L2], n2[WP2:WP2 + L2])
    pooled = jnp.dot(p2_ref[...], n2.astype(jnp.bfloat16),
                     preferred_element_type=jnp.float32)     # (49, 64)
    o_ref[0] = pooled.astype(o_ref.dtype)


def _linear_kernel(x_ref, w_ref, b_ref, o_ref):
    # x: (TM, 3136) bf16, w: (3136, 128) bf16, b: (1, 128) f32, o: (TM, 128) f32
    acc = jnp.dot(x_ref[...], w_ref[...], preferred_element_type=jnp.float32)
    o_ref[...] = (acc + b_ref[...]).astype(o_ref.dtype)


# ---------------------------------------------------------------------------
# pallas_call wrappers
# ---------------------------------------------------------------------------
def conv_layers(x_flat, w1, b1, w2, b2):
    n = x_flat.shape[0]
    return pl.pallas_call(
        _conv_layers_kernel,
        out_shape=jax.ShapeDtypeStruct((n, R2, C2), jnp.bfloat16),
        grid=(n,),
        in_specs=[
            pl.BlockSpec((1, XR1, 1), lambda i: (i, 0, 0)),
            pl.BlockSpec((9, 1, C1), lambda i: (0, 0, 0)),
            pl.BlockSpec((1, C1), lambda i: (0, 0)),
            pl.BlockSpec((R1, L1), lambda i: (0, 0)),
            pl.BlockSpec((9, C1, C2), lambda i: (0, 0, 0)),
            pl.BlockSpec((1, C2), lambda i: (0, 0)),
            pl.BlockSpec((R2, L2), lambda i: (0, 0)),
        ],
        out_specs=pl.BlockSpec((1, R2, C2), lambda i: (i, 0, 0)),
        compiler_params=pltpu.CompilerParams(dimension_semantics=("parallel",)),
    )(x_flat, w1, b1, _P1, w2, b2, _P2)


def linear(x, w, b):
    m, k = x.shape
    n_out = w.shape[1]
    tm = m if m <= 256 else 256
    return pl.pallas_call(
        _linear_kernel,
        out_shape=jax.ShapeDtypeStruct((m, n_out), jnp.float32),
        grid=(pl.cdiv(m, tm),),
        in_specs=[
            pl.BlockSpec((tm, k), lambda i: (i, 0)),
            pl.BlockSpec((k, n_out), lambda i: (0, 0)),
            pl.BlockSpec((1, n_out), lambda i: (0, 0)),
        ],
        out_specs=pl.BlockSpec((tm, n_out), lambda i: (i, 0)),
        compiler_params=pltpu.CompilerParams(dimension_semantics=("parallel",)),
    )(x, w, b)


# ---------------------------------------------------------------------------
# CNNModel forward
# ---------------------------------------------------------------------------
def init_params(key):
    k1, k2, k3, k4, k5, k6 = jax.random.split(key, 6)
    w1 = jax.random.normal(k1, (3, 3, 1, C1), jnp.float32) / np.sqrt(9.0)
    b1 = jax.random.normal(k2, (C1,), jnp.float32) * 0.05
    w2 = jax.random.normal(k3, (3, 3, C1, C2), jnp.float32) / np.sqrt(9.0 * C1)
    b2 = jax.random.normal(k4, (C2,), jnp.float32) * 0.05
    # fc weight rows stored in NHWC (h, w, c) flatten order: a static permutation of
    # PyTorch's (c, h, w) flatten -- forward semantics are identical.
    wfc = jax.random.normal(k5, (K_FC, N_FC), jnp.float32) / np.sqrt(float(K_FC))
    bfc = jax.random.normal(k6, (N_FC,), jnp.float32) * 0.05
    return dict(w1=w1, b1=b1, w2=w2, b2=b2, wfc=wfc, bfc=bfc)


def cnn_forward(x_nchw, params):
    n = x_nchw.shape[0]
    assert x_nchw.shape[1:] == (1, H1, W1)

    # static param prep: reshape / cast / pad only (no runtime activation transposes)
    w1 = params["w1"].reshape(9, 1, C1).astype(jnp.float32)
    b1 = params["b1"].reshape(1, C1).astype(jnp.float32)
    w2 = params["w2"].reshape(9, C1, C2).astype(jnp.bfloat16)
    b2 = params["b2"].reshape(1, C2).astype(jnp.float32)
    wfc = jnp.pad(params["wfc"], ((0, 0), (0, N_PAD - N_FC))).astype(jnp.bfloat16)
    bfc = jnp.pad(params["bfc"], (0, N_PAD - N_FC)).reshape(1, N_PAD).astype(jnp.float32)

    # layers 1+2: pad once, flatten, one fused Pallas kernel per image
    xp = jnp.pad(x_nchw.reshape(n, H1, W1), ((0, 0), (1, 2), (1, 1)))      # (n, 31, 30)
    h2 = conv_layers(xp.reshape(n, XR1, 1).astype(jnp.float32),
                     w1, b1, w2, b2)                                       # (n, 49, 64)

    # fc: lane-dense (padded to 128 columns) matmul, then slice the 10 real logits
    logits = linear(h2.reshape(n, K_FC), wfc, bfc)                         # (n, 128) f32
    return logits[:, :N_FC]


# pure-JAX reference for a correctness sanity check
def reference_forward(x_nchw, params):
    x = jnp.transpose(x_nchw, (0, 2, 3, 1))
    dn = ("NHWC", "HWIO", "NHWC")
    h = lax.conv_general_dilated(x, params["w1"], (1, 1), "SAME", dimension_numbers=dn)
    h = jnp.maximum(h + params["b1"], 0.0)
    h = lax.reduce_window(h, -jnp.inf, lax.max, (1, 2, 2, 1), (1, 2, 2, 1), "VALID")
    h = lax.conv_general_dilated(h, params["w2"], (1, 1), "SAME", dimension_numbers=dn)
    h = jnp.maximum(h + params["b2"], 0.0)
    h = lax.reduce_window(h, -jnp.inf, lax.max, (1, 2, 2, 1), (1, 2, 2, 1), "VALID")
    flat = h.reshape(x.shape[0], -1)  # NHWC flatten matches the stored wfc row order
    return flat @ params["wfc"] + params["bfc"]


if __name__ == "__main__":
    # MNIST-like NCHW input implied by the module: (batch=2, 1, 28, 28)
    x = jax.random.normal(jax.random.PRNGKey(0), (2, 1, H1, W1), jnp.float32)
    params = init_params(jax.random.PRNGKey(42))

    y = jax.block_until_ready(jax.jit(cnn_forward)(x, params))
    assert y.shape == (2, N_FC) and y.dtype == jnp.float32

    y_ref = jax.block_until_ready(reference_forward(x, params))
    assert np.allclose(np.asarray(y), np.asarray(y_ref), rtol=1e-1, atol=1e-1), (
        "Pallas output does not match JAX reference"
    )

    print("KERNEL_OK")
</pallas_src>

<mosaic_0001>
module attributes {stable_mosaic.version = 11 : i64} {
  func.func @_conv_layers_kernel(%arg0: i32, %arg1: memref<1x930x1xf32, #tpu.memory_space<vmem>>, %arg2: memref<9x1x32xf32, #tpu.memory_space<vmem>>, %arg3: memref<1x32xf32, #tpu.memory_space<vmem>>, %arg4: memref<272x809xbf16, #tpu.memory_space<vmem>>, %arg5: memref<9x32x64xbf16, #tpu.memory_space<vmem>>, %arg6: memref<1x64xf32, #tpu.memory_space<vmem>>, %arg7: memref<49x207xbf16, #tpu.memory_space<vmem>>, %arg8: memref<1x49x64xbf16, #tpu.memory_space<vmem>>) attributes {dimension_semantics = [#tpu.dimension_semantics<parallel>], iteration_bounds = array<i64: 2>, scalar_prefetch = 0 : i64, scratch_operands = 0 : i64, tpu.core_type = #tpu.core_type<tc>, window_params = [{transform_indices = @transform_0, window_bounds = array<i64: 1, 930, 1>}, {pipeline_mode = #tpu.pipeline_mode<synchronous>, transform_indices = @transform_1, window_bounds = array<i64: 9, 1, 32>}, {pipeline_mode = #tpu.pipeline_mode<synchronous>, transform_indices = @transform_2, window_bounds = array<i64: 1, 32>}, {pipeline_mode = #tpu.pipeline_mode<synchronous>, transform_indices = @transform_3, window_bounds = array<i64: 272, 809>}, {pipeline_mode = #tpu.pipeline_mode<synchronous>, transform_indices = @transform_4, window_bounds = array<i64: 9, 32, 64>}, {pipeline_mode = #tpu.pipeline_mode<synchronous>, transform_indices = @transform_5, window_bounds = array<i64: 1, 64>}, {pipeline_mode = #tpu.pipeline_mode<synchronous>, transform_indices = @transform_6, window_bounds = array<i64: 49, 207>}, {transform_indices = @transform_7, window_bounds = array<i64: 1, 49, 64>}]} {
    %c0 = arith.constant 0 : index
    %c0_0 = arith.constant 0 : index
    %c0_1 = arith.constant 0 : index
    %0 = vector.load %arg1[%c0, %c0_0, %c0_1] : memref<1x930x1xf32, #tpu.memory_space<vmem>>, vector<1x930x1xf32>
    %1 = vector.shape_cast %0 : vector<1x930x1xf32> to vector<930x1xf32>
    %cst = arith.constant 0.000000e+00 : f32
    %2 = vector.broadcast %cst : f32 to vector<840x32xf32>
    %3 = vector.extract_strided_slice %1 {offsets = [0, 0], sizes = [840, 1], strides = [1, 1]} : vector<930x1xf32> to vector<840x1xf32>
    %c0_2 = arith.constant 0 : index
    %c0_3 = arith.constant 0 : index
    %c0_4 = arith.constant 0 : index
    %4 = vector.load %arg2[%c0_2, %c0_3, %c0_4] : memref<9x1x32xf32, #tpu.memory_space<vmem>>, vector<1x1x32xf32>
    %5 = vector.shape_cast %4 : vector<1x1x32xf32> to vector<1x32xf32>
    %6 = vector.broadcast %3 : vector<840x1xf32> to vector<840x32xf32>
    %7 = vector.broadcast %5 : vector<1x32xf32> to vector<840x32xf32>
    %8 = arith.mulf %6, %7 : vector<840x32xf32>
    %9 = arith.addf %2, %8 : vector<840x32xf32>
    %10 = vector.extract_strided_slice %1 {offsets = [1, 0], sizes = [840, 1], strides = [1, 1]} : vector<930x1xf32> to vector<840x1xf32>
    %c1 = arith.constant 1 : index
    %c0_5 = arith.constant 0 : index
    %c0_6 = arith.constant 0 : index
    %11 = vector.load %arg2[%c1, %c0_5, %c0_6] : memref<9x1x32xf32, #tpu.memory_space<vmem>>, vector<1x1x32xf32>
    %12 = vector.shape_cast %11 : vector<1x1x32xf32> to vector<1x32xf32>
    %13 = vector.broadcast %10 : vector<840x1xf32> to vector<840x32xf32>
    %14 = vector.broadcast %12 : vector<1x32xf32> to vector<840x32xf32>
    %15 = arith.mulf %13, %14 : vector<840x32xf32>
    %16 = arith.addf %9, %15 : vector<840x32xf32>
    %17 = vector.extract_strided_slice %1 {offsets = [2, 0], sizes = [840, 1], strides = [1, 1]} : vector<930x1xf32> to vector<840x1xf32>
    %c2 = arith.constant 2 : index
    %c0_7 = arith.constant 0 : index
    %c0_8 = arith.constant 0 : index
    %18 = vector.load %arg2[%c2, %c0_7, %c0_8] : memref<9x1x32xf32, #tpu.memory_space<vmem>>, vector<1x1x32xf32>
    %19 = vector.shape_cast %18 : vector<1x1x32xf32> to vector<1x32xf32>
    %20 = vector.broadcast %17 : vector<840x1xf32> to vector<840x32xf32>
    %21 = vector.broadcast %19 : vector<1x32xf32> to vector<840x32xf32>
    %22 = arith.mulf %20, %21 : vector<840x32xf32>
    %23 = arith.addf %16, %22 : vector<840x32xf32>
    %24 = vector.extract_strided_slice %1 {offsets = [30, 0], sizes = [840, 1], strides = [1, 1]} : vector<930x1xf32> to vector<840x1xf32>
    %c3 = arith.constant 3 : index
    %c0_9 = arith.constant 0 : index
    %c0_10 = arith.constant 0 : index
    %25 = vector.load %arg2[%c3, %c0_9, %c0_10] : memref<9x1x32xf32, #tpu.memory_space<vmem>>, vector<1x1x32xf32>
    %26 = vector.shape_cast %25 : vector<1x1x32xf32> to vector<1x32xf32>
    %27 = vector.broadcast %24 : vector<840x1xf32> to vector<840x32xf32>
    %28 = vector.broadcast %26 : vector<1x32xf32> to vector<840x32xf32>
    %29 = arith.mulf %27, %28 : vector<840x32xf32>
    %30 = arith.addf %23, %29 : vector<840x32xf32>
    %31 = vector.extract_strided_slice %1 {offsets = [31, 0], sizes = [840, 1], strides = [1, 1]} : vector<930x1xf32> to vector<840x1xf32>
    %c4 = arith.constant 4 : index
    %c0_11 = arith.constant 0 : index
    %c0_12 = arith.constant 0 : index
    %32 = vector.load %arg2[%c4, %c0_11, %c0_12] : memref<9x1x32xf32, #tpu.memory_space<vmem>>, vector<1x1x32xf32>
    %33 = vector.shape_cast %32 : vector<1x1x32xf32> to vector<1x32xf32>
    %34 = vector.broadcast %31 : vector<840x1xf32> to vector<840x32xf32>
    %35 = vector.broadcast %33 : vector<1x32xf32> to vector<840x32xf32>
    %36 = arith.mulf %34, %35 : vector<840x32xf32>
    %37 = arith.addf %30, %36 : vector<840x32xf32>
    %38 = vector.extract_strided_slice %1 {offsets = [32, 0], sizes = [840, 1], strides = [1, 1]} : vector<930x1xf32> to vector<840x1xf32>
    %c5 = arith.constant 5 : index
    %c0_13 = arith.constant 0 : index
    %c0_14 = arith.constant 0 : index
    %39 = vector.load %arg2[%c5, %c0_13, %c0_14] : memref<9x1x32xf32, #tpu.memory_space<vmem>>, vector<1x1x32xf32>
    %40 = vector.shape_cast %39 : vector<1x1x32xf32> to vector<1x32xf32>
    %41 = vector.broadcast %38 : vector<840x1xf32> to vector<840x32xf32>
    %42 = vector.broadcast %40 : vector<1x32xf32> to vector<840x32xf32>
    %43 = arith.mulf %41, %42 : vector<840x32xf32>
    %44 = arith.addf %37, %43 : vector<840x32xf32>
    %45 = vector.extract_strided_slice %1 {offsets = [60, 0], sizes = [840, 1], strides = [1, 1]} : vector<930x1xf32> to vector<840x1xf32>
    %c6 = arith.constant 6 : index
    %c0_15 = arith.constant 0 : index
    %c0_16 = arith.constant 0 : index
    %46 = vector.load %arg2[%c6, %c0_15, %c0_16] : memref<9x1x32xf32, #tpu.memory_space<vmem>>, vector<1x1x32xf32>
    %47 = vector.shape_cast %46 : vector<1x1x32xf32> to vector<1x32xf32>
    %48 = vector.broadcast %45 : vector<840x1xf32> to vector<840x32xf32>
    %49 = vector.broadcast %47 : vector<1x32xf32> to vector<840x32xf32>
    %50 = arith.mulf %48, %49 : vector<840x32xf32>
    %51 = arith.addf %44, %50 : vector<840x32xf32>
    %52 = vector.extract_strided_slice %1 {offsets = [61, 0], sizes = [840, 1], strides = [1, 1]} : vector<930x1xf32> to vector<840x1xf32>
    %c7 = arith.constant 7 : index
    %c0_17 = arith.constant 0 : index
    %c0_18 = arith.constant 0 : index
    %53 = vector.load %arg2[%c7, %c0_17, %c0_18] : memref<9x1x32xf32, #tpu.memory_space<vmem>>, vector<1x1x32xf32>
    %54 = vector.shape_cast %53 : vector<1x1x32xf32> to vector<1x32xf32>
    %55 = vector.broadcast %52 : vector<840x1xf32> to vector<840x32xf32>
    %56 = vector.broadcast %54 : vector<1x32xf32> to vector<840x32xf32>
    %57 = arith.mulf %55, %56 : vector<840x32xf32>
    %58 = arith.addf %51, %57 : vector<840x32xf32>
    %59 = vector.extract_strided_slice %1 {offsets = [62, 0], sizes = [840, 1], strides = [1, 1]} : vector<930x1xf32> to vector<840x1xf32>
    %c8 = arith.constant 8 : index
    %c0_19 = arith.constant 0 : index
    %c0_20 = arith.constant 0 : index
    %60 = vector.load %arg2[%c8, %c0_19, %c0_20] : memref<9x1x32xf32, #tpu.memory_space<vmem>>, vector<1x1x32xf32>
    %61 = vector.shape_cast %60 : vector<1x1x32xf32> to vector<1x32xf32>
    %62 = vector.broadcast %59 : vector<840x1xf32> to vector<840x32xf32>
    %63 = vector.broadcast %61 : vector<1x32xf32> to vector<840x32xf32>
    %64 = arith.mulf %62, %63 : vector<840x32xf32>
    %65 = arith.addf %58, %64 : vector<840x32xf32>
    %c0_21 = arith.constant 0 : index
    %c0_22 = arith.constant 0 : index
    %66 = vector.load %arg3[%c0_21, %c0_22] : memref<1x32xf32, #tpu.memory_space<vmem>>, vector<1x32xf32>
    %67 = vector.broadcast %66 : vector<1x32xf32> to vector<840x32xf32>
    %68 = arith.addf %65, %67 : vector<840x32xf32>
    %cst_23 = arith.constant 0.000000e+00 : f32
    %69 = vector.broadcast %cst_23 : f32 to vector<840x32xf32>
    %70 = arith.maximumf %68, %69 : vector<840x32xf32>
    %71 = vector.extract_strided_slice %70 {offsets = [0, 0], sizes = [839, 32], strides = [1, 1]} : vector<840x32xf32> to vector<839x32xf32>
    %72 = vector.extract_strided_slice %70 {offsets = [1, 0], sizes = [839, 32], strides = [1, 1]} : vector<840x32xf32> to vector<839x32xf32>
    %73 = arith.maximumf %71, %72 : vector<839x32xf32>
    %74 = vector.extract_strided_slice %73 {offsets = [0, 0], sizes = [809, 32], strides = [1, 1]} : vector<839x32xf32> to vector<809x32xf32>
    %75 = vector.extract_strided_slice %73 {offsets = [30, 0], sizes = [809, 32], strides = [1, 1]} : vector<839x32xf32> to vector<809x32xf32>
    %76 = arith.maximumf %74, %75 : vector<809x32xf32>
    %c0_24 = arith.constant 0 : index
    %c0_25 = arith.constant 0 : index
    %77 = vector.load %arg4[%c0_24, %c0_25] : memref<272x809xbf16, #tpu.memory_space<vmem>>, vector<272x809xbf16>
    %78 = arith.truncf %76 : vector<809x32xf32> to vector<809x32xbf16>
    %cst_26 = arith.constant dense<0.000000e+00> : vector<272x32xf32>
    %79 = tpu.matmul %77, %78, %cst_26 {dimension_numbers = #tpu.dot_dimension_numbers<[1], [0], [0], [1], [0, 0, 1, 1], [], []>} : vector<272x809xbf16>, vector<809x32xbf16>, vector<272x32xf32> -> vector<272x32xf32>
    %cst_27 = arith.constant 0.000000e+00 : f32
    %80 = vector.broadcast %cst_27 : f32 to vector<224x64xf32>
    %81 = vector.extract_strided_slice %79 {offsets = [0, 0], sizes = [224, 32], strides = [1, 1]} : vector<272x32xf32> to vector<224x32xf32>
    %82 = arith.truncf %81 : vector<224x32xf32> to vector<224x32xbf16>
    %c0_28 = arith.constant 0 : index
    %c0_29 = arith.constant 0 : index
    %c0_30 = arith.constant 0 : index
    %83 = vector.load %arg5[%c0_28, %c0_29, %c0_30] : memref<9x32x64xbf16, #tpu.memory_space<vmem>>, vector<1x32x64xbf16>
    %84 = vector.shape_cast %83 : vector<1x32x64xbf16> to vector<32x64xbf16>
    %cst_31 = arith.constant dense<0.000000e+00> : vector<224x64xf32>
    %85 = tpu.matmul %82, %84, %cst_31 {dimension_numbers = #tpu.dot_dimension_numbers<[1], [0], [0], [1], [0, 0, 1, 1], [], []>} : vector<224x32xbf16>, vector<32x64xbf16>, vector<224x64xf32> -> vector<224x64xf32>
    %86 = arith.addf %80, %85 : vector<224x64xf32>
    %87 = vector.extract_strided_slice %79 {offsets = [1, 0], sizes = [224, 32], strides = [1, 1]} : vector<272x32xf32> to vector<224x32xf32>
    %88 = arith.truncf %87 : vector<224x32xf32> to vector<224x32xbf16>
    %c1_32 = arith.constant 1 : index
    %c0_33 = arith.constant 0 : index
    %c0_34 = arith.constant 0 : index
    %89 = vector.load %arg5[%c1_32, %c0_33, %c0_34] : memref<9x32x64xbf16, #tpu.memory_space<vmem>>, vector<1x32x64xbf16>
    %90 = vector.shape_cast %89 : vector<1x32x64xbf16> to vector<32x64xbf16>
    %cst_35 = arith.constant dense<0.000000e+00> : vector<224x64xf32>
    %91 = tpu.matmul %88, %90, %cst_35 {dimension_numbers = #tpu.dot_dimension_numbers<[1], [0], [0], [1], [0, 0, 1, 1], [], []>} : vector<224x32xbf16>, vector<32x64xbf16>, vector<224x64xf32> -> vector<224x64xf32>
    %92 = arith.addf %86, %91 : vector<224x64xf32>
    %93 = vector.extract_strided_slice %79 {offsets = [2, 0], sizes = [224, 32], strides = [1, 1]} : vector<272x32xf32> to vector<224x32xf32>
    %94 = arith.truncf %93 : vector<224x32xf32> to vector<224x32xbf16>
    %c2_36 = arith.constant 2 : index
    %c0_37 = arith.constant 0 : index
    %c0_38 = arith.constant 0 : index
    %95 = vector.load %arg5[%c2_36, %c0_37, %c0_38] : memref<9x32x64xbf16, #tpu.memory_space<vmem>>, vector<1x32x64xbf16>
    %96 = vector.shape_cast %95 : vector<1x32x64xbf16> to vector<32x64xbf16>
    %cst_39 = arith.constant dense<0.000000e+00> : vector<224x64xf32>
    %97 = tpu.matmul %94, %96, %cst_39 {dimension_numbers = #tpu.dot_dimension_numbers<[1], [0], [0], [1], [0, 0, 1, 1], [], []>} : vector<224x32xbf16>, vector<32x64xbf16>, vector<224x64xf32> -> vector<224x64xf32>
    %98 = arith.addf %92, %97 : vector<224x64xf32>
    %99 = vector.extract_strided_slice %79 {offsets = [16, 0], sizes = [224, 32], strides = [1, 1]} : vector<272x32xf32> to vector<224x32xf32>
    %100 = arith.truncf %99 : vector<224x32xf32> to vector<224x32xbf16>
    %c3_40 = arith.constant 3 : index
    %c0_41 = arith.constant 0 : index
    %c0_42 = arith.constant 0 : index
    %101 = vector.load %arg5[%c3_40, %c0_41, %c0_42] : memref<9x32x64xbf16, #tpu.memory_space<vmem>>, vector<1x32x64xbf16>
    %102 = vector.shape_cast %101 : vector<1x32x64xbf16> to vector<32x64xbf16>
    %cst_43 = arith.constant dense<0.000000e+00> : vector<224x64xf32>
    %103 = tpu.matmul %100, %102, %cst_43 {dimension_numbers = #tpu.dot_dimension_numbers<[1], [0], [0], [1], [0, 0, 1, 1], [], []>} : vector<224x32xbf16>, vector<32x64xbf16>, vector<224x64xf32> -> vector<224x64xf32>
    %104 = arith.addf %98, %103 : vector<224x64xf32>
    %105 = vector.extract_strided_slice %79 {offsets = [17, 0], sizes = [224, 32], strides = [1, 1]} : vector<272x32xf32> to vector<224x32xf32>
    %106 = arith.truncf %105 : vector<224x32xf32> to vector<224x32xbf16>
    %c4_44 = arith.constant 4 : index
    %c0_45 = arith.constant 0 : index
    %c0_46 = arith.constant 0 : index
    %107 = vector.load %arg5[%c4_44, %c0_45, %c0_46] : memref<9x32x64xbf16, #tpu.memory_space<vmem>>, vector<1x32x64xbf16>
    %108 = vector.shape_cast %107 : vector<1x32x64xbf16> to vector<32x64xbf16>
    %cst_47 = arith.constant dense<0.000000e+00> : vector<224x64xf32>
    %109 = tpu.matmul %106, %108, %cst_47 {dimension_numbers = #tpu.dot_dimension_numbers<[1], [0], [0], [1], [0, 0, 1, 1], [], []>} : vector<224x32xbf16>, vector<32x64xbf16>, vector<224x64xf32> -> vector<224x64xf32>
    %110 = arith.addf %104, %109 : vector<224x64xf32>
    %111 = vector.extract_strided_slice %79 {offsets = [18, 0], sizes = [224, 32], strides = [1, 1]} : vector<272x32xf32> to vector<224x32xf32>
    %112 = arith.truncf %111 : vector<224x32xf32> to vector<224x32xbf16>
    %c5_48 = arith.constant 5 : index
    %c0_49 = arith.constant 0 : index
    %c0_50 = arith.constant 0 : index
    %113 = vector.load %arg5[%c5_48, %c0_49, %c0_50] : memref<9x32x64xbf16, #tpu.memory_space<vmem>>, vector<1x32x64xbf16>
    %114 = vector.shape_cast %113 : vector<1x32x64xbf16> to vector<32x64xbf16>
    %cst_51 = arith.constant dense<0.000000e+00> : vector<224x64xf32>
    %115 = tpu.matmul %112, %114, %cst_51 {dimension_numbers = #tpu.dot_dimension_numbers<[1], [0], [0], [1], [0, 0, 1, 1], [], []>} : vector<224x32xbf16>, vector<32x64xbf16>, vector<224x64xf32> -> vector<224x64xf32>
    %116 = arith.addf %110, %115 : vector<224x64xf32>
    %117 = vector.extract_strided_slice %79 {offsets = [32, 0], sizes = [224, 32], strides = [1, 1]} : vector<272x32xf32> to vector<224x32xf32>
    %118 = arith.truncf %117 : vector<224x32xf32> to vector<224x32xbf16>
    %c6_52 = arith.constant 6 : index
    %c0_53 = arith.constant 0 : index
    %c0_54 = arith.constant 0 : index
    %119 = vector.load %arg5[%c6_52, %c0_53, %c0_54] : memref<9x32x64xbf16, #tpu.memory_space<vmem>>, vector<1x32x64xbf16>
    %120 = vector.shape_cast %119 : vector<1x32x64xbf16> to vector<32x64xbf16>
    %cst_55 = arith.constant dense<0.000000e+00> : vector<224x64xf32>
    %121 = tpu.matmul %118, %120, %cst_55 {dimension_numbers = #tpu.dot_dimension_numbers<[1], [0], [0], [1], [0, 0, 1, 1], [], []>} : vector<224x32xbf16>, vector<32x64xbf16>, vector<224x64xf32> -> vector<224x64xf32>
    %122 = arith.addf %116, %121 : vector<224x64xf32>
    %123 = vector.extract_strided_slice %79 {offsets = [33, 0], sizes = [224, 32], strides = [1, 1]} : vector<272x32xf32> to vector<224x32xf32>
    %124 = arith.truncf %123 : vector<224x32xf32> to vector<224x32xbf16>
    %c7_56 = arith.constant 7 : index
    %c0_57 = arith.constant 0 : index
    %c0_58 = arith.constant 0 : index
    %125 = vector.load %arg5[%c7_56, %c0_57, %c0_58] : memref<9x32x64xbf16, #tpu.memory_space<vmem>>, vector<1x32x64xbf16>
    %126 = vector.shape_cast %125 : vector<1x32x64xbf16> to vector<32x64xbf16>
    %cst_59 = arith.constant dense<0.000000e+00> : vector<224x64xf32>
    %127 = tpu.matmul %124, %126, %cst_59 {dimension_numbers = #tpu.dot_dimension_numbers<[1], [0], [0], [1], [0, 0, 1, 1], [], []>} : vector<224x32xbf16>, vector<32x64xbf16>, vector<224x64xf32> -> vector<224x64xf32>
    %128 = arith.addf %122, %127 : vector<224x64xf32>
    %129 = vector.extract_strided_slice %79 {offsets = [34, 0], sizes = [224, 32], strides = [1, 1]} : vector<272x32xf32> to vector<224x32xf32>
    %130 = arith.truncf %129 : vector<224x32xf32> to vector<224x32xbf16>
    %c8_60 = arith.constant 8 : index
    %c0_61 = arith.constant 0 : index
    %c0_62 = arith.constant 0 : index
    %131 = vector.load %arg5[%c8_60, %c0_61, %c0_62] : memref<9x32x64xbf16, #tpu.memory_space<vmem>>, vector<1x32x64xbf16>
    %132 = vector.shape_cast %131 : vector<1x32x64xbf16> to vector<32x64xbf16>
    %cst_63 = arith.constant dense<0.000000e+00> : vector<224x64xf32>
    %133 = tpu.matmul %130, %132, %cst_63 {dimension_numbers = #tpu.dot_dimension_numbers<[1], [0], [0], [1], [0, 0, 1, 1], [], []>} : vector<224x32xbf16>, vector<32x64xbf16>, vector<224x64xf32> -> vector<224x64xf32>
    %134 = arith.addf %128, %133 : vector<224x64xf32>
    %c0_64 = arith.constant 0 : index
    %c0_65 = arith.constant 0 : index
    %135 = vector.load %arg6[%c0_64, %c0_65] : memref<1x64xf32, #tpu.memory_space<vmem>>, vector<1x64xf32>
    %136 = vector.broadcast %135 : vector<1x64xf32> to vector<224x64xf32>
    %137 = arith.addf %134, %136 : vector<224x64xf32>
    %cst_66 = arith.constant 0.000000e+00 : f32
    %138 = vector.broadcast %cst_66 : f32 to vector<224x64xf32>
    %139 = arith.maximumf %137, %138 : vector<224x64xf32>
    %140 = vector.extract_strided_slice %139 {offsets = [0, 0], sizes = [223, 64], strides = [1, 1]} : vector<224x64xf32> to vector<223x64xf32>
    %141 = vector.extract_strided_slice %139 {offsets = [1, 0], sizes = [223, 64], strides = [1, 1]} : vector<224x64xf32> to vector<223x64xf32>
    %142 = arith.maximumf %140, %141 : vector<223x64xf32>
    %143 = vector.extract_strided_slice %142 {offsets = [0, 0], sizes = [207, 64], strides = [1, 1]} : vector<223x64xf32> to vector<207x64xf32>
    %144 = vector.extract_strided_slice %142 {offsets = [16, 0], sizes = [207, 64], strides = [1, 1]} : vector<223x64xf32> to vector<207x64xf32>
    %145 = arith.maximumf %143, %144 : vector<207x64xf32>
    %c0_67 = arith.constant 0 : index
    %c0_68 = arith.constant 0 : index
    %146 = vector.load %arg7[%c0_67, %c0_68] : memref<49x207xbf16, #tpu.memory_space<vmem>>, vector<49x207xbf16>
    %147 = arith.truncf %145 : vector<207x64xf32> to vector<207x64xbf16>
    %cst_69 = arith.constant dense<0.000000e+00> : vector<49x64xf32>
    %148 = tpu.matmul %146, %147, %cst_69 {dimension_numbers = #tpu.dot_dimension_numbers<[1], [0], [0], [1], [0, 0, 1, 1], [], []>} : vector<49x207xbf16>, vector<207x64xbf16>, vector<49x64xf32> -> vector<49x64xf32>
    %149 = arith.truncf %148 : vector<49x64xf32> to vector<49x64xbf16>
    %c0_70 = arith.constant 0 : index
    %c0_71 = arith.constant 0 : index
    %c0_72 = arith.constant 0 : index
    %150 = vector.load %arg8[%c0_70, %c0_71, %c0_72] : memref<1x49x64xbf16, #tpu.memory_space<vmem>>, vector<1x49x64xbf16>
    %151 = vector.shape_cast %150 : vector<1x49x64xbf16> to vector<49x64xbf16>
    %152 = vector.shape_cast %149 : vector<49x64xbf16> to vector<1x49x64xbf16>
    tpu.vector_store %arg8[%c0_70, %c0_71, %c0_72], %152 {strides = array<i32>} : memref<1x49x64xbf16, #tpu.memory_space<vmem>>, vector<1x49x64xbf16>,
    return
  }
  func.func @transform_0(%arg0: i32) -> (i32, i32, i32) {
    %c0_i32 = arith.constant 0 : i32
    %c0_i32_0 = arith.constant 0 : i32
    %c0_i32_1 = arith.constant 0 : i32
    return %arg0, %c0_i32, %c0_i32_0 : i32, i32, i32
  }
  func.func @transform_1(%arg0: i32) -> (i32, i32, i32) {
    %c0_i32 = arith.constant 0 : i32
    %c0_i32_0 = arith.constant 0 : i32
    %c0_i32_1 = arith.constant 0 : i32
    %c0_i32_2 = arith.constant 0 : i32
    return %c0_i32, %c0_i32_0, %c0_i32_1 : i32, i32, i32
  }
  func.func @transform_2(%arg0: i32) -> (i32, i32) {
    %c0_i32 = arith.constant 0 : i32
    %c0_i32_0 = arith.constant 0 : i32
    %c0_i32_1 = arith.constant 0 : i32
    return %c0_i32, %c0_i32_0 : i32, i32
  }
  func.func @transform_3(%arg0: i32) -> (i32, i32) {
    %c0_i32 = arith.constant 0 : i32
    %c0_i32_0 = arith.constant 0 : i32
    %c0_i32_1 = arith.constant 0 : i32
    return %c0_i32, %c0_i32_0 : i32, i32
  }
  func.func @transform_4(%arg0: i32) -> (i32, i32, i32) {
    %c0_i32 = arith.constant 0 : i32
    %c0_i32_0 = arith.constant 0 : i32
    %c0_i32_1 = arith.constant 0 : i32
    %c0_i32_2 = arith.constant 0 : i32
    return %c0_i32, %c0_i32_0, %c0_i32_1 : i32, i32, i32
  }
  func.func @transform_5(%arg0: i32) -> (i32, i32) {
    %c0_i32 = arith.constant 0 : i32
    %c0_i32_0 = arith.constant 0 : i32
    %c0_i32_1 = arith.constant 0 : i32
    return %c0_i32, %c0_i32_0 : i32, i32
  }
  func.func @transform_6(%arg0: i32) -> (i32, i32) {
    %c0_i32 = arith.constant 0 : i32
    %c0_i32_0 = arith.constant 0 : i32
    %c0_i32_1 = arith.constant 0 : i32
    return %c0_i32, %c0_i32_0 : i32, i32
  }
  func.func @transform_7(%arg0: i32) -> (i32, i32, i32) {
    %c0_i32 = arith.constant 0 : i32
    %c0_i32_0 = arith.constant 0 : i32
    %c0_i32_1 = arith.constant 0 : i32
    return %arg0, %c0_i32, %c0_i32_0 : i32, i32, i32
  }
}

module attributes {stable_mosaic.version = 11 : i64} {
  func.func @_linear_kernel(%arg0: i32, %arg1: memref<2x3136xbf16, #tpu.memory_space<vmem>>, %arg2: memref<3136x128xbf16, #tpu.memory_space<vmem>>, %arg3: memref<1x128xf32, #tpu.memory_space<vmem>>, %arg4: memref<2x128xf32, #tpu.memory_space<vmem>>) attributes {dimension_semantics = [#tpu.dimension_semantics<parallel>], iteration_bounds = array<i64: 1>, scalar_prefetch = 0 : i64, scratch_operands = 0 : i64, tpu.core_type = #tpu.core_type<tc>, window_params = [{transform_indices = @transform_0, window_bounds = array<i64: 2, 3136>}, {pipeline_mode = #tpu.pipeline_mode<synchronous>, transform_indices = @transform_1, window_bounds = array<i64: 3136, 128>}, {pipeline_mode = #tpu.pipeline_mode<synchronous>, transform_indices = @transform_2, window_bounds = array<i64: 1, 128>}, {transform_indices = @transform_3, window_bounds = array<i64: 2, 128>}]} {
    %c0 = arith.constant 0 : index
    %c0_0 = arith.constant 0 : index
    %0 = vector.load %arg1[%c0, %c0_0] : memref<2x3136xbf16, #tpu.memory_space<vmem>>, vector<2x3136xbf16>
    %c0_1 = arith.constant 0 : index
    %c0_2 = arith.constant 0 : index
    %1 = vector.load %arg2[%c0_1, %c0_2] : memref<3136x128xbf16, #tpu.memory_space<vmem>>, vector<3136x128xbf16>
    %cst = arith.constant dense<0.000000e+00> : vector<2x128xf32>
    %2 = tpu.matmul %0, %1, %cst {dimension_numbers = #tpu.dot_dimension_numbers<[1], [0], [0], [1], [0, 0, 1, 1], [], []>} : vector<2x3136xbf16>, vector<3136x128xbf16>, vector<2x128xf32> -> vector<2x128xf32>
    %c0_3 = arith.constant 0 : index
    %c0_4 = arith.constant 0 : index
    %3 = vector.load %arg3[%c0_3, %c0_4] : memref<1x128xf32, #tpu.memory_space<vmem>>, vector<1x128xf32>
    %4 = vector.broadcast %3 : vector<1x128xf32> to vector<2x128xf32>
    %5 = arith.addf %2, %4 : vector<2x128xf32>
    %c0_5 = arith.constant 0 : index
    %c0_6 = arith.constant 0 : index
    %6 = vector.load %arg4[%c0_5, %c0_6] : memref<2x128xf32, #tpu.memory_space<vmem>>, vector<2x128xf32>
    tpu.vector_store %arg4[%c0_5, %c0_6], %5 {strides = array<i32>} : memref<2x128xf32, #tpu.memory_space<vmem>>, vector<2x128xf32>,
    return
  }
  func.func @transform_0(%arg0: i32) -> (i32, i32) {
    %c0_i32 = arith.constant 0 : i32
    %c0_i32_0 = arith.constant 0 : i32
    return %arg0, %c0_i32 : i32, i32
  }
  func.func @transform_1(%arg0: i32) -> (i32, i32) {
    %c0_i32 = arith.constant 0 : i32
    %c0_i32_0 = arith.constant 0 : i32
    %c0_i32_1 = arith.constant 0 : i32
    return %c0_i32, %c0_i32_0 : i32, i32
  }
  func.func @transform_2(%arg0: i32) -> (i32, i32) {
    %c0_i32 = arith.constant 0 : i32
    %c0_i32_0 = arith.constant 0 : i32
    %c0_i32_1 = arith.constant 0 : i32
    return %c0_i32, %c0_i32_0 : i32, i32
  }
  func.func @transform_3(%arg0: i32) -> (i32, i32) {
    %c0_i32 = arith.constant 0 : i32
    %c0_i32_0 = arith.constant 0 : i32
    return %arg0, %c0_i32 : i32, i32
  }
}

</mosaic_0001>

<llo_original>
// kernel: cnn_forward.3
$region0: #{cnn_forward.3}
  #allocation0 [shape = 'u32[]', space=smem, size = 0x4, offset = 0x4, fixed_abs, tag = 'smem constant byte address 0x4 - core index']
  #allocation1 [shape = 'u32[144,128]{1,0:T(1,128)}', space=vmem, size = 0x12000, scoped, tag = 'internal scratch']
  %s0 = inlined_call_operand.vmem [shape: bf16[2,3136], index: 0, kind: input, shape index: {}]
  %s1 = inlined_call_operand.vmem [shape: bf16[3136,128], index: 1, kind: input, shape index: {}]
  %s2 = inlined_call_operand.vmem [shape: f32[1,128], index: 2, kind: input, shape index: {}]
  %s3 = inlined_call_operand.hbm [shape: f32[2,128], index: 3, kind: output, shape index: {}]
  %s4 = sld [smem:[#allocation0]]
  $region22: #{cnn_forward.3} parent=0
    _
  %s6 = ssub.s32 1, %s4
  %s7 = scalar_select 0, %s6, %s4
  $region1: #{cnn_forward.3} parent=0
    #allocation2 [shape = 'u8[1024]{0}', space=vmem, size = 0x400, scoped, tag = 'output window, operand 0, single buffered']
    #allocation3 [shape = 's32[1]{0}', space=sflag, size = 0x4, scoped, tag = 'scoped memory for cnn_forward.3']
    %8 = vsyncpa [#allocation3], 0
    // Predicated region
    $region2: #{cnn_forward.3} parent=1 // pred_check
      _
    $region3: #{cnn_forward.3} parent=1 // pred_check_branch
      %10 = sbr.rel (0) target = $region5
    $region4: #{cnn_forward.3} parent=1 // pred_region
      _
    $region5: #{cnn_forward.3} parent=1 // pred_fallthru
      _
    // Predicated region
    $region6: #{cnn_forward.3} parent=1 // pred_check
      _
    $region7: #{cnn_forward.3} parent=1 // pred_check_branch
      %12 = sbr.rel (0) target = $region9
    $region8: #{cnn_forward.3} parent=1 // pred_region
      _
    $region9: #{cnn_forward.3} parent=1 // pred_fallthru
      _
    // Predicated region
    $region10: #{cnn_forward.3} parent=1 // pred_check
      _
    $region11: #{cnn_forward.3} parent=1 // pred_check_branch
      %14 = sbr.rel (0) target = $region13
    $region12: #{cnn_forward.3} parent=1 // pred_region
      _
    $region13: #{cnn_forward.3} parent=1 // pred_fallthru
      _
    %v16 = vld [vmem:[%s0] sm:$0xff]
    %v17 = vld [vmem:[%s0 + $0x8] sm:$0xff]
    %v18 = vld [vmem:[%s0 + $0x10] sm:$0xff]
    %v19 = vld [vmem:[%s0 + $0x18] sm:$0x1]
    %v20 = vld [vmem:[%s1] sm:$0xf]
    %v21 = vld [vmem:[%s1 + $0x4] sm:$0xf]
    %v22 = vld [vmem:[%s1 + $0x8] sm:$0xf]
    %v23 = vld [vmem:[%s1 + $0xc] sm:$0xf]
    %v24 = vld [vmem:[%s1 + $0x10] sm:$0xf]
    %v25 = vld [vmem:[%s1 + $0x14] sm:$0xf]
    %v26 = vld [vmem:[%s1 + $0x18] sm:$0xf]
    %v27 = vld [vmem:[%s1 + $0x1c] sm:$0xf]
    %v28 = vld [vmem:[%s1 + $0x20] sm:$0xf]
    %v29 = vld [vmem:[%s1 + $0x24] sm:$0xf]
    %v30 = vld [vmem:[%s1 + $0x28] sm:$0xf]
    %v31 = vld [vmem:[%s1 + $0x2c] sm:$0xf]
    %v32 = vld [vmem:[%s1 + $0x30] sm:$0xf]
    %v33 = vld [vmem:[%s1 + $0x34] sm:$0xf]
    %v34 = vld [vmem:[%s1 + $0x38] sm:$0xf]
    %v35 = vld [vmem:[%s1 + $0x3c] sm:$0xf]
    %v36 = vld [vmem:[%s1 + $0x40] sm:$0xf]
    %v37 = vld [vmem:[%s1 + $0x44] sm:$0xf]
    %v38 = vld [vmem:[%s1 + $0x48] sm:$0xf]
    %v39 = vld [vmem:[%s1 + $0x4c] sm:$0xf]
    %v40 = vld [vmem:[%s1 + $0x50] sm:$0xf]
    %v41 = vld [vmem:[%s1 + $0x54] sm:$0xf]
    %v42 = vld [vmem:[%s1 + $0x58] sm:$0xf]
    %v43 = vld [vmem:[%s1 + $0x5c] sm:$0xf]
    %v44 = vld [vmem:[%s1 + $0x60] sm:$0xf]
    %v45 = vld [vmem:[%s1 + $0x64] sm:$0xf]
    %v46 = vld [vmem:[%s1 + $0x68] sm:$0xf]
    %v47 = vld [vmem:[%s1 + $0x6c] sm:$0xf]
    %v48 = vld [vmem:[%s1 + $0x70] sm:$0xf]
    %v49 = vld [vmem:[%s1 + $0x74] sm:$0xf]
    %v50 = vld [vmem:[%s1 + $0x78] sm:$0xf]
    %v51 = vld [vmem:[%s1 + $0x7c] sm:$0xf]
    %v52 = vld [vmem:[%s1 + $0x80] sm:$0xf]
    %v53 = vld [vmem:[%s1 + $0x84] sm:$0xf]
    %v54 = vld [vmem:[%s1 + $0x88] sm:$0xf]
    %v55 = vld [vmem:[%s1 + $0x8c] sm:$0xf]
    %v56 = vld [vmem:[%s1 + $0x90] sm:$0xf]
    %v57 = vld [vmem:[%s1 + $0x94] sm:$0xf]
    %v58 = vld [vmem:[%s1 + $0x98] sm:$0xf]
    %v59 = vld [vmem:[%s1 + $0x9c] sm:$0xf]
    %v60 = vld [vmem:[%s1 + $0xa0] sm:$0xf]
    %v61 = vld [vmem:[%s1 + $0xa4] sm:$0xf]
    %v62 = vld [vmem:[%s1 + $0xa8] sm:$0xf]
    %v63 = vld [vmem:[%s1 + $0xac] sm:$0xf]
    %v64 = vld [vmem:[%s1 + $0xb0] sm:$0xf]
    %v65 = vld [vmem:[%s1 + $0xb4] sm:$0xf]
    %v66 = vld [vmem:[%s1 + $0xb8] sm:$0xf]
    %v67 = vld [vmem:[%s1 + $0xbc] sm:$0xf]
    %v68 = vld [vmem:[%s1 + $0xc0] sm:$0xf]
    %v69 = vld [vmem:[%s1 + $0xc4] sm:$0xf]
    %v70 = vld [vmem:[%s1 + $0xc8] sm:$0xf]
    %v71 = vld [vmem:[%s1 + $0xcc] sm:$0xf]
    %v72 = vld [vmem:[%s1 + $0xd0] sm:$0xf]
    %v73 = vld [vmem:[%s1 + $0xd4] sm:$0xf]
    %v74 = vld [vmem:[%s1 + $0xd8] sm:$0xf]
    %v75 = vld [vmem:[%s1 + $0xdc] sm:$0xf]
    %v76 = vld [vmem:[%s1 + $0xe0] sm:$0xf]
    %v77 = vld [vmem:[%s1 + $0xe4] sm:$0xf]
    %v78 = vld [vmem:[%s1 + $0xe8] sm:$0xf]
    %v79 = vld [vmem:[%s1 + $0xec] sm:$0xf]
    %v80 = vld [vmem:[%s1 + $0xf0] sm:$0xf]
    %v81 = vld [vmem:[%s1 + $0xf4] sm:$0xf]
    %v82 = vld [vmem:[%s1 + $0xf8] sm:$0xf]
    %v83 = vld [vmem:[%s1 + $0xfc] sm:$0xf]
    %v84 = vld [vmem:[%s1 + $0x100] sm:$0xf]
    %v85 = vld [vmem:[%s1 + $0x104] sm:$0xf]
    %v86 = vld [vmem:[%s1 + $0x108] sm:$0xf]
    %v87 = vld [vmem:[%s1 + $0x10c] sm:$0xf]
    %v88 = vld [vmem:[%s1 + $0x110] sm:$0xf]
    %v89 = vld [vmem:[%s1 + $0x114] sm:$0xf]
    %v90 = vld [vmem:[%s1 + $0x118] sm:$0xf]
    %v91 = vld [vmem:[%s1 + $0x11c] sm:$0xf]
    %v92 = vld [vmem:[%s1 + $0x120] sm:$0xf]
    %v93 = vld [vmem:[%s1 + $0x124] sm:$0xf]
    %v94 = vld [vmem:[%s1 + $0x128] sm:$0xf]
    %v95 = vld [vmem:[%s1 + $0x12c] sm:$0xf]
    %v96 = vld [vmem:[%s1 + $0x130] sm:$0xf]
    %v97 = vld [vmem:[%s1 + $0x134] sm:$0xf]
    %v98 = vld [vmem:[%s1 + $0x138] sm:$0xf]
    %v99 = vld [vmem:[%s1 + $0x13c] sm:$0xf]
    %v100 = vld [vmem:[%s1 + $0x140] sm:$0xf]
    %v101 = vld [vmem:[%s1 + $0x144] sm:$0xf]
    %v102 = vld [vmem:[%s1 + $0x148] sm:$0xf]
    %v103 = vld [vmem:[%s1 + $0x14c] sm:$0xf]
    %v104 = vld [vmem:[%s1 + $0x150] sm:$0xf]
    %v105 = vld [vmem:[%s1 + $0x154] sm:$0xf]
    %v106 = vld [vmem:[%s1 + $0x158] sm:$0xf]
    %v107 = vld [vmem:[%s1 + $0x15c] sm:$0xf]
    %v108 = vld [vmem:[%s1 + $0x160] sm:$0xf]
    %v109 = vld [vmem:[%s1 + $0x164] sm:$0xf]
    %v110 = vld [vmem:[%s1 + $0x168] sm:$0xf]
    %v111 = vld [vmem:[%s1 + $0x16c] sm:$0xf]
    %v112 = vld [vmem:[%s1 + $0x170] sm:$0xf]
    %v113 = vld [vmem:[%s1 + $0x174] sm:$0xf]
    %v114 = vld [vmem:[%s1 + $0x178] sm:$0xf]
    %v115 = vld [vmem:[%s1 + $0x17c] sm:$0xf]
    %v116 = vld [vmem:[%s1 + $0x180] sm:$0xf]
    %v117 = vld [vmem:[%s1 + $0x184] sm:$0xf]
    %v118 = vld [vmem:[%s1 + $0x188] sm:$0xf]
    %v119 = vld [vmem:[%s1 + $0x18c] sm:$0xf]
    %v120 = vld [vmem:[%s1 + $0x190] sm:$0xf]
    %v121 = vld [vmem:[%s1 + $0x194] sm:$0xf]
    %v122 = vld [vmem:[%s1 + $0x198] sm:$0xf]
    %v123 = vld [vmem:[%s1 + $0x19c] sm:$0xf]
    %v124 = vld [vmem:[%s1 + $0x1a0] sm:$0xf]
    %v125 = vld [vmem:[%s1 + $0x1a4] sm:$0xf]
    %v126 = vld [vmem:[%s1 + $0x1a8] sm:$0xf]
    %v127 = vld [vmem:[%s1 + $0x1ac] sm:$0xf]
    %v128 = vld [vmem:[%s1 + $0x1b0] sm:$0xf]
    %v129 = vld [vmem:[%s1 + $0x1b4] sm:$0xf]
    %v130 = vld [vmem:[%s1 + $0x1b8] sm:$0xf]
    %v131 = vld [vmem:[%s1 + $0x1bc] sm:$0xf]
    %v132 = vld [vmem:[%s1 + $0x1c0] sm:$0xf]
    %v133 = vld [vmem:[%s1 + $0x1c4] sm:$0xf]
    %v134 = vld [vmem:[%s1 + $0x1c8] sm:$0xf]
    %v135 = vld [vmem:[%s1 + $0x1cc] sm:$0xf]
    %v136 = vld [vmem:[%s1 + $0x1d0] sm:$0xf]
    %v137 = vld [vmem:[%s1 + $0x1d4] sm:$0xf]
    %v138 = vld [vmem:[%s1 + $0x1d8] sm:$0xf]
    %v139 = vld [vmem:[%s1 + $0x1dc] sm:$0xf]
    %v140 = vld [vmem:[%s1 + $0x1e0] sm:$0xf]
    %v141 = vld [vmem:[%s1 + $0x1e4] sm:$0xf]
    %v142 = vld [vmem:[%s1 + $0x1e8] sm:$0xf]
    %v143 = vld [vmem:[%s1 + $0x1ec] sm:$0xf]
    %v144 = vld [vmem:[%s1 + $0x1f0] sm:$0xf]
    %v145 = vld [vmem:[%s1 + $0x1f4] sm:$0xf]
    %v146 = vld [vmem:[%s1 + $0x1f8] sm:$0xf]
    %v147 = vld [vmem:[%s1 + $0x1fc] sm:$0xf]
    %v148 = vld [vmem:[%s1 + $0x200] sm:$0xf]
    %v149 = vld [vmem:[%s1 + $0x204] sm:$0xf]
    %v150 = vld [vmem:[%s1 + $0x208] sm:$0xf]
    %v151 = vld [vmem:[%s1 + $0x20c] sm:$0xf]
    %v152 = vld [vmem:[%s1 + $0x210] sm:$0xf]
    %v153 = vld [vmem:[%s1 + $0x214] sm:$0xf]
    %v154 = vld [vmem:[%s1 + $0x218] sm:$0xf]
    %v155 = vld [vmem:[%s1 + $0x21c] sm:$0xf]
    %v156 = vld [vmem:[%s1 + $0x220] sm:$0xf]
    %v157 = vld [vmem:[%s1 + $0x224] sm:$0xf]
    %v158 = vld [vmem:[%s1 + $0x228] sm:$0xf]
    %v159 = vld [vmem:[%s1 + $0x22c] sm:$0xf]
    %v160 = vld [vmem:[%s1 + $0x230] sm:$0xf]
    %v161 = vld [vmem:[%s1 + $0x234] sm:$0xf]
    %v162 = vld [vmem:[%s1 + $0x238] sm:$0xf]
    %v163 = vld [vmem:[%s1 + $0x23c] sm:$0xf]
    %v164 = vld [vmem:[%s1 + $0x240] sm:$0xf]
    %v165 = vld [vmem:[%s1 + $0x244] sm:$0xf]
    %v166 = vld [vmem:[%s1 + $0x248] sm:$0xf]
    %v167 = vld [vmem:[%s1 + $0x24c] sm:$0xf]
    %v168 = vld [vmem:[%s1 + $0x250] sm:$0xf]
    %v169 = vld [vmem:[%s1 + $0x254] sm:$0xf]
    %v170 = vld [vmem:[%s1 + $0x258] sm:$0xf]
    %v171 = vld [vmem:[%s1 + $0x25c] sm:$0xf]
    %v172 = vld [vmem:[%s1 + $0x260] sm:$0xf]
    %v173 = vld [vmem:[%s1 + $0x264] sm:$0xf]
    %v174 = vld [vmem:[%s1 + $0x268] sm:$0xf]
    %v175 = vld [vmem:[%s1 + $0x26c] sm:$0xf]
    %v176 = vld [vmem:[%s1 + $0x270] sm:$0xf]
    %v177 = vld [vmem:[%s1 + $0x274] sm:$0xf]
    %v178 = vld [vmem:[%s1 + $0x278] sm:$0xf]
    %v179 = vld [vmem:[%s1 + $0x27c] sm:$0xf]
    %v180 = vld [vmem:[%s1 + $0x280] sm:$0xf]
    %v181 = vld [vmem:[%s1 + $0x284] sm:$0xf]
    %v182 = vld [vmem:[%s1 + $0x288] sm:$0xf]
    %v183 = vld [vmem:[%s1 + $0x28c] sm:$0xf]
    %v184 = vld [vmem:[%s1 + $0x290] sm:$0xf]
    %v185 = vld [vmem:[%s1 + $0x294] sm:$0xf]
    %v186 = vld [vmem:[%s1 + $0x298] sm:$0xf]
    %v187 = vld [vmem:[%s1 + $0x29c] sm:$0xf]
    %v188 = vld [vmem:[%s1 + $0x2a0] sm:$0xf]
    %v189 = vld [vmem:[%s1 + $0x2a4] sm:$0xf]
    %v190 = vld [vmem:[%s1 + $0x2a8] sm:$0xf]
    %v191 = vld [vmem:[%s1 + $0x2ac] sm:$0xf]
    %v192 = vld [vmem:[%s1 + $0x2b0] sm:$0xf]
    %v193 = vld [vmem:[%s1 + $0x2b4] sm:$0xf]
    %v194 = vld [vmem:[%s1 + $0x2b8] sm:$0xf]
    %v195 = vld [vmem:[%s1 + $0x2bc] sm:$0xf]
    %v196 = vld [vmem:[%s1 + $0x2c0] sm:$0xf]
    %v197 = vld [vmem:[%s1 + $0x2c4] sm:$0xf]
    %v198 = vld [vmem:[%s1 + $0x2c8] sm:$0xf]
    %v199 = vld [vmem:[%s1 + $0x2cc] sm:$0xf]
    %v200 = vld [vmem:[%s1 + $0x2d0] sm:$0xf]
    %v201 = vld [vmem:[%s1 + $0x2d4] sm:$0xf]
    %v202 = vld [vmem:[%s1 + $0x2d8] sm:$0xf]
    %v203 = vld [vmem:[%s1 + $0x2dc] sm:$0xf]
    %v204 = vld [vmem:[%s1 + $0x2e0] sm:$0xf]
    %v205 = vld [vmem:[%s1 + $0x2e4] sm:$0xf]
    %v206 = vld [vmem:[%s1 + $0x2e8] sm:$0xf]
    %v207 = vld [vmem:[%s1 + $0x2ec] sm:$0xf]
    %v208 = vld [vmem:[%s1 + $0x2f0] sm:$0xf]
    %v209 = vld [vmem:[%s1 + $0x2f4] sm:$0xf]
    %v210 = vld [vmem:[%s1 + $0x2f8] sm:$0xf]
    %v211 = vld [vmem:[%s1 + $0x2fc] sm:$0xf]
    %v212 = vld [vmem:[%s1 + $0x300] sm:$0xf]
    %v213 = vld [vmem:[%s1 + $0x304] sm:$0xf]
    %v214 = vld [vmem:[%s1 + $0x308] sm:$0xf]
    %v215 = vld [vmem:[%s1 + $0x30c] sm:$0xf]
    %v216 = vld [vmem:[%s1 + $0x310] sm:$0xf]
    %v217 = vld [vmem:[%s1 + $0x314] sm:$0xf]
    %v218 = vld [vmem:[%s1 + $0x318] sm:$0xf]
    %v219 = vld [vmem:[%s1 + $0x31c] sm:$0xf]
    %v220 = vld [vmem:[%s1 + $0x320] sm:$0xf]
    %v221 = vld [vmem:[%s1 + $0x324] sm:$0xf]
    %v222 = vld [vmem:[%s1 + $0x328] sm:$0xf]
    %v223 = vld [vmem:[%s1 + $0x32c] sm:$0xf]
    %v224 = vld [vmem:[%s1 + $0x330] sm:$0xf]
    %v225 = vld [vmem:[%s1 + $0x334] sm:$0xf]
    %v226 = vld [vmem:[%s1 + $0x338] sm:$0xf]
    %v227 = vld [vmem:[%s1 + $0x33c] sm:$0xf]
    %v228 = vld [vmem:[%s1 + $0x340] sm:$0xf]
    %v229 = vld [vmem:[%s1 + $0x344] sm:$0xf]
    %v230 = vld [vmem:[%s1 + $0x348] sm:$0xf]
    %v231 = vld [vmem:[%s1 + $0x34c] sm:$0xf]
    %v232 = vld [vmem:[%s1 + $0x350] sm:$0xf]
    %v233 = vld [vmem:[%s1 + $0x354] sm:$0xf]
    %v234 = vld [vmem:[%s1 + $0x358] sm:$0xf]
    %v235 = vld [vmem:[%s1 + $0x35c] sm:$0xf]
    %v236 = vld [vmem:[%s1 + $0x360] sm:$0xf]
    %v237 = vld [vmem:[%s1 + $0x364] sm:$0xf]
    %v238 = vld [vmem:[%s1 + $0x368] sm:$0xf]
    %v239 = vld [vmem:[%s1 + $0x36c] sm:$0xf]
    %v240 = vld [vmem:[%s1 + $0x370] sm:$0xf]
    %v241 = vld [vmem:[%s1 + $0x374] sm:$0xf]
    %v242 = vld [vmem:[%s1 + $0x378] sm:$0xf]
    %v243 = vld [vmem:[%s1 + $0x37c] sm:$0xf]
    %v244 = vld [vmem:[%s1 + $0x380] sm:$0xf]
    %v245 = vld [vmem:[%s1 + $0x384] sm:$0xf]
    %v246 = vld [vmem:[%s1 + $0x388] sm:$0xf]
    %v247 = vld [vmem:[%s1 + $0x38c] sm:$0xf]
    %v248 = vld [vmem:[%s1 + $0x390] sm:$0xf]
    %v249 = vld [vmem:[%s1 + $0x394] sm:$0xf]
    %v250 = vld [vmem:[%s1 + $0x398] sm:$0xf]
    %v251 = vld [vmem:[%s1 + $0x39c] sm:$0xf]
    %v252 = vld [vmem:[%s1 + $0x3a0] sm:$0xf]
    %v253 = vld [vmem:[%s1 + $0x3a4] sm:$0xf]
    %v254 = vld [vmem:[%s1 + $0x3a8] sm:$0xf]
    %v255 = vld [vmem:[%s1 + $0x3ac] sm:$0xf]
    %v256 = vld [vmem:[%s1 + $0x3b0] sm:$0xf]
    %v257 = vld [vmem:[%s1 + $0x3b4] sm:$0xf]
    %v258 = vld [vmem:[%s1 + $0x3b8] sm:$0xf]
    %v259 = vld [vmem:[%s1 + $0x3bc] sm:$0xf]
    %v260 = vld [vmem:[%s1 + $0x3c0] sm:$0xf]
    %v261 = vld [vmem:[%s1 + $0x3c4] sm:$0xf]
    %v262 = vld [vmem:[%s1 + $0x3c8] sm:$0xf]
    %v263 = vld [vmem:[%s1 + $0x3cc] sm:$0xf]
    %v264 = vld [vmem:[%s1 + $0x3d0] sm:$0xf]
    %v265 = vld [vmem:[%s1 + $0x3d4] sm:$0xf]
    %v266 = vld [vmem:[%s1 + $0x3d8] sm:$0xf]
    %v267 = vld [vmem:[%s1 + $0x3dc] sm:$0xf]
    %v268 = vld [vmem:[%s1 + $0x3e0] sm:$0xf]
    %v269 = vld [vmem:[%s1 + $0x3e4] sm:$0xf]
    %v270 = vld [vmem:[%s1 + $0x3e8] sm:$0xf]
    %v271 = vld [vmem:[%s1 + $0x3ec] sm:$0xf]
    %v272 = vld [vmem:[%s1 + $0x3f0] sm:$0xf]
    %v273 = vld [vmem:[%s1 + $0x3f4] sm:$0xf]
    %v274 = vld [vmem:[%s1 + $0x3f8] sm:$0xf]
    %v275 = vld [vmem:[%s1 + $0x3fc] sm:$0xf]
    %v276 = vld [vmem:[%s1 + $0x400] sm:$0xf]
    %v277 = vld [vmem:[%s1 + $0x404] sm:$0xf]
    %v278 = vld [vmem:[%s1 + $0x408] sm:$0xf]
    %v279 = vld [vmem:[%s1 + $0x40c] sm:$0xf]
    %v280 = vld [vmem:[%s1 + $0x410] sm:$0xf]
    %v281 = vld [vmem:[%s1 + $0x414] sm:$0xf]
    %v282 = vld [vmem:[%s1 + $0x418] sm:$0xf]
    %v283 = vld [vmem:[%s1 + $0x41c] sm:$0xf]
    %v284 = vld [vmem:[%s1 + $0x420] sm:$0xf]
    %v285 = vld [vmem:[%s1 + $0x424] sm:$0xf]
    %v286 = vld [vmem:[%s1 + $0x428] sm:$0xf]
    %v287 = vld [vmem:[%s1 + $0x42c] sm:$0xf]
    %v288 = vld [vmem:[%s1 + $0x430] sm:$0xf]
    %v289 = vld [vmem:[%s1 + $0x434] sm:$0xf]
    %v290 = vld [vmem:[%s1 + $0x438] sm:$0xf]
    %v291 = vld [vmem:[%s1 + $0x43c] sm:$0xf]
    %v292 = vld [vmem:[%s1 + $0x440] sm:$0xf]
    %v293 = vld [vmem:[%s1 + $0x444] sm:$0xf]
    %v294 = vld [vmem:[%s1 + $0x448] sm:$0xf]
    %v295 = vld [vmem:[%s1 + $0x44c] sm:$0xf]
    %v296 = vld [vmem:[%s1 + $0x450] sm:$0xf]
    %v297 = vld [vmem:[%s1 + $0x454] sm:$0xf]
    %v298 = vld [vmem:[%s1 + $0x458] sm:$0xf]
    %v299 = vld [vmem:[%s1 + $0x45c] sm:$0xf]
    %v300 = vld [vmem:[%s1 + $0x460] sm:$0xf]
    %v301 = vld [vmem:[%s1 + $0x464] sm:$0xf]
    %v302 = vld [vmem:[%s1 + $0x468] sm:$0xf]
    %v303 = vld [vmem:[%s1 + $0x46c] sm:$0xf]
    %v304 = vld [vmem:[%s1 + $0x470] sm:$0xf]
    %v305 = vld [vmem:[%s1 + $0x474] sm:$0xf]
    %v306 = vld [vmem:[%s1 + $0x478] sm:$0xf]
    %v307 = vld [vmem:[%s1 + $0x47c] sm:$0xf]
    %v308 = vld [vmem:[%s1 + $0x480] sm:$0xf]
    %v309 = vld [vmem:[%s1 + $0x484] sm:$0xf]
    %v310 = vld [vmem:[%s1 + $0x488] sm:$0xf]
    %v311 = vld [vmem:[%s1 + $0x48c] sm:$0xf]
    %v312 = vld [vmem:[%s1 + $0x490] sm:$0xf]
    %v313 = vld [vmem:[%s1 + $0x494] sm:$0xf]
    %v314 = vld [vmem:[%s1 + $0x498] sm:$0xf]
    %v315 = vld [vmem:[%s1 + $0x49c] sm:$0xf]
    %v316 = vld [vmem:[%s1 + $0x4a0] sm:$0xf]
    %v317 = vld [vmem:[%s1 + $0x4a4] sm:$0xf]
    %v318 = vld [vmem:[%s1 + $0x4a8] sm:$0xf]
    %v319 = vld [vmem:[%s1 + $0x4ac] sm:$0xf]
    %v320 = vld [vmem:[%s1 + $0x4b0] sm:$0xf]
    %v321 = vld [vmem:[%s1 + $0x4b4] sm:$0xf]
    %v322 = vld [vmem:[%s1 + $0x4b8] sm:$0xf]
    %v323 = vld [vmem:[%s1 + $0x4bc] sm:$0xf]
    %v324 = vld [vmem:[%s1 + $0x4c0] sm:$0xf]
    %v325 = vld [vmem:[%s1 + $0x4c4] sm:$0xf]
    %v326 = vld [vmem:[%s1 + $0x4c8] sm:$0xf]
    %v327 = vld [vmem:[%s1 + $0x4cc] sm:$0xf]
    %v328 = vld [vmem:[%s1 + $0x4d0] sm:$0xf]
    %v329 = vld [vmem:[%s1 + $0x4d4] sm:$0xf]
    %v330 = vld [vmem:[%s1 + $0x4d8] sm:$0xf]
    %v331 = vld [vmem:[%s1 + $0x4dc] sm:$0xf]
    %v332 = vld [vmem:[%s1 + $0x4e0] sm:$0xf]
    %v333 = vld [vmem:[%s1 + $0x4e4] sm:$0xf]
    %v334 = vld [vmem:[%s1 + $0x4e8] sm:$0xf]
    %v335 = vld [vmem:[%s1 + $0x4ec] sm:$0xf]
    %v336 = vld [vmem:[%s1 + $0x4f0] sm:$0xf]
    %v337 = vld [vmem:[%s1 + $0x4f4] sm:$0xf]
    %v338 = vld [vmem:[%s1 + $0x4f8] sm:$0xf]
    %v339 = vld [vmem:[%s1 + $0x4fc] sm:$0xf]
    %v340 = vld [vmem:[%s1 + $0x500] sm:$0xf]
    %v341 = vld [vmem:[%s1 + $0x504] sm:$0xf]
    %v342 = vld [vmem:[%s1 + $0x508] sm:$0xf]
    %v343 = vld [vmem:[%s1 + $0x50c] sm:$0xf]
    %v344 = vld [vmem:[%s1 + $0x510] sm:$0xf]
    %v345 = vld [vmem:[%s1 + $0x514] sm:$0xf]
    %v346 = vld [vmem:[%s1 + $0x518] sm:$0xf]
    %v347 = vld [vmem:[%s1 + $0x51c] sm:$0xf]
    %v348 = vld [vmem:[%s1 + $0x520] sm:$0xf]
    %v349 = vld [vmem:[%s1 + $0x524] sm:$0xf]
    %v350 = vld [vmem:[%s1 + $0x528] sm:$0xf]
    %v351 = vld [vmem:[%s1 + $0x52c] sm:$0xf]
    %v352 = vld [vmem:[%s1 + $0x530] sm:$0xf]
    %v353 = vld [vmem:[%s1 + $0x534] sm:$0xf]
    %v354 = vld [vmem:[%s1 + $0x538] sm:$0xf]
    %v355 = vld [vmem:[%s1 + $0x53c] sm:$0xf]
    %v356 = vld [vmem:[%s1 + $0x540] sm:$0xf]
    %v357 = vld [vmem:[%s1 + $0x544] sm:$0xf]
    %v358 = vld [vmem:[%s1 + $0x548] sm:$0xf]
    %v359 = vld [vmem:[%s1 + $0x54c] sm:$0xf]
    %v360 = vld [vmem:[%s1 + $0x550] sm:$0xf]
    %v361 = vld [vmem:[%s1 + $0x554] sm:$0xf]
    %v362 = vld [vmem:[%s1 + $0x558] sm:$0xf]
    %v363 = vld [vmem:[%s1 + $0x55c] sm:$0xf]
    %v364 = vld [vmem:[%s1 + $0x560] sm:$0xf]
    %v365 = vld [vmem:[%s1 + $0x564] sm:$0xf]
    %v366 = vld [vmem:[%s1 + $0x568] sm:$0xf]
    %v367 = vld [vmem:[%s1 + $0x56c] sm:$0xf]
    %v368 = vld [vmem:[%s1 + $0x570] sm:$0xf]
    %v369 = vld [vmem:[%s1 + $0x574] sm:$0xf]
    %v370 = vld [vmem:[%s1 + $0x578] sm:$0xf]
    %v371 = vld [vmem:[%s1 + $0x57c] sm:$0xf]
    %v372 = vld [vmem:[%s1 + $0x580] sm:$0xf]
    %v373 = vld [vmem:[%s1 + $0x584] sm:$0xf]
    %v374 = vld [vmem:[%s1 + $0x588] sm:$0xf]
    %v375 = vld [vmem:[%s1 + $0x58c] sm:$0xf]
    %v376 = vld [vmem:[%s1 + $0x590] sm:$0xf]
    %v377 = vld [vmem:[%s1 + $0x594] sm:$0xf]
    %v378 = vld [vmem:[%s1 + $0x598] sm:$0xf]
    %v379 = vld [vmem:[%s1 + $0x59c] sm:$0xf]
    %v380 = vld [vmem:[%s1 + $0x5a0] sm:$0xf]
    %v381 = vld [vmem:[%s1 + $0x5a4] sm:$0xf]
    %v382 = vld [vmem:[%s1 + $0x5a8] sm:$0xf]
    %v383 = vld [vmem:[%s1 + $0x5ac] sm:$0xf]
    %v384 = vld [vmem:[%s1 + $0x5b0] sm:$0xf]
    %v385 = vld [vmem:[%s1 + $0x5b4] sm:$0xf]
    %v386 = vld [vmem:[%s1 + $0x5b8] sm:$0xf]
    %v387 = vld [vmem:[%s1 + $0x5bc] sm:$0xf]
    %v388 = vld [vmem:[%s1 + $0x5c0] sm:$0xf]
    %v389 = vld [vmem:[%s1 + $0x5c4] sm:$0xf]
    %v390 = vld [vmem:[%s1 + $0x5c8] sm:$0xf]
    %v391 = vld [vmem:[%s1 + $0x5cc] sm:$0xf]
    %v392 = vld [vmem:[%s1 + $0x5d0] sm:$0xf]
    %v393 = vld [vmem:[%s1 + $0x5d4] sm:$0xf]
    %v394 = vld [vmem:[%s1 + $0x5d8] sm:$0xf]
    %v395 = vld [vmem:[%s1 + $0x5dc] sm:$0xf]
    %v396 = vld [vmem:[%s1 + $0x5e0] sm:$0xf]
    %v397 = vld [vmem:[%s1 + $0x5e4] sm:$0xf]
    %v398 = vld [vmem:[%s1 + $0x5e8] sm:$0xf]
    %v399 = vld [vmem:[%s1 + $0x5ec] sm:$0xf]
    %v400 = vld [vmem:[%s1 + $0x5f0] sm:$0xf]
    %v401 = vld [vmem:[%s1 + $0x5f4] sm:$0xf]
    %v402 = vld [vmem:[%s1 + $0x5f8] sm:$0xf]
    %v403 = vld [vmem:[%s1 + $0x5fc] sm:$0xf]
    %v404 = vld [vmem:[%s1 + $0x600] sm:$0xf]
    %v405 = vld [vmem:[%s1 + $0x604] sm:$0xf]
    %v406 = vld [vmem:[%s1 + $0x608] sm:$0xf]
    %v407 = vld [vmem:[%s1 + $0x60c] sm:$0xf]
    %v408 = vld [vmem:[%s1 + $0x610] sm:$0xf]
    %v409 = vld [vmem:[%s1 + $0x614] sm:$0xf]
    %v410 = vld [vmem:[%s1 + $0x618] sm:$0xf]
    %v411 = vld [vmem:[%s1 + $0x61c] sm:$0xf]
    %v412 = vld [vmem:[%s2] sm:$0x1]
    %v414 = vlaneseq
    %v415 = vshrl.u32 %v414, 7
    %v416 = vsub.s32 0, %v415
    %v417 = vrot.slane %v412, %v416
    %v423 = vcombine.high %v16, %v16
    %v425 = vunpack.c.l.s4 1966171168
    %v426 = vunpack.c.0.s8 %v425
    %v427 = vlaneseq
    %v428 = vshrl.u32 %v427, 7
    %v429 = vsub.s32 %v426, %v428
    %v430 = vrot.slane %v16, %v429
    %v432 = vunpack.c.l.s4 1966171168
    %v433 = vunpack.c.0.s8 %v432
    %v434 = vlaneseq
    %v435 = vshrl.u32 %v434, 7
    %v436 = vsub.s32 %v433, %v435
    %v437 = vrot.slane %v423, %v436
    %v438 = vcombine.high %v430, %v430
    %v439 = vcombine.high %v437, %v437
    %v441 = vunpack.c.l.s4 1966171168
    %v442 = vunpack.c.0.s8 %v441
    %v443 = vlaneseq
    %v444 = vshrl.u32 %v443, 7
    %v445 = vsub.s32 %v442, %v444
    %v446 = vrot.slane %v430, %v445
    %v448 = vunpack.c.l.s4 1966171168
    %v449 = vunpack.c.0.s8 %v448
    %v450 = vlaneseq
    %v451 = vshrl.u32 %v450, 7
    %v452 = vsub.s32 %v449, %v451
    %v453 = vrot.slane %v437, %v452
    %v455 = vunpack.c.l.s4 1966171168
    %v456 = vunpack.c.0.s8 %v455
    %v457 = vlaneseq
    %v458 = vshrl.u32 %v457, 7
    %v459 = vsub.s32 %v456, %v458
    %v460 = vrot.slane %v438, %v459
    %v462 = vunpack.c.l.s4 1966171168
    %v463 = vunpack.c.0.s8 %v462
    %v464 = vlaneseq
    %v465 = vshrl.u32 %v464, 7
    %v466 = vsub.s32 %v463, %v465
    %v467 = vrot.slane %v439, %v466
    %v468 = vcombine.high %v446, %v446
    %v469 = vcombine.high %v453, %v453
    %v470 = vcombine.high %v460, %v460
    %v471 = vcombine.high %v467, %v467
    %v472 = vcombine.high %v17, %v17
    %v474 = vunpack.c.l.s4 1966171168
    %v475 = vunpack.c.0.s8 %v474
    %v476 = vlaneseq
    %v477 = vshrl.u32 %v476, 7
    %v478 = vsub.s32 %v475, %v477
    %v479 = vrot.slane %v17, %v478
    %v481 = vunpack.c.l.s4 1966171168
    %v482 = vunpack.c.0.s8 %v481
    %v483 = vlaneseq
    %v484 = vshrl.u32 %v483, 7
    %v485 = vsub.s32 %v482, %v484
    %v486 = vrot.slane %v472, %v485
    %v487 = vcombine.high %v479, %v479
    %v488 = vcombine.high %v486, %v486
    %v490 = vunpack.c.l.s4 1966171168
    %v491 = vunpack.c.0.s8 %v490
    %v492 = vlaneseq
    %v493 = vshrl.u32 %v492, 7
    %v494 = vsub.s32 %v491, %v493
    %v495 = vrot.slane %v479, %v494
    %v497 = vunpack.c.l.s4 1966171168
    %v498 = vunpack.c.0.s8 %v497
    %v499 = vlaneseq
    %v500 = vshrl.u32 %v499, 7
    %v501 = vsub.s32 %v498, %v500
    %v502 = vrot.slane %v486, %v501
    %v504 = vunpack.c.l.s4 1966171168
    %v505 = vunpack.c.0.s8 %v504
    %v506 = vlaneseq
    %v507 = vshrl.u32 %v506, 7
    %v508 = vsub.s32 %v505, %v507
    %v509 = vrot.slane %v487, %v508
    %v511 = vunpack.c.l.s4 1966171168
    %v512 = vunpack.c.0.s8 %v511
    %v513 = vlaneseq
    %v514 = vshrl.u32 %v513, 7
    %v515 = vsub.s32 %v512, %v514
    %v516 = vrot.slane %v488, %v515
    %v517 = vcombine.high %v495, %v495
    %v518 = vcombine.high %v502, %v502
    %v519 = vcombine.high %v509, %v509
    %v520 = vcombine.high %v516, %v516
    %v521 = vcombine.high %v18, %v18
    %v523 = vunpack.c.l.s4 1966171168
    %v524 = vunpack.c.0.s8 %v523
    %v525 = vlaneseq
    %v526 = vshrl.u32 %v525, 7
    %v527 = vsub.s32 %v524, %v526
    %v528 = vrot.slane %v18, %v527
    %v530 = vunpack.c.l.s4 1966171168
    %v531 = vunpack.c.0.s8 %v530
    %v532 = vlaneseq
    %v533 = vshrl.u32 %v532, 7
    %v534 = vsub.s32 %v531, %v533
    %v535 = vrot.slane %v521, %v534
    %v536 = vcombine.high %v528, %v528
    %v537 = vcombine.high %v535, %v535
    %v539 = vunpack.c.l.s4 1966171168
    %v540 = vunpack.c.0.s8 %v539
    %v541 = vlaneseq
    %v542 = vshrl.u32 %v541, 7
    %v543 = vsub.s32 %v540, %v542
    %v544 = vrot.slane %v528, %v543
    %v546 = vunpack.c.l.s4 1966171168
    %v547 = vunpack.c.0.s8 %v546
    %v548 = vlaneseq
    %v549 = vshrl.u32 %v548, 7
    %v550 = vsub.s32 %v547, %v549
    %v551 = vrot.slane %v535, %v550
    %v553 = vunpack.c.l.s4 1966171168
    %v554 = vunpack.c.0.s8 %v553
    %v555 = vlaneseq
    %v556 = vshrl.u32 %v555, 7
    %v557 = vsub.s32 %v554, %v556
    %v558 = vrot.slane %v536, %v557
    %v560 = vunpack.c.l.s4 1966171168
    %v561 = vunpack.c.0.s8 %v560
    %v562 = vlaneseq
    %v563 = vshrl.u32 %v562, 7
    %v564 = vsub.s32 %v561, %v563
    %v565 = vrot.slane %v537, %v564
    %v566 = vcombine.high %v544, %v544
    %v567 = vcombine.high %v551, %v551
    %v568 = vcombine.high %v558, %v558
    %v569 = vcombine.high %v565, %v565
    %v571 = vunpack.c.l.s4 1966171168
    %v572 = vunpack.c.0.s8 %v571
    %v573 = vlaneseq
    %v574 = vshrl.u32 %v573, 7
    %v575 = vsub.s32 %v572, %v574
    %v576 = vrot.slane %v19, %v575
    %v578 = vunpack.c.l.s4 1966171168
    %v579 = vunpack.c.0.s8 %v578
    %v580 = vlaneseq
    %v581 = vshrl.u32 %v580, 7
    %v582 = vsub.s32 %v579, %v581
    %v583 = vrot.slane %v576, %v582
    %v1000 = vunpack.c.l.b16 %v20
    %v1001 = vunpack.c.l.b16 %v21
    %v1002 = vunpack.c.l.b16 %v22
    %v1003 = vunpack.c.l.b16 %v23
    %v1004 = vunpack.c.l.b16 %v24
    %v1005 = vunpack.c.l.b16 %v25
    %v1006 = vunpack.c.l.b16 %v26
    %v1007 = vunpack.c.l.b16 %v27
    %v1008 = vunpack.c.l.b16 %v28
    %v1009 = vunpack.c.l.b16 %v29
    %v1010 = vunpack.c.l.b16 %v30
    %v1011 = vunpack.c.l.b16 %v31
    %v1012 = vunpack.c.l.b16 %v32
    %v1013 = vunpack.c.l.b16 %v33
    %v1014 = vunpack.c.l.b16 %v34
    %v1015 = vunpack.c.l.b16 %v35
    %v1016 = vunpack.c.l.b16 %v36
    %v1017 = vunpack.c.l.b16 %v37
    %v1018 = vunpack.c.l.b16 %v38
    %v1019 = vunpack.c.l.b16 %v39
    %v1020 = vunpack.c.l.b16 %v40
    %v1021 = vunpack.c.l.b16 %v41
    %v1022 = vunpack.c.l.b16 %v42
    %v1023 = vunpack.c.l.b16 %v43
    %v1024 = vunpack.c.l.b16 %v44
    %v1025 = vunpack.c.l.b16 %v45
    %v1026 = vunpack.c.l.b16 %v46
    %v1027 = vunpack.c.l.b16 %v47
    %v1028 = vunpack.c.l.b16 %v48
    %v1029 = vunpack.c.l.b16 %v49
    %v1030 = vunpack.c.l.b16 %v50
    %v1031 = vunpack.c.l.b16 %v51
    %v1032 = vunpack.c.l.b16 %v52
    %v1033 = vunpack.c.l.b16 %v53
    %v1034 = vunpack.c.l.b16 %v54
    %v1035 = vunpack.c.l.b16 %v55
    %v1036 = vunpack.c.l.b16 %v56
    %v1037 = vunpack.c.l.b16 %v57
    %v1038 = vunpack.c.l.b16 %v58
    %v1039 = vunpack.c.l.b16 %v59
    %v1040 = vunpack.c.l.b16 %v60
    %v1041 = vunpack.c.l.b16 %v61
    %v1042 = vunpack.c.l.b16 %v62
    %v1043 = vunpack.c.l.b16 %v63
    %v1044 = vunpack.c.l.b16 %v64
    %v1045 = vunpack.c.l.b16 %v65
    %v1046 = vunpack.c.l.b16 %v66
    %v1047 = vunpack.c.l.b16 %v67
    %v1048 = vunpack.c.l.b16 %v68
    %v1049 = vunpack.c.l.b16 %v69
    %v1050 = vunpack.c.l.b16 %v70
    %v1051 = vunpack.c.l.b16 %v71
    %v1052 = vunpack.c.l.b16 %v72
    %v1053 = vunpack.c.l.b16 %v73
    %v1054 = vunpack.c.l.b16 %v74
    %v1055 = vunpack.c.l.b16 %v75
    %v1056 = vunpack.c.l.b16 %v76
    %v1057 = vunpack.c.l.b16 %v77
    %v1058 = vunpack.c.l.b16 %v78
    %v1059 = vunpack.c.l.b16 %v79
    %v1060 = vunpack.c.l.b16 %v80
    %v1061 = vunpack.c.l.b16 %v81
    %v1062 = vunpack.c.l.b16 %v82
    %v1063 = vunpack.c.l.b16 %v83
    %v1064 = vunpack.c.l.b16 %v84
    %v1065 = vunpack.c.l.b16 %v85
    %v1066 = vunpack.c.l.b16 %v86
    %v1067 = vunpack.c.l.b16 %v87
    %v1068 = vunpack.c.l.b16 %v88
    %v1069 = vunpack.c.l.b16 %v89
    %v1070 = vunpack.c.l.b16 %v90
    %v1071 = vunpack.c.l.b16 %v91
    %v1072 = vunpack.c.l.b16 %v92
    %v1073 = vunpack.c.l.b16 %v93
    %v1074 = vunpack.c.l.b16 %v94
    %v1075 = vunpack.c.l.b16 %v95
    %v1076 = vunpack.c.l.b16 %v96
    %v1077 = vunpack.c.l.b16 %v97
    %v1078 = vunpack.c.l.b16 %v98
    %v1079 = vunpack.c.l.b16 %v99
    %v1080 = vunpack.c.l.b16 %v100
    %v1081 = vunpack.c.l.b16 %v101
    %v1082 = vunpack.c.l.b16 %v102
    %v1083 = vunpack.c.l.b16 %v103
    %v1084 = vunpack.c.l.b16 %v104
    %v1085 = vunpack.c.l.b16 %v105
    %v1086 = vunpack.c.l.b16 %v106
    %v1087 = vunpack.c.l.b16 %v107
    %v1088 = vunpack.c.l.b16 %v108
    %v1089 = vunpack.c.l.b16 %v109
    %v1090 = vunpack.c.l.b16 %v110
    %v1091 = vunpack.c.l.b16 %v111
    %v1092 = vunpack.c.l.b16 %v112
    %v1093 = vunpack.c.l.b16 %v113
    %v1094 = vunpack.c.l.b16 %v114
    %v1095 = vunpack.c.l.b16 %v115
    %v1096 = vunpack.c.l.b16 %v116
    %v1097 = vunpack.c.l.b16 %v117
    %v1098 = vunpack.c.l.b16 %v118
    %v1099 = vunpack.c.l.b16 %v119
    %v1100 = vunpack.c.l.b16 %v120
    %v1101 = vunpack.c.l.b16 %v121
    %v1102 = vunpack.c.l.b16 %v122
    %v1103 = vunpack.c.l.b16 %v123
    %v1104 = vunpack.c.l.b16 %v124
    %v1105 = vunpack.c.l.b16 %v125
    %v1106 = vunpack.c.l.b16 %v126
    %v1107 = vunpack.c.l.b16 %v127
    %v1108 = vunpack.c.l.b16 %v128
    %v1109 = vunpack.c.l.b16 %v129
    %v1110 = vunpack.c.l.b16 %v130
    %v1111 = vunpack.c.l.b16 %v131
    %v1112 = vunpack.c.l.b16 %v132
    %v1113 = vunpack.c.l.b16 %v133
    %v1114 = vunpack.c.l.b16 %v134
    %v1115 = vunpack.c.l.b16 %v135
    %v1116 = vunpack.c.l.b16 %v136
    %v1117 = vunpack.c.l.b16 %v137
    %v1118 = vunpack.c.l.b16 %v138
    %v1119 = vunpack.c.l.b16 %v139
    %v1120 = vunpack.c.l.b16 %v140
    %v1121 = vunpack.c.l.b16 %v141
    %v1122 = vunpack.c.l.b16 %v142
    %v1123 = vunpack.c.l.b16 %v143
    %v1124 = vunpack.c.l.b16 %v144
    %v1125 = vunpack.c.l.b16 %v145
    %v1126 = vunpack.c.l.b16 %v146
    %v1127 = vunpack.c.l.b16 %v147
    %v1128 = vunpack.c.l.b16 %v148
    %v1129 = vunpack.c.l.b16 %v149
    %v1130 = vunpack.c.l.b16 %v150
    %v1131 = vunpack.c.l.b16 %v151
    %v1132 = vunpack.c.l.b16 %v152
    %v1133 = vunpack.c.l.b16 %v153
    %v1134 = vunpack.c.l.b16 %v154
    %v1135 = vunpack.c.l.b16 %v155
    %v1136 = vunpack.c.l.b16 %v156
    %v1137 = vunpack.c.l.b16 %v157
    %v1138 = vunpack.c.l.b16 %v158
    %v1139 = vunpack.c.l.b16 %v159
    %v1140 = vunpack.c.l.b16 %v160
    %v1141 = vunpack.c.l.b16 %v161
    %v1142 = vunpack.c.l.b16 %v162
    %v1143 = vunpack.c.l.b16 %v163
    %v1144 = vunpack.c.l.b16 %v164
    %v1145 = vunpack.c.l.b16 %v165
    %v1146 = vunpack.c.l.b16 %v166
    %v1147 = vunpack.c.l.b16 %v167
    %v1148 = vunpack.c.l.b16 %v168
    %v1149 = vunpack.c.l.b16 %v169
    %v1150 = vunpack.c.l.b16 %v170
    %v1151 = vunpack.c.l.b16 %v171
    %v1152 = vunpack.c.l.b16 %v172
    %v1153 = vunpack.c.l.b16 %v173
    %v1154 = vunpack.c.l.b16 %v174
    %v1155 = vunpack.c.l.b16 %v175
    %v1156 = vunpack.c.l.b16 %v176
    %v1157 = vunpack.c.l.b16 %v177
    %v1158 = vunpack.c.l.b16 %v178
    %v1159 = vunpack.c.l.b16 %v179
    %v1160 = vunpack.c.l.b16 %v180
    %v1161 = vunpack.c.l.b16 %v181
    %v1162 = vunpack.c.l.b16 %v182
    %v1163 = vunpack.c.l.b16 %v183
    %v1164 = vunpack.c.l.b16 %v184
    %v1165 = vunpack.c.l.b16 %v185
    %v1166 = vunpack.c.l.b16 %v186
    %v1167 = vunpack.c.l.b16 %v187
    %v1168 = vunpack.c.l.b16 %v188
    %v1169 = vunpack.c.l.b16 %v189
    %v1170 = vunpack.c.l.b16 %v190
    %v1171 = vunpack.c.l.b16 %v191
    %v1172 = vunpack.c.l.b16 %v192
    %v1173 = vunpack.c.l.b16 %v193
    %v1174 = vunpack.c.l.b16 %v194
    %v1175 = vunpack.c.l.b16 %v195
    %v1176 = vunpack.c.l.b16 %v196
    %v1177 = vunpack.c.l.b16 %v197
    %v1178 = vunpack.c.l.b16 %v198
    %v1179 = vunpack.c.l.b16 %v199
    %v1180 = vunpack.c.l.b16 %v200
    %v1181 = vunpack.c.l.b16 %v201
    %v1182 = vunpack.c.l.b16 %v202
    %v1183 = vunpack.c.l.b16 %v203
    %v1184 = vunpack.c.l.b16 %v204
    %v1185 = vunpack.c.l.b16 %v205
    %v1186 = vunpack.c.l.b16 %v206
    %v1187 = vunpack.c.l.b16 %v207
    %v1188 = vunpack.c.l.b16 %v208
    %v1189 = vunpack.c.l.b16 %v209
    %v1190 = vunpack.c.l.b16 %v210
    %v1191 = vunpack.c.l.b16 %v211
    %v1192 = vunpack.c.l.b16 %v212
    %v1193 = vunpack.c.l.b16 %v213
    %v1194 = vunpack.c.l.b16 %v214
    %v1195 = vunpack.c.l.b16 %v215
    %v1196 = vunpack.c.l.b16 %v216
    %v1197 = vunpack.c.l.b16 %v217
    %v1198 = vunpack.c.l.b16 %v218
    %v1199 = vunpack.c.l.b16 %v219
    %v1200 = vunpack.c.l.b16 %v220
    %v1201 = vunpack.c.l.b16 %v221
    %v1202 = vunpack.c.l.b16 %v222
    %v1203 = vunpack.c.l.b16 %v223
    %v1204 = vunpack.c.l.b16 %v224
    %v1205 = vunpack.c.l.b16 %v225
    %v1206 = vunpack.c.l.b16 %v226
    %v1207 = vunpack.c.l.b16 %v227
    %v1208 = vunpack.c.l.b16 %v228
    %v1209 = vunpack.c.l.b16 %v229
    %v1210 = vunpack.c.l.b16 %v230
    %v1211 = vunpack.c.l.b16 %v231
    %v1212 = vunpack.c.l.b16 %v232
    %v1213 = vunpack.c.l.b16 %v233
    %v1214 = vunpack.c.l.b16 %v234
    %v1215 = vunpack.c.l.b16 %v235
    %v1216 = vunpack.c.l.b16 %v236
    %v1217 = vunpack.c.l.b16 %v237
    %v1218 = vunpack.c.l.b16 %v238
    %v1219 = vunpack.c.l.b16 %v239
    %v1220 = vunpack.c.l.b16 %v240
    %v1221 = vunpack.c.l.b16 %v241
    %v1222 = vunpack.c.l.b16 %v242
    %v1223 = vunpack.c.l.b16 %v243
    %v1224 = vunpack.c.l.b16 %v244
    %v1225 = vunpack.c.l.b16 %v245
    %v1226 = vunpack.c.l.b16 %v246
    %v1227 = vunpack.c.l.b16 %v247
    %v1228 = vunpack.c.l.b16 %v248
    %v1229 = vunpack.c.l.b16 %v249
    %v1230 = vunpack.c.l.b16 %v250
    %v1231 = vunpack.c.l.b16 %v251
    %v1232 = vunpack.c.l.b16 %v252
    %v1233 = vunpack.c.l.b16 %v253
    %v1234 = vunpack.c.l.b16 %v254
    %v1235 = vunpack.c.l.b16 %v255
    %v1236 = vunpack.c.l.b16 %v256
    %v1237 = vunpack.c.l.b16 %v257
    %v1238 = vunpack.c.l.b16 %v258
    %v1239 = vunpack.c.l.b16 %v259
    %v1240 = vunpack.c.l.b16 %v260
    %v1241 = vunpack.c.l.b16 %v261
    %v1242 = vunpack.c.l.b16 %v262
    %v1243 = vunpack.c.l.b16 %v263
    %v1244 = vunpack.c.l.b16 %v264
    %v1245 = vunpack.c.l.b16 %v265
    %v1246 = vunpack.c.l.b16 %v266
    %v1247 = vunpack.c.l.b16 %v267
    %v1248 = vunpack.c.l.b16 %v268
    %v1249 = vunpack.c.l.b16 %v269
    %v1250 = vunpack.c.l.b16 %v270
    %v1251 = vunpack.c.l.b16 %v271
    %v1252 = vunpack.c.l.b16 %v272
    %v1253 = vunpack.c.l.b16 %v273
    %v1254 = vunpack.c.l.b16 %v274
    %v1255 = vunpack.c.l.b16 %v275
    %v1256 = vunpack.c.l.b16 %v276
    %v1257 = vunpack.c.l.b16 %v277
    %v1258 = vunpack.c.l.b16 %v278
    %v1259 = vunpack.c.l.b16 %v279
    %v1260 = vunpack.c.l.b16 %v280
    %v1261 = vunpack.c.l.b16 %v281
    %v1262 = vunpack.c.l.b16 %v282
    %v1263 = vunpack.c.l.b16 %v283
    %v1264 = vunpack.c.l.b16 %v284
    %v1265 = vunpack.c.l.b16 %v285
    %v1266 = vunpack.c.l.b16 %v286
    %v1267 = vunpack.c.l.b16 %v287
    %v1268 = vunpack.c.l.b16 %v288
    %v1269 = vunpack.c.l.b16 %v289
    %v1270 = vunpack.c.l.b16 %v290
    %v1271 = vunpack.c.l.b16 %v291
    %v1272 = vunpack.c.l.b16 %v292
    %v1273 = vunpack.c.l.b16 %v293
    %v1274 = vunpack.c.l.b16 %v294
    %v1275 = vunpack.c.l.b16 %v295
    %v1276 = vunpack.c.l.b16 %v296
    %v1277 = vunpack.c.l.b16 %v297
    %v1278 = vunpack.c.l.b16 %v298
    %v1279 = vunpack.c.l.b16 %v299
    %v1280 = vunpack.c.l.b16 %v300
    %v1281 = vunpack.c.l.b16 %v301
    %v1282 = vunpack.c.l.b16 %v302
    %v1283 = vunpack.c.l.b16 %v303
    %v1284 = vunpack.c.l.b16 %v304
    %v1285 = vunpack.c.l.b16 %v305
    %v1286 = vunpack.c.l.b16 %v306
    %v1287 = vunpack.c.l.b16 %v307
    %v1288 = vunpack.c.l.b16 %v308
    %v1289 = vunpack.c.l.b16 %v309
    %v1290 = vunpack.c.l.b16 %v310
    %v1291 = vunpack.c.l.b16 %v311
    %v1292 = vunpack.c.l.b16 %v312
    %v1293 = vunpack.c.l.b16 %v313
    %v1294 = vunpack.c.l.b16 %v314
    %v1295 = vunpack.c.l.b16 %v315
    %v1296 = vunpack.c.l.b16 %v316
    %v1297 = vunpack.c.l.b16 %v317
    %v1298 = vunpack.c.l.b16 %v318
    %v1299 = vunpack.c.l.b16 %v319
    %v1300 = vunpack.c.l.b16 %v320
    %v1301 = vunpack.c.l.b16 %v321
    %v1302 = vunpack.c.l.b16 %v322
    %v1303 = vunpack.c.l.b16 %v323
    %v1304 = vunpack.c.l.b16 %v324
    %v1305 = vunpack.c.l.b16 %v325
    %v1306 = vunpack.c.l.b16 %v326
    %v1307 = vunpack.c.l.b16 %v327
    %v1308 = vunpack.c.l.b16 %v328
    %v1309 = vunpack.c.l.b16 %v329
    %v1310 = vunpack.c.l.b16 %v330
    %v1311 = vunpack.c.l.b16 %v331
    %v1312 = vunpack.c.l.b16 %v332
    %v1313 = vunpack.c.l.b16 %v333
    %v1314 = vunpack.c.l.b16 %v334
    %v1315 = vunpack.c.l.b16 %v335
    %v1316 = vunpack.c.l.b16 %v336
    %v1317 = vunpack.c.l.b16 %v337
    %v1318 = vunpack.c.l.b16 %v338
    %v1319 = vunpack.c.l.b16 %v339
    %v1320 = vunpack.c.l.b16 %v340
    %v1321 = vunpack.c.l.b16 %v341
    %v1322 = vunpack.c.l.b16 %v342
    %v1323 = vunpack.c.l.b16 %v343
    %v1324 = vunpack.c.l.b16 %v344
    %v1325 = vunpack.c.l.b16 %v345
    %v1326 = vunpack.c.l.b16 %v346
    %v1327 = vunpack.c.l.b16 %v347
    %v1328 = vunpack.c.l.b16 %v348
    %v1329 = vunpack.c.l.b16 %v349
    %v1330 = vunpack.c.l.b16 %v350
    %v1331 = vunpack.c.l.b16 %v351
    %v1332 = vunpack.c.l.b16 %v352
    %v1333 = vunpack.c.l.b16 %v353
    %v1334 = vunpack.c.l.b16 %v354
    %v1335 = vunpack.c.l.b16 %v355
    %v1336 = vunpack.c.l.b16 %v356
    %v1337 = vunpack.c.l.b16 %v357
    %v1338 = vunpack.c.l.b16 %v358
    %v1339 = vunpack.c.l.b16 %v359
    %v1340 = vunpack.c.l.b16 %v360
    %v1341 = vunpack.c.l.b16 %v361
    %v1342 = vunpack.c.l.b16 %v362
    %v1343 = vunpack.c.l.b16 %v363
    %v1344 = vunpack.c.l.b16 %v364
    %v1345 = vunpack.c.l.b16 %v365
    %v1346 = vunpack.c.l.b16 %v366
    %v1347 = vunpack.c.l.b16 %v367
    %v1348 = vunpack.c.l.b16 %v368
    %v1349 = vunpack.c.l.b16 %v369
    %v1350 = vunpack.c.l.b16 %v370
    %v1351 = vunpack.c.l.b16 %v371
    %v1352 = vunpack.c.l.b16 %v372
    %v1353 = vunpack.c.l.b16 %v373
    %v1354 = vunpack.c.l.b16 %v374
    %v1355 = vunpack.c.l.b16 %v375
    %v1356 = vunpack.c.l.b16 %v376
    %v1357 = vunpack.c.l.b16 %v377
    %v1358 = vunpack.c.l.b16 %v378
    %v1359 = vunpack.c.l.b16 %v379
    %v1360 = vunpack.c.l.b16 %v380
    %v1361 = vunpack.c.l.b16 %v381
    %v1362 = vunpack.c.l.b16 %v382
    %v1363 = vunpack.c.l.b16 %v383
    %v1364 = vunpack.c.l.b16 %v384
    %v1365 = vunpack.c.l.b16 %v385
    %v1366 = vunpack.c.l.b16 %v386
    %v1367 = vunpack.c.l.b16 %v387
    %v1368 = vunpack.c.l.b16 %v388
    %v1369 = vunpack.c.l.b16 %v389
    %v1370 = vunpack.c.l.b16 %v390
    %v1371 = vunpack.c.l.b16 %v391
    %v1372 = vunpack.c.l.b16 %v392
    %v1373 = vunpack.c.l.b16 %v393
    %v1374 = vunpack.c.l.b16 %v394
    %v1375 = vunpack.c.l.b16 %v395
    %v1376 = vunpack.c.l.b16 %v396
    %v1377 = vunpack.c.l.b16 %v397
    %v1378 = vunpack.c.l.b16 %v398
    %v1379 = vunpack.c.l.b16 %v399
    %v1380 = vunpack.c.l.b16 %v400
    %v1381 = vunpack.c.l.b16 %v401
    %v1382 = vunpack.c.l.b16 %v402
    %v1383 = vunpack.c.l.b16 %v403
    %v1384 = vunpack.c.l.b16 %v404
    %v1385 = vunpack.c.l.b16 %v405
    %v1386 = vunpack.c.l.b16 %v406
    %v1387 = vunpack.c.l.b16 %v407
    %v1388 = vunpack.c.l.b16 %v408
    %v1389 = vunpack.c.l.b16 %v409
    %v1390 = vunpack.c.l.b16 %v410
    %v1391 = vunpack.c.l.b16 %v411
    %v1392 = vpack.c.b16 %v1001, %v1000
    %v1393 = vpack.c.b16 %v1003, %v1002
    %v1394 = vpack.c.b16 %v1005, %v1004
    %v1395 = vpack.c.b16 %v1007, %v1006
    %v1396 = vpack.c.b16 %v1009, %v1008
    %v1397 = vpack.c.b16 %v1011, %v1010
    %v1398 = vpack.c.b16 %v1013, %v1012
    %v1399 = vpack.c.b16 %v1015, %v1014
    %v1400 = vpack.c.b16 %v1017, %v1016
    %v1401 = vpack.c.b16 %v1019, %v1018
    %v1402 = vpack.c.b16 %v1021, %v1020
    %v1403 = vpack.c.b16 %v1023, %v1022
    %v1404 = vpack.c.b16 %v1025, %v1024
    %v1405 = vpack.c.b16 %v1027, %v1026
    %v1406 = vpack.c.b16 %v1029, %v1028
    %v1407 = vpack.c.b16 %v1031, %v1030
    %v1408 = vpack.c.b16 %v1033, %v1032
    %v1409 = vpack.c.b16 %v1035, %v1034
    %v1410 = vpack.c.b16 %v1037, %v1036
    %v1411 = vpack.c.b16 %v1039, %v1038
    %v1412 = vpack.c.b16 %v1041, %v1040
    %v1413 = vpack.c.b16 %v1043, %v1042
    %v1414 = vpack.c.b16 %v1045, %v1044
    %v1415 = vpack.c.b16 %v1047, %v1046
    %v1416 = vpack.c.b16 %v1049, %v1048
    %v1417 = vpack.c.b16 %v1051, %v1050
    %v1418 = vpack.c.b16 %v1053, %v1052
    %v1419 = vpack.c.b16 %v1055, %v1054
    %v1420 = vpack.c.b16 %v1057, %v1056
    %v1421 = vpack.c.b16 %v1059, %v1058
    %v1422 = vpack.c.b16 %v1061, %v1060
    %v1423 = vpack.c.b16 %v1063, %v1062
    %v1424 = vpack.c.b16 %v1065, %v1064
    %v1425 = vpack.c.b16 %v1067, %v1066
    %v1426 = vpack.c.b16 %v1069, %v1068
    %v1427 = vpack.c.b16 %v1071, %v1070
    %v1428 = vpack.c.b16 %v1073, %v1072
    %v1429 = vpack.c.b16 %v1075, %v1074
    %v1430 = vpack.c.b16 %v1077, %v1076
    %v1431 = vpack.c.b16 %v1079, %v1078
    %v1432 = vpack.c.b16 %v1081, %v1080
    %v1433 = vpack.c.b16 %v1083, %v1082
    %v1434 = vpack.c.b16 %v1085, %v1084
    %v1435 = vpack.c.b16 %v1087, %v1086
    %v1436 = vpack.c.b16 %v1089, %v1088
    %v1437 = vpack.c.b16 %v1091, %v1090
    %v1438 = vpack.c.b16 %v1093, %v1092
    %v1439 = vpack.c.b16 %v1095, %v1094
    %v1440 = vpack.c.b16 %v1097, %v1096
    %v1441 = vpack.c.b16 %v1099, %v1098
    %v1442 = vpack.c.b16 %v1101, %v1100
    %v1443 = vpack.c.b16 %v1103, %v1102
    %v1444 = vpack.c.b16 %v1105, %v1104
    %v1445 = vpack.c.b16 %v1107, %v1106
    %v1446 = vpack.c.b16 %v1109, %v1108
    %v1447 = vpack.c.b16 %v1111, %v1110
    %v1448 = vpack.c.b16 %v1113, %v1112
    %v1449 = vpack.c.b16 %v1115, %v1114
    %v1450 = vpack.c.b16 %v1117, %v1116
    %v1451 = vpack.c.b16 %v1119, %v1118
    %v1452 = vpack.c.b16 %v1121, %v1120
    %v1453 = vpack.c.b16 %v1123, %v1122
    %v1454 = vpack.c.b16 %v1125, %v1124
    %v1455 = vpack.c.b16 %v1127, %v1126
    %v1456 = vpack.c.b16 %v1129, %v1128
    %v1457 = vpack.c.b16 %v1131, %v1130
    %v1458 = vpack.c.b16 %v1133, %v1132
    %v1459 = vpack.c.b16 %v1135, %v1134
    %v1460 = vpack.c.b16 %v1137, %v1136
    %v1461 = vpack.c.b16 %v1139, %v1138
    %v1462 = vpack.c.b16 %v1141, %v1140
    %v1463 = vpack.c.b16 %v1143, %v1142
    %v1464 = vpack.c.b16 %v1145, %v1144
    %v1465 = vpack.c.b16 %v1147, %v1146
    %v1466 = vpack.c.b16 %v1149, %v1148
    %v1467 = vpack.c.b16 %v1151, %v1150
    %v1468 = vpack.c.b16 %v1153, %v1152
    %v1469 = vpack.c.b16 %v1155, %v1154
    %v1470 = vpack.c.b16 %v1157, %v1156
    %v1471 = vpack.c.b16 %v1159, %v1158
    %v1472 = vpack.c.b16 %v1161, %v1160
    %v1473 = vpack.c.b16 %v1163, %v1162
    %v1474 = vpack.c.b16 %v1165, %v1164
    %v1475 = vpack.c.b16 %v1167, %v1166
    %v1476 = vpack.c.b16 %v1169, %v1168
    %v1477 = vpack.c.b16 %v1171, %v1170
    %v1478 = vpack.c.b16 %v1173, %v1172
    %v1479 = vpack.c.b16 %v1175, %v1174
    %v1480 = vpack.c.b16 %v1177, %v1176
    %v1481 = vpack.c.b16 %v1179, %v1178
    %v1482 = vpack.c.b16 %v1181, %v1180
    %v1483 = vpack.c.b16 %v1183, %v1182
    %v1484 = vpack.c.b16 %v1185, %v1184
    %v1485 = vpack.c.b16 %v1187, %v1186
    %v1486 = vpack.c.b16 %v1189, %v1188
    %v1487 = vpack.c.b16 %v1191, %v1190
    %v1488 = vpack.c.b16 %v1193, %v1192
    %v1489 = vpack.c.b16 %v1195, %v1194
    %v1490 = vpack.c.b16 %v1197, %v1196
    %v1491 = vpack.c.b16 %v1199, %v1198
    %v1492 = vpack.c.b16 %v1201, %v1200
    %v1493 = vpack.c.b16 %v1203, %v1202
    %v1494 = vpack.c.b16 %v1205, %v1204
    %v1495 = vpack.c.b16 %v1207, %v1206
    %v1496 = vpack.c.b16 %v1209, %v1208
    %v1497 = vpack.c.b16 %v1211, %v1210
    %v1498 = vpack.c.b16 %v1213, %v1212
    %v1499 = vpack.c.b16 %v1215, %v1214
    %v1500 = vpack.c.b16 %v1217, %v1216
    %v1501 = vpack.c.b16 %v1219, %v1218
    %v1502 = vpack.c.b16 %v1221, %v1220
    %v1503 = vpack.c.b16 %v1223, %v1222
    %v1504 = vpack.c.b16 %v1225, %v1224
    %v1505 = vpack.c.b16 %v1227, %v1226
    %v1506 = vpack.c.b16 %v1229, %v1228
    %v1507 = vpack.c.b16 %v1231, %v1230
    %v1508 = vpack.c.b16 %v1233, %v1232
    %v1509 = vpack.c.b16 %v1235, %v1234
    %v1510 = vpack.c.b16 %v1237, %v1236
    %v1511 = vpack.c.b16 %v1239, %v1238
    %v1512 = vpack.c.b16 %v1241, %v1240
    %v1513 = vpack.c.b16 %v1243, %v1242
    %v1514 = vpack.c.b16 %v1245, %v1244
    %v1515 = vpack.c.b16 %v1247, %v1246
    %v1516 = vpack.c.b16 %v1249, %v1248
    %v1517 = vpack.c.b16 %v1251, %v1250
    %v1518 = vpack.c.b16 %v1253, %v1252
    %v1519 = vpack.c.b16 %v1255, %v1254
    %v1520 = vpack.c.b16 %v1257, %v1256
    %v1521 = vpack.c.b16 %v1259, %v1258
    %v1522 = vpack.c.b16 %v1261, %v1260
    %v1523 = vpack.c.b16 %v1263, %v1262
    %v1524 = vpack.c.b16 %v1265, %v1264
    %v1525 = vpack.c.b16 %v1267, %v1266
    %v1526 = vpack.c.b16 %v1269, %v1268
    %v1527 = vpack.c.b16 %v1271, %v1270
    %v1528 = vpack.c.b16 %v1273, %v1272
    %v1529 = vpack.c.b16 %v1275, %v1274
    %v1530 = vpack.c.b16 %v1277, %v1276
    %v1531 = vpack.c.b16 %v1279, %v1278
    %v1532 = vpack.c.b16 %v1281, %v1280
    %v1533 = vpack.c.b16 %v1283, %v1282
    %v1534 = vpack.c.b16 %v1285, %v1284
    %v1535 = vpack.c.b16 %v1287, %v1286
    %v1536 = vpack.c.b16 %v1289, %v1288
    %v1537 = vpack.c.b16 %v1291, %v1290
    %v1538 = vpack.c.b16 %v1293, %v1292
    %v1539 = vpack.c.b16 %v1295, %v1294
    %v1540 = vpack.c.b16 %v1297, %v1296
    %v1541 = vpack.c.b16 %v1299, %v1298
    %v1542 = vpack.c.b16 %v1301, %v1300
    %v1543 = vpack.c.b16 %v1303, %v1302
    %v1544 = vpack.c.b16 %v1305, %v1304
    %v1545 = vpack.c.b16 %v1307, %v1306
    %v1546 = vpack.c.b16 %v1309, %v1308
    %v1547 = vpack.c.b16 %v1311, %v1310
    %v1548 = vpack.c.b16 %v1313, %v1312
    %v1549 = vpack.c.b16 %v1315, %v1314
    %v1550 = vpack.c.b16 %v1317, %v1316
    %v1551 = vpack.c.b16 %v1319, %v1318
    %v1552 = vpack.c.b16 %v1321, %v1320
    %v1553 = vpack.c.b16 %v1323, %v1322
    %v1554 = vpack.c.b16 %v1325, %v1324
    %v1555 = vpack.c.b16 %v1327, %v1326
    %v1556 = vpack.c.b16 %v1329, %v1328
    %v1557 = vpack.c.b16 %v1331, %v1330
    %v1558 = vpack.c.b16 %v1333, %v1332
    %v1559 = vpack.c.b16 %v1335, %v1334
    %v1560 = vpack.c.b16 %v1337, %v1336
    %v1561 = vpack.c.b16 %v1339, %v1338
    %v1562 = vpack.c.b16 %v1341, %v1340
    %v1563 = vpack.c.b16 %v1343, %v1342
    %v1564 = vpack.c.b16 %v1345, %v1344
    %v1565 = vpack.c.b16 %v1347, %v1346
    %v1566 = vpack.c.b16 %v1349, %v1348
    %v1567 = vpack.c.b16 %v1351, %v1350
    %v1568 = vpack.c.b16 %v1353, %v1352
    %v1569 = vpack.c.b16 %v1355, %v1354
    %v1570 = vpack.c.b16 %v1357, %v1356
    %v1571 = vpack.c.b16 %v1359, %v1358
    %v1572 = vpack.c.b16 %v1361, %v1360
    %v1573 = vpack.c.b16 %v1363, %v1362
    %v1574 = vpack.c.b16 %v1365, %v1364
    %v1575 = vpack.c.b16 %v1367, %v1366
    %v1576 = vpack.c.b16 %v1369, %v1368
    %v1577 = vpack.c.b16 %v1371, %v1370
    %v1578 = vpack.c.b16 %v1373, %v1372
    %v1579 = vpack.c.b16 %v1375, %v1374
    %v1580 = vpack.c.b16 %v1377, %v1376
    %v1581 = vpack.c.b16 %v1379, %v1378
    %v1582 = vpack.c.b16 %v1381, %v1380
    %v1583 = vpack.c.b16 %v1383, %v1382
    %v1584 = vpack.c.b16 %v1385, %v1384
    %v1585 = vpack.c.b16 %v1387, %v1386
    %v1586 = vpack.c.b16 %v1389, %v1388
    %v1587 = vpack.c.b16 %v1391, %v1390
    %vm1784 = vcmask 523264
    %v1786 = vsel %vm1784, %v583, 0
    %1788 = vmatprep.subr.bf16.mxu0 0
    %1789 = vmatpush1.bf16.msra.mxu0 %v1392
    %1790 = vmatprep.subr.bf16.mxu0 0
    %1791 = vmatpush1.bf16.msra.mxu0 %v1393
    %1792 = vmatprep.subr.bf16.mxu0 0
    %1793 = vmatpush1.bf16.msra.mxu0 %v1394
    %1794 = vmatprep.subr.bf16.mxu0 0
    %1795 = vmatpush1.bf16.msra.mxu0 %v1395
    %1796 = vmatprep.subr.bf16.mxu0 0
    %1797 = vmatpush1.bf16.msra.mxu0 %v1396
    %1798 = vmatprep.subr.bf16.mxu0 0
    %1799 = vmatpush1.bf16.msra.mxu0 %v1397
    %1800 = vmatprep.subr.bf16.mxu0 0
    %1801 = vmatpush1.bf16.msra.mxu0 %v1398
    %1802 = vmatprep.subr.bf16.mxu0 0
    %1803 = vmatpush1.bf16.msra.mxu0 %v1399
    %1804 = vmatprep.subr.bf16.mxu0 0
    %1805 = vmatpush1.bf16.msra.mxu0 %v1400
    %1806 = vmatprep.subr.bf16.mxu0 0
    %1807 = vmatpush1.bf16.msra.mxu0 %v1401
    %1808 = vmatprep.subr.bf16.mxu0 0
    %1809 = vmatpush1.bf16.msra.mxu0 %v1402
    %1810 = vmatprep.subr.bf16.mxu0 0
    %1811 = vmatpush1.bf16.msra.mxu0 %v1403
    %1812 = vmatprep.subr.bf16.mxu0 0
    %1813 = vmatpush1.bf16.msra.mxu0 %v1404
    %1814 = vmatprep.subr.bf16.mxu0 0
    %1815 = vmatpush1.bf16.msra.mxu0 %v1405
    %1816 = vmatprep.subr.bf16.mxu0 0
    %1817 = vmatpush1.bf16.msra.mxu0 %v1406
    %1818 = vmatprep.subr.bf16.mxu0 0
    %1819 = vmatpush1.bf16.msra.mxu0 %v1407
    %1820 = vmatprep.mubr.bf16.mxu0 %v460
    %1821 = vmatmul.mubr.bf16.gmra.mrb[0].mxu0 %v446
    %v1822 = vpop.f32.mrb[0].mxu0
    %v1823 = vadd.f32 %v417, %v1822
    %v1824 = vpop.f32.mrb[0].mxu0
    %v1825 = vpop.f32.mrb[0].mxu0
    %v1826 = vpop.f32.mrb[0].mxu0
    %1827 = vdwg.mxu0
    %1828 = vmatprep.subr.bf16.mxu0 0
    %1829 = vmatpush1.bf16.msra.mxu0 %v1408
    %1830 = vmatprep.subr.bf16.mxu0 0
    %1831 = vmatpush1.bf16.msra.mxu0 %v1409
    %1832 = vmatprep.subr.bf16.mxu0 0
    %1833 = vmatpush1.bf16.msra.mxu0 %v1410
    %1834 = vmatprep.subr.bf16.mxu0 0
    %1835 = vmatpush1.bf16.msra.mxu0 %v1411
    %1836 = vmatprep.subr.bf16.mxu0 0
    %1837 = vmatpush1.bf16.msra.mxu0 %v1412
    %1838 = vmatprep.subr.bf16.mxu0 0
    %1839 = vmatpush1.bf16.msra.mxu0 %v1413
    %1840 = vmatprep.subr.bf16.mxu0 0
    %1841 = vmatpush1.bf16.msra.mxu0 %v1414
    %1842 = vmatprep.subr.bf16.mxu0 0
    %1843 = vmatpush1.bf16.msra.mxu0 %v1415
    %1844 = vmatprep.subr.bf16.mxu0 0
    %1845 = vmatpush1.bf16.msra.mxu0 %v1416
    %1846 = vmatprep.subr.bf16.mxu0 0
    %1847 = vmatpush1.bf16.msra.mxu0 %v1417
    %1848 = vmatprep.subr.bf16.mxu0 0
    %1849 = vmatpush1.bf16.msra.mxu0 %v1418
    %1850 = vmatprep.subr.bf16.mxu0 0
    %1851 = vmatpush1.bf16.msra.mxu0 %v1419
    %1852 = vmatprep.subr.bf16.mxu0 0
    %1853 = vmatpush1.bf16.msra.mxu0 %v1420
    %1854 = vmatprep.subr.bf16.mxu0 0
    %1855 = vmatpush1.bf16.msra.mxu0 %v1421
    %1856 = vmatprep.subr.bf16.mxu0 0
    %1857 = vmatpush1.bf16.msra.mxu0 %v1422
    %1858 = vmatprep.subr.bf16.mxu0 0
    %1859 = vmatpush1.bf16.msra.mxu0 %v1423
    %1860 = vmatprep.mubr.bf16.mxu0 %v470
    %1861 = vmatmul.mubr.bf16.gmra.mrb[0].mxu0 %v468
    %v1862 = vpop.f32.mrb[0].mxu0
    %v1863 = vadd.f32 %v1823, %v1862
    %v1864 = vpop.f32.mrb[0].mxu0
    %v1865 = vpop.f32.mrb[0].mxu0
    %v1866 = vpop.f32.mrb[0].mxu0
    %1867 = vdwg.mxu0
    %1868 = vmatprep.subr.bf16.mxu0 0
    %1869 = vmatpush1.bf16.msra.mxu0 %v1424
    %1870 = vmatprep.subr.bf16.mxu0 0
    %1871 = vmatpush1.bf16.msra.mxu0 %v1425
    %1872 = vmatprep.subr.bf16.mxu0 0
    %1873 = vmatpush1.bf16.msra.mxu0 %v1426
    %1874 = vmatprep.subr.bf16.mxu0 0
    %1875 = vmatpush1.bf16.msra.mxu0 %v1427
    %1876 = vmatprep.subr.bf16.mxu0 0
    %1877 = vmatpush1.bf16.msra.mxu0 %v1428
    %1878 = vmatprep.subr.bf16.mxu0 0
    %1879 = vmatpush1.bf16.msra.mxu0 %v1429
    %1880 = vmatprep.subr.bf16.mxu0 0
    %1881 = vmatpush1.bf16.msra.mxu0 %v1430
    %1882 = vmatprep.subr.bf16.mxu0 0
    %1883 = vmatpush1.bf16.msra.mxu0 %v1431
    %1884 = vmatprep.subr.bf16.mxu0 0
    %1885 = vmatpush1.bf16.msra.mxu0 %v1432
    %1886 = vmatprep.subr.bf16.mxu0 0
    %1887 = vmatpush1.bf16.msra.mxu0 %v1433
    %1888 = vmatprep.subr.bf16.mxu0 0
    %1889 = vmatpush1.bf16.msra.mxu0 %v1434
    %1890 = vmatprep.subr.bf16.mxu0 0
    %1891 = vmatpush1.bf16.msra.mxu0 %v1435
    %1892 = vmatprep.subr.bf16.mxu0 0
    %1893 = vmatpush1.bf16.msra.mxu0 %v1436
    %1894 = vmatprep.subr.bf16.mxu0 0
    %1895 = vmatpush1.bf16.msra.mxu0 %v1437
    %1896 = vmatprep.subr.bf16.mxu0 0
    %1897 = vmatpush1.bf16.msra.mxu0 %v1438
    %1898 = vmatprep.subr.bf16.mxu0 0
    %1899 = vmatpush1.bf16.msra.mxu0 %v1439
    %1900 = vmatprep.mubr.bf16.mxu0 %v467
    %1901 = vmatmul.mubr.bf16.gmra.mrb[0].mxu0 %v453
    %v1902 = vpop.f32.mrb[0].mxu0
    %v1903 = vadd.f32 %v1863, %v1902
    %v1904 = vpop.f32.mrb[0].mxu0
    %v1905 = vpop.f32.mrb[0].mxu0
    %v1906 = vpop.f32.mrb[0].mxu0
    %1907 = vdwg.mxu0
    %1908 = vmatprep.subr.bf16.mxu0 0
    %1909 = vmatpush1.bf16.msra.mxu0 %v1440
    %1910 = vmatprep.subr.bf16.mxu0 0
    %1911 = vmatpush1.bf16.msra.mxu0 %v1441
    %1912 = vmatprep.subr.bf16.mxu0 0
    %1913 = vmatpush1.bf16.msra.mxu0 %v1442
    %1914 = vmatprep.subr.bf16.mxu0 0
    %1915 = vmatpush1.bf16.msra.mxu0 %v1443
    %1916 = vmatprep.subr.bf16.mxu0 0
    %1917 = vmatpush1.bf16.msra.mxu0 %v1444
    %1918 = vmatprep.subr.bf16.mxu0 0
    %1919 = vmatpush1.bf16.msra.mxu0 %v1445
    %1920 = vmatprep.subr.bf16.mxu0 0
    %1921 = vmatpush1.bf16.msra.mxu0 %v1446
    %1922 = vmatprep.subr.bf16.mxu0 0
    %1923 = vmatpush1.bf16.msra.mxu0 %v1447
    %1924 = vmatprep.subr.bf16.mxu0 0
    %1925 = vmatpush1.bf16.msra.mxu0 %v1448
    %1926 = vmatprep.subr.bf16.mxu0 0
    %1927 = vmatpush1.bf16.msra.mxu0 %v1449
    %1928 = vmatprep.subr.bf16.mxu0 0
    %1929 = vmatpush1.bf16.msra.mxu0 %v1450
    %1930 = vmatprep.subr.bf16.mxu0 0
    %1931 = vmatpush1.bf16.msra.mxu0 %v1451
    %1932 = vmatprep.subr.bf16.mxu0 0
    %1933 = vmatpush1.bf16.msra.mxu0 %v1452
    %1934 = vmatprep.subr.bf16.mxu0 0
    %1935 = vmatpush1.bf16.msra.mxu0 %v1453
    %1936 = vmatprep.subr.bf16.mxu0 0
    %1937 = vmatpush1.bf16.msra.mxu0 %v1454
    %1938 = vmatprep.subr.bf16.mxu0 0
    %1939 = vmatpush1.bf16.msra.mxu0 %v1455
    %1940 = vmatprep.mubr.bf16.mxu0 %v471
    %1941 = vmatmul.mubr.bf16.gmra.mrb[0].mxu0 %v469
    %v1942 = vpop.f32.mrb[0].mxu0
    %v1943 = vadd.f32 %v1903, %v1942
    %v1944 = vpop.f32.mrb[0].mxu0
    %v1945 = vpop.f32.mrb[0].mxu0
    %v1946 = vpop.f32.mrb[0].mxu0
    %1947 = vdwg.mxu0
    %1948 = vmatprep.subr.bf16.mxu0 0
    %1949 = vmatpush1.bf16.msra.mxu0 %v1456
    %1950 = vmatprep.subr.bf16.mxu0 0
    %1951 = vmatpush1.bf16.msra.mxu0 %v1457
    %1952 = vmatprep.subr.bf16.mxu0 0
    %1953 = vmatpush1.bf16.msra.mxu0 %v1458
    %1954 = vmatprep.subr.bf16.mxu0 0
    %1955 = vmatpush1.bf16.msra.mxu0 %v1459
    %1956 = vmatprep.subr.bf16.mxu0 0
    %1957 = vmatpush1.bf16.msra.mxu0 %v1460
    %1958 = vmatprep.subr.bf16.mxu0 0
    %1959 = vmatpush1.bf16.msra.mxu0 %v1461
    %1960 = vmatprep.subr.bf16.mxu0 0
    %1961 = vmatpush1.bf16.msra.mxu0 %v1462
    %1962 = vmatprep.subr.bf16.mxu0 0
    %1963 = vmatpush1.bf16.msra.mxu0 %v1463
    %1964 = vmatprep.subr.bf16.mxu0 0
    %1965 = vmatpush1.bf16.msra.mxu0 %v1464
    %1966 = vmatprep.subr.bf16.mxu0 0
    %1967 = vmatpush1.bf16.msra.mxu0 %v1465
    %1968 = vmatprep.subr.bf16.mxu0 0
    %1969 = vmatpush1.bf16.msra.mxu0 %v1466
    %1970 = vmatprep.subr.bf16.mxu0 0
    %1971 = vmatpush1.bf16.msra.mxu0 %v1467
    %1972 = vmatprep.subr.bf16.mxu0 0
    %1973 = vmatpush1.bf16.msra.mxu0 %v1468
    %1974 = vmatprep.subr.bf16.mxu0 0
    %1975 = vmatpush1.bf16.msra.mxu0 %v1469
    %1976 = vmatprep.subr.bf16.mxu0 0
    %1977 = vmatpush1.bf16.msra.mxu0 %v1470
    %1978 = vmatprep.subr.bf16.mxu0 0
    %1979 = vmatpush1.bf16.msra.mxu0 %v1471
    %1980 = vmatprep.mubr.bf16.mxu0 %v509
    %1981 = vmatmul.mubr.bf16.gmra.mrb[0].mxu0 %v495
    %v1982 = vpop.f32.mrb[0].mxu0
    %v1983 = vadd.f32 %v1943, %v1982
    %v1984 = vpop.f32.mrb[0].mxu0
    %v1985 = vpop.f32.mrb[0].mxu0
    %v1986 = vpop.f32.mrb[0].mxu0
    %1987 = vdwg.mxu0
    %1988 = vmatprep.subr.bf16.mxu0 0
    %1989 = vmatpush1.bf16.msra.mxu0 %v1472
    %1990 = vmatprep.subr.bf16.mxu0 0
    %1991 = vmatpush1.bf16.msra.mxu0 %v1473
    %1992 = vmatprep.subr.bf16.mxu0 0
    %1993 = vmatpush1.bf16.msra.mxu0 %v1474
    %1994 = vmatprep.subr.bf16.mxu0 0
    %1995 = vmatpush1.bf16.msra.mxu0 %v1475
    %1996 = vmatprep.subr.bf16.mxu0 0
    %1997 = vmatpush1.bf16.msra.mxu0 %v1476
    %1998 = vmatprep.subr.bf16.mxu0 0
    %1999 = vmatpush1.bf16.msra.mxu0 %v1477
    %2000 = vmatprep.subr.bf16.mxu0 0
    %2001 = vmatpush1.bf16.msra.mxu0 %v1478
    %2002 = vmatprep.subr.bf16.mxu0 0
    %2003 = vmatpush1.bf16.msra.mxu0 %v1479
    %2004 = vmatprep.subr.bf16.mxu0 0
    %2005 = vmatpush1.bf16.msra.mxu0 %v1480
    %2006 = vmatprep.subr.bf16.mxu0 0
    %2007 = vmatpush1.bf16.msra.mxu0 %v1481
    %2008 = vmatprep.subr.bf16.mxu0 0
    %2009 = vmatpush1.bf16.msra.mxu0 %v1482
    %2010 = vmatprep.subr.bf16.mxu0 0
    %2011 = vmatpush1.bf16.msra.mxu0 %v1483
    %2012 = vmatprep.subr.bf16.mxu0 0
    %2013 = vmatpush1.bf16.msra.mxu0 %v1484
    %2014 = vmatprep.subr.bf16.mxu0 0
    %2015 = vmatpush1.bf16.msra.mxu0 %v1485
    %2016 = vmatprep.subr.bf16.mxu0 0
    %2017 = vmatpush1.bf16.msra.mxu0 %v1486
    %2018 = vmatprep.subr.bf16.mxu0 0
    %2019 = vmatpush1.bf16.msra.mxu0 %v1487
    %2020 = vmatprep.mubr.bf16.mxu0 %v519
    %2021 = vmatmul.mubr.bf16.gmra.mrb[0].mxu0 %v517
    %v2022 = vpop.f32.mrb[0].mxu0
    %v2023 = vadd.f32 %v1983, %v2022
    %v2024 = vpop.f32.mrb[0].mxu0
    %v2025 = vpop.f32.mrb[0].mxu0
    %v2026 = vpop.f32.mrb[0].mxu0
    %2027 = vdwg.mxu0
    %2028 = vmatprep.subr.bf16.mxu0 0
    %2029 = vmatpush1.bf16.msra.mxu0 %v1488
    %2030 = vmatprep.subr.bf16.mxu0 0
    %2031 = vmatpush1.bf16.msra.mxu0 %v1489
    %2032 = vmatprep.subr.bf16.mxu0 0
    %2033 = vmatpush1.bf16.msra.mxu0 %v1490
    %2034 = vmatprep.subr.bf16.mxu0 0
    %2035 = vmatpush1.bf16.msra.mxu0 %v1491
    %2036 = vmatprep.subr.bf16.mxu0 0
    %2037 = vmatpush1.bf16.msra.mxu0 %v1492
    %2038 = vmatprep.subr.bf16.mxu0 0
    %2039 = vmatpush1.bf16.msra.mxu0 %v1493
    %2040 = vmatprep.subr.bf16.mxu0 0
    %2041 = vmatpush1.bf16.msra.mxu0 %v1494
    %2042 = vmatprep.subr.bf16.mxu0 0
    %2043 = vmatpush1.bf16.msra.mxu0 %v1495
    %2044 = vmatprep.subr.bf16.mxu0 0
    %2045 = vmatpush1.bf16.msra.mxu0 %v1496
    %2046 = vmatprep.subr.bf16.mxu0 0
    %2047 = vmatpush1.bf16.msra.mxu0 %v1497
    %2048 = vmatprep.subr.bf16.mxu0 0
    %2049 = vmatpush1.bf16.msra.mxu0 %v1498
    %2050 = vmatprep.subr.bf16.mxu0 0
    %2051 = vmatpush1.bf16.msra.mxu0 %v1499
    %2052 = vmatprep.subr.bf16.mxu0 0
    %2053 = vmatpush1.bf16.msra.mxu0 %v1500
    %2054 = vmatprep.subr.bf16.mxu0 0
    %2055 = vmatpush1.bf16.msra.mxu0 %v1501
    %2056 = vmatprep.subr.bf16.mxu0 0
    %2057 = vmatpush1.bf16.msra.mxu0 %v1502
    %2058 = vmatprep.subr.bf16.mxu0 0
    %2059 = vmatpush1.bf16.msra.mxu0 %v1503
    %2060 = vmatprep.mubr.bf16.mxu0 %v516
    %2061 = vmatmul.mubr.bf16.gmra.mrb[0].mxu0 %v502
    %v2062 = vpop.f32.mrb[0].mxu0
    %v2063 = vadd.f32 %v2023, %v2062
    %v2064 = vpop.f32.mrb[0].mxu0
    %v2065 = vpop.f32.mrb[0].mxu0
    %v2066 = vpop.f32.mrb[0].mxu0
    %2067 = vdwg.mxu0
    %2068 = vmatprep.subr.bf16.mxu0 0
    %2069 = vmatpush1.bf16.msra.mxu0 %v1504
    %2070 = vmatprep.subr.bf16.mxu0 0
    %2071 = vmatpush1.bf16.msra.mxu0 %v1505
    %2072 = vmatprep.subr.bf16.mxu0 0
    %2073 = vmatpush1.bf16.msra.mxu0 %v1506
    %2074 = vmatprep.subr.bf16.mxu0 0
    %2075 = vmatpush1.bf16.msra.mxu0 %v1507
    %2076 = vmatprep.subr.bf16.mxu0 0
    %2077 = vmatpush1.bf16.msra.mxu0 %v1508
    %2078 = vmatprep.subr.bf16.mxu0 0
    %2079 = vmatpush1.bf16.msra.mxu0 %v1509
    %2080 = vmatprep.subr.bf16.mxu0 0
    %2081 = vmatpush1.bf16.msra.mxu0 %v1510
    %2082 = vmatprep.subr.bf16.mxu0 0
    %2083 = vmatpush1.bf16.msra.mxu0 %v1511
    %2084 = vmatprep.subr.bf16.mxu0 0
    %2085 = vmatpush1.bf16.msra.mxu0 %v1512
    %2086 = vmatprep.subr.bf16.mxu0 0
    %2087 = vmatpush1.bf16.msra.mxu0 %v1513
    %2088 = vmatprep.subr.bf16.mxu0 0
    %2089 = vmatpush1.bf16.msra.mxu0 %v1514
    %2090 = vmatprep.subr.bf16.mxu0 0
    %2091 = vmatpush1.bf16.msra.mxu0 %v1515
    %2092 = vmatprep.subr.bf16.mxu0 0
    %2093 = vmatpush1.bf16.msra.mxu0 %v1516
    %2094 = vmatprep.subr.bf16.mxu0 0
    %2095 = vmatpush1.bf16.msra.mxu0 %v1517
    %2096 = vmatprep.subr.bf16.mxu0 0
    %2097 = vmatpush1.bf16.msra.mxu0 %v1518
    %2098 = vmatprep.subr.bf16.mxu0 0
    %2099 = vmatpush1.bf16.msra.mxu0 %v1519
    %2100 = vmatprep.mubr.bf16.mxu0 %v520
    %2101 = vmatmul.mubr.bf16.gmra.mrb[0].mxu0 %v518
    %v2102 = vpop.f32.mrb[0].mxu0
    %v2103 = vadd.f32 %v2063, %v2102
    %v2104 = vpop.f32.mrb[0].mxu0
    %v2105 = vpop.f32.mrb[0].mxu0
    %v2106 = vpop.f32.mrb[0].mxu0
    %2107 = vdwg.mxu0
    %2108 = vmatprep.subr.bf16.mxu0 0
    %2109 = vmatpush1.bf16.msra.mxu0 %v1520
    %2110 = vmatprep.subr.bf16.mxu0 0
    %2111 = vmatpush1.bf16.msra.mxu0 %v1521
    %2112 = vmatprep.subr.bf16.mxu0 0
    %2113 = vmatpush1.bf16.msra.mxu0 %v1522
    %2114 = vmatprep.subr.bf16.mxu0 0
    %2115 = vmatpush1.bf16.msra.mxu0 %v1523
    %2116 = vmatprep.subr.bf16.mxu0 0
    %2117 = vmatpush1.bf16.msra.mxu0 %v1524
    %2118 = vmatprep.subr.bf16.mxu0 0
    %2119 = vmatpush1.bf16.msra.mxu0 %v1525
    %2120 = vmatprep.subr.bf16.mxu0 0
    %2121 = vmatpush1.bf16.msra.mxu0 %v1526
    %2122 = vmatprep.subr.bf16.mxu0 0
    %2123 = vmatpush1.bf16.msra.mxu0 %v1527
    %2124 = vmatprep.subr.bf16.mxu0 0
    %2125 = vmatpush1.bf16.msra.mxu0 %v1528
    %2126 = vmatprep.subr.bf16.mxu0 0
    %2127 = vmatpush1.bf16.msra.mxu0 %v1529
    %2128 = vmatprep.subr.bf16.mxu0 0
    %2129 = vmatpush1.bf16.msra.mxu0 %v1530
    %2130 = vmatprep.subr.bf16.mxu0 0
    %2131 = vmatpush1.bf16.msra.mxu0 %v1531
    %2132 = vmatprep.subr.bf16.mxu0 0
    %2133 = vmatpush1.bf16.msra.mxu0 %v1532
    %2134 = vmatprep.subr.bf16.mxu0 0
    %2135 = vmatpush1.bf16.msra.mxu0 %v1533
    %2136 = vmatprep.subr.bf16.mxu0 0
    %2137 = vmatpush1.bf16.msra.mxu0 %v1534
    %2138 = vmatprep.subr.bf16.mxu0 0
    %2139 = vmatpush1.bf16.msra.mxu0 %v1535
    %2140 = vmatprep.mubr.bf16.mxu0 %v558
    %2141 = vmatmul.mubr.bf16.gmra.mrb[0].mxu0 %v544
    %v2142 = vpop.f32.mrb[0].mxu0
    %v2143 = vadd.f32 %v2103, %v2142
    %v2144 = vpop.f32.mrb[0].mxu0
    %v2145 = vpop.f32.mrb[0].mxu0
    %v2146 = vpop.f32.mrb[0].mxu0
    %2147 = vdwg.mxu0
    %2148 = vmatprep.subr.bf16.mxu0 0
    %2149 = vmatpush1.bf16.msra.mxu0 %v1536
    %2150 = vmatprep.subr.bf16.mxu0 0
    %2151 = vmatpush1.bf16.msra.mxu0 %v1537
    %2152 = vmatprep.subr.bf16.mxu0 0
    %2153 = vmatpush1.bf16.msra.mxu0 %v1538
    %2154 = vmatprep.subr.bf16.mxu0 0
    %2155 = vmatpush1.bf16.msra.mxu0 %v1539
    %2156 = vmatprep.subr.bf16.mxu0 0
    %2157 = vmatpush1.bf16.msra.mxu0 %v1540
    %2158 = vmatprep.subr.bf16.mxu0 0
    %2159 = vmatpush1.bf16.msra.mxu0 %v1541
    %2160 = vmatprep.subr.bf16.mxu0 0
    %2161 = vmatpush1.bf16.msra.mxu0 %v1542
    %2162 = vmatprep.subr.bf16.mxu0 0
    %2163 = vmatpush1.bf16.msra.mxu0 %v1543
    %2164 = vmatprep.subr.bf16.mxu0 0
    %2165 = vmatpush1.bf16.msra.mxu0 %v1544
    %2166 = vmatprep.subr.bf16.mxu0 0
    %2167 = vmatpush1.bf16.msra.mxu0 %v1545
    %2168 = vmatprep.subr.bf16.mxu0 0
    %2169 = vmatpush1.bf16.msra.mxu0 %v1546
    %2170 = vmatprep.subr.bf16.mxu0 0
    %2171 = vmatpush1.bf16.msra.mxu0 %v1547
    %2172 = vmatprep.subr.bf16.mxu0 0
    %2173 = vmatpush1.bf16.msra.mxu0 %v1548
    %2174 = vmatprep.subr.bf16.mxu0 0
    %2175 = vmatpush1.bf16.msra.mxu0 %v1549
    %2176 = vmatprep.subr.bf16.mxu0 0
    %2177 = vmatpush1.bf16.msra.mxu0 %v1550
    %2178 = vmatprep.subr.bf16.mxu0 0
    %2179 = vmatpush1.bf16.msra.mxu0 %v1551
    %2180 = vmatprep.mubr.bf16.mxu0 %v568
    %2181 = vmatmul.mubr.bf16.gmra.mrb[0].mxu0 %v566
    %v2182 = vpop.f32.mrb[0].mxu0
    %v2183 = vadd.f32 %v2143, %v2182
    %v2184 = vpop.f32.mrb[0].mxu0
    %v2185 = vpop.f32.mrb[0].mxu0
    %v2186 = vpop.f32.mrb[0].mxu0
    %2187 = vdwg.mxu0
    %2188 = vmatprep.subr.bf16.mxu0 0
    %2189 = vmatpush1.bf16.msra.mxu0 %v1552
    %2190 = vmatprep.subr.bf16.mxu0 0
    %2191 = vmatpush1.bf16.msra.mxu0 %v1553
    %2192 = vmatprep.subr.bf16.mxu0 0
    %2193 = vmatpush1.bf16.msra.mxu0 %v1554
    %2194 = vmatprep.subr.bf16.mxu0 0
    %2195 = vmatpush1.bf16.msra.mxu0 %v1555
    %2196 = vmatprep.subr.bf16.mxu0 0
    %2197 = vmatpush1.bf16.msra.mxu0 %v1556
    %2198 = vmatprep.subr.bf16.mxu0 0
    %2199 = vmatpush1.bf16.msra.mxu0 %v1557
    %2200 = vmatprep.subr.bf16.mxu0 0
    %2201 = vmatpush1.bf16.msra.mxu0 %v1558
    %2202 = vmatprep.subr.bf16.mxu0 0
    %2203 = vmatpush1.bf16.msra.mxu0 %v1559
    %2204 = vmatprep.subr.bf16.mxu0 0
    %2205 = vmatpush1.bf16.msra.mxu0 %v1560
    %2206 = vmatprep.subr.bf16.mxu0 0
    %2207 = vmatpush1.bf16.msra.mxu0 %v1561
    %2208 = vmatprep.subr.bf16.mxu0 0
    %2209 = vmatpush1.bf16.msra.mxu0 %v1562
    %2210 = vmatprep.subr.bf16.mxu0 0
    %2211 = vmatpush1.bf16.msra.mxu0 %v1563
    %2212 = vmatprep.subr.bf16.mxu0 0
    %2213 = vmatpush1.bf16.msra.mxu0 %v1564
    %2214 = vmatprep.subr.bf16.mxu0 0
    %2215 = vmatpush1.bf16.msra.mxu0 %v1565
    %2216 = vmatprep.subr.bf16.mxu0 0
    %2217 = vmatpush1.bf16.msra.mxu0 %v1566
    %2218 = vmatprep.subr.bf16.mxu0 0
    %2219 = vmatpush1.bf16.msra.mxu0 %v1567
    %2220 = vmatprep.mubr.bf16.mxu0 %v565
    %2221 = vmatmul.mubr.bf16.gmra.mrb[0].mxu0 %v551
    %v2222 = vpop.f32.mrb[0].mxu0
    %v2223 = vadd.f32 %v2183, %v2222
    %v2224 = vpop.f32.mrb[0].mxu0
    %v2225 = vpop.f32.mrb[0].mxu0
    %v2226 = vpop.f32.mrb[0].mxu0
    %2227 = vdwg.mxu0
    %2228 = vmatprep.subr.bf16.mxu0 0
    %2229 = vmatpush1.bf16.msra.mxu0 %v1568
    %2230 = vmatprep.subr.bf16.mxu0 0
    %2231 = vmatpush1.bf16.msra.mxu0 %v1569
    %2232 = vmatprep.subr.bf16.mxu0 0
    %2233 = vmatpush1.bf16.msra.mxu0 %v1570
    %2234 = vmatprep.subr.bf16.mxu0 0
    %2235 = vmatpush1.bf16.msra.mxu0 %v1571
    %2236 = vmatprep.subr.bf16.mxu0 0
    %2237 = vmatpush1.bf16.msra.mxu0 %v1572
    %2238 = vmatprep.subr.bf16.mxu0 0
    %2239 = vmatpush1.bf16.msra.mxu0 %v1573
    %2240 = vmatprep.subr.bf16.mxu0 0
    %2241 = vmatpush1.bf16.msra.mxu0 %v1574
    %2242 = vmatprep.subr.bf16.mxu0 0
    %2243 = vmatpush1.bf16.msra.mxu0 %v1575
    %2244 = vmatprep.subr.bf16.mxu0 0
    %2245 = vmatpush1.bf16.msra.mxu0 %v1576
    %2246 = vmatprep.subr.bf16.mxu0 0
    %2247 = vmatpush1.bf16.msra.mxu0 %v1577
    %2248 = vmatprep.subr.bf16.mxu0 0
    %2249 = vmatpush1.bf16.msra.mxu0 %v1578
    %2250 = vmatprep.subr.bf16.mxu0 0
    %2251 = vmatpush1.bf16.msra.mxu0 %v1579
    %2252 = vmatprep.subr.bf16.mxu0 0
    %2253 = vmatpush1.bf16.msra.mxu0 %v1580
    %2254 = vmatprep.subr.bf16.mxu0 0
    %2255 = vmatpush1.bf16.msra.mxu0 %v1581
    %2256 = vmatprep.subr.bf16.mxu0 0
    %2257 = vmatpush1.bf16.msra.mxu0 %v1582
    %2258 = vmatprep.subr.bf16.mxu0 0
    %2259 = vmatpush1.bf16.msra.mxu0 %v1583
    %2260 = vmatprep.mubr.bf16.mxu0 %v569
    %2261 = vmatmul.mubr.bf16.gmra.mrb[0].mxu0 %v567
    %v2262 = vpop.f32.mrb[0].mxu0
    %v2263 = vadd.f32 %v2223, %v2262
    %v2264 = vpop.f32.mrb[0].mxu0
    %v2265 = vpop.f32.mrb[0].mxu0
    %v2266 = vpop.f32.mrb[0].mxu0
    %2267 = vdwg.mxu0
    %2268 = vmatprep.subr.bf16.mxu0 0
    %2269 = vmatpush1.bf16.msra.mxu0 %v1584
    %2270 = vmatprep.subr.bf16.mxu0 0
    %2271 = vmatpush1.bf16.msra.mxu0 %v1585
    %2272 = vmatprep.subr.bf16.mxu0 0
    %2273 = vmatpush1.bf16.msra.mxu0 %v1586
    %2274 = vmatprep.subr.bf16.mxu0 0
    %2275 = vmatpush1.bf16.msra.mxu0 %v1587
    %2276 = vmatprep.subr.bf16.mxu0 0
    %2277 = vmatpush1.bf16.msra.mxu0 0
    %2278 = vmatprep.subr.bf16.mxu0 0
    %2279 = vmatpush1.bf16.msra.mxu0 0
    %2280 = vmatprep.subr.bf16.mxu0 0
    %2281 = vmatpush1.bf16.msra.mxu0 0
    %2282 = vmatprep.subr.bf16.mxu0 0
    %2283 = vmatpush1.bf16.msra.mxu0 0
    %2284 = vmatprep.subr.bf16.mxu0 0
    %2285 = vmatpush1.bf16.msra.mxu0 0
    %2286 = vmatprep.subr.bf16.mxu0 0
    %2287 = vmatpush1.bf16.msra.mxu0 0
    %2288 = vmatprep.subr.bf16.mxu0 0
    %2289 = vmatpush1.bf16.msra.mxu0 0
    %2290 = vmatprep.subr.bf16.mxu0 0
    %2291 = vmatpush1.bf16.msra.mxu0 0
    %2292 = vmatprep.subr.bf16.mxu0 0
    %2293 = vmatpush1.bf16.msra.mxu0 0
    %2294 = vmatprep.subr.bf16.mxu0 0
    %2295 = vmatpush1.bf16.msra.mxu0 0
    %2296 = vmatprep.subr.bf16.mxu0 0
    %2297 = vmatpush1.bf16.msra.mxu0 0
    %2298 = vmatprep.subr.bf16.mxu0 0
    %2299 = vmatpush1.bf16.msra.mxu0 0
    %2300 = vmatprep.mubr.bf16.mxu0 0
    %2301 = vmatmul.mubr.bf16.gmra.mrb[0].mxu0 %v1786
    %v2302 = vpop.f32.mrb[0].mxu0
    %v2303 = vadd.f32 %v2263, %v2302
    %v2304 = vpop.f32.mrb[0].mxu0
    %v2305 = vpop.f32.mrb[0].mxu0
    %v2306 = vpop.f32.mrb[0].mxu0
    %2307 = vdwg.mxu0
    %2308 = vst [vmem:[#allocation2] sm:$0x3] %v2303
    // Predicated region
    $region14: #{cnn_forward.3} parent=1 // pred_check
      _
    $region15: #{cnn_forward.3} parent=1 // pred_check_branch
      %2310 = sbr.rel (0) target = $region17
    $region16: #{cnn_forward.3} parent=1 // pred_region
      %s2312 = ssub.s32 32, 32
      %2313 = vsyncadd [#allocation3], %s2312
      %s2315 = sshll.u32 [#allocation2], 4
      %s2316 = int_to_ptr.vmem [resolvable:$true] %s2315
      %2318 = dma.vmem_to_hbm [thread:$0]  %s2316, 32, %s3, [#allocation3]
    $region17: #{cnn_forward.3} parent=1 // pred_fallthru
      _
    // Predicated region
    $region18: #{cnn_forward.3} parent=1 // pred_check
      _
    $region19: #{cnn_forward.3} parent=1 // pred_check_branch
      %2320 = sbr.rel (0) target = $region21
    $region20: #{cnn_forward.3} parent=1 // pred_region
      %2321 = dma.done [#allocation3], 32
    $region21: #{cnn_forward.3} parent=1 // pred_fallthru
      _
    %2322 = vsyncpa [#allocation3], 1

// kernel: cnn_forward.2
$region0: #{cnn_forward.2}
  #allocation0 [shape = 'u32[]', space=smem, size = 0x4, offset = 0x4, fixed_abs, tag = 'smem constant byte address 0x4 - core index']
  #allocation1 [shape = 'u32[144,128]{1,0:T(1,128)}', space=vmem, size = 0x12000, scoped, tag = 'internal scratch']
  %s0 = inlined_call_operand.vmem [shape: f32[2,930,1], index: 0, kind: input, shape index: {}]
  %s1 = inlined_call_operand.vmem [shape: f32[9,1,32], index: 1, kind: input, shape index: {}]
  %s2 = inlined_call_operand.vmem [shape: f32[1,32], index: 2, kind: input, shape index: {}]
  %s3 = inlined_call_operand.vmem [shape: bf16[272,809], index: 3, kind: input, shape index: {}]
  %s4 = inlined_call_operand.vmem [shape: bf16[9,32,64], index: 4, kind: input, shape index: {}]
  %s5 = inlined_call_operand.vmem [shape: f32[1,64], index: 5, kind: input, shape index: {}]
  %s6 = inlined_call_operand.vmem [shape: bf16[49,207], index: 6, kind: input, shape index: {}]
  %s7 = inlined_call_operand.vmem [shape: bf16[2,49,64], index: 7, kind: output, shape index: {}]
  %s8 = sld [smem:[#allocation0]]
  $region61: #{cnn_forward.2} parent=0
    _
  %s10 = ssub.s32 1, %s8
  %s11 = scalar_select 0, %s10, %s8
  loop: start=0, step=1, limit=4
  $region2: #{cnn_forward.2} parent=0 // loop_pre_header
    _
  $region3: #{cnn_forward.2} parent=0 // loop_header
    %s13 = sphi 0, %s17
    %p14 = scmp.ge.s32.totalorder %s13, 4
    %s23 = sphi 0, %s25
    %s26 = sphi 0, %s23
    %s27 = sphi 0, %s26
    %s43 = sphi 0, %s27
    %s47 = sphi 0, %s47
    %s49 = sphi 0, %s47
    %s50 = sphi 0, %s49
    %s64 = sphi 0, %s50
    %s68 = sphi 0, %s68
    %s70 = sphi 0, %s68
    %s71 = sphi 0, %s70
    %s85 = sphi 0, %s71
    %s89 = sphi 0, %s89
    %s91 = sphi 0, %s89
    %s92 = sphi 0, %s91
    %s106 = sphi 0, %s92
    %s110 = sphi 0, %s110
    %s112 = sphi 0, %s110
    %s113 = sphi 0, %s112
    %s127 = sphi 0, %s113
    %s131 = sphi 0, %s131
    %s133 = sphi 0, %s131
    %s134 = sphi 0, %s133
    %s148 = sphi 0, %s134
    %s152 = sphi 0, %s152
    %s154 = sphi 0, %s152
    %s155 = sphi 0, %s154
    %s169 = sphi 0, %s155
    %s175 = sphi 0, %s177
    %s178 = sphi 0, %s175
    %s179 = sphi 0, %s178
    %s195 = sphi 0, %s179
  $region4: #{cnn_forward.2} parent=0 // loop_header_branch
    %16 = sbr.rel (%p14) target = $region8
  $region5: #{cnn_forward.2} parent=0 // loop_body
    %s18 = ssub.s32 %s13, 1
    %s19 = ssub.s32 %s13, 2
    %s20 = sadd.s32 %s13, 1
    %s21 = ssub.s32 %s13, %s20
    %p22 = scmp.eq.s32.totalorder %s21, 0
    %s24 = sadd.s32 %s23, 1
    %s25 = scalar_select %p22, %s23, %s24
    %p28 = pneg %p22
    %p29 = scmp.eq.s32.totalorder %s13, 1
    %p30 = por %p28, %p29
    %p31 = scmp.ne.s32.totalorder %s23, %s26
    %p32 = scmp.eq.s32.totalorder %s13, 0
    %p33 = por %p31, %p32
    %p34 = scmp.ne.s32.totalorder %s23, %s26
    %p35 = scmp.eq.s32.totalorder %s18, 1
    %p36 = por %p34, %p35
    %p37 = scmp.ne.s32.totalorder %s26, %s27
    %p38 = scmp.eq.s32.totalorder %s18, 0
    %p39 = por %p37, %p38
    %p40 = scmp.ne.s32.totalorder %s26, %s27
    %p41 = scmp.eq.s32.totalorder %s19, 1
    %p42 = por %p40, %p41
    %p44 = scmp.ne.s32.totalorder %s27, %s43
    %p45 = scmp.eq.s32.totalorder %s19, 0
    %p46 = por %p44, %p45
    %s48 = sadd.s32 %s47, 1
    %p51 = scmp.eq.s32.totalorder %s13, 1
    %p52 = scmp.ne.s32.totalorder %s47, %s49
    %p53 = scmp.eq.s32.totalorder %s13, 0
    %p54 = por %p52, %p53
    %p55 = scmp.ne.s32.totalorder %s47, %s49
    %p56 = scmp.eq.s32.totalorder %s18, 1
    %p57 = por %p55, %p56
    %p58 = scmp.ne.s32.totalorder %s49, %s50
    %p59 = scmp.eq.s32.totalorder %s18, 0
    %p60 = por %p58, %p59
    %p61 = scmp.ne.s32.totalorder %s49, %s50
    %p62 = scmp.eq.s32.totalorder %s19, 1
    %p63 = por %p61, %p62
    %p65 = scmp.ne.s32.totalorder %s50, %s64
    %p66 = scmp.eq.s32.totalorder %s19, 0
    %p67 = por %p65, %p66
    %s69 = sadd.s32 %s68, 1
    %p72 = scmp.eq.s32.totalorder %s13, 1
    %p73 = scmp.ne.s32.totalorder %s68, %s70
    %p74 = scmp.eq.s32.totalorder %s13, 0
    %p75 = por %p73, %p74
    %p76 = scmp.ne.s32.totalorder %s68, %s70
    %p77 = scmp.eq.s32.totalorder %s18, 1
    %p78 = por %p76, %p77
    %p79 = scmp.ne.s32.totalorder %s70, %s71
    %p80 = scmp.eq.s32.totalorder %s18, 0
    %p81 = por %p79, %p80
    %p82 = scmp.ne.s32.totalorder %s70, %s71
    %p83 = scmp.eq.s32.totalorder %s19, 1
    %p84 = por %p82, %p83
    %p86 = scmp.ne.s32.totalorder %s71, %s85
    %p87 = scmp.eq.s32.totalorder %s19, 0
    %p88 = por %p86, %p87
    %s90 = sadd.s32 %s89, 1
    %p93 = scmp.eq.s32.totalorder %s13, 1
    %p94 = scmp.ne.s32.totalorder %s89, %s91
    %p95 = scmp.eq.s32.totalorder %s13, 0
    %p96 = por %p94, %p95
    %p97 = scmp.ne.s32.totalorder %s89, %s91
    %p98 = scmp.eq.s32.totalorder %s18, 1
    %p99 = por %p97, %p98
    %p100 = scmp.ne.s32.totalorder %s91, %s92
    %p101 = scmp.eq.s32.totalorder %s18, 0
    %p102 = por %p100, %p101
    %p103 = scmp.ne.s32.totalorder %s91, %s92
    %p104 = scmp.eq.s32.totalorder %s19, 1
    %p105 = por %p103, %p104
    %p107 = scmp.ne.s32.totalorder %s92, %s106
    %p108 = scmp.eq.s32.totalorder %s19, 0
    %p109 = por %p107, %p108
    %s111 = sadd.s32 %s110, 1
    %p114 = scmp.eq.s32.totalorder %s13, 1
    %p115 = scmp.ne.s32.totalorder %s110, %s112
    %p116 = scmp.eq.s32.totalorder %s13, 0
    %p117 = por %p115, %p116
    %p118 = scmp.ne.s32.totalorder %s110, %s112
    %p119 = scmp.eq.s32.totalorder %s18, 1
    %p120 = por %p118, %p119
    %p121 = scmp.ne.s32.totalorder %s112, %s113
    %p122 = scmp.eq.s32.totalorder %s18, 0
    %p123 = por %p121, %p122
    %p124 = scmp.ne.s32.totalorder %s112, %s113
    %p125 = scmp.eq.s32.totalorder %s19, 1
    %p126 = por %p124, %p125
    %p128 = scmp.ne.s32.totalorder %s113, %s127
    %p129 = scmp.eq.s32.totalorder %s19, 0
    %p130 = por %p128, %p129
    %s132 = sadd.s32 %s131, 1
    %p135 = scmp.eq.s32.totalorder %s13, 1
    %p136 = scmp.ne.s32.totalorder %s131, %s133
    %p137 = scmp.eq.s32.totalorder %s13, 0
    %p138 = por %p136, %p137
    %p139 = scmp.ne.s32.totalorder %s131, %s133
    %p140 = scmp.eq.s32.totalorder %s18, 1
    %p141 = por %p139, %p140
    %p142 = scmp.ne.s32.totalorder %s133, %s134
    %p143 = scmp.eq.s32.totalorder %s18, 0
    %p144 = por %p142, %p143
    %p145 = scmp.ne.s32.totalorder %s133, %s134
    %p146 = scmp.eq.s32.totalorder %s19, 1
    %p147 = por %p145, %p146
    %p149 = scmp.ne.s32.totalorder %s134, %s148
    %p150 = scmp.eq.s32.totalorder %s19, 0
    %p151 = por %p149, %p150
    %s153 = sadd.s32 %s152, 1
    %p156 = scmp.eq.s32.totalorder %s13, 1
    %p157 = scmp.ne.s32.totalorder %s152, %s154
    %p158 = scmp.eq.s32.totalorder %s13, 0
    %p159 = por %p157, %p158
    %p160 = scmp.ne.s32.totalorder %s152, %s154
    %p161 = scmp.eq.s32.totalorder %s18, 1
    %p162 = por %p160, %p161
    %p163 = scmp.ne.s32.totalorder %s154, %s155
    %p164 = scmp.eq.s32.totalorder %s18, 0
    %p165 = por %p163, %p164
    %p166 = scmp.ne.s32.totalorder %s154, %s155
    %p167 = scmp.eq.s32.totalorder %s19, 1
    %p168 = por %p166, %p167
    %p170 = scmp.ne.s32.totalorder %s155, %s169
    %p171 = scmp.eq.s32.totalorder %s19, 0
    %p172 = por %p170, %p171
    %s173 = ssub.s32 %s13, %s20
    %p174 = scmp.eq.s32.totalorder %s173, 0
    %s176 = sadd.s32 %s175, 1
    %s177 = scalar_select %p174, %s175, %s176
    %p180 = pneg %p174
    %p181 = scmp.eq.s32.totalorder %s13, 1
    %p182 = por %p180, %p181
    %p183 = scmp.ne.s32.totalorder %s175, %s178
    %p184 = scmp.eq.s32.totalorder %s13, 0
    %p185 = por %p183, %p184
    %p186 = scmp.ne.s32.totalorder %s175, %s178
    %p187 = scmp.eq.s32.totalorder %s18, 1
    %p188 = por %p186, %p187
    %p189 = scmp.ne.s32.totalorder %s178, %s179
    %p190 = scmp.eq.s32.totalorder %s18, 0
    %p191 = por %p189, %p190
    %p192 = scmp.ne.s32.totalorder %s178, %s179
    %p193 = scmp.eq.s32.totalorder %s19, 1
    %p194 = por %p192, %p193
    %p196 = scmp.ne.s32.totalorder %s179, %s195
    %p197 = scmp.eq.s32.totalorder %s19, 0
    %p198 = por %p196, %p197
    %p199 = scmp.le.s32.totalorder 1, %s13
    %p200 = scmp.lt.s32.totalorder %s13, 3
    %p201 = pnand %p199, %p200
    %p202 = pneg %p201
    // Predicated region
    $region9: #{cnn_forward.2} parent=5 // pred_check
      _
    $region10: #{cnn_forward.2} parent=5 // pred_check_branch
      %204 = sbr.rel (%p201) target = $region12
    $region11: #{cnn_forward.2} parent=5 // pred_region
      %s205 = ssub.s32 %s13, 1
      // Predicated region
      $region13: #{cnn_forward.2} parent=11 // pred_check
        %p206 = pneg %p60
      $region14: #{cnn_forward.2} parent=11 // pred_check_branch
        %208 = sbr.rel (%p206) target = $region16
      $region15: #{cnn_forward.2} parent=11 // pred_region
        _
      $region16: #{cnn_forward.2} parent=11 // pred_fallthru
        _
      // Predicated region
      $region17: #{cnn_forward.2} parent=11 // pred_check
        %p209 = pneg %p81
      $region18: #{cnn_forward.2} parent=11 // pred_check_branch
        %211 = sbr.rel (%p209) target = $region20
      $region19: #{cnn_forward.2} parent=11 // pred_region
        _
      $region20: #{cnn_forward.2} parent=11 // pred_fallthru
        _
      // Predicated region
      $region21: #{cnn_forward.2} parent=11 // pred_check
        %p212 = pneg %p102
      $region22: #{cnn_forward.2} parent=11 // pred_check_branch
        %214 = sbr.rel (%p212) target = $region24
      $region23: #{cnn_forward.2} parent=11 // pred_region
        _
      $region24: #{cnn_forward.2} parent=11 // pred_fallthru
        _
      // Predicated region
      $region25: #{cnn_forward.2} parent=11 // pred_check
        %p215 = pneg %p123
      $region26: #{cnn_forward.2} parent=11 // pred_check_branch
        %217 = sbr.rel (%p215) target = $region28
      $region27: #{cnn_forward.2} parent=11 // pred_region
        _
      $region28: #{cnn_forward.2} parent=11 // pred_fallthru
        _
      // Predicated region
      $region29: #{cnn_forward.2} parent=11 // pred_check
        %p218 = pneg %p144
      $region30: #{cnn_forward.2} parent=11 // pred_check_branch
        %220 = sbr.rel (%p218) target = $region32
      $region31: #{cnn_forward.2} parent=11 // pred_region
        _
      $region32: #{cnn_forward.2} parent=11 // pred_fallthru
        _
      // Predicated region
      $region33: #{cnn_forward.2} parent=11 // pred_check
        %p221 = pneg %p165
      $region34: #{cnn_forward.2} parent=11 // pred_check_branch
        %223 = sbr.rel (%p221) target = $region36
      $region35: #{cnn_forward.2} parent=11 // pred_region
        _
      $region36: #{cnn_forward.2} parent=11 // pred_fallthru
        _
    $region12: #{cnn_forward.2} parent=5 // pred_fallthru
      _
    %p224 = scmp.lt.s32.totalorder %s13, 2
    // Predicated region
    $region37: #{cnn_forward.2} parent=5 // pred_check
      %p225 = pneg %p224
    $region38: #{cnn_forward.2} parent=5 // pred_check_branch
      %227 = sbr.rel (%p225) target = $region40
    $region39: #{cnn_forward.2} parent=5 // pred_region
      // Predicated region
      $region41: #{cnn_forward.2} parent=39 // pred_check
        %p228 = pneg %p33
      $region42: #{cnn_forward.2} parent=39 // pred_check_branch
        %230 = sbr.rel (%p228) target = $region44
      $region43: #{cnn_forward.2} parent=39 // pred_region
        %p231 = scmp.lt.s32.totalorder %s13, 1
        %s232 = scalar_select %p231, %s13, 1
        %s233 = smul.addr %s232, 117
        %s234 = smul.addr %s233, 8
        %s235 = scalar_lea.vmem %s0, %s234
      $region44: #{cnn_forward.2} parent=39 // pred_fallthru
        _
    $region40: #{cnn_forward.2} parent=5 // pred_fallthru
      _
    %p236 = scmp.le.s32.totalorder 1, %s13
    %p237 = scmp.lt.s32.totalorder %s13, 3
    %p238 = pnand %p236, %p237
    %p239 = pneg %p238
    // Predicated region
    $region45: #{cnn_forward.2} parent=5 // pred_check
      _
    $region46: #{cnn_forward.2} parent=5 // pred_check_branch
      %241 = sbr.rel (%p238) target = $region48
    $region47: #{cnn_forward.2} parent=5 // pred_region
      %s242 = ssub.s32 %s13, 1
      %p243 = scmp.lt.s32.totalorder %s18, 1
      %s244 = scalar_select %p243, %s18, 1
      %s245 = smul.addr %s244, 117
      %s246 = smul.addr %s245, 8
      %s247 = scalar_lea.vmem %s0, %s246
      %p248 = pneg %p39
      %p249 = pneg %p36
      %p250 = pneg %p60
      %p251 = pneg %p57
      %p252 = pneg %p81
      %p253 = pneg %p78
      %p254 = pneg %p102
      %p255 = pneg %p99
      %p256 = pneg %p123
      %p257 = pneg %p120
      %p258 = pneg %p144
      %p259 = pneg %p141
      %p260 = pneg %p165
      %p261 = pneg %p162
      %p262 = pneg %p191
      %p263 = pneg %p188
      %p264 = scmp.lt.s32.totalorder %s18, 1
      %s265 = scalar_select %p264, %s18, 1
      %s266 = smul.addr %s265, 7
      %s267 = smul.addr %s266, 4
      %s268 = scalar_lea.vmem %s7, %s267
      %p269 = scmp.lt.s32.totalorder %s18, 1
      %s270 = scalar_select %p269, %s18, 1
      %s271 = smul.addr %s270, 117
      %s272 = smul.addr %s271, 8
      %s273 = scalar_lea.vmem %s0, %s272
      %p274 = scmp.lt.s32.totalorder %s18, 1
      %s275 = scalar_select %p274, %s18, 1
      %s276 = smul.addr %s275, 7
      %s277 = smul.addr %s276, 4
      %s278 = scalar_lea.vmem %s7, %s277
      %v280 = vld [vmem:[%s273] sm:$0xff]
      %v281 = vld [vmem:[%s273 + $0x8] sm:$0xff]
      %v282 = vld [vmem:[%s273 + $0x10] sm:$0xff]
      %v283 = vld [vmem:[%s273 + $0x18] sm:$0xff]
      %v284 = vld [vmem:[%s273 + $0x20] sm:$0xff]
      %v285 = vld [vmem:[%s273 + $0x28] sm:$0xff]
      %v286 = vld [vmem:[%s273 + $0x30] sm:$0xff]
      %v287 = vld [vmem:[%s273 + $0x38] sm:$0xff]
      %v288 = vld [vmem:[%s273 + $0x40] sm:$0xff]
      %v289 = vld [vmem:[%s273 + $0x48] sm:$0xff]
      %v290 = vld [vmem:[%s273 + $0x50] sm:$0xff]
      %v291 = vld [vmem:[%s273 + $0x58] sm:$0xff]
      %v292 = vld [vmem:[%s273 + $0x60] sm:$0xff]
      %v293 = vld [vmem:[%s273 + $0x68] sm:$0xff]
      %v294 = vld [vmem:[%s273 + $0x70] sm:$0xff]
      %v295 = vld [vmem:[%s273 + $0x78] sm:$0xff]
      %v296 = vld [vmem:[%s273 + $0x80] sm:$0xff]
      %v297 = vld [vmem:[%s273 + $0x88] sm:$0xff]
      %v298 = vld [vmem:[%s273 + $0x90] sm:$0xff]
      %v299 = vld [vmem:[%s273 + $0x98] sm:$0xff]
      %v300 = vld [vmem:[%s273 + $0xa0] sm:$0xff]
      %v301 = vld [vmem:[%s273 + $0xa8] sm:$0xff]
      %v302 = vld [vmem:[%s273 + $0xb0] sm:$0xff]
      %v303 = vld [vmem:[%s273 + $0xb8] sm:$0xff]
      %v304 = vld [vmem:[%s273 + $0xc0] sm:$0xff]
      %v305 = vld [vmem:[%s273 + $0xc8] sm:$0xff]
      %v306 = vld [vmem:[%s273 + $0xd0] sm:$0xff]
      %v307 = vld [vmem:[%s273 + $0xd8] sm:$0xff]
      %v308 = vld [vmem:[%s273 + $0xe0] sm:$0xff]
      %v309 = vld [vmem:[%s273 + $0xe8] sm:$0xff]
      %v310 = vld [vmem:[%s273 + $0xf0] sm:$0xff]
      %v311 = vld [vmem:[%s273 + $0xf8] sm:$0xff]
      %v312 = vld [vmem:[%s273 + $0x100] sm:$0xff]
      %v313 = vld [vmem:[%s273 + $0x108] sm:$0xff]
      %v314 = vld [vmem:[%s273 + $0x110] sm:$0xff]
      %v315 = vld [vmem:[%s273 + $0x118] sm:$0xff]
      %v316 = vld [vmem:[%s273 + $0x120] sm:$0xff]
      %v317 = vld [vmem:[%s273 + $0x128] sm:$0xff]
      %v318 = vld [vmem:[%s273 + $0x130] sm:$0xff]
      %v319 = vld [vmem:[%s273 + $0x138] sm:$0xff]
      %v320 = vld [vmem:[%s273 + $0x140] sm:$0xff]
      %v321 = vld [vmem:[%s273 + $0x148] sm:$0xff]
      %v322 = vld [vmem:[%s273 + $0x150] sm:$0xff]
      %v323 = vld [vmem:[%s273 + $0x158] sm:$0xff]
      %v324 = vld [vmem:[%s273 + $0x160] sm:$0xff]
      %v325 = vld [vmem:[%s273 + $0x168] sm:$0xff]
      %v326 = vld [vmem:[%s273 + $0x170] sm:$0xff]
      %v327 = vld [vmem:[%s273 + $0x178] sm:$0xff]
      %v328 = vld [vmem:[%s273 + $0x180] sm:$0xff]
      %v329 = vld [vmem:[%s273 + $0x188] sm:$0xff]
      %v330 = vld [vmem:[%s273 + $0x190] sm:$0xff]
      %v331 = vld [vmem:[%s273 + $0x198] sm:$0xff]
      %v332 = vld [vmem:[%s273 + $0x1a0] sm:$0xff]
      %v333 = vld [vmem:[%s273 + $0x1a8] sm:$0xff]
      %v334 = vld [vmem:[%s273 + $0x1b0] sm:$0xff]
      %v335 = vld [vmem:[%s273 + $0x1b8] sm:$0xff]
      %v336 = vld [vmem:[%s273 + $0x1c0] sm:$0xff]
      %v337 = vld [vmem:[%s273 + $0x1c8] sm:$0xff]
      %v338 = vld [vmem:[%s273 + $0x1d0] sm:$0xff]
      %v339 = vld [vmem:[%s273 + $0x1d8] sm:$0xff]
      %v340 = vld [vmem:[%s273 + $0x1e0] sm:$0xff]
      %v341 = vld [vmem:[%s273 + $0x1e8] sm:$0xff]
      %v342 = vld [vmem:[%s273 + $0x1f0] sm:$0xff]
      %v343 = vld [vmem:[%s273 + $0x1f8] sm:$0xff]
      %v344 = vld [vmem:[%s273 + $0x200] sm:$0xff]
      %v345 = vld [vmem:[%s273 + $0x208] sm:$0xff]
      %v346 = vld [vmem:[%s273 + $0x210] sm:$0xff]
      %v347 = vld [vmem:[%s273 + $0x218] sm:$0xff]
      %v348 = vld [vmem:[%s273 + $0x220] sm:$0xff]
      %v349 = vld [vmem:[%s273 + $0x228] sm:$0xff]
      %v350 = vld [vmem:[%s273 + $0x230] sm:$0xff]
      %v351 = vld [vmem:[%s273 + $0x238] sm:$0xff]
      %v352 = vld [vmem:[%s273 + $0x240] sm:$0xff]
      %v353 = vld [vmem:[%s273 + $0x248] sm:$0xff]
      %v354 = vld [vmem:[%s273 + $0x250] sm:$0xff]
      %v355 = vld [vmem:[%s273 + $0x258] sm:$0xff]
      %v356 = vld [vmem:[%s273 + $0x260] sm:$0xff]
      %v357 = vld [vmem:[%s273 + $0x268] sm:$0xff]
      %v358 = vld [vmem:[%s273 + $0x270] sm:$0xff]
      %v359 = vld [vmem:[%s273 + $0x278] sm:$0xff]
      %v360 = vld [vmem:[%s273 + $0x280] sm:$0xff]
      %v361 = vld [vmem:[%s273 + $0x288] sm:$0xff]
      %v362 = vld [vmem:[%s273 + $0x290] sm:$0xff]
      %v363 = vld [vmem:[%s273 + $0x298] sm:$0xff]
      %v364 = vld [vmem:[%s273 + $0x2a0] sm:$0xff]
      %v365 = vld [vmem:[%s273 + $0x2a8] sm:$0xff]
      %v366 = vld [vmem:[%s273 + $0x2b0] sm:$0xff]
      %v367 = vld [vmem:[%s273 + $0x2b8] sm:$0xff]
      %v368 = vld [vmem:[%s273 + $0x2c0] sm:$0xff]
      %v369 = vld [vmem:[%s273 + $0x2c8] sm:$0xff]
      %v370 = vld [vmem:[%s273 + $0x2d0] sm:$0xff]
      %v371 = vld [vmem:[%s273 + $0x2d8] sm:$0xff]
      %v372 = vld [vmem:[%s273 + $0x2e0] sm:$0xff]
      %v373 = vld [vmem:[%s273 + $0x2e8] sm:$0xff]
      %v374 = vld [vmem:[%s273 + $0x2f0] sm:$0xff]
      %v375 = vld [vmem:[%s273 + $0x2f8] sm:$0xff]
      %v376 = vld [vmem:[%s273 + $0x300] sm:$0xff]
      %v377 = vld [vmem:[%s273 + $0x308] sm:$0xff]
      %v378 = vld [vmem:[%s273 + $0x310] sm:$0xff]
      %v379 = vld [vmem:[%s273 + $0x318] sm:$0xff]
      %v380 = vld [vmem:[%s273 + $0x320] sm:$0xff]
      %v381 = vld [vmem:[%s273 + $0x328] sm:$0xff]
      %v382 = vld [vmem:[%s273 + $0x330] sm:$0xff]
      %v383 = vld [vmem:[%s273 + $0x338] sm:$0xff]
      %v384 = vld [vmem:[%s273 + $0x340] sm:$0xff]
      %v385 = vld [vmem:[%s273 + $0x348] sm:$0xff]
      %v386 = vld [vmem:[%s273 + $0x350] sm:$0xff]
      %v387 = vld [vmem:[%s273 + $0x358] sm:$0xff]
      %v388 = vld [vmem:[%s273 + $0x360] sm:$0xff]
      %v389 = vld [vmem:[%s273 + $0x368] sm:$0xff]
      %v390 = vld [vmem:[%s273 + $0x370] sm:$0xff]
      %v391 = vld [vmem:[%s273 + $0x378] sm:$0xff]
      %v392 = vld [vmem:[%s273 + $0x380] sm:$0xff]
      %v393 = vld [vmem:[%s1] sm:$0x1]
      %395 = vset.pattern.permute.xlu0 0
      %396 = vperm.xlu0 %395, %v280
      %v397 = vpop.permute.xlu0 %396
      %400 = vset.pattern.permute.xlu0 0
      %401 = vperm.xlu0 %400, %v281
      %v402 = vpop.permute.xlu0 %401
      %405 = vset.pattern.permute.xlu0 0
      %406 = vperm.xlu0 %405, %v282
      %v407 = vpop.permute.xlu0 %406
      %410 = vset.pattern.permute.xlu0 0
      %411 = vperm.xlu0 %410, %v283
      %v412 = vpop.permute.xlu0 %411
      %415 = vset.pattern.permute.xlu0 0
      %416 = vperm.xlu0 %415, %v284
      %v417 = vpop.permute.xlu0 %416
      %420 = vset.pattern.permute.xlu0 0
      %421 = vperm.xlu0 %420, %v285
      %v422 = vpop.permute.xlu0 %421
      %425 = vset.pattern.permute.xlu0 0
      %426 = vperm.xlu0 %425, %v286
      %v427 = vpop.permute.xlu0 %426
      %430 = vset.pattern.permute.xlu0 0
      %431 = vperm.xlu0 %430, %v287
      %v432 = vpop.permute.xlu0 %431
      %435 = vset.pattern.permute.xlu0 0
      %436 = vperm.xlu0 %435, %v288
      %v437 = vpop.permute.xlu0 %436
      %440 = vset.pattern.permute.xlu0 0
      %441 = vperm.xlu0 %440, %v289
      %v442 = vpop.permute.xlu0 %441
      %445 = vset.pattern.permute.xlu0 0
      %446 = vperm.xlu0 %445, %v290
      %v447 = vpop.permute.xlu0 %446
      %450 = vset.pattern.permute.xlu0 0
      %451 = vperm.xlu0 %450, %v291
      %v452 = vpop.permute.xlu0 %451
      %455 = vset.pattern.permute.xlu0 0
      %456 = vperm.xlu0 %455, %v292
      %v457 = vpop.permute.xlu0 %456
      %460 = vset.pattern.permute.xlu0 0
      %461 = vperm.xlu0 %460, %v293
      %v462 = vpop.permute.xlu0 %461
      %465 = vset.pattern.permute.xlu0 0
      %466 = vperm.xlu0 %465, %v294
      %v467 = vpop.permute.xlu0 %466
      %470 = vset.pattern.permute.xlu0 0
      %471 = vperm.xlu0 %470, %v295
      %v472 = vpop.permute.xlu0 %471
      %475 = vset.pattern.permute.xlu0 0
      %476 = vperm.xlu0 %475, %v296
      %v477 = vpop.permute.xlu0 %476
      %480 = vset.pattern.permute.xlu0 0
      %481 = vperm.xlu0 %480, %v297
      %v482 = vpop.permute.xlu0 %481
      %485 = vset.pattern.permute.xlu0 0
      %486 = vperm.xlu0 %485, %v298
      %v487 = vpop.permute.xlu0 %486
      %490 = vset.pattern.permute.xlu0 0
      %491 = vperm.xlu0 %490, %v299
      %v492 = vpop.permute.xlu0 %491
      %495 = vset.pattern.permute.xlu0 0
      %496 = vperm.xlu0 %495, %v300
      %v497 = vpop.permute.xlu0 %496
      %500 = vset.pattern.permute.xlu0 0
      %501 = vperm.xlu0 %500, %v301
      %v502 = vpop.permute.xlu0 %501
      %505 = vset.pattern.permute.xlu0 0
      %506 = vperm.xlu0 %505, %v302
      %v507 = vpop.permute.xlu0 %506
      %510 = vset.pattern.permute.xlu0 0
      %511 = vperm.xlu0 %510, %v303
      %v512 = vpop.permute.xlu0 %511
      %515 = vset.pattern.permute.xlu0 0
      %516 = vperm.xlu0 %515, %v304
      %v517 = vpop.permute.xlu0 %516
      %520 = vset.pattern.permute.xlu0 0
      %521 = vperm.xlu0 %520, %v305
      %v522 = vpop.permute.xlu0 %521
      %525 = vset.pattern.permute.xlu0 0
      %526 = vperm.xlu0 %525, %v306
      %v527 = vpop.permute.xlu0 %526
      %530 = vset.pattern.permute.xlu0 0
      %531 = vperm.xlu0 %530, %v307
      %v532 = vpop.permute.xlu0 %531
      %535 = vset.pattern.permute.xlu0 0
      %536 = vperm.xlu0 %535, %v308
      %v537 = vpop.permute.xlu0 %536
      %540 = vset.pattern.permute.xlu0 0
      %541 = vperm.xlu0 %540, %v309
      %v542 = vpop.permute.xlu0 %541
      %545 = vset.pattern.permute.xlu0 0
      %546 = vperm.xlu0 %545, %v310
      %v547 = vpop.permute.xlu0 %546
      %550 = vset.pattern.permute.xlu0 0
      %551 = vperm.xlu0 %550, %v311
      %v552 = vpop.permute.xlu0 %551
      %555 = vset.pattern.permute.xlu0 0
      %556 = vperm.xlu0 %555, %v312
      %v557 = vpop.permute.xlu0 %556
      %560 = vset.pattern.permute.xlu0 0
      %561 = vperm.xlu0 %560, %v313
      %v562 = vpop.permute.xlu0 %561
      %565 = vset.pattern.permute.xlu0 0
      %566 = vperm.xlu0 %565, %v314
      %v567 = vpop.permute.xlu0 %566
      %570 = vset.pattern.permute.xlu0 0
      %571 = vperm.xlu0 %570, %v315
      %v572 = vpop.permute.xlu0 %571
      %575 = vset.pattern.permute.xlu0 0
      %576 = vperm.xlu0 %575, %v316
      %v577 = vpop.permute.xlu0 %576
      %580 = vset.pattern.permute.xlu0 0
      %581 = vperm.xlu0 %580, %v317
      %v582 = vpop.permute.xlu0 %581
      %585 = vset.pattern.permute.xlu0 0
      %586 = vperm.xlu0 %585, %v318
      %v587 = vpop.permute.xlu0 %586
      %590 = vset.pattern.permute.xlu0 0
      %591 = vperm.xlu0 %590, %v319
      %v592 = vpop.permute.xlu0 %591
      %595 = vset.pattern.permute.xlu0 0
      %596 = vperm.xlu0 %595, %v320
      %v597 = vpop.permute.xlu0 %596
      %600 = vset.pattern.permute.xlu0 0
      %601 = vperm.xlu0 %600, %v321
      %v602 = vpop.permute.xlu0 %601
      %605 = vset.pattern.permute.xlu0 0
      %606 = vperm.xlu0 %605, %v322
      %v607 = vpop.permute.xlu0 %606
      %610 = vset.pattern.permute.xlu0 0
      %611 = vperm.xlu0 %610, %v323
      %v612 = vpop.permute.xlu0 %611
      %615 = vset.pattern.permute.xlu0 0
      %616 = vperm.xlu0 %615, %v324
      %v617 = vpop.permute.xlu0 %616
      %620 = vset.pattern.permute.xlu0 0
      %621 = vperm.xlu0 %620, %v325
      %v622 = vpop.permute.xlu0 %621
      %625 = vset.pattern.permute.xlu0 0
      %626 = vperm.xlu0 %625, %v326
      %v627 = vpop.permute.xlu0 %626
      %630 = vset.pattern.permute.xlu0 0
      %631 = vperm.xlu0 %630, %v327
      %v632 = vpop.permute.xlu0 %631
      %635 = vset.pattern.permute.xlu0 0
      %636 = vperm.xlu0 %635, %v328
      %v637 = vpop.permute.xlu0 %636
      %640 = vset.pattern.permute.xlu0 0
      %641 = vperm.xlu0 %640, %v329
      %v642 = vpop.permute.xlu0 %641
      %645 = vset.pattern.permute.xlu0 0
      %646 = vperm.xlu0 %645, %v330
      %v647 = vpop.permute.xlu0 %646
      %650 = vset.pattern.permute.xlu0 0
      %651 = vperm.xlu0 %650, %v331
      %v652 = vpop.permute.xlu0 %651
      %655 = vset.pattern.permute.xlu0 0
      %656 = vperm.xlu0 %655, %v332
      %v657 = vpop.permute.xlu0 %656
      %660 = vset.pattern.permute.xlu0 0
      %661 = vperm.xlu0 %660, %v333
      %v662 = vpop.permute.xlu0 %661
      %665 = vset.pattern.permute.xlu0 0
      %666 = vperm.xlu0 %665, %v334
      %v667 = vpop.permute.xlu0 %666
      %670 = vset.pattern.permute.xlu0 0
      %671 = vperm.xlu0 %670, %v335
      %v672 = vpop.permute.xlu0 %671
      %675 = vset.pattern.permute.xlu0 0
      %676 = vperm.xlu0 %675, %v336
      %v677 = vpop.permute.xlu0 %676
      %680 = vset.pattern.permute.xlu0 0
      %681 = vperm.xlu0 %680, %v337
      %v682 = vpop.permute.xlu0 %681
      %685 = vset.pattern.permute.xlu0 0
      %686 = vperm.xlu0 %685, %v338
      %v687 = vpop.permute.xlu0 %686
      %690 = vset.pattern.permute.xlu0 0
      %691 = vperm.xlu0 %690, %v339
      %v692 = vpop.permute.xlu0 %691
      %695 = vset.pattern.permute.xlu0 0
      %696 = vperm.xlu0 %695, %v340
      %v697 = vpop.permute.xlu0 %696
      %700 = vset.pattern.permute.xlu0 0
      %701 = vperm.xlu0 %700, %v341
      %v702 = vpop.permute.xlu0 %701
      %705 = vset.pattern.permute.xlu0 0
      %706 = vperm.xlu0 %705, %v342
      %v707 = vpop.permute.xlu0 %706
      %710 = vset.pattern.permute.xlu0 0
      %711 = vperm.xlu0 %710, %v343
      %v712 = vpop.permute.xlu0 %711
      %715 = vset.pattern.permute.xlu0 0
      %716 = vperm.xlu0 %715, %v344
      %v717 = vpop.permute.xlu0 %716
      %720 = vset.pattern.permute.xlu0 0
      %721 = vperm.xlu0 %720, %v345
      %v722 = vpop.permute.xlu0 %721
      %725 = vset.pattern.permute.xlu0 0
      %726 = vperm.xlu0 %725, %v346
      %v727 = vpop.permute.xlu0 %726
      %730 = vset.pattern.permute.xlu0 0
      %731 = vperm.xlu0 %730, %v347
      %v732 = vpop.permute.xlu0 %731
      %735 = vset.pattern.permute.xlu0 0
      %736 = vperm.xlu0 %735, %v348
      %v737 = vpop.permute.xlu0 %736
      %740 = vset.pattern.permute.xlu0 0
      %741 = vperm.xlu0 %740, %v349
      %v742 = vpop.permute.xlu0 %741
      %745 = vset.pattern.permute.xlu0 0
      %746 = vperm.xlu0 %745, %v350
      %v747 = vpop.permute.xlu0 %746
      %750 = vset.pattern.permute.xlu0 0
      %751 = vperm.xlu0 %750, %v351
      %v752 = vpop.permute.xlu0 %751
      %755 = vset.pattern.permute.xlu0 0
      %756 = vperm.xlu0 %755, %v352
      %v757 = vpop.permute.xlu0 %756
      %760 = vset.pattern.permute.xlu0 0
      %761 = vperm.xlu0 %760, %v353
      %v762 = vpop.permute.xlu0 %761
      %765 = vset.pattern.permute.xlu0 0
      %766 = vperm.xlu0 %765, %v354
      %v767 = vpop.permute.xlu0 %766
      %770 = vset.pattern.permute.xlu0 0
      %771 = vperm.xlu0 %770, %v355
      %v772 = vpop.permute.xlu0 %771
      %775 = vset.pattern.permute.xlu0 0
      %776 = vperm.xlu0 %775, %v356
      %v777 = vpop.permute.xlu0 %776
      %780 = vset.pattern.permute.xlu0 0
      %781 = vperm.xlu0 %780, %v357
      %v782 = vpop.permute.xlu0 %781
      %785 = vset.pattern.permute.xlu0 0
      %786 = vperm.xlu0 %785, %v358
      %v787 = vpop.permute.xlu0 %786
      %790 = vset.pattern.permute.xlu0 0
      %791 = vperm.xlu0 %790, %v359
      %v792 = vpop.permute.xlu0 %791
      %795 = vset.pattern.permute.xlu0 0
      %796 = vperm.xlu0 %795, %v360
      %v797 = vpop.permute.xlu0 %796
      %800 = vset.pattern.permute.xlu0 0
      %801 = vperm.xlu0 %800, %v361
      %v802 = vpop.permute.xlu0 %801
      %805 = vset.pattern.permute.xlu0 0
      %806 = vperm.xlu0 %805, %v362
      %v807 = vpop.permute.xlu0 %806
      %810 = vset.pattern.permute.xlu0 0
      %811 = vperm.xlu0 %810, %v363
      %v812 = vpop.permute.xlu0 %811
      %815 = vset.pattern.permute.xlu0 0
      %816 = vperm.xlu0 %815, %v364
      %v817 = vpop.permute.xlu0 %816
      %820 = vset.pattern.permute.xlu0 0
      %821 = vperm.xlu0 %820, %v365
      %v822 = vpop.permute.xlu0 %821
      %825 = vset.pattern.permute.xlu0 0
      %826 = vperm.xlu0 %825, %v366
      %v827 = vpop.permute.xlu0 %826
      %830 = vset.pattern.permute.xlu0 0
      %831 = vperm.xlu0 %830, %v367
      %v832 = vpop.permute.xlu0 %831
      %835 = vset.pattern.permute.xlu0 0
      %836 = vperm.xlu0 %835, %v368
      %v837 = vpop.permute.xlu0 %836
      %840 = vset.pattern.permute.xlu0 0
      %841 = vperm.xlu0 %840, %v369
      %v842 = vpop.permute.xlu0 %841
      %845 = vset.pattern.permute.xlu0 0
      %846 = vperm.xlu0 %845, %v370
      %v847 = vpop.permute.xlu0 %846
      %850 = vset.pattern.permute.xlu0 0
      %851 = vperm.xlu0 %850, %v371
      %v852 = vpop.permute.xlu0 %851
      %855 = vset.pattern.permute.xlu0 0
      %856 = vperm.xlu0 %855, %v372
      %v857 = vpop.permute.xlu0 %856
      %860 = vset.pattern.permute.xlu0 0
      %861 = vperm.xlu0 %860, %v373
      %v862 = vpop.permute.xlu0 %861
      %865 = vset.pattern.permute.xlu0 0
      %866 = vperm.xlu0 %865, %v374
      %v867 = vpop.permute.xlu0 %866
      %870 = vset.pattern.permute.xlu0 0
      %871 = vperm.xlu0 %870, %v375
      %v872 = vpop.permute.xlu0 %871
      %875 = vset.pattern.permute.xlu0 0
      %876 = vperm.xlu0 %875, %v376
      %v877 = vpop.permute.xlu0 %876
      %880 = vset.pattern.permute.xlu0 0
      %881 = vperm.xlu0 %880, %v377
      %v882 = vpop.permute.xlu0 %881
      %885 = vset.pattern.permute.xlu0 0
      %886 = vperm.xlu0 %885, %v378
      %v887 = vpop.permute.xlu0 %886
      %890 = vset.pattern.permute.xlu0 0
      %891 = vperm.xlu0 %890, %v379
      %v892 = vpop.permute.xlu0 %891
      %895 = vset.pattern.permute.xlu0 0
      %896 = vperm.xlu0 %895, %v380
      %v897 = vpop.permute.xlu0 %896
      %900 = vset.pattern.permute.xlu0 0
      %901 = vperm.xlu0 %900, %v381
      %v902 = vpop.permute.xlu0 %901
      %905 = vset.pattern.permute.xlu0 0
      %906 = vperm.xlu0 %905, %v382
      %v907 = vpop.permute.xlu0 %906
      %910 = vset.pattern.permute.xlu0 0
      %911 = vperm.xlu0 %910, %v383
      %v912 = vpop.permute.xlu0 %911
      %915 = vset.pattern.permute.xlu0 0
      %916 = vperm.xlu0 %915, %v384
      %v917 = vpop.permute.xlu0 %916
      %v920 = vlaneseq
      %v921 = vshrl.u32 %v920, 7
      %v922 = vsub.s32 0, %v921
      %v923 = vrot.slane %v393, %v922
      %v925 = vmul.f32 %v397, %v923
      %v926 = vmul.f32 %v402, %v923
      %v927 = vmul.f32 %v407, %v923
      %v928 = vmul.f32 %v412, %v923
      %v929 = vmul.f32 %v417, %v923
      %v930 = vmul.f32 %v422, %v923
      %v931 = vmul.f32 %v427, %v923
      %v932 = vmul.f32 %v432, %v923
      %v933 = vmul.f32 %v437, %v923
      %v934 = vmul.f32 %v442, %v923
      %v935 = vmul.f32 %v447, %v923
      %v936 = vmul.f32 %v452, %v923
      %v937 = vmul.f32 %v457, %v923
      %v938 = vmul.f32 %v462, %v923
      %v939 = vmul.f32 %v467, %v923
      %v940 = vmul.f32 %v472, %v923
      %v941 = vmul.f32 %v477, %v923
      %v942 = vmul.f32 %v482, %v923
      %v943 = vmul.f32 %v487, %v923
      %v944 = vmul.f32 %v492, %v923
      %v945 = vmul.f32 %v497, %v923
      %v946 = vmul.f32 %v502, %v923
      %v947 = vmul.f32 %v507, %v923
      %v948 = vmul.f32 %v512, %v923
      %v949 = vmul.f32 %v517, %v923
      %v950 = vmul.f32 %v522, %v923
      %v951 = vmul.f32 %v527, %v923
      %v952 = vmul.f32 %v532, %v923
      %v953 = vmul.f32 %v537, %v923
      %v954 = vmul.f32 %v542, %v923
      %v955 = vmul.f32 %v547, %v923
      %v956 = vmul.f32 %v552, %v923
      %v957 = vmul.f32 %v557, %v923
      %v958 = vmul.f32 %v562, %v923
      %v959 = vmul.f32 %v567, %v923
      %v960 = vmul.f32 %v572, %v923
      %v961 = vmul.f32 %v577, %v923
      %v962 = vmul.f32 %v582, %v923
      %v963 = vmul.f32 %v587, %v923
      %v964 = vmul.f32 %v592, %v923
      %v965 = vmul.f32 %v597, %v923
      %v966 = vmul.f32 %v602, %v923
      %v967 = vmul.f32 %v607, %v923
      %v968 = vmul.f32 %v612, %v923
      %v969 = vmul.f32 %v617, %v923
      %v970 = vmul.f32 %v622, %v923
      %v971 = vmul.f32 %v627, %v923
      %v972 = vmul.f32 %v632, %v923
      %v973 = vmul.f32 %v637, %v923
      %v974 = vmul.f32 %v642, %v923
      %v975 = vmul.f32 %v647, %v923
      %v976 = vmul.f32 %v652, %v923
      %v977 = vmul.f32 %v657, %v923
      %v978 = vmul.f32 %v662, %v923
      %v979 = vmul.f32 %v667, %v923
      %v980 = vmul.f32 %v672, %v923
      %v981 = vmul.f32 %v677, %v923
      %v982 = vmul.f32 %v682, %v923
      %v983 = vmul.f32 %v687, %v923
      %v984 = vmul.f32 %v692, %v923
      %v985 = vmul.f32 %v697, %v923
      %v986 = vmul.f32 %v702, %v923
      %v987 = vmul.f32 %v707, %v923
      %v988 = vmul.f32 %v712, %v923
      %v989 = vmul.f32 %v717, %v923
      %v990 = vmul.f32 %v722, %v923
      %v991 = vmul.f32 %v727, %v923
      %v992 = vmul.f32 %v732, %v923
      %v993 = vmul.f32 %v737, %v923
      %v994 = vmul.f32 %v742, %v923
      %v995 = vmul.f32 %v747, %v923
      %v996 = vmul.f32 %v752, %v923
      %v997 = vmul.f32 %v757, %v923
      %v998 = vmul.f32 %v762, %v923
      %v999 = vmul.f32 %v767, %v923
      %v1000 = vmul.f32 %v772, %v923
      %v1001 = vmul.f32 %v777, %v923
      %v1002 = vmul.f32 %v782, %v923
      %v1003 = vmul.f32 %v787, %v923
      %v1004 = vmul.f32 %v792, %v923
      %v1005 = vmul.f32 %v797, %v923
      %v1006 = vmul.f32 %v802, %v923
      %v1007 = vmul.f32 %v807, %v923
      %v1008 = vmul.f32 %v812, %v923
      %v1009 = vmul.f32 %v817, %v923
      %v1010 = vmul.f32 %v822, %v923
      %v1011 = vmul.f32 %v827, %v923
      %v1012 = vmul.f32 %v832, %v923
      %v1013 = vmul.f32 %v837, %v923
      %v1014 = vmul.f32 %v842, %v923
      %v1015 = vmul.f32 %v847, %v923
      %v1016 = vmul.f32 %v852, %v923
      %v1017 = vmul.f32 %v857, %v923
      %v1018 = vmul.f32 %v862, %v923
      %v1019 = vmul.f32 %v867, %v923
      %v1020 = vmul.f32 %v872, %v923
      %v1021 = vmul.f32 %v877, %v923
      %v1022 = vmul.f32 %v882, %v923
      %v1023 = vmul.f32 %v887, %v923
      %v1024 = vmul.f32 %v892, %v923
      %v1025 = vmul.f32 %v897, %v923
      %v1026 = vmul.f32 %v902, %v923
      %v1027 = vmul.f32 %v907, %v923
      %v1028 = vmul.f32 %v912, %v923
      %v1029 = vmul.f32 %v917, %v923
      %v1030 = vadd.f32 %v925, 0.0
      %v1031 = vadd.f32 %v926, 0.0
      %v1032 = vadd.f32 %v927, 0.0
      %v1033 = vadd.f32 %v928, 0.0
      %v1034 = vadd.f32 %v929, 0.0
      %v1035 = vadd.f32 %v930, 0.0
      %v1036 = vadd.f32 %v931, 0.0
      %v1037 = vadd.f32 %v932, 0.0
      %v1038 = vadd.f32 %v933, 0.0
      %v1039 = vadd.f32 %v934, 0.0
      %v1040 = vadd.f32 %v935, 0.0
      %v1041 = vadd.f32 %v936, 0.0
      %v1042 = vadd.f32 %v937, 0.0
      %v1043 = vadd.f32 %v938, 0.0
      %v1044 = vadd.f32 %v939, 0.0
      %v1045 = vadd.f32 %v940, 0.0
      %v1046 = vadd.f32 %v941, 0.0
      %v1047 = vadd.f32 %v942, 0.0
      %v1048 = vadd.f32 %v943, 0.0
      %v1049 = vadd.f32 %v944, 0.0
      %v1050 = vadd.f32 %v945, 0.0
      %v1051 = vadd.f32 %v946, 0.0
      %v1052 = vadd.f32 %v947, 0.0
      %v1053 = vadd.f32 %v948, 0.0
      %v1054 = vadd.f32 %v949, 0.0
      %v1055 = vadd.f32 %v950, 0.0
      %v1056 = vadd.f32 %v951, 0.0
      %v1057 = vadd.f32 %v952, 0.0
      %v1058 = vadd.f32 %v953, 0.0
      %v1059 = vadd.f32 %v954, 0.0
      %v1060 = vadd.f32 %v955, 0.0
      %v1061 = vadd.f32 %v956, 0.0
      %v1062 = vadd.f32 %v957, 0.0
      %v1063 = vadd.f32 %v958, 0.0
      %v1064 = vadd.f32 %v959, 0.0
      %v1065 = vadd.f32 %v960, 0.0
      %v1066 = vadd.f32 %v961, 0.0
      %v1067 = vadd.f32 %v962, 0.0
      %v1068 = vadd.f32 %v963, 0.0
      %v1069 = vadd.f32 %v964, 0.0
      %v1070 = vadd.f32 %v965, 0.0
      %v1071 = vadd.f32 %v966, 0.0
      %v1072 = vadd.f32 %v967, 0.0
      %v1073 = vadd.f32 %v968, 0.0
      %v1074 = vadd.f32 %v969, 0.0
      %v1075 = vadd.f32 %v970, 0.0
      %v1076 = vadd.f32 %v971, 0.0
      %v1077 = vadd.f32 %v972, 0.0
      %v1078 = vadd.f32 %v973, 0.0
      %v1079 = vadd.f32 %v974, 0.0
      %v1080 = vadd.f32 %v975, 0.0
      %v1081 = vadd.f32 %v976, 0.0
      %v1082 = vadd.f32 %v977, 0.0
      %v1083 = vadd.f32 %v978, 0.0
      %v1084 = vadd.f32 %v979, 0.0
      %v1085 = vadd.f32 %v980, 0.0
      %v1086 = vadd.f32 %v981, 0.0
      %v1087 = vadd.f32 %v982, 0.0
      %v1088 = vadd.f32 %v983, 0.0
      %v1089 = vadd.f32 %v984, 0.0
      %v1090 = vadd.f32 %v985, 0.0
      %v1091 = vadd.f32 %v986, 0.0
      %v1092 = vadd.f32 %v987, 0.0
      %v1093 = vadd.f32 %v988, 0.0
      %v1094 = vadd.f32 %v989, 0.0
      %v1095 = vadd.f32 %v990, 0.0
      %v1096 = vadd.f32 %v991, 0.0
      %v1097 = vadd.f32 %v992, 0.0
      %v1098 = vadd.f32 %v993, 0.0
      %v1099 = vadd.f32 %v994, 0.0
      %v1100 = vadd.f32 %v995, 0.0
      %v1101 = vadd.f32 %v996, 0.0
      %v1102 = vadd.f32 %v997, 0.0
      %v1103 = vadd.f32 %v998, 0.0
      %v1104 = vadd.f32 %v999, 0.0
      %v1105 = vadd.f32 %v1000, 0.0
      %v1106 = vadd.f32 %v1001, 0.0
      %v1107 = vadd.f32 %v1002, 0.0
      %v1108 = vadd.f32 %v1003, 0.0
      %v1109 = vadd.f32 %v1004, 0.0
      %v1110 = vadd.f32 %v1005, 0.0
      %v1111 = vadd.f32 %v1006, 0.0
      %v1112 = vadd.f32 %v1007, 0.0
      %v1113 = vadd.f32 %v1008, 0.0
      %v1114 = vadd.f32 %v1009, 0.0
      %v1115 = vadd.f32 %v1010, 0.0
      %v1116 = vadd.f32 %v1011, 0.0
      %v1117 = vadd.f32 %v1012, 0.0
      %v1118 = vadd.f32 %v1013, 0.0
      %v1119 = vadd.f32 %v1014, 0.0
      %v1120 = vadd.f32 %v1015, 0.0
      %v1121 = vadd.f32 %v1016, 0.0
      %v1122 = vadd.f32 %v1017, 0.0
      %v1123 = vadd.f32 %v1018, 0.0
      %v1124 = vadd.f32 %v1019, 0.0
      %v1125 = vadd.f32 %v1020, 0.0
      %v1126 = vadd.f32 %v1021, 0.0
      %v1127 = vadd.f32 %v1022, 0.0
      %v1128 = vadd.f32 %v1023, 0.0
      %v1129 = vadd.f32 %v1024, 0.0
      %v1130 = vadd.f32 %v1025, 0.0
      %v1131 = vadd.f32 %v1026, 0.0
      %v1132 = vadd.f32 %v1027, 0.0
      %v1133 = vadd.f32 %v1028, 0.0
      %v1134 = vadd.f32 %v1029, 0.0
      %s1135 = scalar_lea.vmem %s1, 1
      %v1136 = vld [vmem:[%s1135] sm:$0x1]
      %1138 = vset.pattern.permute.xlu0 0
      %1139 = vperm.xlu0 %1138, %v385
      %v1140 = vpop.permute.xlu0 %1139
      %v1143 = vlaneseq
      %v1144 = vshrl.u32 %v1143, 7
      %v1145 = vsub.s32 0, %v1144
      %v1146 = vrot.slane %v1136, %v1145
      %v1148 = vmul.f32 %v397, %v1146
      %v1149 = vmul.f32 %v402, %v1146
      %v1150 = vmul.f32 %v407, %v1146
      %v1151 = vmul.f32 %v412, %v1146
      %v1152 = vmul.f32 %v417, %v1146
      %v1153 = vmul.f32 %v422, %v1146
      %v1154 = vmul.f32 %v427, %v1146
      %v1155 = vmul.f32 %v432, %v1146
      %v1156 = vmul.f32 %v437, %v1146
      %v1157 = vmul.f32 %v442, %v1146
      %v1158 = vmul.f32 %v447, %v1146
      %v1159 = vmul.f32 %v452, %v1146
      %v1160 = vmul.f32 %v457, %v1146
      %v1161 = vmul.f32 %v462, %v1146
      %v1162 = vmul.f32 %v467, %v1146
      %v1163 = vmul.f32 %v472, %v1146
      %v1164 = vmul.f32 %v477, %v1146
      %v1165 = vmul.f32 %v482, %v1146
      %v1166 = vmul.f32 %v487, %v1146
      %v1167 = vmul.f32 %v492, %v1146
      %v1168 = vmul.f32 %v497, %v1146
      %v1169 = vmul.f32 %v502, %v1146
      %v1170 = vmul.f32 %v507, %v1146
      %v1171 = vmul.f32 %v512, %v1146
      %v1172 = vmul.f32 %v517, %v1146
      %v1173 = vmul.f32 %v522, %v1146
      %v1174 = vmul.f32 %v527, %v1146
      %v1175 = vmul.f32 %v532, %v1146
      %v1176 = vmul.f32 %v537, %v1146
      %v1177 = vmul.f32 %v542, %v1146
      %v1178 = vmul.f32 %v547, %v1146
      %v1179 = vmul.f32 %v552, %v1146
      %v1180 = vmul.f32 %v557, %v1146
      %v1181 = vmul.f32 %v562, %v1146
      %v1182 = vmul.f32 %v567, %v1146
      %v1183 = vmul.f32 %v572, %v1146
      %v1184 = vmul.f32 %v577, %v1146
      %v1185 = vmul.f32 %v582, %v1146
      %v1186 = vmul.f32 %v587, %v1146
      %v1187 = vmul.f32 %v592, %v1146
      %v1188 = vmul.f32 %v597, %v1146
      %v1189 = vmul.f32 %v602, %v1146
      %v1190 = vmul.f32 %v607, %v1146
      %v1191 = vmul.f32 %v612, %v1146
      %v1192 = vmul.f32 %v617, %v1146
      %v1193 = vmul.f32 %v622, %v1146
      %v1194 = vmul.f32 %v627, %v1146
      %v1195 = vmul.f32 %v632, %v1146
      %v1196 = vmul.f32 %v637, %v1146
      %v1197 = vmul.f32 %v642, %v1146
      %v1198 = vmul.f32 %v647, %v1146
      %v1199 = vmul.f32 %v652, %v1146
      %v1200 = vmul.f32 %v657, %v1146
      %v1201 = vmul.f32 %v662, %v1146
      %v1202 = vmul.f32 %v667, %v1146
      %v1203 = vmul.f32 %v672, %v1146
      %v1204 = vmul.f32 %v677, %v1146
      %v1205 = vmul.f32 %v682, %v1146
      %v1206 = vmul.f32 %v687, %v1146
      %v1207 = vmul.f32 %v692, %v1146
      %v1208 = vmul.f32 %v697, %v1146
      %v1209 = vmul.f32 %v702, %v1146
      %v1210 = vmul.f32 %v707, %v1146
      %v1211 = vmul.f32 %v712, %v1146
      %v1212 = vmul.f32 %v717, %v1146
      %v1213 = vmul.f32 %v722, %v1146
      %v1214 = vmul.f32 %v727, %v1146
      %v1215 = vmul.f32 %v732, %v1146
      %v1216 = vmul.f32 %v737, %v1146
      %v1217 = vmul.f32 %v742, %v1146
      %v1218 = vmul.f32 %v747, %v1146
      %v1219 = vmul.f32 %v752, %v1146
      %v1220 = vmul.f32 %v757, %v1146
      %v1221 = vmul.f32 %v762, %v1146
      %v1222 = vmul.f32 %v767, %v1146
      %v1223 = vmul.f32 %v772, %v1146
      %v1224 = vmul.f32 %v777, %v1146
      %v1225 = vmul.f32 %v782, %v1146
      %v1226 = vmul.f32 %v787, %v1146
      %v1227 = vmul.f32 %v792, %v1146
      %v1228 = vmul.f32 %v797, %v1146
      %v1229 = vmul.f32 %v802, %v1146
      %v1230 = vmul.f32 %v807, %v1146
      %v1231 = vmul.f32 %v812, %v1146
      %v1232 = vmul.f32 %v817, %v1146
      %v1233 = vmul.f32 %v822, %v1146
      %v1234 = vmul.f32 %v827, %v1146
      %v1235 = vmul.f32 %v832, %v1146
      %v1236 = vmul.f32 %v837, %v1146
      %v1237 = vmul.f32 %v842, %v1146
      %v1238 = vmul.f32 %v847, %v1146
      %v1239 = vmul.f32 %v852, %v1146
      %v1240 = vmul.f32 %v857, %v1146
      %v1241 = vmul.f32 %v862, %v1146
      %v1242 = vmul.f32 %v867, %v1146
      %v1243 = vmul.f32 %v872, %v1146
      %v1244 = vmul.f32 %v877, %v1146
      %v1245 = vmul.f32 %v882, %v1146
      %v1246 = vmul.f32 %v887, %v1146
      %v1247 = vmul.f32 %v892, %v1146
      %v1248 = vmul.f32 %v897, %v1146
      %v1249 = vmul.f32 %v902, %v1146
      %v1250 = vmul.f32 %v907, %v1146
      %v1251 = vmul.f32 %v912, %v1146
      %v1252 = vmul.f32 %v917, %v1146
      %v1253 = vmul.f32 %v1140, %v1146
      %vm1360 = vcmask 1046528
      %v1361 = vrot.slane %v1148, 1
      %v1362 = vrot.slane %v1149, 1
      %v1363 = vsel %vm1360, %v1361, %v1362
      %v1364 = vrot.slane %v1150, 1
      %v1365 = vsel %vm1360, %v1362, %v1364
      %v1366 = vrot.slane %v1151, 1
      %v1367 = vsel %vm1360, %v1364, %v1366
      %v1368 = vrot.slane %v1152, 1
      %v1369 = vsel %vm1360, %v1366, %v1368
      %v1370 = vrot.slane %v1153, 1
      %v1371 = vsel %vm1360, %v1368, %v1370
      %v1372 = vrot.slane %v1154, 1
      %v1373 = vsel %vm1360, %v1370, %v1372
      %v1374 = vrot.slane %v1155, 1
      %v1375 = vsel %vm1360, %v1372, %v1374
      %v1376 = vrot.slane %v1156, 1
      %v1377 = vsel %vm1360, %v1374, %v1376
      %v1378 = vrot.slane %v1157, 1
      %v1379 = vsel %vm1360, %v1376, %v1378
      %v1380 = vrot.slane %v1158, 1
      %v1381 = vsel %vm1360, %v1378, %v1380
      %v1382 = vrot.slane %v1159, 1
      %v1383 = vsel %vm1360, %v1380, %v1382
      %v1384 = vrot.slane %v1160, 1
      %v1385 = vsel %vm1360, %v1382, %v1384
      %v1386 = vrot.slane %v1161, 1
      %v1387 = vsel %vm1360, %v1384, %v1386
      %v1388 = vrot.slane %v1162, 1
      %v1389 = vsel %vm1360, %v1386, %v1388
      %v1390 = vrot.slane %v1163, 1
      %v1391 = vsel %vm1360, %v1388, %v1390
      %v1392 = vrot.slane %v1164, 1
      %v1393 = vsel %vm1360, %v1390, %v1392
      %v1394 = vrot.slane %v1165, 1
      %v1395 = vsel %vm1360, %v1392, %v1394
      %v1396 = vrot.slane %v1166, 1
      %v1397 = vsel %vm1360, %v1394, %v1396
      %v1398 = vrot.slane %v1167, 1
      %v1399 = vsel %vm1360, %v1396, %v1398
      %v1400 = vrot.slane %v1168, 1
      %v1401 = vsel %vm1360, %v1398, %v1400
      %v1402 = vrot.slane %v1169, 1
      %v1403 = vsel %vm1360, %v1400, %v1402
      %v1404 = vrot.slane %v1170, 1
      %v1405 = vsel %vm1360, %v1402, %v1404
      %v1406 = vrot.slane %v1171, 1
      %v1407 = vsel %vm1360, %v1404, %v1406
      %v1408 = vrot.slane %v1172, 1
      %v1409 = vsel %vm1360, %v1406, %v1408
      %v1410 = vrot.slane %v1173, 1
      %v1411 = vsel %vm1360, %v1408, %v1410
      %v1412 = vrot.slane %v1174, 1
      %v1413 = vsel %vm1360, %v1410, %v1412
      %v1414 = vrot.slane %v1175, 1
      %v1415 = vsel %vm1360, %v1412, %v1414
      %v1416 = vrot.slane %v1176, 1
      %v1417 = vsel %vm1360, %v1414, %v1416
      %v1418 = vrot.slane %v1177, 1
      %v1419 = vsel %vm1360, %v1416, %v1418
      %v1420 = vrot.slane %v1178, 1
      %v1421 = vsel %vm1360, %v1418, %v1420
      %v1422 = vrot.slane %v1179, 1
      %v1423 = vsel %vm1360, %v1420, %v1422
      %v1424 = vrot.slane %v1180, 1
      %v1425 = vsel %vm1360, %v1422, %v1424
      %v1426 = vrot.slane %v1181, 1
      %v1427 = vsel %vm1360, %v1424, %v1426
      %v1428 = vrot.slane %v1182, 1
      %v1429 = vsel %vm1360, %v1426, %v1428
      %v1430 = vrot.slane %v1183, 1
      %v1431 = vsel %vm1360, %v1428, %v1430
      %v1432 = vrot.slane %v1184, 1
      %v1433 = vsel %vm1360, %v1430, %v1432
      %v1434 = vrot.slane %v1185, 1
      %v1435 = vsel %vm1360, %v1432, %v1434
      %v1436 = vrot.slane %v1186, 1
      %v1437 = vsel %vm1360, %v1434, %v1436
      %v1438 = vrot.slane %v1187, 1
      %v1439 = vsel %vm1360, %v1436, %v1438
      %v1440 = vrot.slane %v1188, 1
      %v1441 = vsel %vm1360, %v1438, %v1440
      %v1442 = vrot.slane %v1189, 1
      %v1443 = vsel %vm1360, %v1440, %v1442
      %v1444 = vrot.slane %v1190, 1
      %v1445 = vsel %vm1360, %v1442, %v1444
      %v1446 = vrot.slane %v1191, 1
      %v1447 = vsel %vm1360, %v1444, %v1446
      %v1448 = vrot.slane %v1192, 1
      %v1449 = vsel %vm1360, %v1446, %v1448
      %v1450 = vrot.slane %v1193, 1
      %v1451 = vsel %vm1360, %v1448, %v1450
      %v1452 = vrot.slane %v1194, 1
      %v1453 = vsel %vm1360, %v1450, %v1452
      %v1454 = vrot.slane %v1195, 1
      %v1455 = vsel %vm1360, %v1452, %v1454
      %v1456 = vrot.slane %v1196, 1
      %v1457 = vsel %vm1360, %v1454, %v1456
      %v1458 = vrot.slane %v1197, 1
      %v1459 = vsel %vm1360, %v1456, %v1458
      %v1460 = vrot.slane %v1198, 1
      %v1461 = vsel %vm1360, %v1458, %v1460
      %v1462 = vrot.slane %v1199, 1
      %v1463 = vsel %vm1360, %v1460, %v1462
      %v1464 = vrot.slane %v1200, 1
      %v1465 = vsel %vm1360, %v1462, %v1464
      %v1466 = vrot.slane %v1201, 1
      %v1467 = vsel %vm1360, %v1464, %v1466
      %v1468 = vrot.slane %v1202, 1
      %v1469 = vsel %vm1360, %v1466, %v1468
      %v1470 = vrot.slane %v1203, 1
      %v1471 = vsel %vm1360, %v1468, %v1470
      %v1472 = vrot.slane %v1204, 1
      %v1473 = vsel %vm1360, %v1470, %v1472
      %v1474 = vrot.slane %v1205, 1
      %v1475 = vsel %vm1360, %v1472, %v1474
      %v1476 = vrot.slane %v1206, 1
      %v1477 = vsel %vm1360, %v1474, %v1476
      %v1478 = vrot.slane %v1207, 1
      %v1479 = vsel %vm1360, %v1476, %v1478
      %v1480 = vrot.slane %v1208, 1
      %v1481 = vsel %vm1360, %v1478, %v1480
      %v1482 = vrot.slane %v1209, 1
      %v1483 = vsel %vm1360, %v1480, %v1482
      %v1484 = vrot.slane %v1210, 1
      %v1485 = vsel %vm1360, %v1482, %v1484
      %v1486 = vrot.slane %v1211, 1
      %v1487 = vsel %vm1360, %v1484, %v1486
      %v1488 = vrot.slane %v1212, 1
      %v1489 = vsel %vm1360, %v1486, %v1488
      %v1490 = vrot.slane %v1213, 1
      %v1491 = vsel %vm1360, %v1488, %v1490
      %v1492 = vrot.slane %v1214, 1
      %v1493 = vsel %vm1360, %v1490, %v1492
      %v1494 = vrot.slane %v1215, 1
      %v1495 = vsel %vm1360, %v1492, %v1494
      %v1496 = vrot.slane %v1216, 1
      %v1497 = vsel %vm1360, %v1494, %v1496
      %v1498 = vrot.slane %v1217, 1
      %v1499 = vsel %vm1360, %v1496, %v1498
      %v1500 = vrot.slane %v1218, 1
      %v1501 = vsel %vm1360, %v1498, %v1500
      %v1502 = vrot.slane %v1219, 1
      %v1503 = vsel %vm1360, %v1500, %v1502
      %v1504 = vrot.slane %v1220, 1
      %v1505 = vsel %vm1360, %v1502, %v1504
      %v1506 = vrot.slane %v1221, 1
      %v1507 = vsel %vm1360, %v1504, %v1506
      %v1508 = vrot.slane %v1222, 1
      %v1509 = vsel %vm1360, %v1506, %v1508
      %v1510 = vrot.slane %v1223, 1
      %v1511 = vsel %vm1360, %v1508, %v1510
      %v1512 = vrot.slane %v1224, 1
      %v1513 = vsel %vm1360, %v1510, %v1512
      %v1514 = vrot.slane %v1225, 1
      %v1515 = vsel %vm1360, %v1512, %v1514
      %v1516 = vrot.slane %v1226, 1
      %v1517 = vsel %vm1360, %v1514, %v1516
      %v1518 = vrot.slane %v1227, 1
      %v1519 = vsel %vm1360, %v1516, %v1518
      %v1520 = vrot.slane %v1228, 1
      %v1521 = vsel %vm1360, %v1518, %v1520
      %v1522 = vrot.slane %v1229, 1
      %v1523 = vsel %vm1360, %v1520, %v1522
      %v1524 = vrot.slane %v1230, 1
      %v1525 = vsel %vm1360, %v1522, %v1524
      %v1526 = vrot.slane %v1231, 1
      %v1527 = vsel %vm1360, %v1524, %v1526
      %v1528 = vrot.slane %v1232, 1
      %v1529 = vsel %vm1360, %v1526, %v1528
      %v1530 = vrot.slane %v1233, 1
      %v1531 = vsel %vm1360, %v1528, %v1530
      %v1532 = vrot.slane %v1234, 1
      %v1533 = vsel %vm1360, %v1530, %v1532
      %v1534 = vrot.slane %v1235, 1
      %v1535 = vsel %vm1360, %v1532, %v1534
      %v1536 = vrot.slane %v1236, 1
      %v1537 = vsel %vm1360, %v1534, %v1536
      %v1538 = vrot.slane %v1237, 1
      %v1539 = vsel %vm1360, %v1536, %v1538
      %v1540 = vrot.slane %v1238, 1
      %v1541 = vsel %vm1360, %v1538, %v1540
      %v1542 = vrot.slane %v1239, 1
      %v1543 = vsel %vm1360, %v1540, %v1542
      %v1544 = vrot.slane %v1240, 1
      %v1545 = vsel %vm1360, %v1542, %v1544
      %v1546 = vrot.slane %v1241, 1
      %v1547 = vsel %vm1360, %v1544, %v1546
      %v1548 = vrot.slane %v1242, 1
      %v1549 = vsel %vm1360, %v1546, %v1548
      %v1550 = vrot.slane %v1243, 1
      %v1551 = vsel %vm1360, %v1548, %v1550
      %v1552 = vrot.slane %v1244, 1
      %v1553 = vsel %vm1360, %v1550, %v1552
      %v1554 = vrot.slane %v1245, 1
      %v1555 = vsel %vm1360, %v1552, %v1554
      %v1556 = vrot.slane %v1246, 1
      %v1557 = vsel %vm1360, %v1554, %v1556
      %v1558 = vrot.slane %v1247, 1
      %v1559 = vsel %vm1360, %v1556, %v1558
      %v1560 = vrot.slane %v1248, 1
      %v1561 = vsel %vm1360, %v1558, %v1560
      %v1562 = vrot.slane %v1249, 1
      %v1563 = vsel %vm1360, %v1560, %v1562
      %v1564 = vrot.slane %v1250, 1
      %v1565 = vsel %vm1360, %v1562, %v1564
      %v1566 = vrot.slane %v1251, 1
      %v1567 = vsel %vm1360, %v1564, %v1566
      %v1568 = vrot.slane %v1252, 1
      %v1569 = vsel %vm1360, %v1566, %v1568
      %v1570 = vrot.slane %v1253, 1
      %v1571 = vsel %vm1360, %v1568, %v1570
      %v1677 = vadd.f32 %v1030, %v1363
      %v1678 = vadd.f32 %v1031, %v1365
      %v1679 = vadd.f32 %v1032, %v1367
      %v1680 = vadd.f32 %v1033, %v1369
      %v1681 = vadd.f32 %v1034, %v1371
      %v1682 = vadd.f32 %v1035, %v1373
      %v1683 = vadd.f32 %v1036, %v1375
      %v1684 = vadd.f32 %v1037, %v1377
      %v1685 = vadd.f32 %v1038, %v1379
      %v1686 = vadd.f32 %v1039, %v1381
      %v1687 = vadd.f32 %v1040, %v1383
      %v1688 = vadd.f32 %v1041, %v1385
      %v1689 = vadd.f32 %v1042, %v1387
      %v1690 = vadd.f32 %v1043, %v1389
      %v1691 = vadd.f32 %v1044, %v1391
      %v1692 = vadd.f32 %v1045, %v1393
      %v1693 = vadd.f32 %v1046, %v1395
      %v1694 = vadd.f32 %v1047, %v1397
      %v1695 = vadd.f32 %v1048, %v1399
      %v1696 = vadd.f32 %v1049, %v1401
      %v1697 = vadd.f32 %v1050, %v1403
      %v1698 = vadd.f32 %v1051, %v1405
      %v1699 = vadd.f32 %v1052, %v1407
      %v1700 = vadd.f32 %v1053, %v1409
      %v1701 = vadd.f32 %v1054, %v1411
      %v1702 = vadd.f32 %v1055, %v1413
      %v1703 = vadd.f32 %v1056, %v1415
      %v1704 = vadd.f32 %v1057, %v1417
      %v1705 = vadd.f32 %v1058, %v1419
      %v1706 = vadd.f32 %v1059, %v1421
      %v1707 = vadd.f32 %v1060, %v1423
      %v1708 = vadd.f32 %v1061, %v1425
      %v1709 = vadd.f32 %v1062, %v1427
      %v1710 = vadd.f32 %v1063, %v1429
      %v1711 = vadd.f32 %v1064, %v1431
      %v1712 = vadd.f32 %v1065, %v1433
      %v1713 = vadd.f32 %v1066, %v1435
      %v1714 = vadd.f32 %v1067, %v1437
      %v1715 = vadd.f32 %v1068, %v1439
      %v1716 = vadd.f32 %v1069, %v1441
      %v1717 = vadd.f32 %v1070, %v1443
      %v1718 = vadd.f32 %v1071, %v1445
      %v1719 = vadd.f32 %v1072, %v1447
      %v1720 = vadd.f32 %v1073, %v1449
      %v1721 = vadd.f32 %v1074, %v1451
      %v1722 = vadd.f32 %v1075, %v1453
      %v1723 = vadd.f32 %v1076, %v1455
      %v1724 = vadd.f32 %v1077, %v1457
      %v1725 = vadd.f32 %v1078, %v1459
      %v1726 = vadd.f32 %v1079, %v1461
      %v1727 = vadd.f32 %v1080, %v1463
      %v1728 = vadd.f32 %v1081, %v1465
      %v1729 = vadd.f32 %v1082, %v1467
      %v1730 = vadd.f32 %v1083, %v1469
      %v1731 = vadd.f32 %v1084, %v1471
      %v1732 = vadd.f32 %v1085, %v1473
      %v1733 = vadd.f32 %v1086, %v1475
      %v1734 = vadd.f32 %v1087, %v1477
      %v1735 = vadd.f32 %v1088, %v1479
      %v1736 = vadd.f32 %v1089, %v1481
      %v1737 = vadd.f32 %v1090, %v1483
      %v1738 = vadd.f32 %v1091, %v1485
      %v1739 = vadd.f32 %v1092, %v1487
      %v1740 = vadd.f32 %v1093, %v1489
      %v1741 = vadd.f32 %v1094, %v1491
      %v1742 = vadd.f32 %v1095, %v1493
      %v1743 = vadd.f32 %v1096, %v1495
      %v1744 = vadd.f32 %v1097, %v1497
      %v1745 = vadd.f32 %v1098, %v1499
      %v1746 = vadd.f32 %v1099, %v1501
      %v1747 = vadd.f32 %v1100, %v1503
      %v1748 = vadd.f32 %v1101, %v1505
      %v1749 = vadd.f32 %v1102, %v1507
      %v1750 = vadd.f32 %v1103, %v1509
      %v1751 = vadd.f32 %v1104, %v1511
      %v1752 = vadd.f32 %v1105, %v1513
      %v1753 = vadd.f32 %v1106, %v1515
      %v1754 = vadd.f32 %v1107, %v1517
      %v1755 = vadd.f32 %v1108, %v1519
      %v1756 = vadd.f32 %v1109, %v1521
      %v1757 = vadd.f32 %v1110, %v1523
      %v1758 = vadd.f32 %v1111, %v1525
      %v1759 = vadd.f32 %v1112, %v1527
      %v1760 = vadd.f32 %v1113, %v1529
      %v1761 = vadd.f32 %v1114, %v1531
      %v1762 = vadd.f32 %v1115, %v1533
      %v1763 = vadd.f32 %v1116, %v1535
      %v1764 = vadd.f32 %v1117, %v1537
      %v1765 = vadd.f32 %v1118, %v1539
      %v1766 = vadd.f32 %v1119, %v1541
      %v1767 = vadd.f32 %v1120, %v1543
      %v1768 = vadd.f32 %v1121, %v1545
      %v1769 = vadd.f32 %v1122, %v1547
      %v1770 = vadd.f32 %v1123, %v1549
      %v1771 = vadd.f32 %v1124, %v1551
      %v1772 = vadd.f32 %v1125, %v1553
      %v1773 = vadd.f32 %v1126, %v1555
      %v1774 = vadd.f32 %v1127, %v1557
      %v1775 = vadd.f32 %v1128, %v1559
      %v1776 = vadd.f32 %v1129, %v1561
      %v1777 = vadd.f32 %v1130, %v1563
      %v1778 = vadd.f32 %v1131, %v1565
      %v1779 = vadd.f32 %v1132, %v1567
      %v1780 = vadd.f32 %v1133, %v1569
      %v1781 = vadd.f32 %v1134, %v1571
      %s1782 = scalar_lea.vmem %s1, 2
      %v1783 = vld [vmem:[%s1782] sm:$0x1]
      %v1785 = vlaneseq
      %v1786 = vshrl.u32 %v1785, 7
      %v1787 = vsub.s32 0, %v1786
      %v1788 = vrot.slane %v1783, %v1787
      %v1790 = vmul.f32 %v397, %v1788
      %v1791 = vmul.f32 %v402, %v1788
      %v1792 = vmul.f32 %v407, %v1788
      %v1793 = vmul.f32 %v412, %v1788
      %v1794 = vmul.f32 %v417, %v1788
      %v1795 = vmul.f32 %v422, %v1788
      %v1796 = vmul.f32 %v427, %v1788
      %v1797 = vmul.f32 %v432, %v1788
      %v1798 = vmul.f32 %v437, %v1788
      %v1799 = vmul.f32 %v442, %v1788
      %v1800 = vmul.f32 %v447, %v1788
      %v1801 = vmul.f32 %v452, %v1788
      %v1802 = vmul.f32 %v457, %v1788
      %v1803 = vmul.f32 %v462, %v1788
      %v1804 = vmul.f32 %v467, %v1788
      %v1805 = vmul.f32 %v472, %v1788
      %v1806 = vmul.f32 %v477, %v1788
      %v1807 = vmul.f32 %v482, %v1788
      %v1808 = vmul.f32 %v487, %v1788
      %v1809 = vmul.f32 %v492, %v1788
      %v1810 = vmul.f32 %v497, %v1788
      %v1811 = vmul.f32 %v502, %v1788
      %v1812 = vmul.f32 %v507, %v1788
      %v1813 = vmul.f32 %v512, %v1788
      %v1814 = vmul.f32 %v517, %v1788
      %v1815 = vmul.f32 %v522, %v1788
      %v1816 = vmul.f32 %v527, %v1788
      %v1817 = vmul.f32 %v532, %v1788
      %v1818 = vmul.f32 %v537, %v1788
      %v1819 = vmul.f32 %v542, %v1788
      %v1820 = vmul.f32 %v547, %v1788
      %v1821 = vmul.f32 %v552, %v1788
      %v1822 = vmul.f32 %v557, %v1788
      %v1823 = vmul.f32 %v562, %v1788
      %v1824 = vmul.f32 %v567, %v1788
      %v1825 = vmul.f32 %v572, %v1788
      %v1826 = vmul.f32 %v577, %v1788
      %v1827 = vmul.f32 %v582, %v1788
      %v1828 = vmul.f32 %v587, %v1788
      %v1829 = vmul.f32 %v592, %v1788
      %v1830 = vmul.f32 %v597, %v1788
      %v1831 = vmul.f32 %v602, %v1788
      %v1832 = vmul.f32 %v607, %v1788
      %v1833 = vmul.f32 %v612, %v1788
      %v1834 = vmul.f32 %v617, %v1788
      %v1835 = vmul.f32 %v622, %v1788
      %v1836 = vmul.f32 %v627, %v1788
      %v1837 = vmul.f32 %v632, %v1788
      %v1838 = vmul.f32 %v637, %v1788
      %v1839 = vmul.f32 %v642, %v1788
      %v1840 = vmul.f32 %v647, %v1788
      %v1841 = vmul.f32 %v652, %v1788
      %v1842 = vmul.f32 %v657, %v1788
      %v1843 = vmul.f32 %v662, %v1788
      %v1844 = vmul.f32 %v667, %v1788
      %v1845 = vmul.f32 %v672, %v1788
      %v1846 = vmul.f32 %v677, %v1788
      %v1847 = vmul.f32 %v682, %v1788
      %v1848 = vmul.f32 %v687, %v1788
      %v1849 = vmul.f32 %v692, %v1788
      %v1850 = vmul.f32 %v697, %v1788
      %v1851 = vmul.f32 %v702, %v1788
      %v1852 = vmul.f32 %v707, %v1788
      %v1853 = vmul.f32 %v712, %v1788
      %v1854 = vmul.f32 %v717, %v1788
      %v1855 = vmul.f32 %v722, %v1788
      %v1856 = vmul.f32 %v727, %v1788
      %v1857 = vmul.f32 %v732, %v1788
      %v1858 = vmul.f32 %v737, %v1788
      %v1859 = vmul.f32 %v742, %v1788
      %v1860 = vmul.f32 %v747, %v1788
      %v1861 = vmul.f32 %v752, %v1788
      %v1862 = vmul.f32 %v757, %v1788
      %v1863 = vmul.f32 %v762, %v1788
      %v1864 = vmul.f32 %v767, %v1788
      %v1865 = vmul.f32 %v772, %v1788
      %v1866 = vmul.f32 %v777, %v1788
      %v1867 = vmul.f32 %v782, %v1788
      %v1868 = vmul.f32 %v787, %v1788
      %v1869 = vmul.f32 %v792, %v1788
      %v1870 = vmul.f32 %v797, %v1788
      %v1871 = vmul.f32 %v802, %v1788
      %v1872 = vmul.f32 %v807, %v1788
      %v1873 = vmul.f32 %v812, %v1788
      %v1874 = vmul.f32 %v817, %v1788
      %v1875 = vmul.f32 %v822, %v1788
      %v1876 = vmul.f32 %v827, %v1788
      %v1877 = vmul.f32 %v832, %v1788
      %v1878 = vmul.f32 %v837, %v1788
      %v1879 = vmul.f32 %v842, %v1788
      %v1880 = vmul.f32 %v847, %v1788
      %v1881 = vmul.f32 %v852, %v1788
      %v1882 = vmul.f32 %v857, %v1788
      %v1883 = vmul.f32 %v862, %v1788
      %v1884 = vmul.f32 %v867, %v1788
      %v1885 = vmul.f32 %v872, %v1788
      %v1886 = vmul.f32 %v877, %v1788
      %v1887 = vmul.f32 %v882, %v1788
      %v1888 = vmul.f32 %v887, %v1788
      %v1889 = vmul.f32 %v892, %v1788
      %v1890 = vmul.f32 %v897, %v1788
      %v1891 = vmul.f32 %v902, %v1788
      %v1892 = vmul.f32 %v907, %v1788
      %v1893 = vmul.f32 %v912, %v1788
      %v1894 = vmul.f32 %v917, %v1788
      %v1895 = vmul.f32 %v1140, %v1788
      %vm2002 = vcmask 1045504
      %v2003 = vrot.slane %v1790, 2
      %v2004 = vrot.slane %v1791, 2
      %v2005 = vsel %vm2002, %v2003, %v2004
      %v2006 = vrot.slane %v1792, 2
      %v2007 = vsel %vm2002, %v2004, %v2006
      %v2008 = vrot.slane %v1793, 2
      %v2009 = vsel %vm2002, %v2006, %v2008
      %v2010 = vrot.slane %v1794, 2
      %v2011 = vsel %vm2002, %v2008, %v2010
      %v2012 = vrot.slane %v1795, 2
      %v2013 = vsel %vm2002, %v2010, %v2012
      %v2014 = vrot.slane %v1796, 2
      %v2015 = vsel %vm2002, %v2012, %v2014
      %v2016 = vrot.slane %v1797, 2
      %v2017 = vsel %vm2002, %v2014, %v2016
      %v2018 = vrot.slane %v1798, 2
      %v2019 = vsel %vm2002, %v2016, %v2018
      %v2020 = vrot.slane %v1799, 2
      %v2021 = vsel %vm2002, %v2018, %v2020
      %v2022 = vrot.slane %v1800, 2
      %v2023 = vsel %vm2002, %v2020, %v2022
      %v2024 = vrot.slane %v1801, 2
      %v2025 = vsel %vm2002, %v2022, %v2024
      %v2026 = vrot.slane %v1802, 2
      %v2027 = vsel %vm2002, %v2024, %v2026
      %v2028 = vrot.slane %v1803, 2
      %v2029 = vsel %vm2002, %v2026, %v2028
      %v2030 = vrot.slane %v1804, 2
      %v2031 = vsel %vm2002, %v2028, %v2030
      %v2032 = vrot.slane %v1805, 2
      %v2033 = vsel %vm2002, %v2030, %v2032
      %v2034 = vrot.slane %v1806, 2
      %v2035 = vsel %vm2002, %v2032, %v2034
      %v2036 = vrot.slane %v1807, 2
      %v2037 = vsel %vm2002, %v2034, %v2036
      %v2038 = vrot.slane %v1808, 2
      %v2039 = vsel %vm2002, %v2036, %v2038
      %v2040 = vrot.slane %v1809, 2
      %v2041 = vsel %vm2002, %v2038, %v2040
      %v2042 = vrot.slane %v1810, 2
      %v2043 = vsel %vm2002, %v2040, %v2042
      %v2044 = vrot.slane %v1811, 2
      %v2045 = vsel %vm2002, %v2042, %v2044
      %v2046 = vrot.slane %v1812, 2
      %v2047 = vsel %vm2002, %v2044, %v2046
      %v2048 = vrot.slane %v1813, 2
      %v2049 = vsel %vm2002, %v2046, %v2048
      %v2050 = vrot.slane %v1814, 2
      %v2051 = vsel %vm2002, %v2048, %v2050
      %v2052 = vrot.slane %v1815, 2
      %v2053 = vsel %vm2002, %v2050, %v2052
      %v2054 = vrot.slane %v1816, 2
      %v2055 = vsel %vm2002, %v2052, %v2054
      %v2056 = vrot.slane %v1817, 2
      %v2057 = vsel %vm2002, %v2054, %v2056
      %v2058 = vrot.slane %v1818, 2
      %v2059 = vsel %vm2002, %v2056, %v2058
      %v2060 = vrot.slane %v1819, 2
      %v2061 = vsel %vm2002, %v2058, %v2060
      %v2062 = vrot.slane %v1820, 2
      %v2063 = vsel %vm2002, %v2060, %v2062
      %v2064 = vrot.slane %v1821, 2
      %v2065 = vsel %vm2002, %v2062, %v2064
      %v2066 = vrot.slane %v1822, 2
      %v2067 = vsel %vm2002, %v2064, %v2066
      %v2068 = vrot.slane %v1823, 2
      %v2069 = vsel %vm2002, %v2066, %v2068
      %v2070 = vrot.slane %v1824, 2
      %v2071 = vsel %vm2002, %v2068, %v2070
      %v2072 = vrot.slane %v1825, 2
      %v2073 = vsel %vm2002, %v2070, %v2072
      %v2074 = vrot.slane %v1826, 2
      %v2075 = vsel %vm2002, %v2072, %v2074
      %v2076 = vrot.slane %v1827, 2
      %v2077 = vsel %vm2002, %v2074, %v2076
      %v2078 = vrot.slane %v1828, 2
      %v2079 = vsel %vm2002, %v2076, %v2078
      %v2080 = vrot.slane %v1829, 2
      %v2081 = vsel %vm2002, %v2078, %v2080
      %v2082 = vrot.slane %v1830, 2
      %v2083 = vsel %vm2002, %v2080, %v2082
      %v2084 = vrot.slane %v1831, 2
      %v2085 = vsel %vm2002, %v2082, %v2084
      %v2086 = vrot.slane %v1832, 2
      %v2087 = vsel %vm2002, %v2084, %v2086
      %v2088 = vrot.slane %v1833, 2
      %v2089 = vsel %vm2002, %v2086, %v2088
      %v2090 = vrot.slane %v1834, 2
      %v2091 = vsel %vm2002, %v2088, %v2090
      %v2092 = vrot.slane %v1835, 2
      %v2093 = vsel %vm2002, %v2090, %v2092
      %v2094 = vrot.slane %v1836, 2
      %v2095 = vsel %vm2002, %v2092, %v2094
      %v2096 = vrot.slane %v1837, 2
      %v2097 = vsel %vm2002, %v2094, %v2096
      %v2098 = vrot.slane %v1838, 2
      %v2099 = vsel %vm2002, %v2096, %v2098
      %v2100 = vrot.slane %v1839, 2
      %v2101 = vsel %vm2002, %v2098, %v2100
      %v2102 = vrot.slane %v1840, 2
      %v2103 = vsel %vm2002, %v2100, %v2102
      %v2104 = vrot.slane %v1841, 2
      %v2105 = vsel %vm2002, %v2102, %v2104
      %v2106 = vrot.slane %v1842, 2
      %v2107 = vsel %vm2002, %v2104, %v2106
      %v2108 = vrot.slane %v1843, 2
      %v2109 = vsel %vm2002, %v2106, %v2108
      %v2110 = vrot.slane %v1844, 2
      %v2111 = vsel %vm2002, %v2108, %v2110
      %v2112 = vrot.slane %v1845, 2
      %v2113 = vsel %vm2002, %v2110, %v2112
      %v2114 = vrot.slane %v1846, 2
      %v2115 = vsel %vm2002, %v2112, %v2114
      %v2116 = vrot.slane %v1847, 2
      %v2117 = vsel %vm2002, %v2114, %v2116
      %v2118 = vrot.slane %v1848, 2
      %v2119 = vsel %vm2002, %v2116, %v2118
      %v2120 = vrot.slane %v1849, 2
      %v2121 = vsel %vm2002, %v2118, %v2120
      %v2122 = vrot.slane %v1850, 2
      %v2123 = vsel %vm2002, %v2120, %v2122
      %v2124 = vrot.slane %v1851, 2
      %v2125 = vsel %vm2002, %v2122, %v2124
      %v2126 = vrot.slane %v1852, 2
      %v2127 = vsel %vm2002, %v2124, %v2126
      %v2128 = vrot.slane %v1853, 2
      %v2129 = vsel %vm2002, %v2126, %v2128
      %v2130 = vrot.slane %v1854, 2
      %v2131 = vsel %vm2002, %v2128, %v2130
      %v2132 = vrot.slane %v1855, 2
      %v2133 = vsel %vm2002, %v2130, %v2132
      %v2134 = vrot.slane %v1856, 2
      %v2135 = vsel %vm2002, %v2132, %v2134
      %v2136 = vrot.slane %v1857, 2
      %v2137 = vsel %vm2002, %v2134, %v2136
      %v2138 = vrot.slane %v1858, 2
      %v2139 = vsel %vm2002, %v2136, %v2138
      %v2140 = vrot.slane %v1859, 2
      %v2141 = vsel %vm2002, %v2138, %v2140
      %v2142 = vrot.slane %v1860, 2
      %v2143 = vsel %vm2002, %v2140, %v2142
      %v2144 = vrot.slane %v1861, 2
      %v2145 = vsel %vm2002, %v2142, %v2144
      %v2146 = vrot.slane %v1862, 2
      %v2147 = vsel %vm2002, %v2144, %v2146
      %v2148 = vrot.slane %v1863, 2
      %v2149 = vsel %vm2002, %v2146, %v2148
      %v2150 = vrot.slane %v1864, 2
      %v2151 = vsel %vm2002, %v2148, %v2150
      %v2152 = vrot.slane %v1865, 2
      %v2153 = vsel %vm2002, %v2150, %v2152
      %v2154 = vrot.slane %v1866, 2
      %v2155 = vsel %vm2002, %v2152, %v2154
      %v2156 = vrot.slane %v1867, 2
      %v2157 = vsel %vm2002, %v2154, %v2156
      %v2158 = vrot.slane %v1868, 2
      %v2159 = vsel %vm2002, %v2156, %v2158
      %v2160 = vrot.slane %v1869, 2
      %v2161 = vsel %vm2002, %v2158, %v2160
      %v2162 = vrot.slane %v1870, 2
      %v2163 = vsel %vm2002, %v2160, %v2162
      %v2164 = vrot.slane %v1871, 2
      %v2165 = vsel %vm2002, %v2162, %v2164
      %v2166 = vrot.slane %v1872, 2
      %v2167 = vsel %vm2002, %v2164, %v2166
      %v2168 = vrot.slane %v1873, 2
      %v2169 = vsel %vm2002, %v2166, %v2168
      %v2170 = vrot.slane %v1874, 2
      %v2171 = vsel %vm2002, %v2168, %v2170
      %v2172 = vrot.slane %v1875, 2
      %v2173 = vsel %vm2002, %v2170, %v2172
      %v2174 = vrot.slane %v1876, 2
      %v2175 = vsel %vm2002, %v2172, %v2174
      %v2176 = vrot.slane %v1877, 2
      %v2177 = vsel %vm2002, %v2174, %v2176
      %v2178 = vrot.slane %v1878, 2
      %v2179 = vsel %vm2002, %v2176, %v2178
      %v2180 = vrot.slane %v1879, 2
      %v2181 = vsel %vm2002, %v2178, %v2180
      %v2182 = vrot.slane %v1880, 2
      %v2183 = vsel %vm2002, %v2180, %v2182
      %v2184 = vrot.slane %v1881, 2
      %v2185 = vsel %vm2002, %v2182, %v2184
      %v2186 = vrot.slane %v1882, 2
      %v2187 = vsel %vm2002, %v2184, %v2186
      %v2188 = vrot.slane %v1883, 2
      %v2189 = vsel %vm2002, %v2186, %v2188
      %v2190 = vrot.slane %v1884, 2
      %v2191 = vsel %vm2002, %v2188, %v2190
      %v2192 = vrot.slane %v1885, 2
      %v2193 = vsel %vm2002, %v2190, %v2192
      %v2194 = vrot.slane %v1886, 2
      %v2195 = vsel %vm2002, %v2192, %v2194
      %v2196 = vrot.slane %v1887, 2
      %v2197 = vsel %vm2002, %v2194, %v2196
      %v2198 = vrot.slane %v1888, 2
      %v2199 = vsel %vm2002, %v2196, %v2198
      %v2200 = vrot.slane %v1889, 2
      %v2201 = vsel %vm2002, %v2198, %v2200
      %v2202 = vrot.slane %v1890, 2
      %v2203 = vsel %vm2002, %v2200, %v2202
      %v2204 = vrot.slane %v1891, 2
      %v2205 = vsel %vm2002, %v2202, %v2204
      %v2206 = vrot.slane %v1892, 2
      %v2207 = vsel %vm2002, %v2204, %v2206
      %v2208 = vrot.slane %v1893, 2
      %v2209 = vsel %vm2002, %v2206, %v2208
      %v2210 = vrot.slane %v1894, 2
      %v2211 = vsel %vm2002, %v2208, %v2210
      %v2212 = vrot.slane %v1895, 2
      %v2213 = vsel %vm2002, %v2210, %v2212
      %v2319 = vadd.f32 %v1677, %v2005
      %v2320 = vadd.f32 %v1678, %v2007
      %v2321 = vadd.f32 %v1679, %v2009
      %v2322 = vadd.f32 %v1680, %v2011
      %v2323 = vadd.f32 %v1681, %v2013
      %v2324 = vadd.f32 %v1682, %v2015
      %v2325 = vadd.f32 %v1683, %v2017
      %v2326 = vadd.f32 %v1684, %v2019
      %v2327 = vadd.f32 %v1685, %v2021
      %v2328 = vadd.f32 %v1686, %v2023
      %v2329 = vadd.f32 %v1687, %v2025
      %v2330 = vadd.f32 %v1688, %v2027
      %v2331 = vadd.f32 %v1689, %v2029
      %v2332 = vadd.f32 %v1690, %v2031
      %v2333 = vadd.f32 %v1691, %v2033
      %v2334 = vadd.f32 %v1692, %v2035
      %v2335 = vadd.f32 %v1693, %v2037
      %v2336 = vadd.f32 %v1694, %v2039
      %v2337 = vadd.f32 %v1695, %v2041
      %v2338 = vadd.f32 %v1696, %v2043
      %v2339 = vadd.f32 %v1697, %v2045
      %v2340 = vadd.f32 %v1698, %v2047
      %v2341 = vadd.f32 %v1699, %v2049
      %v2342 = vadd.f32 %v1700, %v2051
      %v2343 = vadd.f32 %v1701, %v2053
      %v2344 = vadd.f32 %v1702, %v2055
      %v2345 = vadd.f32 %v1703, %v2057
      %v2346 = vadd.f32 %v1704, %v2059
      %v2347 = vadd.f32 %v1705, %v2061
      %v2348 = vadd.f32 %v1706, %v2063
      %v2349 = vadd.f32 %v1707, %v2065
      %v2350 = vadd.f32 %v1708, %v2067
      %v2351 = vadd.f32 %v1709, %v2069
      %v2352 = vadd.f32 %v1710, %v2071
      %v2353 = vadd.f32 %v1711, %v2073
      %v2354 = vadd.f32 %v1712, %v2075
      %v2355 = vadd.f32 %v1713, %v2077
      %v2356 = vadd.f32 %v1714, %v2079
      %v2357 = vadd.f32 %v1715, %v2081
      %v2358 = vadd.f32 %v1716, %v2083
      %v2359 = vadd.f32 %v1717, %v2085
      %v2360 = vadd.f32 %v1718, %v2087
      %v2361 = vadd.f32 %v1719, %v2089
      %v2362 = vadd.f32 %v1720, %v2091
      %v2363 = vadd.f32 %v1721, %v2093
      %v2364 = vadd.f32 %v1722, %v2095
      %v2365 = vadd.f32 %v1723, %v2097
      %v2366 = vadd.f32 %v1724, %v2099
      %v2367 = vadd.f32 %v1725, %v2101
      %v2368 = vadd.f32 %v1726, %v2103
      %v2369 = vadd.f32 %v1727, %v2105
      %v2370 = vadd.f32 %v1728, %v2107
      %v2371 = vadd.f32 %v1729, %v2109
      %v2372 = vadd.f32 %v1730, %v2111
      %v2373 = vadd.f32 %v1731, %v2113
      %v2374 = vadd.f32 %v1732, %v2115
      %v2375 = vadd.f32 %v1733, %v2117
      %v2376 = vadd.f32 %v1734, %v2119
      %v2377 = vadd.f32 %v1735, %v2121
      %v2378 = vadd.f32 %v1736, %v2123
      %v2379 = vadd.f32 %v1737, %v2125
      %v2380 = vadd.f32 %v1738, %v2127
      %v2381 = vadd.f32 %v1739, %v2129
      %v2382 = vadd.f32 %v1740, %v2131
      %v2383 = vadd.f32 %v1741, %v2133
      %v2384 = vadd.f32 %v1742, %v2135
      %v2385 = vadd.f32 %v1743, %v2137
      %v2386 = vadd.f32 %v1744, %v2139
      %v2387 = vadd.f32 %v1745, %v2141
      %v2388 = vadd.f32 %v1746, %v2143
      %v2389 = vadd.f32 %v1747, %v2145
      %v2390 = vadd.f32 %v1748, %v2147
      %v2391 = vadd.f32 %v1749, %v2149
      %v2392 = vadd.f32 %v1750, %v2151
      %v2393 = vadd.f32 %v1751, %v2153
      %v2394 = vadd.f32 %v1752, %v2155
      %v2395 = vadd.f32 %v1753, %v2157
      %v2396 = vadd.f32 %v1754, %v2159
      %v2397 = vadd.f32 %v1755, %v2161
      %v2398 = vadd.f32 %v1756, %v2163
      %v2399 = vadd.f32 %v1757, %v2165
      %v2400 = vadd.f32 %v1758, %v2167
      %v2401 = vadd.f32 %v1759, %v2169
      %v2402 = vadd.f32 %v1760, %v2171
      %v2403 = vadd.f32 %v1761, %v2173
      %v2404 = vadd.f32 %v1762, %v2175
      %v2405 = vadd.f32 %v1763, %v2177
      %v2406 = vadd.f32 %v1764, %v2179
      %v2407 = vadd.f32 %v1765, %v2181
      %v2408 = vadd.f32 %v1766, %v2183
      %v2409 = vadd.f32 %v1767, %v2185
      %v2410 = vadd.f32 %v1768, %v2187
      %v2411 = vadd.f32 %v1769, %v2189
      %v2412 = vadd.f32 %v1770, %v2191
      %v2413 = vadd.f32 %v1771, %v2193
      %v2414 = vadd.f32 %v1772, %v2195
      %v2415 = vadd.f32 %v1773, %v2197
      %v2416 = vadd.f32 %v1774, %v2199
      %v2417 = vadd.f32 %v1775, %v2201
      %v2418 = vadd.f32 %v1776, %v2203
      %v2419 = vadd.f32 %v1777, %v2205
      %v2420 = vadd.f32 %v1778, %v2207
      %v2421 = vadd.f32 %v1779, %v2209
      %v2422 = vadd.f32 %v1780, %v2211
      %v2423 = vadd.f32 %v1781, %v2213
      %s2424 = scalar_lea.vmem %s1, 3
      %v2425 = vld [vmem:[%s2424] sm:$0x1]
      %2427 = vset.pattern.permute.xlu0 0
      %2428 = vperm.xlu0 %2427, %v386
      %v2429 = vpop.permute.xlu0 %2428
      %2432 = vset.pattern.permute.xlu0 0
      %2433 = vperm.xlu0 %2432, %v387
      %v2434 = vpop.permute.xlu0 %2433
      %2437 = vset.pattern.permute.xlu0 0
      %2438 = vperm.xlu0 %2437, %v388
      %v2439 = vpop.permute.xlu0 %2438
      %v2442 = vlaneseq
      %v2443 = vshrl.u32 %v2442, 7
      %v2444 = vsub.s32 0, %v2443
      %v2445 = vrot.slane %v2425, %v2444
      %v2447 = vmul.f32 %v412, %v2445
      %v2448 = vmul.f32 %v417, %v2445
      %v2449 = vmul.f32 %v422, %v2445
      %v2450 = vmul.f32 %v427, %v2445
      %v2451 = vmul.f32 %v432, %v2445
      %v2452 = vmul.f32 %v437, %v2445
      %v2453 = vmul.f32 %v442, %v2445
      %v2454 = vmul.f32 %v447, %v2445
      %v2455 = vmul.f32 %v452, %v2445
      %v2456 = vmul.f32 %v457, %v2445
      %v2457 = vmul.f32 %v462, %v2445
      %v2458 = vmul.f32 %v467, %v2445
      %v2459 = vmul.f32 %v472, %v2445
      %v2460 = vmul.f32 %v477, %v2445
      %v2461 = vmul.f32 %v482, %v2445
      %v2462 = vmul.f32 %v487, %v2445
      %v2463 = vmul.f32 %v492, %v2445
      %v2464 = vmul.f32 %v497, %v2445
      %v2465 = vmul.f32 %v502, %v2445
      %v2466 = vmul.f32 %v507, %v2445
      %v2467 = vmul.f32 %v512, %v2445
      %v2468 = vmul.f32 %v517, %v2445
      %v2469 = vmul.f32 %v522, %v2445
      %v2470 = vmul.f32 %v527, %v2445
      %v2471 = vmul.f32 %v532, %v2445
      %v2472 = vmul.f32 %v537, %v2445
      %v2473 = vmul.f32 %v542, %v2445
      %v2474 = vmul.f32 %v547, %v2445
      %v2475 = vmul.f32 %v552, %v2445
      %v2476 = vmul.f32 %v557, %v2445
      %v2477 = vmul.f32 %v562, %v2445
      %v2478 = vmul.f32 %v567, %v2445
      %v2479 = vmul.f32 %v572, %v2445
      %v2480 = vmul.f32 %v577, %v2445
      %v2481 = vmul.f32 %v582, %v2445
      %v2482 = vmul.f32 %v587, %v2445
      %v2483 = vmul.f32 %v592, %v2445
      %v2484 = vmul.f32 %v597, %v2445
      %v2485 = vmul.f32 %v602, %v2445
      %v2486 = vmul.f32 %v607, %v2445
      %v2487 = vmul.f32 %v612, %v2445
      %v2488 = vmul.f32 %v617, %v2445
      %v2489 = vmul.f32 %v622, %v2445
      %v2490 = vmul.f32 %v627, %v2445
      %v2491 = vmul.f32 %v632, %v2445
      %v2492 = vmul.f32 %v637, %v2445
      %v2493 = vmul.f32 %v642, %v2445
      %v2494 = vmul.f32 %v647, %v2445
      %v2495 = vmul.f32 %v652, %v2445
      %v2496 = vmul.f32 %v657, %v2445
      %v2497 = vmul.f32 %v662, %v2445
      %v2498 = vmul.f32 %v667, %v2445
      %v2499 = vmul.f32 %v672, %v2445
      %v2500 = vmul.f32 %v677, %v2445
      %v2501 = vmul.f32 %v682, %v2445
      %v2502 = vmul.f32 %v687, %v2445
      %v2503 = vmul.f32 %v692, %v2445
      %v2504 = vmul.f32 %v697, %v2445
      %v2505 = vmul.f32 %v702, %v2445
      %v2506 = vmul.f32 %v707, %v2445
      %v2507 = vmul.f32 %v712, %v2445
      %v2508 = vmul.f32 %v717, %v2445
      %v2509 = vmul.f32 %v722, %v2445
      %v2510 = vmul.f32 %v727, %v2445
      %v2511 = vmul.f32 %v732, %v2445
      %v2512 = vmul.f32 %v737, %v2445
      %v2513 = vmul.f32 %v742, %v2445
      %v2514 = vmul.f32 %v747, %v2445
      %v2515 = vmul.f32 %v752, %v2445
      %v2516 = vmul.f32 %v757, %v2445
      %v2517 = vmul.f32 %v762, %v2445
      %v2518 = vmul.f32 %v767, %v2445
      %v2519 = vmul.f32 %v772, %v2445
      %v2520 = vmul.f32 %v777, %v2445
      %v2521 = vmul.f32 %v782, %v2445
      %v2522 = vmul.f32 %v787, %v2445
      %v2523 = vmul.f32 %v792, %v2445
      %v2524 = vmul.f32 %v797, %v2445
      %v2525 = vmul.f32 %v802, %v2445
      %v2526 = vmul.f32 %v807, %v2445
      %v2527 = vmul.f32 %v812, %v2445
      %v2528 = vmul.f32 %v817, %v2445
      %v2529 = vmul.f32 %v822, %v2445
      %v2530 = vmul.f32 %v827, %v2445
      %v2531 = vmul.f32 %v832, %v2445
      %v2532 = vmul.f32 %v837, %v2445
      %v2533 = vmul.f32 %v842, %v2445
      %v2534 = vmul.f32 %v847, %v2445
      %v2535 = vmul.f32 %v852, %v2445
      %v2536 = vmul.f32 %v857, %v2445
      %v2537 = vmul.f32 %v862, %v2445
      %v2538 = vmul.f32 %v867, %v2445
      %v2539 = vmul.f32 %v872, %v2445
      %v2540 = vmul.f32 %v877, %v2445
      %v2541 = vmul.f32 %v882, %v2445
      %v2542 = vmul.f32 %v887, %v2445
      %v2543 = vmul.f32 %v892, %v2445
      %v2544 = vmul.f32 %v897, %v2445
      %v2545 = vmul.f32 %v902, %v2445
      %v2546 = vmul.f32 %v907, %v2445
      %v2547 = vmul.f32 %v912, %v2445
      %v2548 = vmul.f32 %v917, %v2445
      %v2549 = vmul.f32 %v1140, %v2445
      %v2550 = vmul.f32 %v2429, %v2445
      %v2551 = vmul.f32 %v2434, %v2445
      %v2552 = vmul.f32 %v2439, %v2445
      %vm2659 = vcmask 1041408
      %v2660 = vrot.slane %v2447, 6
      %v2661 = vrot.slane %v2448, 6
      %v2662 = vsel %vm2659, %v2660, %v2661
      %v2663 = vrot.slane %v2449, 6
      %v2664 = vsel %vm2659, %v2661, %v2663
      %v2665 = vrot.slane %v2450, 6
      %v2666 = vsel %vm2659, %v2663, %v2665
      %v2667 = vrot.slane %v2451, 6
      %v2668 = vsel %vm2659, %v2665, %v2667
      %v2669 = vrot.slane %v2452, 6
      %v2670 = vsel %vm2659, %v2667, %v2669
      %v2671 = vrot.slane %v2453, 6
      %v2672 = vsel %vm2659, %v2669, %v2671
      %v2673 = vrot.slane %v2454, 6
      %v2674 = vsel %vm2659, %v2671, %v2673
      %v2675 = vrot.slane %v2455, 6
      %v2676 = vsel %vm2659, %v2673, %v2675
      %v2677 = vrot.slane %v2456, 6
      %v2678 = vsel %vm2659, %v2675, %v2677
      %v2679 = vrot.slane %v2457, 6
      %v2680 = vsel %vm2659, %v2677, %v2679
      %v2681 = vrot.slane %v2458, 6
      %v2682 = vsel %vm2659, %v2679, %v2681
      %v2683 = vrot.slane %v2459, 6
      %v2684 = vsel %vm2659, %v2681, %v2683
      %v2685 = vrot.slane %v2460, 6
      %v2686 = vsel %vm2659, %v2683, %v2685
      %v2687 = vrot.slane %v2461, 6
      %v2688 = vsel %vm2659, %v2685, %v2687
      %v2689 = vrot.slane %v2462, 6
      %v2690 = vsel %vm2659, %v2687, %v2689
      %v2691 = vrot.slane %v2463, 6
      %v2692 = vsel %vm2659, %v2689, %v2691
      %v2693 = vrot.slane %v2464, 6
      %v2694 = vsel %vm2659, %v2691, %v2693
      %v2695 = vrot.slane %v2465, 6
      %v2696 = vsel %vm2659, %v2693, %v2695
      %v2697 = vrot.slane %v2466, 6
      %v2698 = vsel %vm2659, %v2695, %v2697
      %v2699 = vrot.slane %v2467, 6
      %v2700 = vsel %vm2659, %v2697, %v2699
      %v2701 = vrot.slane %v2468, 6
      %v2702 = vsel %vm2659, %v2699, %v2701
      %v2703 = vrot.slane %v2469, 6
      %v2704 = vsel %vm2659, %v2701, %v2703
      %v2705 = vrot.slane %v2470, 6
      %v2706 = vsel %vm2659, %v2703, %v2705
      %v2707 = vrot.slane %v2471, 6
      %v2708 = vsel %vm2659, %v2705, %v2707
      %v2709 = vrot.slane %v2472, 6
      %v2710 = vsel %vm2659, %v2707, %v2709
      %v2711 = vrot.slane %v2473, 6
      %v2712 = vsel %vm2659, %v2709, %v2711
      %v2713 = vrot.slane %v2474, 6
      %v2714 = vsel %vm2659, %v2711, %v2713
      %v2715 = vrot.slane %v2475, 6
      %v2716 = vsel %vm2659, %v2713, %v2715
      %v2717 = vrot.slane %v2476, 6
      %v2718 = vsel %vm2659, %v2715, %v2717
      %v2719 = vrot.slane %v2477, 6
      %v2720 = vsel %vm2659, %v2717, %v2719
      %v2721 = vrot.slane %v2478, 6
      %v2722 = vsel %vm2659, %v2719, %v2721
      %v2723 = vrot.slane %v2479, 6
      %v2724 = vsel %vm2659, %v2721, %v2723
      %v2725 = vrot.slane %v2480, 6
      %v2726 = vsel %vm2659, %v2723, %v2725
      %v2727 = vrot.slane %v2481, 6
      %v2728 = vsel %vm2659, %v2725, %v2727
      %v2729 = vrot.slane %v2482, 6
      %v2730 = vsel %vm2659, %v2727, %v2729
      %v2731 = vrot.slane %v2483, 6
      %v2732 = vsel %vm2659, %v2729, %v2731
      %v2733 = vrot.slane %v2484, 6
      %v2734 = vsel %vm2659, %v2731, %v2733
      %v2735 = vrot.slane %v2485, 6
      %v2736 = vsel %vm2659, %v2733, %v2735
      %v2737 = vrot.slane %v2486, 6
      %v2738 = vsel %vm2659, %v2735, %v2737
      %v2739 = vrot.slane %v2487, 6
      %v2740 = vsel %vm2659, %v2737, %v2739
      %v2741 = vrot.slane %v2488, 6
      %v2742 = vsel %vm2659, %v2739, %v2741
      %v2743 = vrot.slane %v2489, 6
      %v2744 = vsel %vm2659, %v2741, %v2743
      %v2745 = vrot.slane %v2490, 6
      %v2746 = vsel %vm2659, %v2743, %v2745
      %v2747 = vrot.slane %v2491, 6
      %v2748 = vsel %vm2659, %v2745, %v2747
      %v2749 = vrot.slane %v2492, 6
      %v2750 = vsel %vm2659, %v2747, %v2749
      %v2751 = vrot.slane %v2493, 6
      %v2752 = vsel %vm2659, %v2749, %v2751
      %v2753 = vrot.slane %v2494, 6
      %v2754 = vsel %vm2659, %v2751, %v2753
      %v2755 = vrot.slane %v2495, 6
      %v2756 = vsel %vm2659, %v2753, %v2755
      %v2757 = vrot.slane %v2496, 6
      %v2758 = vsel %vm2659, %v2755, %v2757
      %v2759 = vrot.slane %v2497, 6
      %v2760 = vsel %vm2659, %v2757, %v2759
      %v2761 = vrot.slane %v2498, 6
      %v2762 = vsel %vm2659, %v2759, %v2761
      %v2763 = vrot.slane %v2499, 6
      %v2764 = vsel %vm2659, %v2761, %v2763
      %v2765 = vrot.slane %v2500, 6
      %v2766 = vsel %vm2659, %v2763, %v2765
      %v2767 = vrot.slane %v2501, 6
      %v2768 = vsel %vm2659, %v2765, %v2767
      %v2769 = vrot.slane %v2502, 6
      %v2770 = vsel %vm2659, %v2767, %v2769
      %v2771 = vrot.slane %v2503, 6
      %v2772 = vsel %vm2659, %v2769, %v2771
      %v2773 = vrot.slane %v2504, 6
      %v2774 = vsel %vm2659, %v2771, %v2773
      %v2775 = vrot.slane %v2505, 6
      %v2776 = vsel %vm2659, %v2773, %v2775
      %v2777 = vrot.slane %v2506, 6
      %v2778 = vsel %vm2659, %v2775, %v2777
      %v2779 = vrot.slane %v2507, 6
      %v2780 = vsel %vm2659, %v2777, %v2779
      %v2781 = vrot.slane %v2508, 6
      %v2782 = vsel %vm2659, %v2779, %v2781
      %v2783 = vrot.slane %v2509, 6
      %v2784 = vsel %vm2659, %v2781, %v2783
      %v2785 = vrot.slane %v2510, 6
      %v2786 = vsel %vm2659, %v2783, %v2785
      %v2787 = vrot.slane %v2511, 6
      %v2788 = vsel %vm2659, %v2785, %v2787
      %v2789 = vrot.slane %v2512, 6
      %v2790 = vsel %vm2659, %v2787, %v2789
      %v2791 = vrot.slane %v2513, 6
      %v2792 = vsel %vm2659, %v2789, %v2791
      %v2793 = vrot.slane %v2514, 6
      %v2794 = vsel %vm2659, %v2791, %v2793
      %v2795 = vrot.slane %v2515, 6
      %v2796 = vsel %vm2659, %v2793, %v2795
      %v2797 = vrot.slane %v2516, 6
      %v2798 = vsel %vm2659, %v2795, %v2797
      %v2799 = vrot.slane %v2517, 6
      %v2800 = vsel %vm2659, %v2797, %v2799
      %v2801 = vrot.slane %v2518, 6
      %v2802 = vsel %vm2659, %v2799, %v2801
      %v2803 = vrot.slane %v2519, 6
      %v2804 = vsel %vm2659, %v2801, %v2803
      %v2805 = vrot.slane %v2520, 6
      %v2806 = vsel %vm2659, %v2803, %v2805
      %v2807 = vrot.slane %v2521, 6
      %v2808 = vsel %vm2659, %v2805, %v2807
      %v2809 = vrot.slane %v2522, 6
      %v2810 = vsel %vm2659, %v2807, %v2809
      %v2811 = vrot.slane %v2523, 6
      %v2812 = vsel %vm2659, %v2809, %v2811
      %v2813 = vrot.slane %v2524, 6
      %v2814 = vsel %vm2659, %v2811, %v2813
      %v2815 = vrot.slane %v2525, 6
      %v2816 = vsel %vm2659, %v2813, %v2815
      %v2817 = vrot.slane %v2526, 6
      %v2818 = vsel %vm2659, %v2815, %v2817
      %v2819 = vrot.slane %v2527, 6
      %v2820 = vsel %vm2659, %v2817, %v2819
      %v2821 = vrot.slane %v2528, 6
      %v2822 = vsel %vm2659, %v2819, %v2821
      %v2823 = vrot.slane %v2529, 6
      %v2824 = vsel %vm2659, %v2821, %v2823
      %v2825 = vrot.slane %v2530, 6
      %v2826 = vsel %vm2659, %v2823, %v2825
      %v2827 = vrot.slane %v2531, 6
      %v2828 = vsel %vm2659, %v2825, %v2827
      %v2829 = vrot.slane %v2532, 6
      %v2830 = vsel %vm2659, %v2827, %v2829
      %v2831 = vrot.slane %v2533, 6
      %v2832 = vsel %vm2659, %v2829, %v2831
      %v2833 = vrot.slane %v2534, 6
      %v2834 = vsel %vm2659, %v2831, %v2833
      %v2835 = vrot.slane %v2535, 6
      %v2836 = vsel %vm2659, %v2833, %v2835
      %v2837 = vrot.slane %v2536, 6
      %v2838 = vsel %vm2659, %v2835, %v2837
      %v2839 = vrot.slane %v2537, 6
      %v2840 = vsel %vm2659, %v2837, %v2839
      %v2841 = vrot.slane %v2538, 6
      %v2842 = vsel %vm2659, %v2839, %v2841
      %v2843 = vrot.slane %v2539, 6
      %v2844 = vsel %vm2659, %v2841, %v2843
      %v2845 = vrot.slane %v2540, 6
      %v2846 = vsel %vm2659, %v2843, %v2845
      %v2847 = vrot.slane %v2541, 6
      %v2848 = vsel %vm2659, %v2845, %v2847
      %v2849 = vrot.slane %v2542, 6
      %v2850 = vsel %vm2659, %v2847, %v2849
      %v2851 = vrot.slane %v2543, 6
      %v2852 = vsel %vm2659, %v2849, %v2851
      %v2853 = vrot.slane %v2544, 6
      %v2854 = vsel %vm2659, %v2851, %v2853
      %v2855 = vrot.slane %v2545, 6
      %v2856 = vsel %vm2659, %v2853, %v2855
      %v2857 = vrot.slane %v2546, 6
      %v2858 = vsel %vm2659, %v2855, %v2857
      %v2859 = vrot.slane %v2547, 6
      %v2860 = vsel %vm2659, %v2857, %v2859
      %v2861 = vrot.slane %v2548, 6
      %v2862 = vsel %vm2659, %v2859, %v2861
      %v2863 = vrot.slane %v2549, 6
      %v2864 = vsel %vm2659, %v2861, %v2863
      %v2865 = vrot.slane %v2550, 6
      %v2866 = vsel %vm2659, %v2863, %v2865
      %v2867 = vrot.slane %v2551, 6
      %v2868 = vsel %vm2659, %v2865, %v2867
      %v2869 = vrot.slane %v2552, 6
      %v2870 = vsel %vm2659, %v2867, %v2869
      %v2976 = vadd.f32 %v2319, %v2662
      %v2977 = vadd.f32 %v2320, %v2664
      %v2978 = vadd.f32 %v2321, %v2666
      %v2979 = vadd.f32 %v2322, %v2668
      %v2980 = vadd.f32 %v2323, %v2670
      %v2981 = vadd.f32 %v2324, %v2672
      %v2982 = vadd.f32 %v2325, %v2674
      %v2983 = vadd.f32 %v2326, %v2676
      %v2984 = vadd.f32 %v2327, %v2678
      %v2985 = vadd.f32 %v2328, %v2680
      %v2986 = vadd.f32 %v2329, %v2682
      %v2987 = vadd.f32 %v2330, %v2684
      %v2988 = vadd.f32 %v2331, %v2686
      %v2989 = vadd.f32 %v2332, %v2688
      %v2990 = vadd.f32 %v2333, %v2690
      %v2991 = vadd.f32 %v2334, %v2692
      %v2992 = vadd.f32 %v2335, %v2694
      %v2993 = vadd.f32 %v2336, %v2696
      %v2994 = vadd.f32 %v2337, %v2698
      %v2995 = vadd.f32 %v2338, %v2700
      %v2996 = vadd.f32 %v2339, %v2702
      %v2997 = vadd.f32 %v2340, %v2704
      %v2998 = vadd.f32 %v2341, %v2706
      %v2999 = vadd.f32 %v2342, %v2708
      %v3000 = vadd.f32 %v2343, %v2710
      %v3001 = vadd.f32 %v2344, %v2712
      %v3002 = vadd.f32 %v2345, %v2714
      %v3003 = vadd.f32 %v2346, %v2716
      %v3004 = vadd.f32 %v2347, %v2718
      %v3005 = vadd.f32 %v2348, %v2720
      %v3006 = vadd.f32 %v2349, %v2722
      %v3007 = vadd.f32 %v2350, %v2724
      %v3008 = vadd.f32 %v2351, %v2726
      %v3009 = vadd.f32 %v2352, %v2728
      %v3010 = vadd.f32 %v2353, %v2730
      %v3011 = vadd.f32 %v2354, %v2732
      %v3012 = vadd.f32 %v2355, %v2734
      %v3013 = vadd.f32 %v2356, %v2736
      %v3014 = vadd.f32 %v2357, %v2738
      %v3015 = vadd.f32 %v2358, %v2740
      %v3016 = vadd.f32 %v2359, %v2742
      %v3017 = vadd.f32 %v2360, %v2744
      %v3018 = vadd.f32 %v2361, %v2746
      %v3019 = vadd.f32 %v2362, %v2748
      %v3020 = vadd.f32 %v2363, %v2750
      %v3021 = vadd.f32 %v2364, %v2752
      %v3022 = vadd.f32 %v2365, %v2754
      %v3023 = vadd.f32 %v2366, %v2756
      %v3024 = vadd.f32 %v2367, %v2758
      %v3025 = vadd.f32 %v2368, %v2760
      %v3026 = vadd.f32 %v2369, %v2762
      %v3027 = vadd.f32 %v2370, %v2764
      %v3028 = vadd.f32 %v2371, %v2766
      %v3029 = vadd.f32 %v2372, %v2768
      %v3030 = vadd.f32 %v2373, %v2770
      %v3031 = vadd.f32 %v2374, %v2772
      %v3032 = vadd.f32 %v2375, %v2774
      %v3033 = vadd.f32 %v2376, %v2776
      %v3034 = vadd.f32 %v2377, %v2778
      %v3035 = vadd.f32 %v2378, %v2780
      %v3036 = vadd.f32 %v2379, %v2782
      %v3037 = vadd.f32 %v2380, %v2784
      %v3038 = vadd.f32 %v2381, %v2786
      %v3039 = vadd.f32 %v2382, %v2788
      %v3040 = vadd.f32 %v2383, %v2790
      %v3041 = vadd.f32 %v2384, %v2792
      %v3042 = vadd.f32 %v2385, %v2794
      %v3043 = vadd.f32 %v2386, %v2796
      %v3044 = vadd.f32 %v2387, %v2798
      %v3045 = vadd.f32 %v2388, %v2800
      %v3046 = vadd.f32 %v2389, %v2802
      %v3047 = vadd.f32 %v2390, %v2804
      %v3048 = vadd.f32 %v2391, %v2806
      %v3049 = vadd.f32 %v2392, %v2808
      %v3050 = vadd.f32 %v2393, %v2810
      %v3051 = vadd.f32 %v2394, %v2812
      %v3052 = vadd.f32 %v2395, %v2814
      %v3053 = vadd.f32 %v2396, %v2816
      %v3054 = vadd.f32 %v2397, %v2818
      %v3055 = vadd.f32 %v2398, %v2820
      %v3056 = vadd.f32 %v2399, %v2822
      %v3057 = vadd.f32 %v2400, %v2824
      %v3058 = vadd.f32 %v2401, %v2826
      %v3059 = vadd.f32 %v2402, %v2828
      %v3060 = vadd.f32 %v2403, %v2830
      %v3061 = vadd.f32 %v2404, %v2832
      %v3062 = vadd.f32 %v2405, %v2834
      %v3063 = vadd.f32 %v2406, %v2836
      %v3064 = vadd.f32 %v2407, %v2838
      %v3065 = vadd.f32 %v2408, %v2840
      %v3066 = vadd.f32 %v2409, %v2842
      %v3067 = vadd.f32 %v2410, %v2844
      %v3068 = vadd.f32 %v2411, %v2846
      %v3069 = vadd.f32 %v2412, %v2848
      %v3070 = vadd.f32 %v2413, %v2850
      %v3071 = vadd.f32 %v2414, %v2852
      %v3072 = vadd.f32 %v2415, %v2854
      %v3073 = vadd.f32 %v2416, %v2856
      %v3074 = vadd.f32 %v2417, %v2858
      %v3075 = vadd.f32 %v2418, %v2860
      %v3076 = vadd.f32 %v2419, %v2862
      %v3077 = vadd.f32 %v2420, %v2864
      %v3078 = vadd.f32 %v2421, %v2866
      %v3079 = vadd.f32 %v2422, %v2868
      %v3080 = vadd.f32 %v2423, %v2870
      %s3081 = scalar_lea.vmem %s1, 4
      %v3082 = vld [vmem:[%s3081] sm:$0x1]
      %v3084 = vlaneseq
      %v3085 = vshrl.u32 %v3084, 7
      %v3086 = vsub.s32 0, %v3085
      %v3087 = vrot.slane %v3082, %v3086
      %v3089 = vmul.f32 %v412, %v3087
      %v3090 = vmul.f32 %v417, %v3087
      %v3091 = vmul.f32 %v422, %v3087
      %v3092 = vmul.f32 %v427, %v3087
      %v3093 = vmul.f32 %v432, %v3087
      %v3094 = vmul.f32 %v437, %v3087
      %v3095 = vmul.f32 %v442, %v3087
      %v3096 = vmul.f32 %v447, %v3087
      %v3097 = vmul.f32 %v452, %v3087
      %v3098 = vmul.f32 %v457, %v3087
      %v3099 = vmul.f32 %v462, %v3087
      %v3100 = vmul.f32 %v467, %v3087
      %v3101 = vmul.f32 %v472, %v3087
      %v3102 = vmul.f32 %v477, %v3087
      %v3103 = vmul.f32 %v482, %v3087
      %v3104 = vmul.f32 %v487, %v3087
      %v3105 = vmul.f32 %v492, %v3087
      %v3106 = vmul.f32 %v497, %v3087
      %v3107 = vmul.f32 %v502, %v3087
      %v3108 = vmul.f32 %v507, %v3087
      %v3109 = vmul.f32 %v512, %v3087
      %v3110 = vmul.f32 %v517, %v3087
      %v3111 = vmul.f32 %v522, %v3087
      %v3112 = vmul.f32 %v527, %v3087
      %v3113 = vmul.f32 %v532, %v3087
      %v3114 = vmul.f32 %v537, %v3087
      %v3115 = vmul.f32 %v542, %v3087
      %v3116 = vmul.f32 %v547, %v3087
      %v3117 = vmul.f32 %v552, %v3087
      %v3118 = vmul.f32 %v557, %v3087
      %v3119 = vmul.f32 %v562, %v3087
      %v3120 = vmul.f32 %v567, %v3087
      %v3121 = vmul.f32 %v572, %v3087
      %v3122 = vmul.f32 %v577, %v3087
      %v3123 = vmul.f32 %v582, %v3087
      %v3124 = vmul.f32 %v587, %v3087
      %v3125 = vmul.f32 %v592, %v3087
      %v3126 = vmul.f32 %v597, %v3087
      %v3127 = vmul.f32 %v602, %v3087
      %v3128 = vmul.f32 %v607, %v3087
      %v3129 = vmul.f32 %v612, %v3087
      %v3130 = vmul.f32 %v617, %v3087
      %v3131 = vmul.f32 %v622, %v3087
      %v3132 = vmul.f32 %v627, %v3087
      %v3133 = vmul.f32 %v632, %v3087
      %v3134 = vmul.f32 %v637, %v3087
      %v3135 = vmul.f32 %v642, %v3087
      %v3136 = vmul.f32 %v647, %v3087
      %v3137 = vmul.f32 %v652, %v3087
      %v3138 = vmul.f32 %v657, %v3087
      %v3139 = vmul.f32 %v662, %v3087
      %v3140 = vmul.f32 %v667, %v3087
      %v3141 = vmul.f32 %v672, %v3087
      %v3142 = vmul.f32 %v677, %v3087
      %v3143 = vmul.f32 %v682, %v3087
      %v3144 = vmul.f32 %v687, %v3087
      %v3145 = vmul.f32 %v692, %v3087
      %v3146 = vmul.f32 %v697, %v3087
      %v3147 = vmul.f32 %v702, %v3087
      %v3148 = vmul.f32 %v707, %v3087
      %v3149 = vmul.f32 %v712, %v3087
      %v3150 = vmul.f32 %v717, %v3087
      %v3151 = vmul.f32 %v722, %v3087
      %v3152 = vmul.f32 %v727, %v3087
      %v3153 = vmul.f32 %v732, %v3087
      %v3154 = vmul.f32 %v737, %v3087
      %v3155 = vmul.f32 %v742, %v3087
      %v3156 = vmul.f32 %v747, %v3087
      %v3157 = vmul.f32 %v752, %v3087
      %v3158 = vmul.f32 %v757, %v3087
      %v3159 = vmul.f32 %v762, %v3087
      %v3160 = vmul.f32 %v767, %v3087
      %v3161 = vmul.f32 %v772, %v3087
      %v3162 = vmul.f32 %v777, %v3087
      %v3163 = vmul.f32 %v782, %v3087
      %v3164 = vmul.f32 %v787, %v3087
      %v3165 = vmul.f32 %v792, %v3087
      %v3166 = vmul.f32 %v797, %v3087
      %v3167 = vmul.f32 %v802, %v3087
      %v3168 = vmul.f32 %v807, %v3087
      %v3169 = vmul.f32 %v812, %v3087
      %v3170 = vmul.f32 %v817, %v3087
      %v3171 = vmul.f32 %v822, %v3087
      %v3172 = vmul.f32 %v827, %v3087
      %v3173 = vmul.f32 %v832, %v3087
      %v3174 = vmul.f32 %v837, %v3087
      %v3175 = vmul.f32 %v842, %v3087
      %v3176 = vmul.f32 %v847, %v3087
      %v3177 = vmul.f32 %v852, %v3087
      %v3178 = vmul.f32 %v857, %v3087
      %v3179 = vmul.f32 %v862, %v3087
      %v3180 = vmul.f32 %v867, %v3087
      %v3181 = vmul.f32 %v872, %v3087
      %v3182 = vmul.f32 %v877, %v3087
      %v3183 = vmul.f32 %v882, %v3087
      %v3184 = vmul.f32 %v887, %v3087
      %v3185 = vmul.f32 %v892, %v3087
      %v3186 = vmul.f32 %v897, %v3087
      %v3187 = vmul.f32 %v902, %v3087
      %v3188 = vmul.f32 %v907, %v3087
      %v3189 = vmul.f32 %v912, %v3087
      %v3190 = vmul.f32 %v917, %v3087
      %v3191 = vmul.f32 %v1140, %v3087
      %v3192 = vmul.f32 %v2429, %v3087
      %v3193 = vmul.f32 %v2434, %v3087
      %v3194 = vmul.f32 %v2439, %v3087
      %vm3301 = vcmask 1040384
      %v3302 = vrot.slane %v3089, 7
      %v3303 = vrot.slane %v3090, 7
      %v3304 = vsel %vm3301, %v3302, %v3303
      %v3305 = vrot.slane %v3091, 7
      %v3306 = vsel %vm3301, %v3303, %v3305
      %v3307 = vrot.slane %v3092, 7
      %v3308 = vsel %vm3301, %v3305, %v3307
      %v3309 = vrot.slane %v3093, 7
      %v3310 = vsel %vm3301, %v3307, %v3309
      %v3311 = vrot.slane %v3094, 7
      %v3312 = vsel %vm3301, %v3309, %v3311
      %v3313 = vrot.slane %v3095, 7
      %v3314 = vsel %vm3301, %v3311, %v3313
      %v3315 = vrot.slane %v3096, 7
      %v3316 = vsel %vm3301, %v3313, %v3315
      %v3317 = vrot.slane %v3097, 7
      %v3318 = vsel %vm3301, %v3315, %v3317
      %v3319 = vrot.slane %v3098, 7
      %v3320 = vsel %vm3301, %v3317, %v3319
      %v3321 = vrot.slane %v3099, 7
      %v3322 = vsel %vm3301, %v3319, %v3321
      %v3323 = vrot.slane %v3100, 7
      %v3324 = vsel %vm3301, %v3321, %v3323
      %v3325 = vrot.slane %v3101, 7
      %v3326 = vsel %vm3301, %v3323, %v3325
      %v3327 = vrot.slane %v3102, 7
      %v3328 = vsel %vm3301, %v3325, %v3327
      %v3329 = vrot.slane %v3103, 7
      %v3330 = vsel %vm3301, %v3327, %v3329
      %v3331 = vrot.slane %v3104, 7
      %v3332 = vsel %vm3301, %v3329, %v3331
      %v3333 = vrot.slane %v3105, 7
      %v3334 = vsel %vm3301, %v3331, %v3333
      %v3335 = vrot.slane %v3106, 7
      %v3336 = vsel %vm3301, %v3333, %v3335
      %v3337 = vrot.slane %v3107, 7
      %v3338 = vsel %vm3301, %v3335, %v3337
      %v3339 = vrot.slane %v3108, 7
      %v3340 = vsel %vm3301, %v3337, %v3339
      %v3341 = vrot.slane %v3109, 7
      %v3342 = vsel %vm3301, %v3339, %v3341
      %v3343 = vrot.slane %v3110, 7
      %v3344 = vsel %vm3301, %v3341, %v3343
      %v3345 = vrot.slane %v3111, 7
      %v3346 = vsel %vm3301, %v3343, %v3345
      %v3347 = vrot.slane %v3112, 7
      %v3348 = vsel %vm3301, %v3345, %v3347
      %v3349 = vrot.slane %v3113, 7
      %v3350 = vsel %vm3301, %v3347, %v3349
      %v3351 = vrot.slane %v3114, 7
      %v3352 = vsel %vm3301, %v3349, %v3351
      %v3353 = vrot.slane %v3115, 7
      %v3354 = vsel %vm3301, %v3351, %v3353
      %v3355 = vrot.slane %v3116, 7
      %v3356 = vsel %vm3301, %v3353, %v3355
      %v3357 = vrot.slane %v3117, 7
      %v3358 = vsel %vm3301, %v3355, %v3357
      %v3359 = vrot.slane %v3118, 7
      %v3360 = vsel %vm3301, %v3357, %v3359
      %v3361 = vrot.slane %v3119, 7
      %v3362 = vsel %vm3301, %v3359, %v3361
      %v3363 = vrot.slane %v3120, 7
      %v3364 = vsel %vm3301, %v3361, %v3363
      %v3365 = vrot.slane %v3121, 7
      %v3366 = vsel %vm3301, %v3363, %v3365
      %v3367 = vrot.slane %v3122, 7
      %v3368 = vsel %vm3301, %v3365, %v3367
      %v3369 = vrot.slane %v3123, 7
      %v3370 = vsel %vm3301, %v3367, %v3369
      %v3371 = vrot.slane %v3124, 7
      %v3372 = vsel %vm3301, %v3369, %v3371
      %v3373 = vrot.slane %v3125, 7
      %v3374 = vsel %vm3301, %v3371, %v3373
      %v3375 = vrot.slane %v3126, 7
      %v3376 = vsel %vm3301, %v3373, %v3375
      %v3377 = vrot.slane %v3127, 7
      %v3378 = vsel %vm3301, %v3375, %v3377
      %v3379 = vrot.slane %v3128, 7
      %v3380 = vsel %vm3301, %v3377, %v3379
      %v3381 = vrot.slane %v3129, 7
      %v3382 = vsel %vm3301, %v3379, %v3381
      %v3383 = vrot.slane %v3130, 7
      %v3384 = vsel %vm3301, %v3381, %v3383
      %v3385 = vrot.slane %v3131, 7
      %v3386 = vsel %vm3301, %v3383, %v3385
      %v3387 = vrot.slane %v3132, 7
      %v3388 = vsel %vm3301, %v3385, %v3387
      %v3389 = vrot.slane %v3133, 7
      %v3390 = vsel %vm3301, %v3387, %v3389
      %v3391 = vrot.slane %v3134, 7
      %v3392 = vsel %vm3301, %v3389, %v3391
      %v3393 = vrot.slane %v3135, 7
      %v3394 = vsel %vm3301, %v3391, %v3393
      %v3395 = vrot.slane %v3136, 7
      %v3396 = vsel %vm3301, %v3393, %v3395
      %v3397 = vrot.slane %v3137, 7
      %v3398 = vsel %vm3301, %v3395, %v3397
      %v3399 = vrot.slane %v3138, 7
      %v3400 = vsel %vm3301, %v3397, %v3399
      %v3401 = vrot.slane %v3139, 7
      %v3402 = vsel %vm3301, %v3399, %v3401
      %v3403 = vrot.slane %v3140, 7
      %v3404 = vsel %vm3301, %v3401, %v3403
      %v3405 = vrot.slane %v3141, 7
      %v3406 = vsel %vm3301, %v3403, %v3405
      %v3407 = vrot.slane %v3142, 7
      %v3408 = vsel %vm3301, %v3405, %v3407
      %v3409 = vrot.slane %v3143, 7
      %v3410 = vsel %vm3301, %v3407, %v3409
      %v3411 = vrot.slane %v3144, 7
      %v3412 = vsel %vm3301, %v3409, %v3411
      %v3413 = vrot.slane %v3145, 7
      %v3414 = vsel %vm3301, %v3411, %v3413
      %v3415 = vrot.slane %v3146, 7
      %v3416 = vsel %vm3301, %v3413, %v3415
      %v3417 = vrot.slane %v3147, 7
      %v3418 = vsel %vm3301, %v3415, %v3417
      %v3419 = vrot.slane %v3148, 7
      %v3420 = vsel %vm3301, %v3417, %v3419
      %v3421 = vrot.slane %v3149, 7
      %v3422 = vsel %vm3301, %v3419, %v3421
      %v3423 = vrot.slane %v3150, 7
      %v3424 = vsel %vm3301, %v3421, %v3423
      %v3425 = vrot.slane %v3151, 7
      %v3426 = vsel %vm3301, %v3423, %v3425
      %v3427 = vrot.slane %v3152, 7
      %v3428 = vsel %vm3301, %v3425, %v3427
      %v3429 = vrot.slane %v3153, 7
      %v3430 = vsel %vm3301, %v3427, %v3429
      %v3431 = vrot.slane %v3154, 7
      %v3432 = vsel %vm3301, %v3429, %v3431
      %v3433 = vrot.slane %v3155, 7
      %v3434 = vsel %vm3301, %v3431, %v3433
      %v3435 = vrot.slane %v3156, 7
      %v3436 = vsel %vm3301, %v3433, %v3435
      %v3437 = vrot.slane %v3157, 7
      %v3438 = vsel %vm3301, %v3435, %v3437
      %v3439 = vrot.slane %v3158, 7
      %v3440 = vsel %vm3301, %v3437, %v3439
      %v3441 = vrot.slane %v3159, 7
      %v3442 = vsel %vm3301, %v3439, %v3441
      %v3443 = vrot.slane %v3160, 7
      %v3444 = vsel %vm3301, %v3441, %v3443
      %v3445 = vrot.slane %v3161, 7
      %v3446 = vsel %vm3301, %v3443, %v3445
      %v3447 = vrot.slane %v3162, 7
      %v3448 = vsel %vm3301, %v3445, %v3447
      %v3449 = vrot.slane %v3163, 7
      %v3450 = vsel %vm3301, %v3447, %v3449
      %v3451 = vrot.slane %v3164, 7
      %v3452 = vsel %vm3301, %v3449, %v3451
      %v3453 = vrot.slane %v3165, 7
      %v3454 = vsel %vm3301, %v3451, %v3453
      %v3455 = vrot.slane %v3166, 7
      %v3456 = vsel %vm3301, %v3453, %v3455
      %v3457 = vrot.slane %v3167, 7
      %v3458 = vsel %vm3301, %v3455, %v3457
      %v3459 = vrot.slane %v3168, 7
      %v3460 = vsel %vm3301, %v3457, %v3459
      %v3461 = vrot.slane %v3169, 7
      %v3462 = vsel %vm3301, %v3459, %v3461
      %v3463 = vrot.slane %v3170, 7
      %v3464 = vsel %vm3301, %v3461, %v3463
      %v3465 = vrot.slane %v3171, 7
      %v3466 = vsel %vm3301, %v3463, %v3465
      %v3467 = vrot.slane %v3172, 7
      %v3468 = vsel %vm3301, %v3465, %v3467
      %v3469 = vrot.slane %v3173, 7
      %v3470 = vsel %vm3301, %v3467, %v3469
      %v3471 = vrot.slane %v3174, 7
      %v3472 = vsel %vm3301, %v3469, %v3471
      %v3473 = vrot.slane %v3175, 7
      %v3474 = vsel %vm3301, %v3471, %v3473
      %v3475 = vrot.slane %v3176, 7
      %v3476 = vsel %vm3301, %v3473, %v3475
      %v3477 = vrot.slane %v3177, 7
      %v3478 = vsel %vm3301, %v3475, %v3477
      %v3479 = vrot.slane %v3178, 7
      %v3480 = vsel %vm3301, %v3477, %v3479
      %v3481 = vrot.slane %v3179, 7
      %v3482 = vsel %vm3301, %v3479, %v3481
      %v3483 = vrot.slane %v3180, 7
      %v3484 = vsel %vm3301, %v3481, %v3483
      %v3485 = vrot.slane %v3181, 7
      %v3486 = vsel %vm3301, %v3483, %v3485
      %v3487 = vrot.slane %v3182, 7
      %v3488 = vsel %vm3301, %v3485, %v3487
      %v3489 = vrot.slane %v3183, 7
      %v3490 = vsel %vm3301, %v3487, %v3489
      %v3491 = vrot.slane %v3184, 7
      %v3492 = vsel %vm3301, %v3489, %v3491
      %v3493 = vrot.slane %v3185, 7
      %v3494 = vsel %vm3301, %v3491, %v3493
      %v3495 = vrot.slane %v3186, 7
      %v3496 = vsel %vm3301, %v3493, %v3495
      %v3497 = vrot.slane %v3187, 7
      %v3498 = vsel %vm3301, %v3495, %v3497
      %v3499 = vrot.slane %v3188, 7
      %v3500 = vsel %vm3301, %v3497, %v3499
      %v3501 = vrot.slane %v3189, 7
      %v3502 = vsel %vm3301, %v3499, %v3501
      %v3503 = vrot.slane %v3190, 7
      %v3504 = vsel %vm3301, %v3501, %v3503
      %v3505 = vrot.slane %v3191, 7
      %v3506 = vsel %vm3301, %v3503, %v3505
      %v3507 = vrot.slane %v3192, 7
      %v3508 = vsel %vm3301, %v3505, %v3507
      %v3509 = vrot.slane %v3193, 7
      %v3510 = vsel %vm3301, %v3507, %v3509
      %v3511 = vrot.slane %v3194, 7
      %v3512 = vsel %vm3301, %v3509, %v3511
      %v3618 = vadd.f32 %v2976, %v3304
      %v3619 = vadd.f32 %v2977, %v3306
      %v3620 = vadd.f32 %v2978, %v3308
      %v3621 = vadd.f32 %v2979, %v3310
      %v3622 = vadd.f32 %v2980, %v3312
      %v3623 = vadd.f32 %v2981, %v3314
      %v3624 = vadd.f32 %v2982, %v3316
      %v3625 = vadd.f32 %v2983, %v3318
      %v3626 = vadd.f32 %v2984, %v3320
      %v3627 = vadd.f32 %v2985, %v3322
      %v3628 = vadd.f32 %v2986, %v3324
      %v3629 = vadd.f32 %v2987, %v3326
      %v3630 = vadd.f32 %v2988, %v3328
      %v3631 = vadd.f32 %v2989, %v3330
      %v3632 = vadd.f32 %v2990, %v3332
      %v3633 = vadd.f32 %v2991, %v3334
      %v3634 = vadd.f32 %v2992, %v3336
      %v3635 = vadd.f32 %v2993, %v3338
      %v3636 = vadd.f32 %v2994, %v3340
      %v3637 = vadd.f32 %v2995, %v3342
      %v3638 = vadd.f32 %v2996, %v3344
      %v3639 = vadd.f32 %v2997, %v3346
      %v3640 = vadd.f32 %v2998, %v3348
      %v3641 = vadd.f32 %v2999, %v3350
      %v3642 = vadd.f32 %v3000, %v3352
      %v3643 = vadd.f32 %v3001, %v3354
      %v3644 = vadd.f32 %v3002, %v3356
      %v3645 = vadd.f32 %v3003, %v3358
      %v3646 = vadd.f32 %v3004, %v3360
      %v3647 = vadd.f32 %v3005, %v3362
      %v3648 = vadd.f32 %v3006, %v3364
      %v3649 = vadd.f32 %v3007, %v3366
      %v3650 = vadd.f32 %v3008, %v3368
      %v3651 = vadd.f32 %v3009, %v3370
      %v3652 = vadd.f32 %v3010, %v3372
      %v3653 = vadd.f32 %v3011, %v3374
      %v3654 = vadd.f32 %v3012, %v3376
      %v3655 = vadd.f32 %v3013, %v3378
      %v3656 = vadd.f32 %v3014, %v3380
      %v3657 = vadd.f32 %v3015, %v3382
      %v3658 = vadd.f32 %v3016, %v3384
      %v3659 = vadd.f32 %v3017, %v3386
      %v3660 = vadd.f32 %v3018, %v3388
      %v3661 = vadd.f32 %v3019, %v3390
      %v3662 = vadd.f32 %v3020, %v3392
      %v3663 = vadd.f32 %v3021, %v3394
      %v3664 = vadd.f32 %v3022, %v3396
      %v3665 = vadd.f32 %v3023, %v3398
      %v3666 = vadd.f32 %v3024, %v3400
      %v3667 = vadd.f32 %v3025, %v3402
      %v3668 = vadd.f32 %v3026, %v3404
      %v3669 = vadd.f32 %v3027, %v3406
      %v3670 = vadd.f32 %v3028, %v3408
      %v3671 = vadd.f32 %v3029, %v3410
      %v3672 = vadd.f32 %v3030, %v3412
      %v3673 = vadd.f32 %v3031, %v3414
      %v3674 = vadd.f32 %v3032, %v3416
      %v3675 = vadd.f32 %v3033, %v3418
      %v3676 = vadd.f32 %v3034, %v3420
      %v3677 = vadd.f32 %v3035, %v3422
      %v3678 = vadd.f32 %v3036, %v3424
      %v3679 = vadd.f32 %v3037, %v3426
      %v3680 = vadd.f32 %v3038, %v3428
      %v3681 = vadd.f32 %v3039, %v3430
      %v3682 = vadd.f32 %v3040, %v3432
      %v3683 = vadd.f32 %v3041, %v3434
      %v3684 = vadd.f32 %v3042, %v3436
      %v3685 = vadd.f32 %v3043, %v3438
      %v3686 = vadd.f32 %v3044, %v3440
      %v3687 = vadd.f32 %v3045, %v3442
      %v3688 = vadd.f32 %v3046, %v3444
      %v3689 = vadd.f32 %v3047, %v3446
      %v3690 = vadd.f32 %v3048, %v3448
      %v3691 = vadd.f32 %v3049, %v3450
      %v3692 = vadd.f32 %v3050, %v3452
      %v3693 = vadd.f32 %v3051, %v3454
      %v3694 = vadd.f32 %v3052, %v3456
      %v3695 = vadd.f32 %v3053, %v3458
      %v3696 = vadd.f32 %v3054, %v3460
      %v3697 = vadd.f32 %v3055, %v3462
      %v3698 = vadd.f32 %v3056, %v3464
      %v3699 = vadd.f32 %v3057, %v3466
      %v3700 = vadd.f32 %v3058, %v3468
      %v3701 = vadd.f32 %v3059, %v3470
      %v3702 = vadd.f32 %v3060, %v3472
      %v3703 = vadd.f32 %v3061, %v3474
      %v3704 = vadd.f32 %v3062, %v3476
      %v3705 = vadd.f32 %v3063, %v3478
      %v3706 = vadd.f32 %v3064, %v3480
      %v3707 = vadd.f32 %v3065, %v3482
      %v3708 = vadd.f32 %v3066, %v3484
      %v3709 = vadd.f32 %v3067, %v3486
      %v3710 = vadd.f32 %v3068, %v3488
      %v3711 = vadd.f32 %v3069, %v3490
      %v3712 = vadd.f32 %v3070, %v3492
      %v3713 = vadd.f32 %v3071, %v3494
      %v3714 = vadd.f32 %v3072, %v3496
      %v3715 = vadd.f32 %v3073, %v3498
      %v3716 = vadd.f32 %v3074, %v3500
      %v3717 = vadd.f32 %v3075, %v3502
      %v3718 = vadd.f32 %v3076, %v3504
      %v3719 = vadd.f32 %v3077, %v3506
      %v3720 = vadd.f32 %v3078, %v3508
      %v3721 = vadd.f32 %v3079, %v3510
      %v3722 = vadd.f32 %v3080, %v3512
      %s3723 = scalar_lea.vmem %s1, 5
      %v3724 = vld [vmem:[%s3723] sm:$0x1]
      %v3726 = vlaneseq
      %v3727 = vshrl.u32 %v3726, 7
      %v3728 = vsub.s32 0, %v3727
      %v3729 = vrot.slane %v3724, %v3728
      %v3731 = vmul.f32 %v417, %v3729
      %v3732 = vmul.f32 %v422, %v3729
      %v3733 = vmul.f32 %v427, %v3729
      %v3734 = vmul.f32 %v432, %v3729
      %v3735 = vmul.f32 %v437, %v3729
      %v3736 = vmul.f32 %v442, %v3729
      %v3737 = vmul.f32 %v447, %v3729
      %v3738 = vmul.f32 %v452, %v3729
      %v3739 = vmul.f32 %v457, %v3729
      %v3740 = vmul.f32 %v462, %v3729
      %v3741 = vmul.f32 %v467, %v3729
      %v3742 = vmul.f32 %v472, %v3729
      %v3743 = vmul.f32 %v477, %v3729
      %v3744 = vmul.f32 %v482, %v3729
      %v3745 = vmul.f32 %v487, %v3729
      %v3746 = vmul.f32 %v492, %v3729
      %v3747 = vmul.f32 %v497, %v3729
      %v3748 = vmul.f32 %v502, %v3729
      %v3749 = vmul.f32 %v507, %v3729
      %v3750 = vmul.f32 %v512, %v3729
      %v3751 = vmul.f32 %v517, %v3729
      %v3752 = vmul.f32 %v522, %v3729
      %v3753 = vmul.f32 %v527, %v3729
      %v3754 = vmul.f32 %v532, %v3729
      %v3755 = vmul.f32 %v537, %v3729
      %v3756 = vmul.f32 %v542, %v3729
      %v3757 = vmul.f32 %v547, %v3729
      %v3758 = vmul.f32 %v552, %v3729
      %v3759 = vmul.f32 %v557, %v3729
      %v3760 = vmul.f32 %v562, %v3729
      %v3761 = vmul.f32 %v567, %v3729
      %v3762 = vmul.f32 %v572, %v3729
      %v3763 = vmul.f32 %v577, %v3729
      %v3764 = vmul.f32 %v582, %v3729
      %v3765 = vmul.f32 %v587, %v3729
      %v3766 = vmul.f32 %v592, %v3729
      %v3767 = vmul.f32 %v597, %v3729
      %v3768 = vmul.f32 %v602, %v3729
      %v3769 = vmul.f32 %v607, %v3729
      %v3770 = vmul.f32 %v612, %v3729
      %v3771 = vmul.f32 %v617, %v3729
      %v3772 = vmul.f32 %v622, %v3729
      %v3773 = vmul.f32 %v627, %v3729
      %v3774 = vmul.f32 %v632, %v3729
      %v3775 = vmul.f32 %v637, %v3729
      %v3776 = vmul.f32 %v642, %v3729
      %v3777 = vmul.f32 %v647, %v3729
      %v3778 = vmul.f32 %v652, %v3729
      %v3779 = vmul.f32 %v657, %v3729
      %v3780 = vmul.f32 %v662, %v3729
      %v3781 = vmul.f32 %v667, %v3729
      %v3782 = vmul.f32 %v672, %v3729
      %v3783 = vmul.f32 %v677, %v3729
      %v3784 = vmul.f32 %v682, %v3729
      %v3785 = vmul.f32 %v687, %v3729
      %v3786 = vmul.f32 %v692, %v3729
      %v3787 = vmul.f32 %v697, %v3729
      %v3788 = vmul.f32 %v702, %v3729
      %v3789 = vmul.f32 %v707, %v3729
      %v3790 = vmul.f32 %v712, %v3729
      %v3791 = vmul.f32 %v717, %v3729
      %v3792 = vmul.f32 %v722, %v3729
      %v3793 = vmul.f32 %v727, %v3729
      %v3794 = vmul.f32 %v732, %v3729
      %v3795 = vmul.f32 %v737, %v3729
      %v3796 = vmul.f32 %v742, %v3729
      %v3797 = vmul.f32 %v747, %v3729
      %v3798 = vmul.f32 %v752, %v3729
      %v3799 = vmul.f32 %v757, %v3729
      %v3800 = vmul.f32 %v762, %v3729
      %v3801 = vmul.f32 %v767, %v3729
      %v3802 = vmul.f32 %v772, %v3729
      %v3803 = vmul.f32 %v777, %v3729
      %v3804 = vmul.f32 %v782, %v3729
      %v3805 = vmul.f32 %v787, %v3729
      %v3806 = vmul.f32 %v792, %v3729
      %v3807 = vmul.f32 %v797, %v3729
      %v3808 = vmul.f32 %v802, %v3729
      %v3809 = vmul.f32 %v807, %v3729
      %v3810 = vmul.f32 %v812, %v3729
      %v3811 = vmul.f32 %v817, %v3729
      %v3812 = vmul.f32 %v822, %v3729
      %v3813 = vmul.f32 %v827, %v3729
      %v3814 = vmul.f32 %v832, %v3729
      %v3815 = vmul.f32 %v837, %v3729
      %v3816 = vmul.f32 %v842, %v3729
      %v3817 = vmul.f32 %v847, %v3729
      %v3818 = vmul.f32 %v852, %v3729
      %v3819 = vmul.f32 %v857, %v3729
      %v3820 = vmul.f32 %v862, %v3729
      %v3821 = vmul.f32 %v867, %v3729
      %v3822 = vmul.f32 %v872, %v3729
      %v3823 = vmul.f32 %v877, %v3729
      %v3824 = vmul.f32 %v882, %v3729
      %v3825 = vmul.f32 %v887, %v3729
      %v3826 = vmul.f32 %v892, %v3729
      %v3827 = vmul.f32 %v897, %v3729
      %v3828 = vmul.f32 %v902, %v3729
      %v3829 = vmul.f32 %v907, %v3729
      %v3830 = vmul.f32 %v912, %v3729
      %v3831 = vmul.f32 %v917, %v3729
      %v3832 = vmul.f32 %v1140, %v3729
      %v3833 = vmul.f32 %v2429, %v3729
      %v3834 = vmul.f32 %v2434, %v3729
      %v3835 = vmul.f32 %v2439, %v3729
      %v3836 = vadd.f32 %v3618, %v3731
      %v3837 = vadd.f32 %v3619, %v3732
      %v3838 = vadd.f32 %v3620, %v3733
      %v3839 = vadd.f32 %v3621, %v3734
      %v3840 = vadd.f32 %v3622, %v3735
      %v3841 = vadd.f32 %v3623, %v3736
      %v3842 = vadd.f32 %v3624, %v3737
      %v3843 = vadd.f32 %v3625, %v3738
      %v3844 = vadd.f32 %v3626, %v3739
      %v3845 = vadd.f32 %v3627, %v3740
      %v3846 = vadd.f32 %v3628, %v3741
      %v3847 = vadd.f32 %v3629, %v3742
      %v3848 = vadd.f32 %v3630, %v3743
      %v3849 = vadd.f32 %v3631, %v3744
      %v3850 = vadd.f32 %v3632, %v3745
      %v3851 = vadd.f32 %v3633, %v3746
      %v3852 = vadd.f32 %v3634, %v3747
      %v3853 = vadd.f32 %v3635, %v3748
      %v3854 = vadd.f32 %v3636, %v3749
      %v3855 = vadd.f32 %v3637, %v3750
      %v3856 = vadd.f32 %v3638, %v3751
      %v3857 = vadd.f32 %v3639, %v3752
      %v3858 = vadd.f32 %v3640, %v3753
      %v3859 = vadd.f32 %v3641, %v3754
      %v3860 = vadd.f32 %v3642, %v3755
      %v3861 = vadd.f32 %v3643, %v3756
      %v3862 = vadd.f32 %v3644, %v3757
      %v3863 = vadd.f32 %v3645, %v3758
      %v3864 = vadd.f32 %v3646, %v3759
      %v3865 = vadd.f32 %v3647, %v3760
      %v3866 = vadd.f32 %v3648, %v3761
      %v3867 = vadd.f32 %v3649, %v3762
      %v3868 = vadd.f32 %v3650, %v3763
      %v3869 = vadd.f32 %v3651, %v3764
      %v3870 = vadd.f32 %v3652, %v3765
      %v3871 = vadd.f32 %v3653, %v3766
      %v3872 = vadd.f32 %v3654, %v3767
      %v3873 = vadd.f32 %v3655, %v3768
      %v3874 = vadd.f32 %v3656, %v3769
      %v3875 = vadd.f32 %v3657, %v3770
      %v3876 = vadd.f32 %v3658, %v3771
      %v3877 = vadd.f32 %v3659, %v3772
      %v3878 = vadd.f32 %v3660, %v3773
      %v3879 = vadd.f32 %v3661, %v3774
      %v3880 = vadd.f32 %v3662, %v3775
      %v3881 = vadd.f32 %v3663, %v3776
      %v3882 = vadd.f32 %v3664, %v3777
      %v3883 = vadd.f32 %v3665, %v3778
      %v3884 = vadd.f32 %v3666, %v3779
      %v3885 = vadd.f32 %v3667, %v3780
      %v3886 = vadd.f32 %v3668, %v3781
      %v3887 = vadd.f32 %v3669, %v3782
      %v3888 = vadd.f32 %v3670, %v3783
      %v3889 = vadd.f32 %v3671, %v3784
      %v3890 = vadd.f32 %v3672, %v3785
      %v3891 = vadd.f32 %v3673, %v3786
      %v3892 = vadd.f32 %v3674, %v3787
      %v3893 = vadd.f32 %v3675, %v3788
      %v3894 = vadd.f32 %v3676, %v3789
      %v3895 = vadd.f32 %v3677, %v3790
      %v3896 = vadd.f32 %v3678, %v3791
      %v3897 = vadd.f32 %v3679, %v3792
      %v3898 = vadd.f32 %v3680, %v3793
      %v3899 = vadd.f32 %v3681, %v3794
      %v3900 = vadd.f32 %v3682, %v3795
      %v3901 = vadd.f32 %v3683, %v3796
      %v3902 = vadd.f32 %v3684, %v3797
      %v3903 = vadd.f32 %v3685, %v3798
      %v3904 = vadd.f32 %v3686, %v3799
      %v3905 = vadd.f32 %v3687, %v3800
      %v3906 = vadd.f32 %v3688, %v3801
      %v3907 = vadd.f32 %v3689, %v3802
      %v3908 = vadd.f32 %v3690, %v3803
      %v3909 = vadd.f32 %v3691, %v3804
      %v3910 = vadd.f32 %v3692, %v3805
      %v3911 = vadd.f32 %v3693, %v3806
      %v3912 = vadd.f32 %v3694, %v3807
      %v3913 = vadd.f32 %v3695, %v3808
      %v3914 = vadd.f32 %v3696, %v3809
      %v3915 = vadd.f32 %v3697, %v3810
      %v3916 = vadd.f32 %v3698, %v3811
      %v3917 = vadd.f32 %v3699, %v3812
      %v3918 = vadd.f32 %v3700, %v3813
      %v3919 = vadd.f32 %v3701, %v3814
      %v3920 = vadd.f32 %v3702, %v3815
      %v3921 = vadd.f32 %v3703, %v3816
      %v3922 = vadd.f32 %v3704, %v3817
      %v3923 = vadd.f32 %v3705, %v3818
      %v3924 = vadd.f32 %v3706, %v3819
      %v3925 = vadd.f32 %v3707, %v3820
      %v3926 = vadd.f32 %v3708, %v3821
      %v3927 = vadd.f32 %v3709, %v3822
      %v3928 = vadd.f32 %v3710, %v3823
      %v3929 = vadd.f32 %v3711, %v3824
      %v3930 = vadd.f32 %v3712, %v3825
      %v3931 = vadd.f32 %v3713, %v3826
      %v3932 = vadd.f32 %v3714, %v3827
      %v3933 = vadd.f32 %v3715, %v3828
      %v3934 = vadd.f32 %v3716, %v3829
      %v3935 = vadd.f32 %v3717, %v3830
      %v3936 = vadd.f32 %v3718, %v3831
      %v3937 = vadd.f32 %v3719, %v3832
      %v3938 = vadd.f32 %v3720, %v3833
      %v3939 = vadd.f32 %v3721, %v3834
      %v3940 = vadd.f32 %v3722, %v3835
      %s3941 = scalar_lea.vmem %s1, 6
      %v3942 = vld [vmem:[%s3941] sm:$0x1]
      %3944 = vset.pattern.permute.xlu0 0
      %3945 = vperm.xlu0 %3944, %v389
      %v3946 = vpop.permute.xlu0 %3945
      %3949 = vset.pattern.permute.xlu0 0
      %3950 = vperm.xlu0 %3949, %v390
      %v3951 = vpop.permute.xlu0 %3950
      %3954 = vset.pattern.permute.xlu0 0
      %3955 = vperm.xlu0 %3954, %v391
      %v3956 = vpop.permute.xlu0 %3955
      %3959 = vset.pattern.permute.xlu0 0
      %3960 = vperm.xlu0 %3959, %v392
      %v3961 = vpop.permute.xlu0 %3960
      %v3964 = vlaneseq
      %v3965 = vshrl.u32 %v3964, 7
      %v3966 = vsub.s32 0, %v3965
      %v3967 = vrot.slane %v3942, %v3966
      %v3969 = vmul.f32 %v432, %v3967
      %v3970 = vmul.f32 %v437, %v3967
      %v3971 = vmul.f32 %v442, %v3967
      %v3972 = vmul.f32 %v447, %v3967
      %v3973 = vmul.f32 %v452, %v3967
      %v3974 = vmul.f32 %v457, %v3967
      %v3975 = vmul.f32 %v462, %v3967
      %v3976 = vmul.f32 %v467, %v3967
      %v3977 = vmul.f32 %v472, %v3967
      %v3978 = vmul.f32 %v477, %v3967
      %v3979 = vmul.f32 %v482, %v3967
      %v3980 = vmul.f32 %v487, %v3967
      %v3981 = vmul.f32 %v492, %v3967
      %v3982 = vmul.f32 %v497, %v3967
      %v3983 = vmul.f32 %v502, %v3967
      %v3984 = vmul.f32 %v507, %v3967
      %v3985 = vmul.f32 %v512, %v3967
      %v3986 = vmul.f32 %v517, %v3967
      %v3987 = vmul.f32 %v522, %v3967
      %v3988 = vmul.f32 %v527, %v3967
      %v3989 = vmul.f32 %v532, %v3967
      %v3990 = vmul.f32 %v537, %v3967
      %v3991 = vmul.f32 %v542, %v3967
      %v3992 = vmul.f32 %v547, %v3967
      %v3993 = vmul.f32 %v552, %v3967
      %v3994 = vmul.f32 %v557, %v3967
      %v3995 = vmul.f32 %v562, %v3967
      %v3996 = vmul.f32 %v567, %v3967
      %v3997 = vmul.f32 %v572, %v3967
      %v3998 = vmul.f32 %v577, %v3967
      %v3999 = vmul.f32 %v582, %v3967
      %v4000 = vmul.f32 %v587, %v3967
      %v4001 = vmul.f32 %v592, %v3967
      %v4002 = vmul.f32 %v597, %v3967
      %v4003 = vmul.f32 %v602, %v3967
      %v4004 = vmul.f32 %v607, %v3967
      %v4005 = vmul.f32 %v612, %v3967
      %v4006 = vmul.f32 %v617, %v3967
      %v4007 = vmul.f32 %v622, %v3967
      %v4008 = vmul.f32 %v627, %v3967
      %v4009 = vmul.f32 %v632, %v3967
      %v4010 = vmul.f32 %v637, %v3967
      %v4011 = vmul.f32 %v642, %v3967
      %v4012 = vmul.f32 %v647, %v3967
      %v4013 = vmul.f32 %v652, %v3967
      %v4014 = vmul.f32 %v657, %v3967
      %v4015 = vmul.f32 %v662, %v3967
      %v4016 = vmul.f32 %v667, %v3967
      %v4017 = vmul.f32 %v672, %v3967
      %v4018 = vmul.f32 %v677, %v3967
      %v4019 = vmul.f32 %v682, %v3967
      %v4020 = vmul.f32 %v687, %v3967
      %v4021 = vmul.f32 %v692, %v3967
      %v4022 = vmul.f32 %v697, %v3967
      %v4023 = vmul.f32 %v702, %v3967
      %v4024 = vmul.f32 %v707, %v3967
      %v4025 = vmul.f32 %v712, %v3967
      %v4026 = vmul.f32 %v717, %v3967
      %v4027 = vmul.f32 %v722, %v3967
      %v4028 = vmul.f32 %v727, %v3967
      %v4029 = vmul.f32 %v732, %v3967
      %v4030 = vmul.f32 %v737, %v3967
      %v4031 = vmul.f32 %v742, %v3967
      %v4032 = vmul.f32 %v747, %v3967
      %v4033 = vmul.f32 %v752, %v3967
      %v4034 = vmul.f32 %v757, %v3967
      %v4035 = vmul.f32 %v762, %v3967
      %v4036 = vmul.f32 %v767, %v3967
      %v4037 = vmul.f32 %v772, %v3967
      %v4038 = vmul.f32 %v777, %v3967
      %v4039 = vmul.f32 %v782, %v3967
      %v4040 = vmul.f32 %v787, %v3967
      %v4041 = vmul.f32 %v792, %v3967
      %v4042 = vmul.f32 %v797, %v3967
      %v4043 = vmul.f32 %v802, %v3967
      %v4044 = vmul.f32 %v807, %v3967
      %v4045 = vmul.f32 %v812, %v3967
      %v4046 = vmul.f32 %v817, %v3967
      %v4047 = vmul.f32 %v822, %v3967
      %v4048 = vmul.f32 %v827, %v3967
      %v4049 = vmul.f32 %v832, %v3967
      %v4050 = vmul.f32 %v837, %v3967
      %v4051 = vmul.f32 %v842, %v3967
      %v4052 = vmul.f32 %v847, %v3967
      %v4053 = vmul.f32 %v852, %v3967
      %v4054 = vmul.f32 %v857, %v3967
      %v4055 = vmul.f32 %v862, %v3967
      %v4056 = vmul.f32 %v867, %v3967
      %v4057 = vmul.f32 %v872, %v3967
      %v4058 = vmul.f32 %v877, %v3967
      %v4059 = vmul.f32 %v882, %v3967
      %v4060 = vmul.f32 %v887, %v3967
      %v4061 = vmul.f32 %v892, %v3967
      %v4062 = vmul.f32 %v897, %v3967
      %v4063 = vmul.f32 %v902, %v3967
      %v4064 = vmul.f32 %v907, %v3967
      %v4065 = vmul.f32 %v912, %v3967
      %v4066 = vmul.f32 %v917, %v3967
      %v4067 = vmul.f32 %v1140, %v3967
      %v4068 = vmul.f32 %v2429, %v3967
      %v4069 = vmul.f32 %v2434, %v3967
      %v4070 = vmul.f32 %v2439, %v3967
      %v4071 = vmul.f32 %v3946, %v3967
      %v4072 = vmul.f32 %v3951, %v3967
      %v4073 = vmul.f32 %v3956, %v3967
      %v4074 = vmul.f32 %v3961, %v3967
      %vm4181 = vcmask 1043456
      %v4182 = vrot.slane %v3969, 4
      %v4183 = vrot.slane %v3970, 4
      %v4184 = vsel %vm4181, %v4182, %v4183
      %v4185 = vrot.slane %v3971, 4
      %v4186 = vsel %vm4181, %v4183, %v4185
      %v4187 = vrot.slane %v3972, 4
      %v4188 = vsel %vm4181, %v4185, %v4187
      %v4189 = vrot.slane %v3973, 4
      %v4190 = vsel %vm4181, %v4187, %v4189
      %v4191 = vrot.slane %v3974, 4
      %v4192 = vsel %vm4181, %v4189, %v4191
      %v4193 = vrot.slane %v3975, 4
      %v4194 = vsel %vm4181, %v4191, %v4193
      %v4195 = vrot.slane %v3976, 4
      %v4196 = vsel %vm4181, %v4193, %v4195
      %v4197 = vrot.slane %v3977, 4
      %v4198 = vsel %vm4181, %v4195, %v4197
      %v4199 = vrot.slane %v3978, 4
      %v4200 = vsel %vm4181, %v4197, %v4199
      %v4201 = vrot.slane %v3979, 4
      %v4202 = vsel %vm4181, %v4199, %v4201
      %v4203 = vrot.slane %v3980, 4
      %v4204 = vsel %vm4181, %v4201, %v4203
      %v4205 = vrot.slane %v3981, 4
      %v4206 = vsel %vm4181, %v4203, %v4205
      %v4207 = vrot.slane %v3982, 4
      %v4208 = vsel %vm4181, %v4205, %v4207
      %v4209 = vrot.slane %v3983, 4
      %v4210 = vsel %vm4181, %v4207, %v4209
      %v4211 = vrot.slane %v3984, 4
      %v4212 = vsel %vm4181, %v4209, %v4211
      %v4213 = vrot.slane %v3985, 4
      %v4214 = vsel %vm4181, %v4211, %v4213
      %v4215 = vrot.slane %v3986, 4
      %v4216 = vsel %vm4181, %v4213, %v4215
      %v4217 = vrot.slane %v3987, 4
      %v4218 = vsel %vm4181, %v4215, %v4217
      %v4219 = vrot.slane %v3988, 4
      %v4220 = vsel %vm4181, %v4217, %v4219
      %v4221 = vrot.slane %v3989, 4
      %v4222 = vsel %vm4181, %v4219, %v4221
      %v4223 = vrot.slane %v3990, 4
      %v4224 = vsel %vm4181, %v4221, %v4223
      %v4225 = vrot.slane %v3991, 4
      %v4226 = vsel %vm4181, %v4223, %v4225
      %v4227 = vrot.slane %v3992, 4
      %v4228 = vsel %vm4181, %v4225, %v4227
      %v4229 = vrot.slane %v3993, 4
      %v4230 = vsel %vm4181, %v4227, %v4229
      %v4231 = vrot.slane %v3994, 4
      %v4232 = vsel %vm4181, %v4229, %v4231
      %v4233 = vrot.slane %v3995, 4
      %v4234 = vsel %vm4181, %v4231, %v4233
      %v4235 = vrot.slane %v3996, 4
      %v4236 = vsel %vm4181, %v4233, %v4235
      %v4237 = vrot.slane %v3997, 4
      %v4238 = vsel %vm4181, %v4235, %v4237
      %v4239 = vrot.slane %v3998, 4
      %v4240 = vsel %vm4181, %v4237, %v4239
      %v4241 = vrot.slane %v3999, 4
      %v4242 = vsel %vm4181, %v4239, %v4241
      %v4243 = vrot.slane %v4000, 4
      %v4244 = vsel %vm4181, %v4241, %v4243
      %v4245 = vrot.slane %v4001, 4
      %v4246 = vsel %vm4181, %v4243, %v4245
      %v4247 = vrot.slane %v4002, 4
      %v4248 = vsel %vm4181, %v4245, %v4247
      %v4249 = vrot.slane %v4003, 4
      %v4250 = vsel %vm4181, %v4247, %v4249
      %v4251 = vrot.slane %v4004, 4
      %v4252 = vsel %vm4181, %v4249, %v4251
      %v4253 = vrot.slane %v4005, 4
      %v4254 = vsel %vm4181, %v4251, %v4253
      %v4255 = vrot.slane %v4006, 4
      %v4256 = vsel %vm4181, %v4253, %v4255
      %v4257 = vrot.slane %v4007, 4
      %v4258 = vsel %vm4181, %v4255, %v4257
      %v4259 = vrot.slane %v4008, 4
      %v4260 = vsel %vm4181, %v4257, %v4259
      %v4261 = vrot.slane %v4009, 4
      %v4262 = vsel %vm4181, %v4259, %v4261
      %v4263 = vrot.slane %v4010, 4
      %v4264 = vsel %vm4181, %v4261, %v4263
      %v4265 = vrot.slane %v4011, 4
      %v4266 = vsel %vm4181, %v4263, %v4265
      %v4267 = vrot.slane %v4012, 4
      %v4268 = vsel %vm4181, %v4265, %v4267
      %v4269 = vrot.slane %v4013, 4
      %v4270 = vsel %vm4181, %v4267, %v4269
      %v4271 = vrot.slane %v4014, 4
      %v4272 = vsel %vm4181, %v4269, %v4271
      %v4273 = vrot.slane %v4015, 4
      %v4274 = vsel %vm4181, %v4271, %v4273
      %v4275 = vrot.slane %v4016, 4
      %v4276 = vsel %vm4181, %v4273, %v4275
      %v4277 = vrot.slane %v4017, 4
      %v4278 = vsel %vm4181, %v4275, %v4277
      %v4279 = vrot.slane %v4018, 4
      %v4280 = vsel %vm4181, %v4277, %v4279
      %v4281 = vrot.slane %v4019, 4
      %v4282 = vsel %vm4181, %v4279, %v4281
      %v4283 = vrot.slane %v4020, 4
      %v4284 = vsel %vm4181, %v4281, %v4283
      %v4285 = vrot.slane %v4021, 4
      %v4286 = vsel %vm4181, %v4283, %v4285
      %v4287 = vrot.slane %v4022, 4
      %v4288 = vsel %vm4181, %v4285, %v4287
      %v4289 = vrot.slane %v4023, 4
      %v4290 = vsel %vm4181, %v4287, %v4289
      %v4291 = vrot.slane %v4024, 4
      %v4292 = vsel %vm4181, %v4289, %v4291
      %v4293 = vrot.slane %v4025, 4
      %v4294 = vsel %vm4181, %v4291, %v4293
      %v4295 = vrot.slane %v4026, 4
      %v4296 = vsel %vm4181, %v4293, %v4295
      %v4297 = vrot.slane %v4027, 4
      %v4298 = vsel %vm4181, %v4295, %v4297
      %v4299 = vrot.slane %v4028, 4
      %v4300 = vsel %vm4181, %v4297, %v4299
      %v4301 = vrot.slane %v4029, 4
      %v4302 = vsel %vm4181, %v4299, %v4301
      %v4303 = vrot.slane %v4030, 4
      %v4304 = vsel %vm4181, %v4301, %v4303
      %v4305 = vrot.slane %v4031, 4
      %v4306 = vsel %vm4181, %v4303, %v4305
      %v4307 = vrot.slane %v4032, 4
      %v4308 = vsel %vm4181, %v4305, %v4307
      %v4309 = vrot.slane %v4033, 4
      %v4310 = vsel %vm4181, %v4307, %v4309
      %v4311 = vrot.slane %v4034, 4
      %v4312 = vsel %vm4181, %v4309, %v4311
      %v4313 = vrot.slane %v4035, 4
      %v4314 = vsel %vm4181, %v4311, %v4313
      %v4315 = vrot.slane %v4036, 4
      %v4316 = vsel %vm4181, %v4313, %v4315
      %v4317 = vrot.slane %v4037, 4
      %v4318 = vsel %vm4181, %v4315, %v4317
      %v4319 = vrot.slane %v4038, 4
      %v4320 = vsel %vm4181, %v4317, %v4319
      %v4321 = vrot.slane %v4039, 4
      %v4322 = vsel %vm4181, %v4319, %v4321
      %v4323 = vrot.slane %v4040, 4
      %v4324 = vsel %vm4181, %v4321, %v4323
      %v4325 = vrot.slane %v4041, 4
      %v4326 = vsel %vm4181, %v4323, %v4325
      %v4327 = vrot.slane %v4042, 4
      %v4328 = vsel %vm4181, %v4325, %v4327
      %v4329 = vrot.slane %v4043, 4
      %v4330 = vsel %vm4181, %v4327, %v4329
      %v4331 = vrot.slane %v4044, 4
      %v4332 = vsel %vm4181, %v4329, %v4331
      %v4333 = vrot.slane %v4045, 4
      %v4334 = vsel %vm4181, %v4331, %v4333
      %v4335 = vrot.slane %v4046, 4
      %v4336 = vsel %vm4181, %v4333, %v4335
      %v4337 = vrot.slane %v4047, 4
      %v4338 = vsel %vm4181, %v4335, %v4337
      %v4339 = vrot.slane %v4048, 4
      %v4340 = vsel %vm4181, %v4337, %v4339
      %v4341 = vrot.slane %v4049, 4
      %v4342 = vsel %vm4181, %v4339, %v4341
      %v4343 = vrot.slane %v4050, 4
      %v4344 = vsel %vm4181, %v4341, %v4343
      %v4345 = vrot.slane %v4051, 4
      %v4346 = vsel %vm4181, %v4343, %v4345
      %v4347 = vrot.slane %v4052, 4
      %v4348 = vsel %vm4181, %v4345, %v4347
      %v4349 = vrot.slane %v4053, 4
      %v4350 = vsel %vm4181, %v4347, %v4349
      %v4351 = vrot.slane %v4054, 4
      %v4352 = vsel %vm4181, %v4349, %v4351
      %v4353 = vrot.slane %v4055, 4
      %v4354 = vsel %vm4181, %v4351, %v4353
      %v4355 = vrot.slane %v4056, 4
      %v4356 = vsel %vm4181, %v4353, %v4355
      %v4357 = vrot.slane %v4057, 4
      %v4358 = vsel %vm4181, %v4355, %v4357
      %v4359 = vrot.slane %v4058, 4
      %v4360 = vsel %vm4181, %v4357, %v4359
      %v4361 = vrot.slane %v4059, 4
      %v4362 = vsel %vm4181, %v4359, %v4361
      %v4363 = vrot.slane %v4060, 4
      %v4364 = vsel %vm4181, %v4361, %v4363
      %v4365 = vrot.slane %v4061, 4
      %v4366 = vsel %vm4181, %v4363, %v4365
      %v4367 = vrot.slane %v4062, 4
      %v4368 = vsel %vm4181, %v4365, %v4367
      %v4369 = vrot.slane %v4063, 4
      %v4370 = vsel %vm4181, %v4367, %v4369
      %v4371 = vrot.slane %v4064, 4
      %v4372 = vsel %vm4181, %v4369, %v4371
      %v4373 = vrot.slane %v4065, 4
      %v4374 = vsel %vm4181, %v4371, %v4373
      %v4375 = vrot.slane %v4066, 4
      %v4376 = vsel %vm4181, %v4373, %v4375
      %v4377 = vrot.slane %v4067, 4
      %v4378 = vsel %vm4181, %v4375, %v4377
      %v4379 = vrot.slane %v4068, 4
      %v4380 = vsel %vm4181, %v4377, %v4379
      %v4381 = vrot.slane %v4069, 4
      %v4382 = vsel %vm4181, %v4379, %v4381
      %v4383 = vrot.slane %v4070, 4
      %v4384 = vsel %vm4181, %v4381, %v4383
      %v4385 = vrot.slane %v4071, 4
      %v4386 = vsel %vm4181, %v4383, %v4385
      %v4387 = vrot.slane %v4072, 4
      %v4388 = vsel %vm4181, %v4385, %v4387
      %v4389 = vrot.slane %v4073, 4
      %v4390 = vsel %vm4181, %v4387, %v4389
      %v4391 = vrot.slane %v4074, 4
      %v4392 = vsel %vm4181, %v4389, %v4391
      %v4498 = vadd.f32 %v3836, %v4184
      %v4499 = vadd.f32 %v3837, %v4186
      %v4500 = vadd.f32 %v3838, %v4188
      %v4501 = vadd.f32 %v3839, %v4190
      %v4502 = vadd.f32 %v3840, %v4192
      %v4503 = vadd.f32 %v3841, %v4194
      %v4504 = vadd.f32 %v3842, %v4196
      %v4505 = vadd.f32 %v3843, %v4198
      %v4506 = vadd.f32 %v3844, %v4200
      %v4507 = vadd.f32 %v3845, %v4202
      %v4508 = vadd.f32 %v3846, %v4204
      %v4509 = vadd.f32 %v3847, %v4206
      %v4510 = vadd.f32 %v3848, %v4208
      %v4511 = vadd.f32 %v3849, %v4210
      %v4512 = vadd.f32 %v3850, %v4212
      %v4513 = vadd.f32 %v3851, %v4214
      %v4514 = vadd.f32 %v3852, %v4216
      %v4515 = vadd.f32 %v3853, %v4218
      %v4516 = vadd.f32 %v3854, %v4220
      %v4517 = vadd.f32 %v3855, %v4222
      %v4518 = vadd.f32 %v3856, %v4224
      %v4519 = vadd.f32 %v3857, %v4226
      %v4520 = vadd.f32 %v3858, %v4228
      %v4521 = vadd.f32 %v3859, %v4230
      %v4522 = vadd.f32 %v3860, %v4232
      %v4523 = vadd.f32 %v3861, %v4234
      %v4524 = vadd.f32 %v3862, %v4236
      %v4525 = vadd.f32 %v3863, %v4238
      %v4526 = vadd.f32 %v3864, %v4240
      %v4527 = vadd.f32 %v3865, %v4242
      %v4528 = vadd.f32 %v3866, %v4244
      %v4529 = vadd.f32 %v3867, %v4246
      %v4530 = vadd.f32 %v3868, %v4248
      %v4531 = vadd.f32 %v3869, %v4250
      %v4532 = vadd.f32 %v3870, %v4252
      %v4533 = vadd.f32 %v3871, %v4254
      %v4534 = vadd.f32 %v3872, %v4256
      %v4535 = vadd.f32 %v3873, %v4258
      %v4536 = vadd.f32 %v3874, %v4260
      %v4537 = vadd.f32 %v3875, %v4262
      %v4538 = vadd.f32 %v3876, %v4264
      %v4539 = vadd.f32 %v3877, %v4266
      %v4540 = vadd.f32 %v3878, %v4268
      %v4541 = vadd.f32 %v3879, %v4270
      %v4542 = vadd.f32 %v3880, %v4272
      %v4543 = vadd.f32 %v3881, %v4274
      %v4544 = vadd.f32 %v3882, %v4276
      %v4545 = vadd.f32 %v3883, %v4278
      %v4546 = vadd.f32 %v3884, %v4280
      %v4547 = vadd.f32 %v3885, %v4282
      %v4548 = vadd.f32 %v3886, %v4284
      %v4549 = vadd.f32 %v3887, %v4286
      %v4550 = vadd.f32 %v3888, %v4288
      %v4551 = vadd.f32 %v3889, %v4290
      %v4552 = vadd.f32 %v3890, %v4292
      %v4553 = vadd.f32 %v3891, %v4294
      %v4554 = vadd.f32 %v3892, %v4296
      %v4555 = vadd.f32 %v3893, %v4298
      %v4556 = vadd.f32 %v3894, %v4300
      %v4557 = vadd.f32 %v3895, %v4302
      %v4558 = vadd.f32 %v3896, %v4304
      %v4559 = vadd.f32 %v3897, %v4306
      %v4560 = vadd.f32 %v3898, %v4308
      %v4561 = vadd.f32 %v3899, %v4310
      %v4562 = vadd.f32 %v3900, %v4312
      %v4563 = vadd.f32 %v3901, %v4314
      %v4564 = vadd.f32 %v3902, %v4316
      %v4565 = vadd.f32 %v3903, %v4318
      %v4566 = vadd.f32 %v3904, %v4320
      %v4567 = vadd.f32 %v3905, %v4322
      %v4568 = vadd.f32 %v3906, %v4324
      %v4569 = vadd.f32 %v3907, %v4326
      %v4570 = vadd.f32 %v3908, %v4328
      %v4571 = vadd.f32 %v3909, %v4330
      %v4572 = vadd.f32 %v3910, %v4332
      %v4573 = vadd.f32 %v3911, %v4334
      %v4574 = vadd.f32 %v3912, %v4336
      %v4575 = vadd.f32 %v3913, %v4338
      %v4576 = vadd.f32 %v3914, %v4340
      %v4577 = vadd.f32 %v3915, %v4342
      %v4578 = vadd.f32 %v3916, %v4344
      %v4579 = vadd.f32 %v3917, %v4346
      %v4580 = vadd.f32 %v3918, %v4348
      %v4581 = vadd.f32 %v3919, %v4350
      %v4582 = vadd.f32 %v3920, %v4352
      %v4583 = vadd.f32 %v3921, %v4354
      %v4584 = vadd.f32 %v3922, %v4356
      %v4585 = vadd.f32 %v3923, %v4358
      %v4586 = vadd.f32 %v3924, %v4360
      %v4587 = vadd.f32 %v3925, %v4362
      %v4588 = vadd.f32 %v3926, %v4364
      %v4589 = vadd.f32 %v3927, %v4366
      %v4590 = vadd.f32 %v3928, %v4368
      %v4591 = vadd.f32 %v3929, %v4370
      %v4592 = vadd.f32 %v3930, %v4372
      %v4593 = vadd.f32 %v3931, %v4374
      %v4594 = vadd.f32 %v3932, %v4376
      %v4595 = vadd.f32 %v3933, %v4378
      %v4596 = vadd.f32 %v3934, %v4380
      %v4597 = vadd.f32 %v3935, %v4382
      %v4598 = vadd.f32 %v3936, %v4384
      %v4599 = vadd.f32 %v3937, %v4386
      %v4600 = vadd.f32 %v3938, %v4388
      %v4601 = vadd.f32 %v3939, %v4390
      %v4602 = vadd.f32 %v3940, %v4392
      %s4603 = scalar_lea.vmem %s1, 7
      %v4604 = vld [vmem:[%s4603] sm:$0x1]
      %v4606 = vlaneseq
      %v4607 = vshrl.u32 %v4606, 7
      %v4608 = vsub.s32 0, %v4607
      %v4609 = vrot.slane %v4604, %v4608
      %v4611 = vmul.f32 %v432, %v4609
      %v4612 = vmul.f32 %v437, %v4609
      %v4613 = vmul.f32 %v442, %v4609
      %v4614 = vmul.f32 %v447, %v4609
      %v4615 = vmul.f32 %v452, %v4609
      %v4616 = vmul.f32 %v457, %v4609
      %v4617 = vmul.f32 %v462, %v4609
      %v4618 = vmul.f32 %v467, %v4609
      %v4619 = vmul.f32 %v472, %v4609
      %v4620 = vmul.f32 %v477, %v4609
      %v4621 = vmul.f32 %v482, %v4609
      %v4622 = vmul.f32 %v487, %v4609
      %v4623 = vmul.f32 %v492, %v4609
      %v4624 = vmul.f32 %v497, %v4609
      %v4625 = vmul.f32 %v502, %v4609
      %v4626 = vmul.f32 %v507, %v4609
      %v4627 = vmul.f32 %v512, %v4609
      %v4628 = vmul.f32 %v517, %v4609
      %v4629 = vmul.f32 %v522, %v4609
      %v4630 = vmul.f32 %v527, %v4609
      %v4631 = vmul.f32 %v532, %v4609
      %v4632 = vmul.f32 %v537, %v4609
      %v4633 = vmul.f32 %v542, %v4609
      %v4634 = vmul.f32 %v547, %v4609
      %v4635 = vmul.f32 %v552, %v4609
      %v4636 = vmul.f32 %v557, %v4609
      %v4637 = vmul.f32 %v562, %v4609
      %v4638 = vmul.f32 %v567, %v4609
      %v4639 = vmul.f32 %v572, %v4609
      %v4640 = vmul.f32 %v577, %v4609
      %v4641 = vmul.f32 %v582, %v4609
      %v4642 = vmul.f32 %v587, %v4609
      %v4643 = vmul.f32 %v592, %v4609
      %v4644 = vmul.f32 %v597, %v4609
      %v4645 = vmul.f32 %v602, %v4609
      %v4646 = vmul.f32 %v607, %v4609
      %v4647 = vmul.f32 %v612, %v4609
      %v4648 = vmul.f32 %v617, %v4609
      %v4649 = vmul.f32 %v622, %v4609
      %v4650 = vmul.f32 %v627, %v4609
      %v4651 = vmul.f32 %v632, %v4609
      %v4652 = vmul.f32 %v637, %v4609
      %v4653 = vmul.f32 %v642, %v4609
      %v4654 = vmul.f32 %v647, %v4609
      %v4655 = vmul.f32 %v652, %v4609
      %v4656 = vmul.f32 %v657, %v4609
      %v4657 = vmul.f32 %v662, %v4609
      %v4658 = vmul.f32 %v667, %v4609
      %v4659 = vmul.f32 %v672, %v4609
      %v4660 = vmul.f32 %v677, %v4609
      %v4661 = vmul.f32 %v682, %v4609
      %v4662 = vmul.f32 %v687, %v4609
      %v4663 = vmul.f32 %v692, %v4609
      %v4664 = vmul.f32 %v697, %v4609
      %v4665 = vmul.f32 %v702, %v4609
      %v4666 = vmul.f32 %v707, %v4609
      %v4667 = vmul.f32 %v712, %v4609
      %v4668 = vmul.f32 %v717, %v4609
      %v4669 = vmul.f32 %v722, %v4609
      %v4670 = vmul.f32 %v727, %v4609
      %v4671 = vmul.f32 %v732, %v4609
      %v4672 = vmul.f32 %v737, %v4609
      %v4673 = vmul.f32 %v742, %v4609
      %v4674 = vmul.f32 %v747, %v4609
      %v4675 = vmul.f32 %v752, %v4609
      %v4676 = vmul.f32 %v757, %v4609
      %v4677 = vmul.f32 %v762, %v4609
      %v4678 = vmul.f32 %v767, %v4609
      %v4679 = vmul.f32 %v772, %v4609
      %v4680 = vmul.f32 %v777, %v4609
      %v4681 = vmul.f32 %v782, %v4609
      %v4682 = vmul.f32 %v787, %v4609
      %v4683 = vmul.f32 %v792, %v4609
      %v4684 = vmul.f32 %v797, %v4609
      %v4685 = vmul.f32 %v802, %v4609
      %v4686 = vmul.f32 %v807, %v4609
      %v4687 = vmul.f32 %v812, %v4609
      %v4688 = vmul.f32 %v817, %v4609
      %v4689 = vmul.f32 %v822, %v4609
      %v4690 = vmul.f32 %v827, %v4609
      %v4691 = vmul.f32 %v832, %v4609
      %v4692 = vmul.f32 %v837, %v4609
      %v4693 = vmul.f32 %v842, %v4609
      %v4694 = vmul.f32 %v847, %v4609
      %v4695 = vmul.f32 %v852, %v4609
      %v4696 = vmul.f32 %v857, %v4609
      %v4697 = vmul.f32 %v862, %v4609
      %v4698 = vmul.f32 %v867, %v4609
      %v4699 = vmul.f32 %v872, %v4609
      %v4700 = vmul.f32 %v877, %v4609
      %v4701 = vmul.f32 %v882, %v4609
      %v4702 = vmul.f32 %v887, %v4609
      %v4703 = vmul.f32 %v892, %v4609
      %v4704 = vmul.f32 %v897, %v4609
      %v4705 = vmul.f32 %v902, %v4609
      %v4706 = vmul.f32 %v907, %v4609
      %v4707 = vmul.f32 %v912, %v4609
      %v4708 = vmul.f32 %v917, %v4609
      %v4709 = vmul.f32 %v1140, %v4609
      %v4710 = vmul.f32 %v2429, %v4609
      %v4711 = vmul.f32 %v2434, %v4609
      %v4712 = vmul.f32 %v2439, %v4609
      %v4713 = vmul.f32 %v3946, %v4609
      %v4714 = vmul.f32 %v3951, %v4609
      %v4715 = vmul.f32 %v3956, %v4609
      %v4716 = vmul.f32 %v3961, %v4609
      %vm4823 = vcmask 1042432
      %v4824 = vrot.slane %v4611, 5
      %v4825 = vrot.slane %v4612, 5
      %v4826 = vsel %vm4823, %v4824, %v4825
      %v4827 = vrot.slane %v4613, 5
      %v4828 = vsel %vm4823, %v4825, %v4827
      %v4829 = vrot.slane %v4614, 5
      %v4830 = vsel %vm4823, %v4827, %v4829
      %v4831 = vrot.slane %v4615, 5
      %v4832 = vsel %vm4823, %v4829, %v4831
      %v4833 = vrot.slane %v4616, 5
      %v4834 = vsel %vm4823, %v4831, %v4833
      %v4835 = vrot.slane %v4617, 5
      %v4836 = vsel %vm4823, %v4833, %v4835
      %v4837 = vrot.slane %v4618, 5
      %v4838 = vsel %vm4823, %v4835, %v4837
      %v4839 = vrot.slane %v4619, 5
      %v4840 = vsel %vm4823, %v4837, %v4839
      %v4841 = vrot.slane %v4620, 5
      %v4842 = vsel %vm4823, %v4839, %v4841
      %v4843 = vrot.slane %v4621, 5
      %v4844 = vsel %vm4823, %v4841, %v4843
      %v4845 = vrot.slane %v4622, 5
      %v4846 = vsel %vm4823, %v4843, %v4845
      %v4847 = vrot.slane %v4623, 5
      %v4848 = vsel %vm4823, %v4845, %v4847
      %v4849 = vrot.slane %v4624, 5
      %v4850 = vsel %vm4823, %v4847, %v4849
      %v4851 = vrot.slane %v4625, 5
      %v4852 = vsel %vm4823, %v4849, %v4851
      %v4853 = vrot.slane %v4626, 5
      %v4854 = vsel %vm4823, %v4851, %v4853
      %v4855 = vrot.slane %v4627, 5
      %v4856 = vsel %vm4823, %v4853, %v4855
      %v4857 = vrot.slane %v4628, 5
      %v4858 = vsel %vm4823, %v4855, %v4857
      %v4859 = vrot.slane %v4629, 5
      %v4860 = vsel %vm4823, %v4857, %v4859
      %v4861 = vrot.slane %v4630, 5
      %v4862 = vsel %vm4823, %v4859, %v4861
      %v4863 = vrot.slane %v4631, 5
      %v4864 = vsel %vm4823, %v4861, %v4863
      %v4865 = vrot.slane %v4632, 5
      %v4866 = vsel %vm4823, %v4863, %v4865
      %v4867 = vrot.slane %v4633, 5
      %v4868 = vsel %vm4823, %v4865, %v4867
      %v4869 = vrot.slane %v4634, 5
      %v4870 = vsel %vm4823, %v4867, %v4869
      %v4871 = vrot.slane %v4635, 5
      %v4872 = vsel %vm4823, %v4869, %v4871
      %v4873 = vrot.slane %v4636, 5
      %v4874 = vsel %vm4823, %v4871, %v4873
      %v4875 = vrot.slane %v4637, 5
      %v4876 = vsel %vm4823, %v4873, %v4875
      %v4877 = vrot.slane %v4638, 5
      %v4878 = vsel %vm4823, %v4875, %v4877
      %v4879 = vrot.slane %v4639, 5
      %v4880 = vsel %vm4823, %v4877, %v4879
      %v4881 = vrot.slane %v4640, 5
      %v4882 = vsel %vm4823, %v4879, %v4881
      %v4883 = vrot.slane %v4641, 5
      %v4884 = vsel %vm4823, %v4881, %v4883
      %v4885 = vrot.slane %v4642, 5
      %v4886 = vsel %vm4823, %v4883, %v4885
      %v4887 = vrot.slane %v4643, 5
      %v4888 = vsel %vm4823, %v4885, %v4887
      %v4889 = vrot.slane %v4644, 5
      %v4890 = vsel %vm4823, %v4887, %v4889
      %v4891 = vrot.slane %v4645, 5
      %v4892 = vsel %vm4823, %v4889, %v4891
      %v4893 = vrot.slane %v4646, 5
      %v4894 = vsel %vm4823, %v4891, %v4893
      %v4895 = vrot.slane %v4647, 5
      %v4896 = vsel %vm4823, %v4893, %v4895
      %v4897 = vrot.slane %v4648, 5
      %v4898 = vsel %vm4823, %v4895, %v4897
      %v4899 = vrot.slane %v4649, 5
      %v4900 = vsel %vm4823, %v4897, %v4899
      %v4901 = vrot.slane %v4650, 5
      %v4902 = vsel %vm4823, %v4899, %v4901
      %v4903 = vrot.slane %v4651, 5
      %v4904 = vsel %vm4823, %v4901, %v4903
      %v4905 = vrot.slane %v4652, 5
      %v4906 = vsel %vm4823, %v4903, %v4905
      %v4907 = vrot.slane %v4653, 5
      %v4908 = vsel %vm4823, %v4905, %v4907
      %v4909 = vrot.slane %v4654, 5
      %v4910 = vsel %vm4823, %v4907, %v4909
      %v4911 = vrot.slane %v4655, 5
      %v4912 = vsel %vm4823, %v4909, %v4911
      %v4913 = vrot.slane %v4656, 5
      %v4914 = vsel %vm4823, %v4911, %v4913
      %v4915 = vrot.slane %v4657, 5
      %v4916 = vsel %vm4823, %v4913, %v4915
      %v4917 = vrot.slane %v4658, 5
      %v4918 = vsel %vm4823, %v4915, %v4917
      %v4919 = vrot.slane %v4659, 5
      %v4920 = vsel %vm4823, %v4917, %v4919
      %v4921 = vrot.slane %v4660, 5
      %v4922 = vsel %vm4823, %v4919, %v4921
      %v4923 = vrot.slane %v4661, 5
      %v4924 = vsel %vm4823, %v4921, %v4923
      %v4925 = vrot.slane %v4662, 5
      %v4926 = vsel %vm4823, %v4923, %v4925
      %v4927 = vrot.slane %v4663, 5
      %v4928 = vsel %vm4823, %v4925, %v4927
      %v4929 = vrot.slane %v4664, 5
      %v4930 = vsel %vm4823, %v4927, %v4929
      %v4931 = vrot.slane %v4665, 5
      %v4932 = vsel %vm4823, %v4929, %v4931
      %v4933 = vrot.slane %v4666, 5
      %v4934 = vsel %vm4823, %v4931, %v4933
      %v4935 = vrot.slane %v4667, 5
      %v4936 = vsel %vm4823, %v4933, %v4935
      %v4937 = vrot.slane %v4668, 5
      %v4938 = vsel %vm4823, %v4935, %v4937
      %v4939 = vrot.slane %v4669, 5
      %v4940 = vsel %vm4823, %v4937, %v4939
      %v4941 = vrot.slane %v4670, 5
      %v4942 = vsel %vm4823, %v4939, %v4941
      %v4943 = vrot.slane %v4671, 5
      %v4944 = vsel %vm4823, %v4941, %v4943
      %v4945 = vrot.slane %v4672, 5
      %v4946 = vsel %vm4823, %v4943, %v4945
      %v4947 = vrot.slane %v4673, 5
      %v4948 = vsel %vm4823, %v4945, %v4947
      %v4949 = vrot.slane %v4674, 5
      %v4950 = vsel %vm4823, %v4947, %v4949
      %v4951 = vrot.slane %v4675, 5
      %v4952 = vsel %vm4823, %v4949, %v4951
      %v4953 = vrot.slane %v4676, 5
      %v4954 = vsel %vm4823, %v4951, %v4953
      %v4955 = vrot.slane %v4677, 5
      %v4956 = vsel %vm4823, %v4953, %v4955
      %v4957 = vrot.slane %v4678, 5
      %v4958 = vsel %vm4823, %v4955, %v4957
      %v4959 = vrot.slane %v4679, 5
      %v4960 = vsel %vm4823, %v4957, %v4959
      %v4961 = vrot.slane %v4680, 5
      %v4962 = vsel %vm4823, %v4959, %v4961
      %v4963 = vrot.slane %v4681, 5
      %v4964 = vsel %vm4823, %v4961, %v4963
      %v4965 = vrot.slane %v4682, 5
      %v4966 = vsel %vm4823, %v4963, %v4965
      %v4967 = vrot.slane %v4683, 5
      %v4968 = vsel %vm4823, %v4965, %v4967
      %v4969 = vrot.slane %v4684, 5
      %v4970 = vsel %vm4823, %v4967, %v4969
      %v4971 = vrot.slane %v4685, 5
      %v4972 = vsel %vm4823, %v4969, %v4971
      %v4973 = vrot.slane %v4686, 5
      %v4974 = vsel %vm4823, %v4971, %v4973
      %v4975 = vrot.slane %v4687, 5
      %v4976 = vsel %vm4823, %v4973, %v4975
      %v4977 = vrot.slane %v4688, 5
      %v4978 = vsel %vm4823, %v4975, %v4977
      %v4979 = vrot.slane %v4689, 5
      %v4980 = vsel %vm4823, %v4977, %v4979
      %v4981 = vrot.slane %v4690, 5
      %v4982 = vsel %vm4823, %v4979, %v4981
      %v4983 = vrot.slane %v4691, 5
      %v4984 = vsel %vm4823, %v4981, %v4983
      %v4985 = vrot.slane %v4692, 5
      %v4986 = vsel %vm4823, %v4983, %v4985
      %v4987 = vrot.slane %v4693, 5
      %v4988 = vsel %vm4823, %v4985, %v4987
      %v4989 = vrot.slane %v4694, 5
      %v4990 = vsel %vm4823, %v4987, %v4989
      %v4991 = vrot.slane %v4695, 5
      %v4992 = vsel %vm4823, %v4989, %v4991
      %v4993 = vrot.slane %v4696, 5
      %v4994 = vsel %vm4823, %v4991, %v4993
      %v4995 = vrot.slane %v4697, 5
      %v4996 = vsel %vm4823, %v4993, %v4995
      %v4997 = vrot.slane %v4698, 5
      %v4998 = vsel %vm4823, %v4995, %v4997
      %v4999 = vrot.slane %v4699, 5
      %v5000 = vsel %vm4823, %v4997, %v4999
      %v5001 = vrot.slane %v4700, 5
      %v5002 = vsel %vm4823, %v4999, %v5001
      %v5003 = vrot.slane %v4701, 5
      %v5004 = vsel %vm4823, %v5001, %v5003
      %v5005 = vrot.slane %v4702, 5
      %v5006 = vsel %vm4823, %v5003, %v5005
      %v5007 = vrot.slane %v4703, 5
      %v5008 = vsel %vm4823, %v5005, %v5007
      %v5009 = vrot.slane %v4704, 5
      %v5010 = vsel %vm4823, %v5007, %v5009
      %v5011 = vrot.slane %v4705, 5
      %v5012 = vsel %vm4823, %v5009, %v5011
      %v5013 = vrot.slane %v4706, 5
      %v5014 = vsel %vm4823, %v5011, %v5013
      %v5015 = vrot.slane %v4707, 5
      %v5016 = vsel %vm4823, %v5013, %v5015
      %v5017 = vrot.slane %v4708, 5
      %v5018 = vsel %vm4823, %v5015, %v5017
      %v5019 = vrot.slane %v4709, 5
      %v5020 = vsel %vm4823, %v5017, %v5019
      %v5021 = vrot.slane %v4710, 5
      %v5022 = vsel %vm4823, %v5019, %v5021
      %v5023 = vrot.slane %v4711, 5
      %v5024 = vsel %vm4823, %v5021, %v5023
      %v5025 = vrot.slane %v4712, 5
      %v5026 = vsel %vm4823, %v5023, %v5025
      %v5027 = vrot.slane %v4713, 5
      %v5028 = vsel %vm4823, %v5025, %v5027
      %v5029 = vrot.slane %v4714, 5
      %v5030 = vsel %vm4823, %v5027, %v5029
      %v5031 = vrot.slane %v4715, 5
      %v5032 = vsel %vm4823, %v5029, %v5031
      %v5033 = vrot.slane %v4716, 5
      %v5034 = vsel %vm4823, %v5031, %v5033
      %v5140 = vadd.f32 %v4498, %v4826
      %v5141 = vadd.f32 %v4499, %v4828
      %v5142 = vadd.f32 %v4500, %v4830
      %v5143 = vadd.f32 %v4501, %v4832
      %v5144 = vadd.f32 %v4502, %v4834
      %v5145 = vadd.f32 %v4503, %v4836
      %v5146 = vadd.f32 %v4504, %v4838
      %v5147 = vadd.f32 %v4505, %v4840
      %v5148 = vadd.f32 %v4506, %v4842
      %v5149 = vadd.f32 %v4507, %v4844
      %v5150 = vadd.f32 %v4508, %v4846
      %v5151 = vadd.f32 %v4509, %v4848
      %v5152 = vadd.f32 %v4510, %v4850
      %v5153 = vadd.f32 %v4511, %v4852
      %v5154 = vadd.f32 %v4512, %v4854
      %v5155 = vadd.f32 %v4513, %v4856
      %v5156 = vadd.f32 %v4514, %v4858
      %v5157 = vadd.f32 %v4515, %v4860
      %v5158 = vadd.f32 %v4516, %v4862
      %v5159 = vadd.f32 %v4517, %v4864
      %v5160 = vadd.f32 %v4518, %v4866
      %v5161 = vadd.f32 %v4519, %v4868
      %v5162 = vadd.f32 %v4520, %v4870
      %v5163 = vadd.f32 %v4521, %v4872
      %v5164 = vadd.f32 %v4522, %v4874
      %v5165 = vadd.f32 %v4523, %v4876
      %v5166 = vadd.f32 %v4524, %v4878
      %v5167 = vadd.f32 %v4525, %v4880
      %v5168 = vadd.f32 %v4526, %v4882
      %v5169 = vadd.f32 %v4527, %v4884
      %v5170 = vadd.f32 %v4528, %v4886
      %v5171 = vadd.f32 %v4529, %v4888
      %v5172 = vadd.f32 %v4530, %v4890
      %v5173 = vadd.f32 %v4531, %v4892
      %v5174 = vadd.f32 %v4532, %v4894
      %v5175 = vadd.f32 %v4533, %v4896
      %v5176 = vadd.f32 %v4534, %v4898
      %v5177 = vadd.f32 %v4535, %v4900
      %v5178 = vadd.f32 %v4536, %v4902
      %v5179 = vadd.f32 %v4537, %v4904
      %v5180 = vadd.f32 %v4538, %v4906
      %v5181 = vadd.f32 %v4539, %v4908
      %v5182 = vadd.f32 %v4540, %v4910
      %v5183 = vadd.f32 %v4541, %v4912
      %v5184 = vadd.f32 %v4542, %v4914
      %v5185 = vadd.f32 %v4543, %v4916
      %v5186 = vadd.f32 %v4544, %v4918
      %v5187 = vadd.f32 %v4545, %v4920
      %v5188 = vadd.f32 %v4546, %v4922
      %v5189 = vadd.f32 %v4547, %v4924
      %v5190 = vadd.f32 %v4548, %v4926
      %v5191 = vadd.f32 %v4549, %v4928
      %v5192 = vadd.f32 %v4550, %v4930
      %v5193 = vadd.f32 %v4551, %v4932
      %v5194 = vadd.f32 %v4552, %v4934
      %v5195 = vadd.f32 %v4553, %v4936
      %v5196 = vadd.f32 %v4554, %v4938
      %v5197 = vadd.f32 %v4555, %v4940
      %v5198 = vadd.f32 %v4556, %v4942
      %v5199 = vadd.f32 %v4557, %v4944
      %v5200 = vadd.f32 %v4558, %v4946
      %v5201 = vadd.f32 %v4559, %v4948
      %v5202 = vadd.f32 %v4560, %v4950
      %v5203 = vadd.f32 %v4561, %v4952
      %v5204 = vadd.f32 %v4562, %v4954
      %v5205 = vadd.f32 %v4563, %v4956
      %v5206 = vadd.f32 %v4564, %v4958
      %v5207 = vadd.f32 %v4565, %v4960
      %v5208 = vadd.f32 %v4566, %v4962
      %v5209 = vadd.f32 %v4567, %v4964
      %v5210 = vadd.f32 %v4568, %v4966
      %v5211 = vadd.f32 %v4569, %v4968
      %v5212 = vadd.f32 %v4570, %v4970
      %v5213 = vadd.f32 %v4571, %v4972
      %v5214 = vadd.f32 %v4572, %v4974
      %v5215 = vadd.f32 %v4573, %v4976
      %v5216 = vadd.f32 %v4574, %v4978
      %v5217 = vadd.f32 %v4575, %v4980
      %v5218 = vadd.f32 %v4576, %v4982
      %v5219 = vadd.f32 %v4577, %v4984
      %v5220 = vadd.f32 %v4578, %v4986
      %v5221 = vadd.f32 %v4579, %v4988
      %v5222 = vadd.f32 %v4580, %v4990
      %v5223 = vadd.f32 %v4581, %v4992
      %v5224 = vadd.f32 %v4582, %v4994
      %v5225 = vadd.f32 %v4583, %v4996
      %v5226 = vadd.f32 %v4584, %v4998
      %v5227 = vadd.f32 %v4585, %v5000
      %v5228 = vadd.f32 %v4586, %v5002
      %v5229 = vadd.f32 %v4587, %v5004
      %v5230 = vadd.f32 %v4588, %v5006
      %v5231 = vadd.f32 %v4589, %v5008
      %v5232 = vadd.f32 %v4590, %v5010
      %v5233 = vadd.f32 %v4591, %v5012
      %v5234 = vadd.f32 %v4592, %v5014
      %v5235 = vadd.f32 %v4593, %v5016
      %v5236 = vadd.f32 %v4594, %v5018
      %v5237 = vadd.f32 %v4595, %v5020
      %v5238 = vadd.f32 %v4596, %v5022
      %v5239 = vadd.f32 %v4597, %v5024
      %v5240 = vadd.f32 %v4598, %v5026
      %v5241 = vadd.f32 %v4599, %v5028
      %v5242 = vadd.f32 %v4600, %v5030
      %v5243 = vadd.f32 %v4601, %v5032
      %v5244 = vadd.f32 %v4602, %v5034
      %s5245 = scalar_lea.vmem %s1, 8
      %v5246 = vld [vmem:[%s5245] sm:$0x1]
      %v5248 = vlaneseq
      %v5249 = vshrl.u32 %v5248, 7
      %v5250 = vsub.s32 0, %v5249
      %v5251 = vrot.slane %v5246, %v5250
      %v5253 = vmul.f32 %v432, %v5251
      %v5254 = vmul.f32 %v437, %v5251
      %v5255 = vmul.f32 %v442, %v5251
      %v5256 = vmul.f32 %v447, %v5251
      %v5257 = vmul.f32 %v452, %v5251
      %v5258 = vmul.f32 %v457, %v5251
      %v5259 = vmul.f32 %v462, %v5251
      %v5260 = vmul.f32 %v467, %v5251
      %v5261 = vmul.f32 %v472, %v5251
      %v5262 = vmul.f32 %v477, %v5251
      %v5263 = vmul.f32 %v482, %v5251
      %v5264 = vmul.f32 %v487, %v5251
      %v5265 = vmul.f32 %v492, %v5251
      %v5266 = vmul.f32 %v497, %v5251
      %v5267 = vmul.f32 %v502, %v5251
      %v5268 = vmul.f32 %v507, %v5251
      %v5269 = vmul.f32 %v512, %v5251
      %v5270 = vmul.f32 %v517, %v5251
      %v5271 = vmul.f32 %v522, %v5251
      %v5272 = vmul.f32 %v527, %v5251
      %v5273 = vmul.f32 %v532, %v5251
      %v5274 = vmul.f32 %v537, %v5251
      %v5275 = vmul.f32 %v542, %v5251
      %v5276 = vmul.f32 %v547, %v5251
      %v5277 = vmul.f32 %v552, %v5251
      %v5278 = vmul.f32 %v557, %v5251
      %v5279 = vmul.f32 %v562, %v5251
      %v5280 = vmul.f32 %v567, %v5251
      %v5281 = vmul.f32 %v572, %v5251
      %v5282 = vmul.f32 %v577, %v5251
      %v5283 = vmul.f32 %v582, %v5251
      %v5284 = vmul.f32 %v587, %v5251
      %v5285 = vmul.f32 %v592, %v5251
      %v5286 = vmul.f32 %v597, %v5251
      %v5287 = vmul.f32 %v602, %v5251
      %v5288 = vmul.f32 %v607, %v5251
      %v5289 = vmul.f32 %v612, %v5251
      %v5290 = vmul.f32 %v617, %v5251
      %v5291 = vmul.f32 %v622, %v5251
      %v5292 = vmul.f32 %v627, %v5251
      %v5293 = vmul.f32 %v632, %v5251
      %v5294 = vmul.f32 %v637, %v5251
      %v5295 = vmul.f32 %v642, %v5251
      %v5296 = vmul.f32 %v647, %v5251
      %v5297 = vmul.f32 %v652, %v5251
      %v5298 = vmul.f32 %v657, %v5251
      %v5299 = vmul.f32 %v662, %v5251
      %v5300 = vmul.f32 %v667, %v5251
      %v5301 = vmul.f32 %v672, %v5251
      %v5302 = vmul.f32 %v677, %v5251
      %v5303 = vmul.f32 %v682, %v5251
      %v5304 = vmul.f32 %v687, %v5251
      %v5305 = vmul.f32 %v692, %v5251
      %v5306 = vmul.f32 %v697, %v5251
      %v5307 = vmul.f32 %v702, %v5251
      %v5308 = vmul.f32 %v707, %v5251
      %v5309 = vmul.f32 %v712, %v5251
      %v5310 = vmul.f32 %v717, %v5251
      %v5311 = vmul.f32 %v722, %v5251
      %v5312 = vmul.f32 %v727, %v5251
      %v5313 = vmul.f32 %v732, %v5251
      %v5314 = vmul.f32 %v737, %v5251
      %v5315 = vmul.f32 %v742, %v5251
      %v5316 = vmul.f32 %v747, %v5251
      %v5317 = vmul.f32 %v752, %v5251
      %v5318 = vmul.f32 %v757, %v5251
      %v5319 = vmul.f32 %v762, %v5251
      %v5320 = vmul.f32 %v767, %v5251
      %v5321 = vmul.f32 %v772, %v5251
      %v5322 = vmul.f32 %v777, %v5251
      %v5323 = vmul.f32 %v782, %v5251
      %v5324 = vmul.f32 %v787, %v5251
      %v5325 = vmul.f32 %v792, %v5251
      %v5326 = vmul.f32 %v797, %v5251
      %v5327 = vmul.f32 %v802, %v5251
      %v5328 = vmul.f32 %v807, %v5251
      %v5329 = vmul.f32 %v812, %v5251
      %v5330 = vmul.f32 %v817, %v5251
      %v5331 = vmul.f32 %v822, %v5251
      %v5332 = vmul.f32 %v827, %v5251
      %v5333 = vmul.f32 %v832, %v5251
      %v5334 = vmul.f32 %v837, %v5251
      %v5335 = vmul.f32 %v842, %v5251
      %v5336 = vmul.f32 %v847, %v5251
      %v5337 = vmul.f32 %v852, %v5251
      %v5338 = vmul.f32 %v857, %v5251
      %v5339 = vmul.f32 %v862, %v5251
      %v5340 = vmul.f32 %v867, %v5251
      %v5341 = vmul.f32 %v872, %v5251
      %v5342 = vmul.f32 %v877, %v5251
      %v5343 = vmul.f32 %v882, %v5251
      %v5344 = vmul.f32 %v887, %v5251
      %v5345 = vmul.f32 %v892, %v5251
      %v5346 = vmul.f32 %v897, %v5251
      %v5347 = vmul.f32 %v902, %v5251
      %v5348 = vmul.f32 %v907, %v5251
      %v5349 = vmul.f32 %v912, %v5251
      %v5350 = vmul.f32 %v917, %v5251
      %v5351 = vmul.f32 %v1140, %v5251
      %v5352 = vmul.f32 %v2429, %v5251
      %v5353 = vmul.f32 %v2434, %v5251
      %v5354 = vmul.f32 %v2439, %v5251
      %v5355 = vmul.f32 %v3946, %v5251
      %v5356 = vmul.f32 %v3951, %v5251
      %v5357 = vmul.f32 %v3956, %v5251
      %v5358 = vmul.f32 %v3961, %v5251
      %v5465 = vrot.slane %v5253, 6
      %v5466 = vrot.slane %v5254, 6
      %v5467 = vsel %vm2659, %v5465, %v5466
      %v5468 = vrot.slane %v5255, 6
      %v5469 = vsel %vm2659, %v5466, %v5468
      %v5470 = vrot.slane %v5256, 6
      %v5471 = vsel %vm2659, %v5468, %v5470
      %v5472 = vrot.slane %v5257, 6
      %v5473 = vsel %vm2659, %v5470, %v5472
      %v5474 = vrot.slane %v5258, 6
      %v5475 = vsel %vm2659, %v5472, %v5474
      %v5476 = vrot.slane %v5259, 6
      %v5477 = vsel %vm2659, %v5474, %v5476
      %v5478 = vrot.slane %v5260, 6
      %v5479 = vsel %vm2659, %v5476, %v5478
      %v5480 = vrot.slane %v5261, 6
      %v5481 = vsel %vm2659, %v5478, %v5480
      %v5482 = vrot.slane %v5262, 6
      %v5483 = vsel %vm2659, %v5480, %v5482
      %v5484 = vrot.slane %v5263, 6
      %v5485 = vsel %vm2659, %v5482, %v5484
      %v5486 = vrot.slane %v5264, 6
      %v5487 = vsel %vm2659, %v5484, %v5486
      %v5488 = vrot.slane %v5265, 6
      %v5489 = vsel %vm2659, %v5486, %v5488
      %v5490 = vrot.slane %v5266, 6
      %v5491 = vsel %vm2659, %v5488, %v5490
      %v5492 = vrot.slane %v5267, 6
      %v5493 = vsel %vm2659, %v5490, %v5492
      %v5494 = vrot.slane %v5268, 6
      %v5495 = vsel %vm2659, %v5492, %v5494
      %v5496 = vrot.slane %v5269, 6
      %v5497 = vsel %vm2659, %v5494, %v5496
      %v5498 = vrot.slane %v5270, 6
      %v5499 = vsel %vm2659, %v5496, %v5498
      %v5500 = vrot.slane %v5271, 6
      %v5501 = vsel %vm2659, %v5498, %v5500
      %v5502 = vrot.slane %v5272, 6
      %v5503 = vsel %vm2659, %v5500, %v5502
      %v5504 = vrot.slane %v5273, 6
      %v5505 = vsel %vm2659, %v5502, %v5504
      %v5506 = vrot.slane %v5274, 6
      %v5507 = vsel %vm2659, %v5504, %v5506
      %v5508 = vrot.slane %v5275, 6
      %v5509 = vsel %vm2659, %v5506, %v5508
      %v5510 = vrot.slane %v5276, 6
      %v5511 = vsel %vm2659, %v5508, %v5510
      %v5512 = vrot.slane %v5277, 6
      %v5513 = vsel %vm2659, %v5510, %v5512
      %v5514 = vrot.slane %v5278, 6
      %v5515 = vsel %vm2659, %v5512, %v5514
      %v5516 = vrot.slane %v5279, 6
      %v5517 = vsel %vm2659, %v5514, %v5516
      %v5518 = vrot.slane %v5280, 6
      %v5519 = vsel %vm2659, %v5516, %v5518
      %v5520 = vrot.slane %v5281, 6
      %v5521 = vsel %vm2659, %v5518, %v5520
      %v5522 = vrot.slane %v5282, 6
      %v5523 = vsel %vm2659, %v5520, %v5522
      %v5524 = vrot.slane %v5283, 6
      %v5525 = vsel %vm2659, %v5522, %v5524
      %v5526 = vrot.slane %v5284, 6
      %v5527 = vsel %vm2659, %v5524, %v5526
      %v5528 = vrot.slane %v5285, 6
      %v5529 = vsel %vm2659, %v5526, %v5528
      %v5530 = vrot.slane %v5286, 6
      %v5531 = vsel %vm2659, %v5528, %v5530
      %v5532 = vrot.slane %v5287, 6
      %v5533 = vsel %vm2659, %v5530, %v5532
      %v5534 = vrot.slane %v5288, 6
      %v5535 = vsel %vm2659, %v5532, %v5534
      %v5536 = vrot.slane %v5289, 6
      %v5537 = vsel %vm2659, %v5534, %v5536
      %v5538 = vrot.slane %v5290, 6
      %v5539 = vsel %vm2659, %v5536, %v5538
      %v5540 = vrot.slane %v5291, 6
      %v5541 = vsel %vm2659, %v5538, %v5540
      %v5542 = vrot.slane %v5292, 6
      %v5543 = vsel %vm2659, %v5540, %v5542
      %v5544 = vrot.slane %v5293, 6
      %v5545 = vsel %vm2659, %v5542, %v5544
      %v5546 = vrot.slane %v5294, 6
      %v5547 = vsel %vm2659, %v5544, %v5546
      %v5548 = vrot.slane %v5295, 6
      %v5549 = vsel %vm2659, %v5546, %v5548
      %v5550 = vrot.slane %v5296, 6
      %v5551 = vsel %vm2659, %v5548, %v5550
      %v5552 = vrot.slane %v5297, 6
      %v5553 = vsel %vm2659, %v5550, %v5552
      %v5554 = vrot.slane %v5298, 6
      %v5555 = vsel %vm2659, %v5552, %v5554
      %v5556 = vrot.slane %v5299, 6
      %v5557 = vsel %vm2659, %v5554, %v5556
      %v5558 = vrot.slane %v5300, 6
      %v5559 = vsel %vm2659, %v5556, %v5558
      %v5560 = vrot.slane %v5301, 6
      %v5561 = vsel %vm2659, %v5558, %v5560
      %v5562 = vrot.slane %v5302, 6
      %v5563 = vsel %vm2659, %v5560, %v5562
      %v5564 = vrot.slane %v5303, 6
      %v5565 = vsel %vm2659, %v5562, %v5564
      %v5566 = vrot.slane %v5304, 6
      %v5567 = vsel %vm2659, %v5564, %v5566
      %v5568 = vrot.slane %v5305, 6
      %v5569 = vsel %vm2659, %v5566, %v5568
      %v5570 = vrot.slane %v5306, 6
      %v5571 = vsel %vm2659, %v5568, %v5570
      %v5572 = vrot.slane %v5307, 6
      %v5573 = vsel %vm2659, %v5570, %v5572
      %v5574 = vrot.slane %v5308, 6
      %v5575 = vsel %vm2659, %v5572, %v5574
      %v5576 = vrot.slane %v5309, 6
      %v5577 = vsel %vm2659, %v5574, %v5576
      %v5578 = vrot.slane %v5310, 6
      %v5579 = vsel %vm2659, %v5576, %v5578
      %v5580 = vrot.slane %v5311, 6
      %v5581 = vsel %vm2659, %v5578, %v5580
      %v5582 = vrot.slane %v5312, 6
      %v5583 = vsel %vm2659, %v5580, %v5582
      %v5584 = vrot.slane %v5313, 6
      %v5585 = vsel %vm2659, %v5582, %v5584
      %v5586 = vrot.slane %v5314, 6
      %v5587 = vsel %vm2659, %v5584, %v5586
      %v5588 = vrot.slane %v5315, 6
      %v5589 = vsel %vm2659, %v5586, %v5588
      %v5590 = vrot.slane %v5316, 6
      %v5591 = vsel %vm2659, %v5588, %v5590
      %v5592 = vrot.slane %v5317, 6
      %v5593 = vsel %vm2659, %v5590, %v5592
      %v5594 = vrot.slane %v5318, 6
      %v5595 = vsel %vm2659, %v5592, %v5594
      %v5596 = vrot.slane %v5319, 6
      %v5597 = vsel %vm2659, %v5594, %v5596
      %v5598 = vrot.slane %v5320, 6
      %v5599 = vsel %vm2659, %v5596, %v5598
      %v5600 = vrot.slane %v5321, 6
      %v5601 = vsel %vm2659, %v5598, %v5600
      %v5602 = vrot.slane %v5322, 6
      %v5603 = vsel %vm2659, %v5600, %v5602
      %v5604 = vrot.slane %v5323, 6
      %v5605 = vsel %vm2659, %v5602, %v5604
      %v5606 = vrot.slane %v5324, 6
      %v5607 = vsel %vm2659, %v5604, %v5606
      %v5608 = vrot.slane %v5325, 6
      %v5609 = vsel %vm2659, %v5606, %v5608
      %v5610 = vrot.slane %v5326, 6
      %v5611 = vsel %vm2659, %v5608, %v5610
      %v5612 = vrot.slane %v5327, 6
      %v5613 = vsel %vm2659, %v5610, %v5612
      %v5614 = vrot.slane %v5328, 6
      %v5615 = vsel %vm2659, %v5612, %v5614
      %v5616 = vrot.slane %v5329, 6
      %v5617 = vsel %vm2659, %v5614, %v5616
      %v5618 = vrot.slane %v5330, 6
      %v5619 = vsel %vm2659, %v5616, %v5618
      %v5620 = vrot.slane %v5331, 6
      %v5621 = vsel %vm2659, %v5618, %v5620
      %v5622 = vrot.slane %v5332, 6
      %v5623 = vsel %vm2659, %v5620, %v5622
      %v5624 = vrot.slane %v5333, 6
      %v5625 = vsel %vm2659, %v5622, %v5624
      %v5626 = vrot.slane %v5334, 6
      %v5627 = vsel %vm2659, %v5624, %v5626
      %v5628 = vrot.slane %v5335, 6
      %v5629 = vsel %vm2659, %v5626, %v5628
      %v5630 = vrot.slane %v5336, 6
      %v5631 = vsel %vm2659, %v5628, %v5630
      %v5632 = vrot.slane %v5337, 6
      %v5633 = vsel %vm2659, %v5630, %v5632
      %v5634 = vrot.slane %v5338, 6
      %v5635 = vsel %vm2659, %v5632, %v5634
      %v5636 = vrot.slane %v5339, 6
      %v5637 = vsel %vm2659, %v5634, %v5636
      %v5638 = vrot.slane %v5340, 6
      %v5639 = vsel %vm2659, %v5636, %v5638
      %v5640 = vrot.slane %v5341, 6
      %v5641 = vsel %vm2659, %v5638, %v5640
      %v5642 = vrot.slane %v5342, 6
      %v5643 = vsel %vm2659, %v5640, %v5642
      %v5644 = vrot.slane %v5343, 6
      %v5645 = vsel %vm2659, %v5642, %v5644
      %v5646 = vrot.slane %v5344, 6
      %v5647 = vsel %vm2659, %v5644, %v5646
      %v5648 = vrot.slane %v5345, 6
      %v5649 = vsel %vm2659, %v5646, %v5648
      %v5650 = vrot.slane %v5346, 6
      %v5651 = vsel %vm2659, %v5648, %v5650
      %v5652 = vrot.slane %v5347, 6
      %v5653 = vsel %vm2659, %v5650, %v5652
      %v5654 = vrot.slane %v5348, 6
      %v5655 = vsel %vm2659, %v5652, %v5654
      %v5656 = vrot.slane %v5349, 6
      %v5657 = vsel %vm2659, %v5654, %v5656
      %v5658 = vrot.slane %v5350, 6
      %v5659 = vsel %vm2659, %v5656, %v5658
      %v5660 = vrot.slane %v5351, 6
      %v5661 = vsel %vm2659, %v5658, %v5660
      %v5662 = vrot.slane %v5352, 6
      %v5663 = vsel %vm2659, %v5660, %v5662
      %v5664 = vrot.slane %v5353, 6
      %v5665 = vsel %vm2659, %v5662, %v5664
      %v5666 = vrot.slane %v5354, 6
      %v5667 = vsel %vm2659, %v5664, %v5666
      %v5668 = vrot.slane %v5355, 6
      %v5669 = vsel %vm2659, %v5666, %v5668
      %v5670 = vrot.slane %v5356, 6
      %v5671 = vsel %vm2659, %v5668, %v5670
      %v5672 = vrot.slane %v5357, 6
      %v5673 = vsel %vm2659, %v5670, %v5672
      %v5674 = vrot.slane %v5358, 6
      %v5675 = vsel %vm2659, %v5672, %v5674
      %v5781 = vadd.f32 %v5140, %v5467
      %v5782 = vadd.f32 %v5141, %v5469
      %v5783 = vadd.f32 %v5142, %v5471
      %v5784 = vadd.f32 %v5143, %v5473
      %v5785 = vadd.f32 %v5144, %v5475
      %v5786 = vadd.f32 %v5145, %v5477
      %v5787 = vadd.f32 %v5146, %v5479
      %v5788 = vadd.f32 %v5147, %v5481
      %v5789 = vadd.f32 %v5148, %v5483
      %v5790 = vadd.f32 %v5149, %v5485
      %v5791 = vadd.f32 %v5150, %v5487
      %v5792 = vadd.f32 %v5151, %v5489
      %v5793 = vadd.f32 %v5152, %v5491
      %v5794 = vadd.f32 %v5153, %v5493
      %v5795 = vadd.f32 %v5154, %v5495
      %v5796 = vadd.f32 %v5155, %v5497
      %v5797 = vadd.f32 %v5156, %v5499
      %v5798 = vadd.f32 %v5157, %v5501
      %v5799 = vadd.f32 %v5158, %v5503
      %v5800 = vadd.f32 %v5159, %v5505
      %v5801 = vadd.f32 %v5160, %v5507
      %v5802 = vadd.f32 %v5161, %v5509
      %v5803 = vadd.f32 %v5162, %v5511
      %v5804 = vadd.f32 %v5163, %v5513
      %v5805 = vadd.f32 %v5164, %v5515
      %v5806 = vadd.f32 %v5165, %v5517
      %v5807 = vadd.f32 %v5166, %v5519
      %v5808 = vadd.f32 %v5167, %v5521
      %v5809 = vadd.f32 %v5168, %v5523
      %v5810 = vadd.f32 %v5169, %v5525
      %v5811 = vadd.f32 %v5170, %v5527
      %v5812 = vadd.f32 %v5171, %v5529
      %v5813 = vadd.f32 %v5172, %v5531
      %v5814 = vadd.f32 %v5173, %v5533
      %v5815 = vadd.f32 %v5174, %v5535
      %v5816 = vadd.f32 %v5175, %v5537
      %v5817 = vadd.f32 %v5176, %v5539
      %v5818 = vadd.f32 %v5177, %v5541
      %v5819 = vadd.f32 %v5178, %v5543
      %v5820 = vadd.f32 %v5179, %v5545
      %v5821 = vadd.f32 %v5180, %v5547
      %v5822 = vadd.f32 %v5181, %v5549
      %v5823 = vadd.f32 %v5182, %v5551
      %v5824 = vadd.f32 %v5183, %v5553
      %v5825 = vadd.f32 %v5184, %v5555
      %v5826 = vadd.f32 %v5185, %v5557
      %v5827 = vadd.f32 %v5186, %v5559
      %v5828 = vadd.f32 %v5187, %v5561
      %v5829 = vadd.f32 %v5188, %v5563
      %v5830 = vadd.f32 %v5189, %v5565
      %v5831 = vadd.f32 %v5190, %v5567
      %v5832 = vadd.f32 %v5191, %v5569
      %v5833 = vadd.f32 %v5192, %v5571
      %v5834 = vadd.f32 %v5193, %v5573
      %v5835 = vadd.f32 %v5194, %v5575
      %v5836 = vadd.f32 %v5195, %v5577
      %v5837 = vadd.f32 %v5196, %v5579
      %v5838 = vadd.f32 %v5197, %v5581
      %v5839 = vadd.f32 %v5198, %v5583
      %v5840 = vadd.f32 %v5199, %v5585
      %v5841 = vadd.f32 %v5200, %v5587
      %v5842 = vadd.f32 %v5201, %v5589
      %v5843 = vadd.f32 %v5202, %v5591
      %v5844 = vadd.f32 %v5203, %v5593
      %v5845 = vadd.f32 %v5204, %v5595
      %v5846 = vadd.f32 %v5205, %v5597
      %v5847 = vadd.f32 %v5206, %v5599
      %v5848 = vadd.f32 %v5207, %v5601
      %v5849 = vadd.f32 %v5208, %v5603
      %v5850 = vadd.f32 %v5209, %v5605
      %v5851 = vadd.f32 %v5210, %v5607
      %v5852 = vadd.f32 %v5211, %v5609
      %v5853 = vadd.f32 %v5212, %v5611
      %v5854 = vadd.f32 %v5213, %v5613
      %v5855 = vadd.f32 %v5214, %v5615
      %v5856 = vadd.f32 %v5215, %v5617
      %v5857 = vadd.f32 %v5216, %v5619
      %v5858 = vadd.f32 %v5217, %v5621
      %v5859 = vadd.f32 %v5218, %v5623
      %v5860 = vadd.f32 %v5219, %v5625
      %v5861 = vadd.f32 %v5220, %v5627
      %v5862 = vadd.f32 %v5221, %v5629
      %v5863 = vadd.f32 %v5222, %v5631
      %v5864 = vadd.f32 %v5223, %v5633
      %v5865 = vadd.f32 %v5224, %v5635
      %v5866 = vadd.f32 %v5225, %v5637
      %v5867 = vadd.f32 %v5226, %v5639
      %v5868 = vadd.f32 %v5227, %v5641
      %v5869 = vadd.f32 %v5228, %v5643
      %v5870 = vadd.f32 %v5229, %v5645
      %v5871 = vadd.f32 %v5230, %v5647
      %v5872 = vadd.f32 %v5231, %v5649
      %v5873 = vadd.f32 %v5232, %v5651
      %v5874 = vadd.f32 %v5233, %v5653
      %v5875 = vadd.f32 %v5234, %v5655
      %v5876 = vadd.f32 %v5235, %v5657
      %v5877 = vadd.f32 %v5236, %v5659
      %v5878 = vadd.f32 %v5237, %v5661
      %v5879 = vadd.f32 %v5238, %v5663
      %v5880 = vadd.f32 %v5239, %v5665
      %v5881 = vadd.f32 %v5240, %v5667
      %v5882 = vadd.f32 %v5241, %v5669
      %v5883 = vadd.f32 %v5242, %v5671
      %v5884 = vadd.f32 %v5243, %v5673
      %v5885 = vadd.f32 %v5244, %v5675
      %v5886 = vld [vmem:[%s2] sm:$0x1]
      %v5888 = vlaneseq
      %v5889 = vshrl.u32 %v5888, 7
      %v5890 = vsub.s32 0, %v5889
      %v5891 = vrot.slane %v5886, %v5890
      %v5893 = vadd.f32 %v5781, %v5891
      %v5894 = vadd.f32 %v5782, %v5891
      %v5895 = vadd.f32 %v5783, %v5891
      %v5896 = vadd.f32 %v5784, %v5891
      %v5897 = vadd.f32 %v5785, %v5891
      %v5898 = vadd.f32 %v5786, %v5891
      %v5899 = vadd.f32 %v5787, %v5891
      %v5900 = vadd.f32 %v5788, %v5891
      %v5901 = vadd.f32 %v5789, %v5891
      %v5902 = vadd.f32 %v5790, %v5891
      %v5903 = vadd.f32 %v5791, %v5891
      %v5904 = vadd.f32 %v5792, %v5891
      %v5905 = vadd.f32 %v5793, %v5891
      %v5906 = vadd.f32 %v5794, %v5891
      %v5907 = vadd.f32 %v5795, %v5891
      %v5908 = vadd.f32 %v5796, %v5891
      %v5909 = vadd.f32 %v5797, %v5891
      %v5910 = vadd.f32 %v5798, %v5891
      %v5911 = vadd.f32 %v5799, %v5891
      %v5912 = vadd.f32 %v5800, %v5891
      %v5913 = vadd.f32 %v5801, %v5891
      %v5914 = vadd.f32 %v5802, %v5891
      %v5915 = vadd.f32 %v5803, %v5891
      %v5916 = vadd.f32 %v5804, %v5891
      %v5917 = vadd.f32 %v5805, %v5891
      %v5918 = vadd.f32 %v5806, %v5891
      %v5919 = vadd.f32 %v5807, %v5891
      %v5920 = vadd.f32 %v5808, %v5891
      %v5921 = vadd.f32 %v5809, %v5891
      %v5922 = vadd.f32 %v5810, %v5891
      %v5923 = vadd.f32 %v5811, %v5891
      %v5924 = vadd.f32 %v5812, %v5891
      %v5925 = vadd.f32 %v5813, %v5891
      %v5926 = vadd.f32 %v5814, %v5891
      %v5927 = vadd.f32 %v5815, %v5891
      %v5928 = vadd.f32 %v5816, %v5891
      %v5929 = vadd.f32 %v5817, %v5891
      %v5930 = vadd.f32 %v5818, %v5891
      %v5931 = vadd.f32 %v5819, %v5891
      %v5932 = vadd.f32 %v5820, %v5891
      %v5933 = vadd.f32 %v5821, %v5891
      %v5934 = vadd.f32 %v5822, %v5891
      %v5935 = vadd.f32 %v5823, %v5891
      %v5936 = vadd.f32 %v5824, %v5891
      %v5937 = vadd.f32 %v5825, %v5891
      %v5938 = vadd.f32 %v5826, %v5891
      %v5939 = vadd.f32 %v5827, %v5891
      %v5940 = vadd.f32 %v5828, %v5891
      %v5941 = vadd.f32 %v5829, %v5891
      %v5942 = vadd.f32 %v5830, %v5891
      %v5943 = vadd.f32 %v5831, %v5891
      %v5944 = vadd.f32 %v5832, %v5891
      %v5945 = vadd.f32 %v5833, %v5891
      %v5946 = vadd.f32 %v5834, %v5891
      %v5947 = vadd.f32 %v5835, %v5891
      %v5948 = vadd.f32 %v5836, %v5891
      %v5949 = vadd.f32 %v5837, %v5891
      %v5950 = vadd.f32 %v5838, %v5891
      %v5951 = vadd.f32 %v5839, %v5891
      %v5952 = vadd.f32 %v5840, %v5891
      %v5953 = vadd.f32 %v5841, %v5891
      %v5954 = vadd.f32 %v5842, %v5891
      %v5955 = vadd.f32 %v5843, %v5891
      %v5956 = vadd.f32 %v5844, %v5891
      %v5957 = vadd.f32 %v5845, %v5891
      %v5958 = vadd.f32 %v5846, %v5891
      %v5959 = vadd.f32 %v5847, %v5891
      %v5960 = vadd.f32 %v5848, %v5891
      %v5961 = vadd.f32 %v5849, %v5891
      %v5962 = vadd.f32 %v5850, %v5891
      %v5963 = vadd.f32 %v5851, %v5891
      %v5964 = vadd.f32 %v5852, %v5891
      %v5965 = vadd.f32 %v5853, %v5891
      %v5966 = vadd.f32 %v5854, %v5891
      %v5967 = vadd.f32 %v5855, %v5891
      %v5968 = vadd.f32 %v5856, %v5891
      %v5969 = vadd.f32 %v5857, %v5891
      %v5970 = vadd.f32 %v5858, %v5891
      %v5971 = vadd.f32 %v5859, %v5891
      %v5972 = vadd.f32 %v5860, %v5891
      %v5973 = vadd.f32 %v5861, %v5891
      %v5974 = vadd.f32 %v5862, %v5891
      %v5975 = vadd.f32 %v5863, %v5891
      %v5976 = vadd.f32 %v5864, %v5891
      %v5977 = vadd.f32 %v5865, %v5891
      %v5978 = vadd.f32 %v5866, %v5891
      %v5979 = vadd.f32 %v5867, %v5891
      %v5980 = vadd.f32 %v5868, %v5891
      %v5981 = vadd.f32 %v5869, %v5891
      %v5982 = vadd.f32 %v5870, %v5891
      %v5983 = vadd.f32 %v5871, %v5891
      %v5984 = vadd.f32 %v5872, %v5891
      %v5985 = vadd.f32 %v5873, %v5891
      %v5986 = vadd.f32 %v5874, %v5891
      %v5987 = vadd.f32 %v5875, %v5891
      %v5988 = vadd.f32 %v5876, %v5891
      %v5989 = vadd.f32 %v5877, %v5891
      %v5990 = vadd.f32 %v5878, %v5891
      %v5991 = vadd.f32 %v5879, %v5891
      %v5992 = vadd.f32 %v5880, %v5891
      %v5993 = vadd.f32 %v5881, %v5891
      %v5994 = vadd.f32 %v5882, %v5891
      %v5995 = vadd.f32 %v5883, %v5891
      %v5996 = vadd.f32 %v5884, %v5891
      %v5997 = vadd.f32 %v5885, %v5891
      %v5998 = vmax.f32 %v5893, 0.0
      %v5999 = vmax.f32 %v5894, 0.0
      %v6000 = vmax.f32 %v5895, 0.0
      %v6001 = vmax.f32 %v5896, 0.0
      %v6002 = vmax.f32 %v5897, 0.0
      %v6003 = vmax.f32 %v5898, 0.0
      %v6004 = vmax.f32 %v5899, 0.0
      %v6005 = vmax.f32 %v5900, 0.0
      %v6006 = vmax.f32 %v5901, 0.0
      %v6007 = vmax.f32 %v5902, 0.0
      %v6008 = vmax.f32 %v5903, 0.0
      %v6009 = vmax.f32 %v5904, 0.0
      %v6010 = vmax.f32 %v5905, 0.0
      %v6011 = vmax.f32 %v5906, 0.0
      %v6012 = vmax.f32 %v5907, 0.0
      %v6013 = vmax.f32 %v5908, 0.0
      %v6014 = vmax.f32 %v5909, 0.0
      %v6015 = vmax.f32 %v5910, 0.0
      %v6016 = vmax.f32 %v5911, 0.0
      %v6017 = vmax.f32 %v5912, 0.0
      %v6018 = vmax.f32 %v5913, 0.0
      %v6019 = vmax.f32 %v5914, 0.0
      %v6020 = vmax.f32 %v5915, 0.0
      %v6021 = vmax.f32 %v5916, 0.0
      %v6022 = vmax.f32 %v5917, 0.0
      %v6023 = vmax.f32 %v5918, 0.0
      %v6024 = vmax.f32 %v5919, 0.0
      %v6025 = vmax.f32 %v5920, 0.0
      %v6026 = vmax.f32 %v5921, 0.0
      %v6027 = vmax.f32 %v5922, 0.0
      %v6028 = vmax.f32 %v5923, 0.0
      %v6029 = vmax.f32 %v5924, 0.0
      %v6030 = vmax.f32 %v5925, 0.0
      %v6031 = vmax.f32 %v5926, 0.0
      %v6032 = vmax.f32 %v5927, 0.0
      %v6033 = vmax.f32 %v5928, 0.0
      %v6034 = vmax.f32 %v5929, 0.0
      %v6035 = vmax.f32 %v5930, 0.0
      %v6036 = vmax.f32 %v5931, 0.0
      %v6037 = vmax.f32 %v5932, 0.0
      %v6038 = vmax.f32 %v5933, 0.0
      %v6039 = vmax.f32 %v5934, 0.0
      %v6040 = vmax.f32 %v5935, 0.0
      %v6041 = vmax.f32 %v5936, 0.0
      %v6042 = vmax.f32 %v5937, 0.0
      %v6043 = vmax.f32 %v5938, 0.0
      %v6044 = vmax.f32 %v5939, 0.0
      %v6045 = vmax.f32 %v5940, 0.0
      %v6046 = vmax.f32 %v5941, 0.0
      %v6047 = vmax.f32 %v5942, 0.0
      %v6048 = vmax.f32 %v5943, 0.0
      %v6049 = vmax.f32 %v5944, 0.0
      %v6050 = vmax.f32 %v5945, 0.0
      %v6051 = vmax.f32 %v5946, 0.0
      %v6052 = vmax.f32 %v5947, 0.0
      %v6053 = vmax.f32 %v5948, 0.0
      %v6054 = vmax.f32 %v5949, 0.0
      %v6055 = vmax.f32 %v5950, 0.0
      %v6056 = vmax.f32 %v5951, 0.0
      %v6057 = vmax.f32 %v5952, 0.0
      %v6058 = vmax.f32 %v5953, 0.0
      %v6059 = vmax.f32 %v5954, 0.0
      %v6060 = vmax.f32 %v5955, 0.0
      %v6061 = vmax.f32 %v5956, 0.0
      %v6062 = vmax.f32 %v5957, 0.0
      %v6063 = vmax.f32 %v5958, 0.0
      %v6064 = vmax.f32 %v5959, 0.0
      %v6065 = vmax.f32 %v5960, 0.0
      %v6066 = vmax.f32 %v5961, 0.0
      %v6067 = vmax.f32 %v5962, 0.0
      %v6068 = vmax.f32 %v5963, 0.0
      %v6069 = vmax.f32 %v5964, 0.0
      %v6070 = vmax.f32 %v5965, 0.0
      %v6071 = vmax.f32 %v5966, 0.0
      %v6072 = vmax.f32 %v5967, 0.0
      %v6073 = vmax.f32 %v5968, 0.0
      %v6074 = vmax.f32 %v5969, 0.0
      %v6075 = vmax.f32 %v5970, 0.0
      %v6076 = vmax.f32 %v5971, 0.0
      %v6077 = vmax.f32 %v5972, 0.0
      %v6078 = vmax.f32 %v5973, 0.0
      %v6079 = vmax.f32 %v5974, 0.0
      %v6080 = vmax.f32 %v5975, 0.0
      %v6081 = vmax.f32 %v5976, 0.0
      %v6082 = vmax.f32 %v5977, 0.0
      %v6083 = vmax.f32 %v5978, 0.0
      %v6084 = vmax.f32 %v5979, 0.0
      %v6085 = vmax.f32 %v5980, 0.0
      %v6086 = vmax.f32 %v5981, 0.0
      %v6087 = vmax.f32 %v5982, 0.0
      %v6088 = vmax.f32 %v5983, 0.0
      %v6089 = vmax.f32 %v5984, 0.0
      %v6090 = vmax.f32 %v5985, 0.0
      %v6091 = vmax.f32 %v5986, 0.0
      %v6092 = vmax.f32 %v5987, 0.0
      %v6093 = vmax.f32 %v5988, 0.0
      %v6094 = vmax.f32 %v5989, 0.0
      %v6095 = vmax.f32 %v5990, 0.0
      %v6096 = vmax.f32 %v5991, 0.0
      %v6097 = vmax.f32 %v5992, 0.0
      %v6098 = vmax.f32 %v5993, 0.0
      %v6099 = vmax.f32 %v5994, 0.0
      %v6100 = vmax.f32 %v5995, 0.0
      %v6101 = vmax.f32 %v5996, 0.0
      %v6102 = vmax.f32 %v5997, 0.0
      %v6208 = vrot.slane %v5998, 1
      %v6209 = vrot.slane %v5999, 1
      %v6210 = vsel %vm1360, %v6208, %v6209
      %v6211 = vrot.slane %v6000, 1
      %v6212 = vsel %vm1360, %v6209, %v6211
      %v6213 = vrot.slane %v6001, 1
      %v6214 = vsel %vm1360, %v6211, %v6213
      %v6215 = vrot.slane %v6002, 1
      %v6216 = vsel %vm1360, %v6213, %v6215
      %v6217 = vrot.slane %v6003, 1
      %v6218 = vsel %vm1360, %v6215, %v6217
      %v6219 = vrot.slane %v6004, 1
      %v6220 = vsel %vm1360, %v6217, %v6219
      %v6221 = vrot.slane %v6005, 1
      %v6222 = vsel %vm1360, %v6219, %v6221
      %v6223 = vrot.slane %v6006, 1
      %v6224 = vsel %vm1360, %v6221, %v6223
      %v6225 = vrot.slane %v6007, 1
      %v6226 = vsel %vm1360, %v6223, %v6225
      %v6227 = vrot.slane %v6008, 1
      %v6228 = vsel %vm1360, %v6225, %v6227
      %v6229 = vrot.slane %v6009, 1
      %v6230 = vsel %vm1360, %v6227, %v6229
      %v6231 = vrot.slane %v6010, 1
      %v6232 = vsel %vm1360, %v6229, %v6231
      %v6233 = vrot.slane %v6011, 1
      %v6234 = vsel %vm1360, %v6231, %v6233
      %v6235 = vrot.slane %v6012, 1
      %v6236 = vsel %vm1360, %v6233, %v6235
      %v6237 = vrot.slane %v6013, 1
      %v6238 = vsel %vm1360, %v6235, %v6237
      %v6239 = vrot.slane %v6014, 1
      %v6240 = vsel %vm1360, %v6237, %v6239
      %v6241 = vrot.slane %v6015, 1
      %v6242 = vsel %vm1360, %v6239, %v6241
      %v6243 = vrot.slane %v6016, 1
      %v6244 = vsel %vm1360, %v6241, %v6243
      %v6245 = vrot.slane %v6017, 1
      %v6246 = vsel %vm1360, %v6243, %v6245
      %v6247 = vrot.slane %v6018, 1
      %v6248 = vsel %vm1360, %v6245, %v6247
      %v6249 = vrot.slane %v6019, 1
      %v6250 = vsel %vm1360, %v6247, %v6249
      %v6251 = vrot.slane %v6020, 1
      %v6252 = vsel %vm1360, %v6249, %v6251
      %v6253 = vrot.slane %v6021, 1
      %v6254 = vsel %vm1360, %v6251, %v6253
      %v6255 = vrot.slane %v6022, 1
      %v6256 = vsel %vm1360, %v6253, %v6255
      %v6257 = vrot.slane %v6023, 1
      %v6258 = vsel %vm1360, %v6255, %v6257
      %v6259 = vrot.slane %v6024, 1
      %v6260 = vsel %vm1360, %v6257, %v6259
      %v6261 = vrot.slane %v6025, 1
      %v6262 = vsel %vm1360, %v6259, %v6261
      %v6263 = vrot.slane %v6026, 1
      %v6264 = vsel %vm1360, %v6261, %v6263
      %v6265 = vrot.slane %v6027, 1
      %v6266 = vsel %vm1360, %v6263, %v6265
      %v6267 = vrot.slane %v6028, 1
      %v6268 = vsel %vm1360, %v6265, %v6267
      %v6269 = vrot.slane %v6029, 1
      %v6270 = vsel %vm1360, %v6267, %v6269
      %v6271 = vrot.slane %v6030, 1
      %v6272 = vsel %vm1360, %v6269, %v6271
      %v6273 = vrot.slane %v6031, 1
      %v6274 = vsel %vm1360, %v6271, %v6273
      %v6275 = vrot.slane %v6032, 1
      %v6276 = vsel %vm1360, %v6273, %v6275
      %v6277 = vrot.slane %v6033, 1
      %v6278 = vsel %vm1360, %v6275, %v6277
      %v6279 = vrot.slane %v6034, 1
      %v6280 = vsel %vm1360, %v6277, %v6279
      %v6281 = vrot.slane %v6035, 1
      %v6282 = vsel %vm1360, %v6279, %v6281
      %v6283 = vrot.slane %v6036, 1
      %v6284 = vsel %vm1360, %v6281, %v6283
      %v6285 = vrot.slane %v6037, 1
      %v6286 = vsel %vm1360, %v6283, %v6285
      %v6287 = vrot.slane %v6038, 1
      %v6288 = vsel %vm1360, %v6285, %v6287
      %v6289 = vrot.slane %v6039, 1
      %v6290 = vsel %vm1360, %v6287, %v6289
      %v6291 = vrot.slane %v6040, 1
      %v6292 = vsel %vm1360, %v6289, %v6291
      %v6293 = vrot.slane %v6041, 1
      %v6294 = vsel %vm1360, %v6291, %v6293
      %v6295 = vrot.slane %v6042, 1
      %v6296 = vsel %vm1360, %v6293, %v6295
      %v6297 = vrot.slane %v6043, 1
      %v6298 = vsel %vm1360, %v6295, %v6297
      %v6299 = vrot.slane %v6044, 1
      %v6300 = vsel %vm1360, %v6297, %v6299
      %v6301 = vrot.slane %v6045, 1
      %v6302 = vsel %vm1360, %v6299, %v6301
      %v6303 = vrot.slane %v6046, 1
      %v6304 = vsel %vm1360, %v6301, %v6303
      %v6305 = vrot.slane %v6047, 1
      %v6306 = vsel %vm1360, %v6303, %v6305
      %v6307 = vrot.slane %v6048, 1
      %v6308 = vsel %vm1360, %v6305, %v6307
      %v6309 = vrot.slane %v6049, 1
      %v6310 = vsel %vm1360, %v6307, %v6309
      %v6311 = vrot.slane %v6050, 1
      %v6312 = vsel %vm1360, %v6309, %v6311
      %v6313 = vrot.slane %v6051, 1
      %v6314 = vsel %vm1360, %v6311, %v6313
      %v6315 = vrot.slane %v6052, 1
      %v6316 = vsel %vm1360, %v6313, %v6315
      %v6317 = vrot.slane %v6053, 1
      %v6318 = vsel %vm1360, %v6315, %v6317
      %v6319 = vrot.slane %v6054, 1
      %v6320 = vsel %vm1360, %v6317, %v6319
      %v6321 = vrot.slane %v6055, 1
      %v6322 = vsel %vm1360, %v6319, %v6321
      %v6323 = vrot.slane %v6056, 1
      %v6324 = vsel %vm1360, %v6321, %v6323
      %v6325 = vrot.slane %v6057, 1
      %v6326 = vsel %vm1360, %v6323, %v6325
      %v6327 = vrot.slane %v6058, 1
      %v6328 = vsel %vm1360, %v6325, %v6327
      %v6329 = vrot.slane %v6059, 1
      %v6330 = vsel %vm1360, %v6327, %v6329
      %v6331 = vrot.slane %v6060, 1
      %v6332 = vsel %vm1360, %v6329, %v6331
      %v6333 = vrot.slane %v6061, 1
      %v6334 = vsel %vm1360, %v6331, %v6333
      %v6335 = vrot.slane %v6062, 1
      %v6336 = vsel %vm1360, %v6333, %v6335
      %v6337 = vrot.slane %v6063, 1
      %v6338 = vsel %vm1360, %v6335, %v6337
      %v6339 = vrot.slane %v6064, 1
      %v6340 = vsel %vm1360, %v6337, %v6339
      %v6341 = vrot.slane %v6065, 1
      %v6342 = vsel %vm1360, %v6339, %v6341
      %v6343 = vrot.slane %v6066, 1
      %v6344 = vsel %vm1360, %v6341, %v6343
      %v6345 = vrot.slane %v6067, 1
      %v6346 = vsel %vm1360, %v6343, %v6345
      %v6347 = vrot.slane %v6068, 1
      %v6348 = vsel %vm1360, %v6345, %v6347
      %v6349 = vrot.slane %v6069, 1
      %v6350 = vsel %vm1360, %v6347, %v6349
      %v6351 = vrot.slane %v6070, 1
      %v6352 = vsel %vm1360, %v6349, %v6351
      %v6353 = vrot.slane %v6071, 1
      %v6354 = vsel %vm1360, %v6351, %v6353
      %v6355 = vrot.slane %v6072, 1
      %v6356 = vsel %vm1360, %v6353, %v6355
      %v6357 = vrot.slane %v6073, 1
      %v6358 = vsel %vm1360, %v6355, %v6357
      %v6359 = vrot.slane %v6074, 1
      %v6360 = vsel %vm1360, %v6357, %v6359
      %v6361 = vrot.slane %v6075, 1
      %v6362 = vsel %vm1360, %v6359, %v6361
      %v6363 = vrot.slane %v6076, 1
      %v6364 = vsel %vm1360, %v6361, %v6363
      %v6365 = vrot.slane %v6077, 1
      %v6366 = vsel %vm1360, %v6363, %v6365
      %v6367 = vrot.slane %v6078, 1
      %v6368 = vsel %vm1360, %v6365, %v6367
      %v6369 = vrot.slane %v6079, 1
      %v6370 = vsel %vm1360, %v6367, %v6369
      %v6371 = vrot.slane %v6080, 1
      %v6372 = vsel %vm1360, %v6369, %v6371
      %v6373 = vrot.slane %v6081, 1
      %v6374 = vsel %vm1360, %v6371, %v6373
      %v6375 = vrot.slane %v6082, 1
      %v6376 = vsel %vm1360, %v6373, %v6375
      %v6377 = vrot.slane %v6083, 1
      %v6378 = vsel %vm1360, %v6375, %v6377
      %v6379 = vrot.slane %v6084, 1
      %v6380 = vsel %vm1360, %v6377, %v6379
      %v6381 = vrot.slane %v6085, 1
      %v6382 = vsel %vm1360, %v6379, %v6381
      %v6383 = vrot.slane %v6086, 1
      %v6384 = vsel %vm1360, %v6381, %v6383
      %v6385 = vrot.slane %v6087, 1
      %v6386 = vsel %vm1360, %v6383, %v6385
      %v6387 = vrot.slane %v6088, 1
      %v6388 = vsel %vm1360, %v6385, %v6387
      %v6389 = vrot.slane %v6089, 1
      %v6390 = vsel %vm1360, %v6387, %v6389
      %v6391 = vrot.slane %v6090, 1
      %v6392 = vsel %vm1360, %v6389, %v6391
      %v6393 = vrot.slane %v6091, 1
      %v6394 = vsel %vm1360, %v6391, %v6393
      %v6395 = vrot.slane %v6092, 1
      %v6396 = vsel %vm1360, %v6393, %v6395
      %v6397 = vrot.slane %v6093, 1
      %v6398 = vsel %vm1360, %v6395, %v6397
      %v6399 = vrot.slane %v6094, 1
      %v6400 = vsel %vm1360, %v6397, %v6399
      %v6401 = vrot.slane %v6095, 1
      %v6402 = vsel %vm1360, %v6399, %v6401
      %v6403 = vrot.slane %v6096, 1
      %v6404 = vsel %vm1360, %v6401, %v6403
      %v6405 = vrot.slane %v6097, 1
      %v6406 = vsel %vm1360, %v6403, %v6405
      %v6407 = vrot.slane %v6098, 1
      %v6408 = vsel %vm1360, %v6405, %v6407
      %v6409 = vrot.slane %v6099, 1
      %v6410 = vsel %vm1360, %v6407, %v6409
      %v6411 = vrot.slane %v6100, 1
      %v6412 = vsel %vm1360, %v6409, %v6411
      %v6413 = vrot.slane %v6101, 1
      %v6414 = vsel %vm1360, %v6411, %v6413
      %v6415 = vrot.slane %v6102, 1
      %v6416 = vsel %vm1360, %v6413, %v6415
      %v6522 = vmax.f32 %v5998, %v6210
      %v6523 = vmax.f32 %v5999, %v6212
      %v6524 = vmax.f32 %v6000, %v6214
      %v6525 = vmax.f32 %v6001, %v6216
      %v6526 = vmax.f32 %v6002, %v6218
      %v6527 = vmax.f32 %v6003, %v6220
      %v6528 = vmax.f32 %v6004, %v6222
      %v6529 = vmax.f32 %v6005, %v6224
      %v6530 = vmax.f32 %v6006, %v6226
      %v6531 = vmax.f32 %v6007, %v6228
      %v6532 = vmax.f32 %v6008, %v6230
      %v6533 = vmax.f32 %v6009, %v6232
      %v6534 = vmax.f32 %v6010, %v6234
      %v6535 = vmax.f32 %v6011, %v6236
      %v6536 = vmax.f32 %v6012, %v6238
      %v6537 = vmax.f32 %v6013, %v6240
      %v6538 = vmax.f32 %v6014, %v6242
      %v6539 = vmax.f32 %v6015, %v6244
      %v6540 = vmax.f32 %v6016, %v6246
      %v6541 = vmax.f32 %v6017, %v6248
      %v6542 = vmax.f32 %v6018, %v6250
      %v6543 = vmax.f32 %v6019, %v6252
      %v6544 = vmax.f32 %v6020, %v6254
      %v6545 = vmax.f32 %v6021, %v6256
      %v6546 = vmax.f32 %v6022, %v6258
      %v6547 = vmax.f32 %v6023, %v6260
      %v6548 = vmax.f32 %v6024, %v6262
      %v6549 = vmax.f32 %v6025, %v6264
      %v6550 = vmax.f32 %v6026, %v6266
      %v6551 = vmax.f32 %v6027, %v6268
      %v6552 = vmax.f32 %v6028, %v6270
      %v6553 = vmax.f32 %v6029, %v6272
      %v6554 = vmax.f32 %v6030, %v6274
      %v6555 = vmax.f32 %v6031, %v6276
      %v6556 = vmax.f32 %v6032, %v6278
      %v6557 = vmax.f32 %v6033, %v6280
      %v6558 = vmax.f32 %v6034, %v6282
      %v6559 = vmax.f32 %v6035, %v6284
      %v6560 = vmax.f32 %v6036, %v6286
      %v6561 = vmax.f32 %v6037, %v6288
      %v6562 = vmax.f32 %v6038, %v6290
      %v6563 = vmax.f32 %v6039, %v6292
      %v6564 = vmax.f32 %v6040, %v6294
      %v6565 = vmax.f32 %v6041, %v6296
      %v6566 = vmax.f32 %v6042, %v6298
      %v6567 = vmax.f32 %v6043, %v6300
      %v6568 = vmax.f32 %v6044, %v6302
      %v6569 = vmax.f32 %v6045, %v6304
      %v6570 = vmax.f32 %v6046, %v6306
      %v6571 = vmax.f32 %v6047, %v6308
      %v6572 = vmax.f32 %v6048, %v6310
      %v6573 = vmax.f32 %v6049, %v6312
      %v6574 = vmax.f32 %v6050, %v6314
      %v6575 = vmax.f32 %v6051, %v6316
      %v6576 = vmax.f32 %v6052, %v6318
      %v6577 = vmax.f32 %v6053, %v6320
      %v6578 = vmax.f32 %v6054, %v6322
      %v6579 = vmax.f32 %v6055, %v6324
      %v6580 = vmax.f32 %v6056, %v6326
      %v6581 = vmax.f32 %v6057, %v6328
      %v6582 = vmax.f32 %v6058, %v6330
      %v6583 = vmax.f32 %v6059, %v6332
      %v6584 = vmax.f32 %v6060, %v6334
      %v6585 = vmax.f32 %v6061, %v6336
      %v6586 = vmax.f32 %v6062, %v6338
      %v6587 = vmax.f32 %v6063, %v6340
      %v6588 = vmax.f32 %v6064, %v6342
      %v6589 = vmax.f32 %v6065, %v6344
      %v6590 = vmax.f32 %v6066, %v6346
      %v6591 = vmax.f32 %v6067, %v6348
      %v6592 = vmax.f32 %v6068, %v6350
      %v6593 = vmax.f32 %v6069, %v6352
      %v6594 = vmax.f32 %v6070, %v6354
      %v6595 = vmax.f32 %v6071, %v6356
      %v6596 = vmax.f32 %v6072, %v6358
      %v6597 = vmax.f32 %v6073, %v6360
      %v6598 = vmax.f32 %v6074, %v6362
      %v6599 = vmax.f32 %v6075, %v6364
      %v6600 = vmax.f32 %v6076, %v6366
      %v6601 = vmax.f32 %v6077, %v6368
      %v6602 = vmax.f32 %v6078, %v6370
      %v6603 = vmax.f32 %v6079, %v6372
      %v6604 = vmax.f32 %v6080, %v6374
      %v6605 = vmax.f32 %v6081, %v6376
      %v6606 = vmax.f32 %v6082, %v6378
      %v6607 = vmax.f32 %v6083, %v6380
      %v6608 = vmax.f32 %v6084, %v6382
      %v6609 = vmax.f32 %v6085, %v6384
      %v6610 = vmax.f32 %v6086, %v6386
      %v6611 = vmax.f32 %v6087, %v6388
      %v6612 = vmax.f32 %v6088, %v6390
      %v6613 = vmax.f32 %v6089, %v6392
      %v6614 = vmax.f32 %v6090, %v6394
      %v6615 = vmax.f32 %v6091, %v6396
      %v6616 = vmax.f32 %v6092, %v6398
      %v6617 = vmax.f32 %v6093, %v6400
      %v6618 = vmax.f32 %v6094, %v6402
      %v6619 = vmax.f32 %v6095, %v6404
      %v6620 = vmax.f32 %v6096, %v6406
      %v6621 = vmax.f32 %v6097, %v6408
      %v6622 = vmax.f32 %v6098, %v6410
      %v6623 = vmax.f32 %v6099, %v6412
      %v6624 = vmax.f32 %v6100, %v6414
      %v6625 = vmax.f32 %v6101, %v6416
      %v6626 = vmax.f32 %v6102, %v6415
      %v6729 = vrot.slane %v6525, 6
      %v6730 = vrot.slane %v6526, 6
      %v6731 = vsel %vm2659, %v6729, %v6730
      %v6732 = vrot.slane %v6527, 6
      %v6733 = vsel %vm2659, %v6730, %v6732
      %v6734 = vrot.slane %v6528, 6
      %v6735 = vsel %vm2659, %v6732, %v6734
      %v6736 = vrot.slane %v6529, 6
      %v6737 = vsel %vm2659, %v6734, %v6736
      %v6738 = vrot.slane %v6530, 6
      %v6739 = vsel %vm2659, %v6736, %v6738
      %v6740 = vrot.slane %v6531, 6
      %v6741 = vsel %vm2659, %v6738, %v6740
      %v6742 = vrot.slane %v6532, 6
      %v6743 = vsel %vm2659, %v6740, %v6742
      %v6744 = vrot.slane %v6533, 6
      %v6745 = vsel %vm2659, %v6742, %v6744
      %v6746 = vrot.slane %v6534, 6
      %v6747 = vsel %vm2659, %v6744, %v6746
      %v6748 = vrot.slane %v6535, 6
      %v6749 = vsel %vm2659, %v6746, %v6748
      %v6750 = vrot.slane %v6536, 6
      %v6751 = vsel %vm2659, %v6748, %v6750
      %v6752 = vrot.slane %v6537, 6
      %v6753 = vsel %vm2659, %v6750, %v6752
      %v6754 = vrot.slane %v6538, 6
      %v6755 = vsel %vm2659, %v6752, %v6754
      %v6756 = vrot.slane %v6539, 6
      %v6757 = vsel %vm2659, %v6754, %v6756
      %v6758 = vrot.slane %v6540, 6
      %v6759 = vsel %vm2659, %v6756, %v6758
      %v6760 = vrot.slane %v6541, 6
      %v6761 = vsel %vm2659, %v6758, %v6760
      %v6762 = vrot.slane %v6542, 6
      %v6763 = vsel %vm2659, %v6760, %v6762
      %v6764 = vrot.slane %v6543, 6
      %v6765 = vsel %vm2659, %v6762, %v6764
      %v6766 = vrot.slane %v6544, 6
      %v6767 = vsel %vm2659, %v6764, %v6766
      %v6768 = vrot.slane %v6545, 6
      %v6769 = vsel %vm2659, %v6766, %v6768
      %v6770 = vrot.slane %v6546, 6
      %v6771 = vsel %vm2659, %v6768, %v6770
      %v6772 = vrot.slane %v6547, 6
      %v6773 = vsel %vm2659, %v6770, %v6772
      %v6774 = vrot.slane %v6548, 6
      %v6775 = vsel %vm2659, %v6772, %v6774
      %v6776 = vrot.slane %v6549, 6
      %v6777 = vsel %vm2659, %v6774, %v6776
      %v6778 = vrot.slane %v6550, 6
      %v6779 = vsel %vm2659, %v6776, %v6778
      %v6780 = vrot.slane %v6551, 6
      %v6781 = vsel %vm2659, %v6778, %v6780
      %v6782 = vrot.slane %v6552, 6
      %v6783 = vsel %vm2659, %v6780, %v6782
      %v6784 = vrot.slane %v6553, 6
      %v6785 = vsel %vm2659, %v6782, %v6784
      %v6786 = vrot.slane %v6554, 6
      %v6787 = vsel %vm2659, %v6784, %v6786
      %v6788 = vrot.slane %v6555, 6
      %v6789 = vsel %vm2659, %v6786, %v6788
      %v6790 = vrot.slane %v6556, 6
      %v6791 = vsel %vm2659, %v6788, %v6790
      %v6792 = vrot.slane %v6557, 6
      %v6793 = vsel %vm2659, %v6790, %v6792
      %v6794 = vrot.slane %v6558, 6
      %v6795 = vsel %vm2659, %v6792, %v6794
      %v6796 = vrot.slane %v6559, 6
      %v6797 = vsel %vm2659, %v6794, %v6796
      %v6798 = vrot.slane %v6560, 6
      %v6799 = vsel %vm2659, %v6796, %v6798
      %v6800 = vrot.slane %v6561, 6
      %v6801 = vsel %vm2659, %v6798, %v6800
      %v6802 = vrot.slane %v6562, 6
      %v6803 = vsel %vm2659, %v6800, %v6802
      %v6804 = vrot.slane %v6563, 6
      %v6805 = vsel %vm2659, %v6802, %v6804
      %v6806 = vrot.slane %v6564, 6
      %v6807 = vsel %vm2659, %v6804, %v6806
      %v6808 = vrot.slane %v6565, 6
      %v6809 = vsel %vm2659, %v6806, %v6808
      %v6810 = vrot.slane %v6566, 6
      %v6811 = vsel %vm2659, %v6808, %v6810
      %v6812 = vrot.slane %v6567, 6
      %v6813 = vsel %vm2659, %v6810, %v6812
      %v6814 = vrot.slane %v6568, 6
      %v6815 = vsel %vm2659, %v6812, %v6814
      %v6816 = vrot.slane %v6569, 6
      %v6817 = vsel %vm2659, %v6814, %v6816
      %v6818 = vrot.slane %v6570, 6
      %v6819 = vsel %vm2659, %v6816, %v6818
      %v6820 = vrot.slane %v6571, 6
      %v6821 = vsel %vm2659, %v6818, %v6820
      %v6822 = vrot.slane %v6572, 6
      %v6823 = vsel %vm2659, %v6820, %v6822
      %v6824 = vrot.slane %v6573, 6
      %v6825 = vsel %vm2659, %v6822, %v6824
      %v6826 = vrot.slane %v6574, 6
      %v6827 = vsel %vm2659, %v6824, %v6826
      %v6828 = vrot.slane %v6575, 6
      %v6829 = vsel %vm2659, %v6826, %v6828
      %v6830 = vrot.slane %v6576, 6
      %v6831 = vsel %vm2659, %v6828, %v6830
      %v6832 = vrot.slane %v6577, 6
      %v6833 = vsel %vm2659, %v6830, %v6832
      %v6834 = vrot.slane %v6578, 6
      %v6835 = vsel %vm2659, %v6832, %v6834
      %v6836 = vrot.slane %v6579, 6
      %v6837 = vsel %vm2659, %v6834, %v6836
      %v6838 = vrot.slane %v6580, 6
      %v6839 = vsel %vm2659, %v6836, %v6838
      %v6840 = vrot.slane %v6581, 6
      %v6841 = vsel %vm2659, %v6838, %v6840
      %v6842 = vrot.slane %v6582, 6
      %v6843 = vsel %vm2659, %v6840, %v6842
      %v6844 = vrot.slane %v6583, 6
      %v6845 = vsel %vm2659, %v6842, %v6844
      %v6846 = vrot.slane %v6584, 6
      %v6847 = vsel %vm2659, %v6844, %v6846
      %v6848 = vrot.slane %v6585, 6
      %v6849 = vsel %vm2659, %v6846, %v6848
      %v6850 = vrot.slane %v6586, 6
      %v6851 = vsel %vm2659, %v6848, %v6850
      %v6852 = vrot.slane %v6587, 6
      %v6853 = vsel %vm2659, %v6850, %v6852
      %v6854 = vrot.slane %v6588, 6
      %v6855 = vsel %vm2659, %v6852, %v6854
      %v6856 = vrot.slane %v6589, 6
      %v6857 = vsel %vm2659, %v6854, %v6856
      %v6858 = vrot.slane %v6590, 6
      %v6859 = vsel %vm2659, %v6856, %v6858
      %v6860 = vrot.slane %v6591, 6
      %v6861 = vsel %vm2659, %v6858, %v6860
      %v6862 = vrot.slane %v6592, 6
      %v6863 = vsel %vm2659, %v6860, %v6862
      %v6864 = vrot.slane %v6593, 6
      %v6865 = vsel %vm2659, %v6862, %v6864
      %v6866 = vrot.slane %v6594, 6
      %v6867 = vsel %vm2659, %v6864, %v6866
      %v6868 = vrot.slane %v6595, 6
      %v6869 = vsel %vm2659, %v6866, %v6868
      %v6870 = vrot.slane %v6596, 6
      %v6871 = vsel %vm2659, %v6868, %v6870
      %v6872 = vrot.slane %v6597, 6
      %v6873 = vsel %vm2659, %v6870, %v6872
      %v6874 = vrot.slane %v6598, 6
      %v6875 = vsel %vm2659, %v6872, %v6874
      %v6876 = vrot.slane %v6599, 6
      %v6877 = vsel %vm2659, %v6874, %v6876
      %v6878 = vrot.slane %v6600, 6
      %v6879 = vsel %vm2659, %v6876, %v6878
      %v6880 = vrot.slane %v6601, 6
      %v6881 = vsel %vm2659, %v6878, %v6880
      %v6882 = vrot.slane %v6602, 6
      %v6883 = vsel %vm2659, %v6880, %v6882
      %v6884 = vrot.slane %v6603, 6
      %v6885 = vsel %vm2659, %v6882, %v6884
      %v6886 = vrot.slane %v6604, 6
      %v6887 = vsel %vm2659, %v6884, %v6886
      %v6888 = vrot.slane %v6605, 6
      %v6889 = vsel %vm2659, %v6886, %v6888
      %v6890 = vrot.slane %v6606, 6
      %v6891 = vsel %vm2659, %v6888, %v6890
      %v6892 = vrot.slane %v6607, 6
      %v6893 = vsel %vm2659, %v6890, %v6892
      %v6894 = vrot.slane %v6608, 6
      %v6895 = vsel %vm2659, %v6892, %v6894
      %v6896 = vrot.slane %v6609, 6
      %v6897 = vsel %vm2659, %v6894, %v6896
      %v6898 = vrot.slane %v6610, 6
      %v6899 = vsel %vm2659, %v6896, %v6898
      %v6900 = vrot.slane %v6611, 6
      %v6901 = vsel %vm2659, %v6898, %v6900
      %v6902 = vrot.slane %v6612, 6
      %v6903 = vsel %vm2659, %v6900, %v6902
      %v6904 = vrot.slane %v6613, 6
      %v6905 = vsel %vm2659, %v6902, %v6904
      %v6906 = vrot.slane %v6614, 6
      %v6907 = vsel %vm2659, %v6904, %v6906
      %v6908 = vrot.slane %v6615, 6
      %v6909 = vsel %vm2659, %v6906, %v6908
      %v6910 = vrot.slane %v6616, 6
      %v6911 = vsel %vm2659, %v6908, %v6910
      %v6912 = vrot.slane %v6617, 6
      %v6913 = vsel %vm2659, %v6910, %v6912
      %v6914 = vrot.slane %v6618, 6
      %v6915 = vsel %vm2659, %v6912, %v6914
      %v6916 = vrot.slane %v6619, 6
      %v6917 = vsel %vm2659, %v6914, %v6916
      %v6918 = vrot.slane %v6620, 6
      %v6919 = vsel %vm2659, %v6916, %v6918
      %v6920 = vrot.slane %v6621, 6
      %v6921 = vsel %vm2659, %v6918, %v6920
      %v6922 = vrot.slane %v6622, 6
      %v6923 = vsel %vm2659, %v6920, %v6922
      %v6924 = vrot.slane %v6623, 6
      %v6925 = vsel %vm2659, %v6922, %v6924
      %v6926 = vrot.slane %v6624, 6
      %v6927 = vsel %vm2659, %v6924, %v6926
      %v6928 = vrot.slane %v6625, 6
      %v6929 = vsel %vm2659, %v6926, %v6928
      %v6930 = vrot.slane %v6626, 6
      %v6931 = vsel %vm2659, %v6928, %v6930
      %v7034 = vmax.f32 %v6522, %v6731
      %v7035 = vmax.f32 %v6523, %v6733
      %v7036 = vmax.f32 %v6524, %v6735
      %v7037 = vmax.f32 %v6525, %v6737
      %v7038 = vmax.f32 %v6526, %v6739
      %v7039 = vmax.f32 %v6527, %v6741
      %v7040 = vmax.f32 %v6528, %v6743
      %v7041 = vmax.f32 %v6529, %v6745
      %v7042 = vmax.f32 %v6530, %v6747
      %v7043 = vmax.f32 %v6531, %v6749
      %v7044 = vmax.f32 %v6532, %v6751
      %v7045 = vmax.f32 %v6533, %v6753
      %v7046 = vmax.f32 %v6534, %v6755
      %v7047 = vmax.f32 %v6535, %v6757
      %v7048 = vmax.f32 %v6536, %v6759
      %v7049 = vmax.f32 %v6537, %v6761
      %v7050 = vmax.f32 %v6538, %v6763
      %v7051 = vmax.f32 %v6539, %v6765
      %v7052 = vmax.f32 %v6540, %v6767
      %v7053 = vmax.f32 %v6541, %v6769
      %v7054 = vmax.f32 %v6542, %v6771
      %v7055 = vmax.f32 %v6543, %v6773
      %v7056 = vmax.f32 %v6544, %v6775
      %v7057 = vmax.f32 %v6545, %v6777
      %v7058 = vmax.f32 %v6546, %v6779
      %v7059 = vmax.f32 %v6547, %v6781
      %v7060 = vmax.f32 %v6548, %v6783
      %v7061 = vmax.f32 %v6549, %v6785
      %v7062 = vmax.f32 %v6550, %v6787
      %v7063 = vmax.f32 %v6551, %v6789
      %v7064 = vmax.f32 %v6552, %v6791
      %v7065 = vmax.f32 %v6553, %v6793
      %v7066 = vmax.f32 %v6554, %v6795
      %v7067 = vmax.f32 %v6555, %v6797
      %v7068 = vmax.f32 %v6556, %v6799
      %v7069 = vmax.f32 %v6557, %v6801
      %v7070 = vmax.f32 %v6558, %v6803
      %v7071 = vmax.f32 %v6559, %v6805
      %v7072 = vmax.f32 %v6560, %v6807
      %v7073 = vmax.f32 %v6561, %v6809
      %v7074 = vmax.f32 %v6562, %v6811
      %v7075 = vmax.f32 %v6563, %v6813
      %v7076 = vmax.f32 %v6564, %v6815
      %v7077 = vmax.f32 %v6565, %v6817
      %v7078 = vmax.f32 %v6566, %v6819
      %v7079 = vmax.f32 %v6567, %v6821
      %v7080 = vmax.f32 %v6568, %v6823
      %v7081 = vmax.f32 %v6569, %v6825
      %v7082 = vmax.f32 %v6570, %v6827
      %v7083 = vmax.f32 %v6571, %v6829
      %v7084 = vmax.f32 %v6572, %v6831
      %v7085 = vmax.f32 %v6573, %v6833
      %v7086 = vmax.f32 %v6574, %v6835
      %v7087 = vmax.f32 %v6575, %v6837
      %v7088 = vmax.f32 %v6576, %v6839
      %v7089 = vmax.f32 %v6577, %v6841
      %v7090 = vmax.f32 %v6578, %v6843
      %v7091 = vmax.f32 %v6579, %v6845
      %v7092 = vmax.f32 %v6580, %v6847
      %v7093 = vmax.f32 %v6581, %v6849
      %v7094 = vmax.f32 %v6582, %v6851
      %v7095 = vmax.f32 %v6583, %v6853
      %v7096 = vmax.f32 %v6584, %v6855
      %v7097 = vmax.f32 %v6585, %v6857
      %v7098 = vmax.f32 %v6586, %v6859
      %v7099 = vmax.f32 %v6587, %v6861
      %v7100 = vmax.f32 %v6588, %v6863
      %v7101 = vmax.f32 %v6589, %v6865
      %v7102 = vmax.f32 %v6590, %v6867
      %v7103 = vmax.f32 %v6591, %v6869
      %v7104 = vmax.f32 %v6592, %v6871
      %v7105 = vmax.f32 %v6593, %v6873
      %v7106 = vmax.f32 %v6594, %v6875
      %v7107 = vmax.f32 %v6595, %v6877
      %v7108 = vmax.f32 %v6596, %v6879
      %v7109 = vmax.f32 %v6597, %v6881
      %v7110 = vmax.f32 %v6598, %v6883
      %v7111 = vmax.f32 %v6599, %v6885
      %v7112 = vmax.f32 %v6600, %v6887
      %v7113 = vmax.f32 %v6601, %v6889
      %v7114 = vmax.f32 %v6602, %v6891
      %v7115 = vmax.f32 %v6603, %v6893
      %v7116 = vmax.f32 %v6604, %v6895
      %v7117 = vmax.f32 %v6605, %v6897
      %v7118 = vmax.f32 %v6606, %v6899
      %v7119 = vmax.f32 %v6607, %v6901
      %v7120 = vmax.f32 %v6608, %v6903
      %v7121 = vmax.f32 %v6609, %v6905
      %v7122 = vmax.f32 %v6610, %v6907
      %v7123 = vmax.f32 %v6611, %v6909
      %v7124 = vmax.f32 %v6612, %v6911
      %v7125 = vmax.f32 %v6613, %v6913
      %v7126 = vmax.f32 %v6614, %v6915
      %v7127 = vmax.f32 %v6615, %v6917
      %v7128 = vmax.f32 %v6616, %v6919
      %v7129 = vmax.f32 %v6617, %v6921
      %v7130 = vmax.f32 %v6618, %v6923
      %v7131 = vmax.f32 %v6619, %v6925
      %v7132 = vmax.f32 %v6620, %v6927
      %v7133 = vmax.f32 %v6621, %v6929
      %v7134 = vmax.f32 %v6622, %v6931
      %v7135 = vmax.f32 %v6623, %v6930
      %v7136 = vld [vmem:[%s3] sm:$0xff]
      %v7137 = vld [vmem:[%s3 + $0x8] sm:$0xff]
      %v7138 = vld [vmem:[%s3 + $0x10] sm:$0xff]
      %v7139 = vld [vmem:[%s3 + $0x18] sm:$0xf]
      %v7140 = vld [vmem:[%s3 + $0x1c] sm:$0xff]
      %v7141 = vld [vmem:[%s3 + $0x24] sm:$0xff]
      %v7142 = vld [vmem:[%s3 + $0x2c] sm:$0xff]
      %v7143 = vld [vmem:[%s3 + $0x34] sm:$0xf]
      %v7144 = vld [vmem:[%s3 + $0x38] sm:$0xff]
      %v7145 = vld [vmem:[%s3 + $0x40] sm:$0xff]
      %v7146 = vld [vmem:[%s3 + $0x48] sm:$0xff]
      %v7147 = vld [vmem:[%s3 + $0x50] sm:$0xf]
      %v7148 = vld [vmem:[%s3 + $0x54] sm:$0xff]
      %v7149 = vld [vmem:[%s3 + $0x5c] sm:$0xff]
      %v7150 = vld [vmem:[%s3 + $0x64] sm:$0xff]
      %v7151 = vld [vmem:[%s3 + $0x6c] sm:$0xf]
      %v7152 = vld [vmem:[%s3 + $0x70] sm:$0xff]
      %v7153 = vld [vmem:[%s3 + $0x78] sm:$0xff]
      %v7154 = vld [vmem:[%s3 + $0x80] sm:$0xff]
      %v7155 = vld [vmem:[%s3 + $0x88] sm:$0xf]
      %v7156 = vld [vmem:[%s3 + $0x8c] sm:$0xff]
      %v7157 = vld [vmem:[%s3 + $0x94] sm:$0xff]
      %v7158 = vld [vmem:[%s3 + $0x9c] sm:$0xff]
      %v7159 = vld [vmem:[%s3 + $0xa4] sm:$0xf]
      %v7160 = vld [vmem:[%s3 + $0xa8] sm:$0xff]
      %v7161 = vld [vmem:[%s3 + $0xb0] sm:$0xff]
      %v7162 = vld [vmem:[%s3 + $0xb8] sm:$0xff]
      %v7163 = vld [vmem:[%s3 + $0xc0] sm:$0xf]
      %v7164 = vld [vmem:[%s3 + $0xc4] sm:$0xff]
      %v7165 = vld [vmem:[%s3 + $0xcc] sm:$0xff]
      %v7166 = vld [vmem:[%s3 + $0xd4] sm:$0xff]
      %v7167 = vld [vmem:[%s3 + $0xdc] sm:$0xf]
      %v7168 = vld [vmem:[%s3 + $0xe0] sm:$0xff]
      %v7169 = vld [vmem:[%s3 + $0xe8] sm:$0xff]
      %v7170 = vld [vmem:[%s3 + $0xf0] sm:$0xff]
      %v7171 = vld [vmem:[%s3 + $0xf8] sm:$0xf]
      %v7172 = vld [vmem:[%s3 + $0xfc] sm:$0xff]
      %v7173 = vld [vmem:[%s3 + $0x104] sm:$0xff]
      %v7174 = vld [vmem:[%s3 + $0x10c] sm:$0xff]
      %v7175 = vld [vmem:[%s3 + $0x114] sm:$0xf]
      %v7176 = vld [vmem:[%s3 + $0x118] sm:$0xff]
      %v7177 = vld [vmem:[%s3 + $0x120] sm:$0xff]
      %v7178 = vld [vmem:[%s3 + $0x128] sm:$0xff]
      %v7179 = vld [vmem:[%s3 + $0x130] sm:$0xf]
      %v7180 = vld [vmem:[%s3 + $0x134] sm:$0xff]
      %v7181 = vld [vmem:[%s3 + $0x13c] sm:$0xff]
      %v7182 = vld [vmem:[%s3 + $0x144] sm:$0xff]
      %v7183 = vld [vmem:[%s3 + $0x14c] sm:$0xf]
      %v7184 = vld [vmem:[%s3 + $0x150] sm:$0xff]
      %v7185 = vld [vmem:[%s3 + $0x158] sm:$0xff]
      %v7186 = vld [vmem:[%s3 + $0x160] sm:$0xff]
      %v7187 = vld [vmem:[%s3 + $0x168] sm:$0xf]
      %v7188 = vld [vmem:[%s3 + $0x16c] sm:$0xff]
      %v7189 = vld [vmem:[%s3 + $0x174] sm:$0xff]
      %v7190 = vld [vmem:[%s3 + $0x17c] sm:$0xff]
      %v7191 = vld [vmem:[%s3 + $0x184] sm:$0xf]
      %v7192 = vld [vmem:[%s3 + $0x188] sm:$0xff]
      %v7193 = vld [vmem:[%s3 + $0x190] sm:$0xff]
      %v7194 = vld [vmem:[%s3 + $0x198] sm:$0xff]
      %v7195 = vld [vmem:[%s3 + $0x1a0] sm:$0xf]
      %v7196 = vld [vmem:[%s3 + $0x1a4] sm:$0xff]
      %v7197 = vld [vmem:[%s3 + $0x1ac] sm:$0xff]
      %v7198 = vld [vmem:[%s3 + $0x1b4] sm:$0xff]
      %v7199 = vld [vmem:[%s3 + $0x1bc] sm:$0xf]
      %v7200 = vld [vmem:[%s3 + $0x1c0] sm:$0xff]
      %v7201 = vld [vmem:[%s3 + $0x1c8] sm:$0xff]
      %v7202 = vld [vmem:[%s3 + $0x1d0] sm:$0xff]
      %v7203 = vld [vmem:[%s3 + $0x1d8] sm:$0xf]
      %v7204 = vld [vmem:[%s3 + $0x1dc] sm:$0xff]
      %v7205 = vld [vmem:[%s3 + $0x1e4] sm:$0xff]
      %v7206 = vld [vmem:[%s3 + $0x1ec] sm:$0xff]
      %v7207 = vld [vmem:[%s3 + $0x1f4] sm:$0xf]
      %v7208 = vld [vmem:[%s3 + $0x1f8] sm:$0xff]
      %v7209 = vld [vmem:[%s3 + $0x200] sm:$0xff]
      %v7210 = vld [vmem:[%s3 + $0x208] sm:$0xff]
      %v7211 = vld [vmem:[%s3 + $0x210] sm:$0xf]
      %v7212 = vld [vmem:[%s3 + $0x214] sm:$0xff]
      %v7213 = vld [vmem:[%s3 + $0x21c] sm:$0xff]
      %v7214 = vld [vmem:[%s3 + $0x224] sm:$0xff]
      %v7215 = vld [vmem:[%s3 + $0x22c] sm:$0xf]
      %v7216 = vld [vmem:[%s3 + $0x230] sm:$0xff]
      %v7217 = vld [vmem:[%s3 + $0x238] sm:$0xff]
      %v7218 = vld [vmem:[%s3 + $0x240] sm:$0xff]
      %v7219 = vld [vmem:[%s3 + $0x248] sm:$0xf]
      %v7220 = vld [vmem:[%s3 + $0x24c] sm:$0xff]
      %v7221 = vld [vmem:[%s3 + $0x254] sm:$0xff]
      %v7222 = vld [vmem:[%s3 + $0x25c] sm:$0xff]
      %v7223 = vld [vmem:[%s3 + $0x264] sm:$0xf]
      %v7224 = vld [vmem:[%s3 + $0x268] sm:$0xff]
      %v7225 = vld [vmem:[%s3 + $0x270] sm:$0xff]
      %v7226 = vld [vmem:[%s3 + $0x278] sm:$0xff]
      %v7227 = vld [vmem:[%s3 + $0x280] sm:$0xf]
      %v7228 = vld [vmem:[%s3 + $0x284] sm:$0xff]
      %v7229 = vld [vmem:[%s3 + $0x28c] sm:$0xff]
      %v7230 = vld [vmem:[%s3 + $0x294] sm:$0xff]
      %v7231 = vld [vmem:[%s3 + $0x29c] sm:$0xf]
      %v7232 = vld [vmem:[%s3 + $0x2a0] sm:$0xff]
      %v7233 = vld [vmem:[%s3 + $0x2a8] sm:$0xff]
      %v7234 = vld [vmem:[%s3 + $0x2b0] sm:$0xff]
      %v7235 = vld [vmem:[%s3 + $0x2b8] sm:$0xf]
      %v7236 = vld [vmem:[%s3 + $0x2bc] sm:$0xff]
      %v7237 = vld [vmem:[%s3 + $0x2c4] sm:$0xff]
      %v7238 = vld [vmem:[%s3 + $0x2cc] sm:$0xff]
      %v7239 = vld [vmem:[%s3 + $0x2d4] sm:$0xf]
      %v7240 = vld [vmem:[%s3 + $0x2d8] sm:$0xff]
      %v7241 = vld [vmem:[%s3 + $0x2e0] sm:$0xff]
      %v7242 = vld [vmem:[%s3 + $0x2e8] sm:$0xff]
      %v7243 = vld [vmem:[%s3 + $0x2f0] sm:$0xf]
      %v7244 = vld [vmem:[%s3 + $0x2f4] sm:$0xff]
      %v7245 = vld [vmem:[%s3 + $0x2fc] sm:$0xff]
      %v7246 = vld [vmem:[%s3 + $0x304] sm:$0xff]
      %v7247 = vld [vmem:[%s3 + $0x30c] sm:$0xf]
      %v7248 = vld [vmem:[%s3 + $0x310] sm:$0xff]
      %v7249 = vld [vmem:[%s3 + $0x318] sm:$0xff]
      %v7250 = vld [vmem:[%s3 + $0x320] sm:$0xff]
      %v7251 = vld [vmem:[%s3 + $0x328] sm:$0xf]
      %v7252 = vld [vmem:[%s3 + $0x32c] sm:$0xff]
      %v7253 = vld [vmem:[%s3 + $0x334] sm:$0xff]
      %v7254 = vld [vmem:[%s3 + $0x33c] sm:$0xff]
      %v7255 = vld [vmem:[%s3 + $0x344] sm:$0xf]
      %v7256 = vld [vmem:[%s3 + $0x348] sm:$0xff]
      %v7257 = vld [vmem:[%s3 + $0x350] sm:$0xff]
      %v7258 = vld [vmem:[%s3 + $0x358] sm:$0xff]
      %v7259 = vld [vmem:[%s3 + $0x360] sm:$0xf]
      %v7260 = vld [vmem:[%s3 + $0x364] sm:$0xff]
      %v7261 = vld [vmem:[%s3 + $0x36c] sm:$0xff]
      %v7262 = vld [vmem:[%s3 + $0x374] sm:$0xff]
      %v7263 = vld [vmem:[%s3 + $0x37c] sm:$0xf]
      %v7264 = vld [vmem:[%s3 + $0x380] sm:$0xff]
      %v7265 = vld [vmem:[%s3 + $0x388] sm:$0xff]
      %v7266 = vld [vmem:[%s3 + $0x390] sm:$0xff]
      %v7267 = vld [vmem:[%s3 + $0x398] sm:$0xf]
      %v7268 = vld [vmem:[%s3 + $0x39c] sm:$0xff]
      %v7269 = vld [vmem:[%s3 + $0x3a4] sm:$0xff]
      %v7270 = vld [vmem:[%s3 + $0x3ac] sm:$0xff]
      %v7271 = vld [vmem:[%s3 + $0x3b4] sm:$0xf]
      %v7272 = vpack.c.bf16 %v7035, %v7034
      %v7273 = vpack.c.bf16 %v7037, %v7036
      %v7274 = vpack.c.bf16 %v7039, %v7038
      %v7275 = vpack.c.bf16 %v7041, %v7040
      %v7276 = vpack.c.bf16 %v7043, %v7042
      %v7277 = vpack.c.bf16 %v7045, %v7044
      %v7278 = vpack.c.bf16 %v7047, %v7046
      %v7279 = vpack.c.bf16 %v7049, %v7048
      %v7280 = vpack.c.bf16 %v7051, %v7050
      %v7281 = vpack.c.bf16 %v7053, %v7052
      %v7282 = vpack.c.bf16 %v7055, %v7054
      %v7283 = vpack.c.bf16 %v7057, %v7056
      %v7284 = vpack.c.bf16 %v7059, %v7058
      %v7285 = vpack.c.bf16 %v7061, %v7060
      %v7286 = vpack.c.bf16 %v7063, %v7062
      %v7287 = vpack.c.bf16 %v7065, %v7064
      %v7288 = vpack.c.bf16 %v7067, %v7066
      %v7289 = vpack.c.bf16 %v7069, %v7068
      %v7290 = vpack.c.bf16 %v7071, %v7070
      %v7291 = vpack.c.bf16 %v7073, %v7072
      %v7292 = vpack.c.bf16 %v7075, %v7074
      %v7293 = vpack.c.bf16 %v7077, %v7076
      %v7294 = vpack.c.bf16 %v7079, %v7078
      %v7295 = vpack.c.bf16 %v7081, %v7080
      %v7296 = vpack.c.bf16 %v7083, %v7082
      %v7297 = vpack.c.bf16 %v7085, %v7084
      %v7298 = vpack.c.bf16 %v7087, %v7086
      %v7299 = vpack.c.bf16 %v7089, %v7088
      %v7300 = vpack.c.bf16 %v7091, %v7090
      %v7301 = vpack.c.bf16 %v7093, %v7092
      %v7302 = vpack.c.bf16 %v7095, %v7094
      %v7303 = vpack.c.bf16 %v7097, %v7096
      %v7304 = vpack.c.bf16 %v7099, %v7098
      %v7305 = vpack.c.bf16 %v7101, %v7100
      %v7306 = vpack.c.bf16 %v7103, %v7102
      %v7307 = vpack.c.bf16 %v7105, %v7104
      %v7308 = vpack.c.bf16 %v7107, %v7106
      %v7309 = vpack.c.bf16 %v7109, %v7108
      %v7310 = vpack.c.bf16 %v7111, %v7110
      %v7311 = vpack.c.bf16 %v7113, %v7112
      %v7312 = vpack.c.bf16 %v7115, %v7114
      %v7313 = vpack.c.bf16 %v7117, %v7116
      %v7314 = vpack.c.bf16 %v7119, %v7118
      %v7315 = vpack.c.bf16 %v7121, %v7120
      %v7316 = vpack.c.bf16 %v7123, %v7122
      %v7317 = vpack.c.bf16 %v7125, %v7124
      %v7318 = vpack.c.bf16 %v7127, %v7126
      %v7319 = vpack.c.bf16 %v7129, %v7128
      %v7320 = vpack.c.bf16 %v7131, %v7130
      %v7321 = vpack.c.bf16 %v7133, %v7132
      %v7322 = vpack.c.bf16 %v7135, %v7134
      %v7459 = vunpack.c.l.b16 %v7136
      %v7460 = vunpack.c.h.b16 %v7136
      %v7461 = vunpack.c.l.b16 %v7137
      %v7462 = vunpack.c.h.b16 %v7137
      %v7463 = vunpack.c.l.b16 %v7138
      %v7464 = vunpack.c.h.b16 %v7138
      %v7465 = vunpack.c.l.b16 %v7139
      %v7466 = vunpack.c.l.b16 %v7140
      %v7467 = vunpack.c.h.b16 %v7140
      %v7468 = vunpack.c.l.b16 %v7141
      %v7469 = vunpack.c.h.b16 %v7141
      %v7470 = vunpack.c.l.b16 %v7142
      %v7471 = vunpack.c.h.b16 %v7142
      %v7472 = vunpack.c.l.b16 %v7143
      %v7473 = vunpack.c.l.b16 %v7144
      %v7474 = vunpack.c.h.b16 %v7144
      %v7475 = vunpack.c.l.b16 %v7145
      %v7476 = vunpack.c.h.b16 %v7145
      %v7477 = vunpack.c.l.b16 %v7146
      %v7478 = vunpack.c.h.b16 %v7146
      %v7479 = vunpack.c.l.b16 %v7147
      %v7480 = vunpack.c.l.b16 %v7148
      %v7481 = vunpack.c.h.b16 %v7148
      %v7482 = vunpack.c.l.b16 %v7149
      %v7483 = vunpack.c.h.b16 %v7149
      %v7484 = vunpack.c.l.b16 %v7150
      %v7485 = vunpack.c.h.b16 %v7150
      %v7486 = vunpack.c.l.b16 %v7151
      %v7487 = vunpack.c.l.b16 %v7152
      %v7488 = vunpack.c.h.b16 %v7152
      %v7489 = vunpack.c.l.b16 %v7153
      %v7490 = vunpack.c.h.b16 %v7153
      %v7491 = vunpack.c.l.b16 %v7154
      %v7492 = vunpack.c.h.b16 %v7154
      %v7493 = vunpack.c.l.b16 %v7155
      %v7494 = vunpack.c.l.b16 %v7156
      %v7495 = vunpack.c.h.b16 %v7156
      %v7496 = vunpack.c.l.b16 %v7157
      %v7497 = vunpack.c.h.b16 %v7157
      %v7498 = vunpack.c.l.b16 %v7158
      %v7499 = vunpack.c.h.b16 %v7158
      %v7500 = vunpack.c.l.b16 %v7159
      %v7501 = vunpack.c.l.b16 %v7160
      %v7502 = vunpack.c.h.b16 %v7160
      %v7503 = vunpack.c.l.b16 %v7161
      %v7504 = vunpack.c.h.b16 %v7161
      %v7505 = vunpack.c.l.b16 %v7162
      %v7506 = vunpack.c.h.b16 %v7162
      %v7507 = vunpack.c.l.b16 %v7163
      %v7508 = vunpack.c.l.b16 %v7164
      %v7509 = vunpack.c.h.b16 %v7164
      %v7510 = vunpack.c.l.b16 %v7165
      %v7511 = vunpack.c.h.b16 %v7165
      %v7512 = vunpack.c.l.b16 %v7166
      %v7513 = vunpack.c.h.b16 %v7166
      %v7514 = vunpack.c.l.b16 %v7167
      %v7515 = vunpack.c.l.b16 %v7168
      %v7516 = vunpack.c.h.b16 %v7168
      %v7517 = vunpack.c.l.b16 %v7169
      %v7518 = vunpack.c.h.b16 %v7169
      %v7519 = vunpack.c.l.b16 %v7170
      %v7520 = vunpack.c.h.b16 %v7170
      %v7521 = vunpack.c.l.b16 %v7171
      %v7522 = vunpack.c.l.b16 %v7172
      %v7523 = vunpack.c.h.b16 %v7172
      %v7524 = vunpack.c.l.b16 %v7173
      %v7525 = vunpack.c.h.b16 %v7173
      %v7526 = vunpack.c.l.b16 %v7174
      %v7527 = vunpack.c.h.b16 %v7174
      %v7528 = vunpack.c.l.b16 %v7175
      %v7529 = vunpack.c.l.b16 %v7176
      %v7530 = vunpack.c.h.b16 %v7176
      %v7531 = vunpack.c.l.b16 %v7177
      %v7532 = vunpack.c.h.b16 %v7177
      %v7533 = vunpack.c.l.b16 %v7178
      %v7534 = vunpack.c.h.b16 %v7178
      %v7535 = vunpack.c.l.b16 %v7179
      %v7536 = vunpack.c.l.b16 %v7180
      %v7537 = vunpack.c.h.b16 %v7180
      %v7538 = vunpack.c.l.b16 %v7181
      %v7539 = vunpack.c.h.b16 %v7181
      %v7540 = vunpack.c.l.b16 %v7182
      %v7541 = vunpack.c.h.b16 %v7182
      %v7542 = vunpack.c.l.b16 %v7183
      %v7543 = vunpack.c.l.b16 %v7184
      %v7544 = vunpack.c.h.b16 %v7184
      %v7545 = vunpack.c.l.b16 %v7185
      %v7546 = vunpack.c.h.b16 %v7185
      %v7547 = vunpack.c.l.b16 %v7186
      %v7548 = vunpack.c.h.b16 %v7186
      %v7549 = vunpack.c.l.b16 %v7187
      %v7550 = vunpack.c.l.b16 %v7188
      %v7551 = vunpack.c.h.b16 %v7188
      %v7552 = vunpack.c.l.b16 %v7189
      %v7553 = vunpack.c.h.b16 %v7189
      %v7554 = vunpack.c.l.b16 %v7190
      %v7555 = vunpack.c.h.b16 %v7190
      %v7556 = vunpack.c.l.b16 %v7191
      %v7557 = vunpack.c.l.b16 %v7192
      %v7558 = vunpack.c.h.b16 %v7192
      %v7559 = vunpack.c.l.b16 %v7193
      %v7560 = vunpack.c.h.b16 %v7193
      %v7561 = vunpack.c.l.b16 %v7194
      %v7562 = vunpack.c.h.b16 %v7194
      %v7563 = vunpack.c.l.b16 %v7195
      %v7564 = vunpack.c.l.b16 %v7196
      %v7565 = vunpack.c.h.b16 %v7196
      %v7566 = vunpack.c.l.b16 %v7197
      %v7567 = vunpack.c.h.b16 %v7197
      %v7568 = vunpack.c.l.b16 %v7198
      %v7569 = vunpack.c.h.b16 %v7198
      %v7570 = vunpack.c.l.b16 %v7199
      %v7571 = vunpack.c.l.b16 %v7200
      %v7572 = vunpack.c.h.b16 %v7200
      %v7573 = vunpack.c.l.b16 %v7201
      %v7574 = vunpack.c.h.b16 %v7201
      %v7575 = vunpack.c.l.b16 %v7202
      %v7576 = vunpack.c.h.b16 %v7202
      %v7577 = vunpack.c.l.b16 %v7203
      %v7578 = vunpack.c.l.b16 %v7204
      %v7579 = vunpack.c.h.b16 %v7204
      %v7580 = vunpack.c.l.b16 %v7205
      %v7581 = vunpack.c.h.b16 %v7205
      %v7582 = vunpack.c.l.b16 %v7206
      %v7583 = vunpack.c.h.b16 %v7206
      %v7584 = vunpack.c.l.b16 %v7207
      %v7585 = vunpack.c.l.b16 %v7208
      %v7586 = vunpack.c.h.b16 %v7208
      %v7587 = vunpack.c.l.b16 %v7209
      %v7588 = vunpack.c.h.b16 %v7209
      %v7589 = vunpack.c.l.b16 %v7210
      %v7590 = vunpack.c.h.b16 %v7210
      %v7591 = vunpack.c.l.b16 %v7211
      %v7592 = vunpack.c.l.b16 %v7212
      %v7593 = vunpack.c.h.b16 %v7212
      %v7594 = vunpack.c.l.b16 %v7213
      %v7595 = vunpack.c.h.b16 %v7213
      %v7596 = vunpack.c.l.b16 %v7214
      %v7597 = vunpack.c.h.b16 %v7214
      %v7598 = vunpack.c.l.b16 %v7215
      %v7599 = vunpack.c.l.b16 %v7216
      %v7600 = vunpack.c.h.b16 %v7216
      %v7601 = vunpack.c.l.b16 %v7217
      %v7602 = vunpack.c.h.b16 %v7217
      %v7603 = vunpack.c.l.b16 %v7218
      %v7604 = vunpack.c.h.b16 %v7218
      %v7605 = vunpack.c.l.b16 %v7219
      %v7606 = vunpack.c.l.b16 %v7220
      %v7607 = vunpack.c.h.b16 %v7220
      %v7608 = vunpack.c.l.b16 %v7221
      %v7609 = vunpack.c.h.b16 %v7221
      %v7610 = vunpack.c.l.b16 %v7222
      %v7611 = vunpack.c.h.b16 %v7222
      %v7612 = vunpack.c.l.b16 %v7223
      %v7613 = vunpack.c.l.b16 %v7224
      %v7614 = vunpack.c.h.b16 %v7224
      %v7615 = vunpack.c.l.b16 %v7225
      %v7616 = vunpack.c.h.b16 %v7225
      %v7617 = vunpack.c.l.b16 %v7226
      %v7618 = vunpack.c.h.b16 %v7226
      %v7619 = vunpack.c.l.b16 %v7227
      %v7620 = vunpack.c.l.b16 %v7228
      %v7621 = vunpack.c.h.b16 %v7228
      %v7622 = vunpack.c.l.b16 %v7229
      %v7623 = vunpack.c.h.b16 %v7229
      %v7624 = vunpack.c.l.b16 %v7230
      %v7625 = vunpack.c.h.b16 %v7230
      %v7626 = vunpack.c.l.b16 %v7231
      %v7627 = vunpack.c.l.b16 %v7232
      %v7628 = vunpack.c.h.b16 %v7232
      %v7629 = vunpack.c.l.b16 %v7233
      %v7630 = vunpack.c.h.b16 %v7233
      %v7631 = vunpack.c.l.b16 %v7234
      %v7632 = vunpack.c.h.b16 %v7234
      %v7633 = vunpack.c.l.b16 %v7235
      %v7634 = vunpack.c.l.b16 %v7236
      %v7635 = vunpack.c.h.b16 %v7236
      %v7636 = vunpack.c.l.b16 %v7237
      %v7637 = vunpack.c.h.b16 %v7237
      %v7638 = vunpack.c.l.b16 %v7238
      %v7639 = vunpack.c.h.b16 %v7238
      %v7640 = vunpack.c.l.b16 %v7239
      %v7641 = vunpack.c.l.b16 %v7240
      %v7642 = vunpack.c.h.b16 %v7240
      %v7643 = vunpack.c.l.b16 %v7241
      %v7644 = vunpack.c.h.b16 %v7241
      %v7645 = vunpack.c.l.b16 %v7242
      %v7646 = vunpack.c.h.b16 %v7242
      %v7647 = vunpack.c.l.b16 %v7243
      %v7648 = vunpack.c.l.b16 %v7244
      %v7649 = vunpack.c.h.b16 %v7244
      %v7650 = vunpack.c.l.b16 %v7245
      %v7651 = vunpack.c.h.b16 %v7245
      %v7652 = vunpack.c.l.b16 %v7246
      %v7653 = vunpack.c.h.b16 %v7246
      %v7654 = vunpack.c.l.b16 %v7247
      %v7655 = vunpack.c.l.b16 %v7248
      %v7656 = vunpack.c.h.b16 %v7248
      %v7657 = vunpack.c.l.b16 %v7249
      %v7658 = vunpack.c.h.b16 %v7249
      %v7659 = vunpack.c.l.b16 %v7250
      %v7660 = vunpack.c.h.b16 %v7250
      %v7661 = vunpack.c.l.b16 %v7251
      %v7662 = vunpack.c.l.b16 %v7252
      %v7663 = vunpack.c.h.b16 %v7252
      %v7664 = vunpack.c.l.b16 %v7253
      %v7665 = vunpack.c.h.b16 %v7253
      %v7666 = vunpack.c.l.b16 %v7254
      %v7667 = vunpack.c.h.b16 %v7254
      %v7668 = vunpack.c.l.b16 %v7255
      %v7669 = vunpack.c.l.b16 %v7256
      %v7670 = vunpack.c.h.b16 %v7256
      %v7671 = vunpack.c.l.b16 %v7257
      %v7672 = vunpack.c.h.b16 %v7257
      %v7673 = vunpack.c.l.b16 %v7258
      %v7674 = vunpack.c.h.b16 %v7258
      %v7675 = vunpack.c.l.b16 %v7259
      %v7676 = vunpack.c.l.b16 %v7260
      %v7677 = vunpack.c.h.b16 %v7260
      %v7678 = vunpack.c.l.b16 %v7261
      %v7679 = vunpack.c.h.b16 %v7261
      %v7680 = vunpack.c.l.b16 %v7262
      %v7681 = vunpack.c.h.b16 %v7262
      %v7682 = vunpack.c.l.b16 %v7263
      %v7683 = vunpack.c.l.b16 %v7264
      %v7684 = vunpack.c.h.b16 %v7264
      %v7685 = vunpack.c.l.b16 %v7265
      %v7686 = vunpack.c.h.b16 %v7265
      %v7687 = vunpack.c.l.b16 %v7266
      %v7688 = vunpack.c.h.b16 %v7266
      %v7689 = vunpack.c.l.b16 %v7267
      %v7690 = vunpack.c.l.b16 %v7268
      %v7691 = vunpack.c.h.b16 %v7268
      %v7692 = vunpack.c.l.b16 %v7269
      %v7693 = vunpack.c.h.b16 %v7269
      %v7694 = vunpack.c.l.b16 %v7270
      %v7695 = vunpack.c.h.b16 %v7270
      %v7696 = vunpack.c.l.b16 %v7271
      %v7697 = vpack.c.b16 %v7466, %v7459
      %v7698 = vpack.c.b16 %v7467, %v7460
      %v7699 = vpack.c.b16 %v7468, %v7461
      %v7700 = vpack.c.b16 %v7469, %v7462
      %v7701 = vpack.c.b16 %v7470, %v7463
      %v7702 = vpack.c.b16 %v7471, %v7464
      %v7703 = vpack.c.b16 %v7472, %v7465
      %v7704 = vpack.c.b16 %v7480, %v7473
      %v7705 = vpack.c.b16 %v7481, %v7474
      %v7706 = vpack.c.b16 %v7482, %v7475
      %v7707 = vpack.c.b16 %v7483, %v7476
      %v7708 = vpack.c.b16 %v7484, %v7477
      %v7709 = vpack.c.b16 %v7485, %v7478
      %v7710 = vpack.c.b16 %v7486, %v7479
      %v7711 = vpack.c.b16 %v7494, %v7487
      %v7712 = vpack.c.b16 %v7495, %v7488
      %v7713 = vpack.c.b16 %v7496, %v7489
      %v7714 = vpack.c.b16 %v7497, %v7490
      %v7715 = vpack.c.b16 %v7498, %v7491
      %v7716 = vpack.c.b16 %v7499, %v7492
      %v7717 = vpack.c.b16 %v7500, %v7493
      %v7718 = vpack.c.b16 %v7508, %v7501
      %v7719 = vpack.c.b16 %v7509, %v7502
      %v7720 = vpack.c.b16 %v7510, %v7503
      %v7721 = vpack.c.b16 %v7511, %v7504
      %v7722 = vpack.c.b16 %v7512, %v7505
      %v7723 = vpack.c.b16 %v7513, %v7506
      %v7724 = vpack.c.b16 %v7514, %v7507
      %v7725 = vpack.c.b16 %v7522, %v7515
      %v7726 = vpack.c.b16 %v7523, %v7516
      %v7727 = vpack.c.b16 %v7524, %v7517
      %v7728 = vpack.c.b16 %v7525, %v7518
      %v7729 = vpack.c.b16 %v7526, %v7519
      %v7730 = vpack.c.b16 %v7527, %v7520
      %v7731 = vpack.c.b16 %v7528, %v7521
      %v7732 = vpack.c.b16 %v7536, %v7529
      %v7733 = vpack.c.b16 %v7537, %v7530
      %v7734 = vpack.c.b16 %v7538, %v7531
      %v7735 = vpack.c.b16 %v7539, %v7532
      %v7736 = vpack.c.b16 %v7540, %v7533
      %v7737 = vpack.c.b16 %v7541, %v7534
      %v7738 = vpack.c.b16 %v7542, %v7535
      %v7739 = vpack.c.b16 %v7550, %v7543
      %v7740 = vpack.c.b16 %v7551, %v7544
      %v7741 = vpack.c.b16 %v7552, %v7545
      %v7742 = vpack.c.b16 %v7553, %v7546
      %v7743 = vpack.c.b16 %v7554, %v7547
      %v7744 = vpack.c.b16 %v7555, %v7548
      %v7745 = vpack.c.b16 %v7556, %v7549
      %v7746 = vpack.c.b16 %v7564, %v7557
      %v7747 = vpack.c.b16 %v7565, %v7558
      %v7748 = vpack.c.b16 %v7566, %v7559
      %v7749 = vpack.c.b16 %v7567, %v7560
      %v7750 = vpack.c.b16 %v7568, %v7561
      %v7751 = vpack.c.b16 %v7569, %v7562
      %v7752 = vpack.c.b16 %v7570, %v7563
      %v7753 = vpack.c.b16 %v7578, %v7571
      %v7754 = vpack.c.b16 %v7579, %v7572
      %v7755 = vpack.c.b16 %v7580, %v7573
      %v7756 = vpack.c.b16 %v7581, %v7574
      %v7757 = vpack.c.b16 %v7582, %v7575
      %v7758 = vpack.c.b16 %v7583, %v7576
      %v7759 = vpack.c.b16 %v7584, %v7577
      %v7760 = vpack.c.b16 %v7592, %v7585
      %v7761 = vpack.c.b16 %v7593, %v7586
      %v7762 = vpack.c.b16 %v7594, %v7587
      %v7763 = vpack.c.b16 %v7595, %v7588
      %v7764 = vpack.c.b16 %v7596, %v7589
      %v7765 = vpack.c.b16 %v7597, %v7590
      %v7766 = vpack.c.b16 %v7598, %v7591
      %v7767 = vpack.c.b16 %v7606, %v7599
      %v7768 = vpack.c.b16 %v7607, %v7600
      %v7769 = vpack.c.b16 %v7608, %v7601
      %v7770 = vpack.c.b16 %v7609, %v7602
      %v7771 = vpack.c.b16 %v7610, %v7603
      %v7772 = vpack.c.b16 %v7611, %v7604
      %v7773 = vpack.c.b16 %v7612, %v7605
      %v7774 = vpack.c.b16 %v7620, %v7613
      %v7775 = vpack.c.b16 %v7621, %v7614
      %v7776 = vpack.c.b16 %v7622, %v7615
      %v7777 = vpack.c.b16 %v7623, %v7616
      %v7778 = vpack.c.b16 %v7624, %v7617
      %v7779 = vpack.c.b16 %v7625, %v7618
      %v7780 = vpack.c.b16 %v7626, %v7619
      %v7781 = vpack.c.b16 %v7634, %v7627
      %v7782 = vpack.c.b16 %v7635, %v7628
      %v7783 = vpack.c.b16 %v7636, %v7629
      %v7784 = vpack.c.b16 %v7637, %v7630
      %v7785 = vpack.c.b16 %v7638, %v7631
      %v7786 = vpack.c.b16 %v7639, %v7632
      %v7787 = vpack.c.b16 %v7640, %v7633
      %v7788 = vpack.c.b16 %v7648, %v7641
      %v7789 = vpack.c.b16 %v7649, %v7642
      %v7790 = vpack.c.b16 %v7650, %v7643
      %v7791 = vpack.c.b16 %v7651, %v7644
      %v7792 = vpack.c.b16 %v7652, %v7645
      %v7793 = vpack.c.b16 %v7653, %v7646
      %v7794 = vpack.c.b16 %v7654, %v7647
      %v7795 = vpack.c.b16 %v7662, %v7655
      %v7796 = vpack.c.b16 %v7663, %v7656
      %v7797 = vpack.c.b16 %v7664, %v7657
      %v7798 = vpack.c.b16 %v7665, %v7658
      %v7799 = vpack.c.b16 %v7666, %v7659
      %v7800 = vpack.c.b16 %v7667, %v7660
      %v7801 = vpack.c.b16 %v7668, %v7661
      %v7802 = vpack.c.b16 %v7676, %v7669
      %v7803 = vpack.c.b16 %v7677, %v7670
      %v7804 = vpack.c.b16 %v7678, %v7671
      %v7805 = vpack.c.b16 %v7679, %v7672
      %v7806 = vpack.c.b16 %v7680, %v7673
      %v7807 = vpack.c.b16 %v7681, %v7674
      %v7808 = vpack.c.b16 %v7682, %v7675
      %v7809 = vpack.c.b16 %v7690, %v7683
      %v7810 = vpack.c.b16 %v7691, %v7684
      %v7811 = vpack.c.b16 %v7692, %v7685
      %v7812 = vpack.c.b16 %v7693, %v7686
      %v7813 = vpack.c.b16 %v7694, %v7687
      %v7814 = vpack.c.b16 %v7695, %v7688
      %v7815 = vpack.c.b16 %v7696, %v7689
      %vm7918 = vcmask 334848
      %v7920 = vsel %vm7918, %v7703, 0
      %v7923 = vsel %vm7918, %v7710, 0
      %v7926 = vsel %vm7918, %v7717, 0
      %v7929 = vsel %vm7918, %v7724, 0
      %v7932 = vsel %vm7918, %v7731, 0
      %v7935 = vsel %vm7918, %v7738, 0
      %v7938 = vsel %vm7918, %v7745, 0
      %v7941 = vsel %vm7918, %v7752, 0
      %v7944 = vsel %vm7918, %v7759, 0
      %v7947 = vsel %vm7918, %v7766, 0
      %v7950 = vsel %vm7918, %v7773, 0
      %v7953 = vsel %vm7918, %v7780, 0
      %v7956 = vsel %vm7918, %v7787, 0
      %v7959 = vsel %vm7918, %v7794, 0
      %v7962 = vsel %vm7918, %v7801, 0
      %v7965 = vsel %vm7918, %v7808, 0
      %v7968 = vsel %vm7918, %v7815, 0
      %vm7970 = vcmask 1044480
      %v7971 = vsel %vm4181, 4294967295, 65535
      %v7972 = vsel %vm7970, %v7971, 0
      %v7974 = vand.u32 %v7322, %v7972
      %7976 = vmatprep.subr.bf16.mxu0 0
      %7977 = vmatpush1.bf16.msra.mxu0 %v7272
      %7978 = vmatprep.subr.bf16.mxu0 0
      %7979 = vmatpush1.bf16.msra.mxu0 %v7273
      %7980 = vmatprep.subr.bf16.mxu0 0
      %7981 = vmatpush1.bf16.msra.mxu0 %v7274
      %7982 = vmatprep.subr.bf16.mxu0 0
      %7983 = vmatpush1.bf16.msra.mxu0 %v7275
      %7984 = vmatprep.subr.bf16.mxu0 0
      %7985 = vmatpush1.bf16.msra.mxu0 %v7276
      %7986 = vmatprep.subr.bf16.mxu0 0
      %7987 = vmatpush1.bf16.msra.mxu0 %v7277
      %7988 = vmatprep.subr.bf16.mxu0 0
      %7989 = vmatpush1.bf16.msra.mxu0 %v7278
      %7990 = vmatprep.subr.bf16.mxu0 0
      %7991 = vmatpush1.bf16.msra.mxu0 %v7279
      %7992 = vmatprep.subr.bf16.mxu0 0
      %7993 = vmatpush1.bf16.msra.mxu0 %v7280
      %7994 = vmatprep.subr.bf16.mxu0 0
      %7995 = vmatpush1.bf16.msra.mxu0 %v7281
      %7996 = vmatprep.subr.bf16.mxu0 0
      %7997 = vmatpush1.bf16.msra.mxu0 %v7282
      %7998 = vmatprep.subr.bf16.mxu0 0
      %7999 = vmatpush1.bf16.msra.mxu0 %v7283
      %8000 = vmatprep.subr.bf16.mxu0 0
      %8001 = vmatpush1.bf16.msra.mxu0 %v7284
      %8002 = vmatprep.subr.bf16.mxu0 0
      %8003 = vmatpush1.bf16.msra.mxu0 %v7285
      %8004 = vmatprep.subr.bf16.mxu0 0
      %8005 = vmatpush1.bf16.msra.mxu0 %v7286
      %8006 = vmatprep.subr.bf16.mxu0 0
      %8007 = vmatpush1.bf16.msra.mxu0 %v7287
      %8008 = vmatprep.mubr.bf16.mxu0 %v7698
      %8009 = vmatmul.mubr.bf16.gmra.mrb[0].mxu0 %v7697
      %v8010 = vpop.f32.mrb[0].mxu0
      %v8011 = vadd.f32 0.0, %v8010
      %v8012 = vpop.f32.mrb[0].mxu0
      %v8013 = vpop.f32.mrb[0].mxu0
      %v8014 = vadd.f32 0.0, %v8013
      %v8015 = vpop.f32.mrb[0].mxu0
      %8016 = vmatprep.mubr.bf16.mxu0 %v7705
      %8017 = vmatmul.mubr.bf16.gmra.mrb[0].mxu0 %v7704
      %v8018 = vpop.f32.mrb[0].mxu0
      %v8019 = vadd.f32 0.0, %v8018
      %v8020 = vpop.f32.mrb[0].mxu0
      %v8021 = vpop.f32.mrb[0].mxu0
      %v8022 = vadd.f32 0.0, %v8021
      %v8023 = vpop.f32.mrb[0].mxu0
      %8024 = vmatprep.mubr.bf16.mxu0 %v7712
      %8025 = vmatmul.mubr.bf16.gmra.mrb[0].mxu0 %v7711
      %v8026 = vpop.f32.mrb[0].mxu0
      %v8027 = vadd.f32 0.0, %v8026
      %v8028 = vpop.f32.mrb[0].mxu0
      %v8029 = vpop.f32.mrb[0].mxu0
      %v8030 = vadd.f32 0.0, %v8029
      %v8031 = vpop.f32.mrb[0].mxu0
      %8032 = vmatprep.mubr.bf16.mxu0 %v7719
      %8033 = vmatmul.mubr.bf16.gmra.mrb[0].mxu0 %v7718
      %v8034 = vpop.f32.mrb[0].mxu0
      %v8035 = vadd.f32 0.0, %v8034
      %v8036 = vpop.f32.mrb[0].mxu0
      %v8037 = vpop.f32.mrb[0].mxu0
      %v8038 = vadd.f32 0.0, %v8037
      %v8039 = vpop.f32.mrb[0].mxu0
      %8040 = vmatprep.mubr.bf16.mxu0 %v7726
      %8041 = vmatmul.mubr.bf16.gmra.mrb[0].mxu0 %v7725
      %v8042 = vpop.f32.mrb[0].mxu0
      %v8043 = vadd.f32 0.0, %v8042
      %v8044 = vpop.f32.mrb[0].mxu0
      %v8045 = vpop.f32.mrb[0].mxu0
      %v8046 = vadd.f32 0.0, %v8045
      %v8047 = vpop.f32.mrb[0].mxu0
      %8048 = vmatprep.mubr.bf16.mxu0 %v7733
      %8049 = vmatmul.mubr.bf16.gmra.mrb[0].mxu0 %v7732
      %v8050 = vpop.f32.mrb[0].mxu0
      %v8051 = vadd.f32 0.0, %v8050
      %v8052 = vpop.f32.mrb[0].mxu0
      %v8053 = vpop.f32.mrb[0].mxu0
      %v8054 = vadd.f32 0.0, %v8053
      %v8055 = vpop.f32.mrb[0].mxu0
      %8056 = vmatprep.mubr.bf16.mxu0 %v7740
      %8057 = vmatmul.mubr.bf16.gmra.mrb[0].mxu0 %v7739
      %v8058 = vpop.f32.mrb[0].mxu0
      %v8059 = vadd.f32 0.0, %v8058
      %v8060 = vpop.f32.mrb[0].mxu0
      %v8061 = vpop.f32.mrb[0].mxu0
      %v8062 = vadd.f32 0.0, %v8061
      %v8063 = vpop.f32.mrb[0].mxu0
      %8064 = vmatprep.mubr.bf16.mxu0 %v7747
      %8065 = vmatmul.mubr.bf16.gmra.mrb[0].mxu0 %v7746
      %v8066 = vpop.f32.mrb[0].mxu0
      %v8067 = vadd.f32 0.0, %v8066
      %v8068 = vpop.f32.mrb[0].mxu0
      %v8069 = vpop.f32.mrb[0].mxu0
      %v8070 = vadd.f32 0.0, %v8069
      %v8071 = vpop.f32.mrb[0].mxu0
      %8072 = vmatprep.mubr.bf16.mxu0 %v7754
      %8073 = vmatmul.mubr.bf16.gmra.mrb[0].mxu0 %v7753
      %v8074 = vpop.f32.mrb[0].mxu0
      %v8075 = vadd.f32 0.0, %v8074
      %v8076 = vpop.f32.mrb[0].mxu0
      %v8077 = vpop.f32.mrb[0].mxu0
      %v8078 = vadd.f32 0.0, %v8077
      %v8079 = vpop.f32.mrb[0].mxu0
      %8080 = vmatprep.mubr.bf16.mxu0 %v7761
      %8081 = vmatmul.mubr.bf16.gmra.mrb[0].mxu0 %v7760
      %v8082 = vpop.f32.mrb[0].mxu0
      %v8083 = vadd.f32 0.0, %v8082
      %v8084 = vpop.f32.mrb[0].mxu0
      %v8085 = vpop.f32.mrb[0].mxu0
      %v8086 = vadd.f32 0.0, %v8085
      %v8087 = vpop.f32.mrb[0].mxu0
      %8088 = vmatprep.mubr.bf16.mxu0 %v7768
      %8089 = vmatmul.mubr.bf16.gmra.mrb[0].mxu0 %v7767
      %v8090 = vpop.f32.mrb[0].mxu0
      %v8091 = vadd.f32 0.0, %v8090
      %v8092 = vpop.f32.mrb[0].mxu0
      %v8093 = vpop.f32.mrb[0].mxu0
      %v8094 = vadd.f32 0.0, %v8093
      %v8095 = vpop.f32.mrb[0].mxu0
      %8096 = vmatprep.mubr.bf16.mxu0 %v7775
      %8097 = vmatmul.mubr.bf16.gmra.mrb[0].mxu0 %v7774
      %v8098 = vpop.f32.mrb[0].mxu0
      %v8099 = vadd.f32 0.0, %v8098
      %v8100 = vpop.f32.mrb[0].mxu0
      %v8101 = vpop.f32.mrb[0].mxu0
      %v8102 = vadd.f32 0.0, %v8101
      %v8103 = vpop.f32.mrb[0].mxu0
      %8104 = vmatprep.mubr.bf16.mxu0 %v7782
      %8105 = vmatmul.mubr.bf16.gmra.mrb[0].mxu0 %v7781
      %v8106 = vpop.f32.mrb[0].mxu0
      %v8107 = vadd.f32 0.0, %v8106
      %v8108 = vpop.f32.mrb[0].mxu0
      %v8109 = vpop.f32.mrb[0].mxu0
      %v8110 = vadd.f32 0.0, %v8109
      %v8111 = vpop.f32.mrb[0].mxu0
      %8112 = vmatprep.mubr.bf16.mxu0 %v7789
      %8113 = vmatmul.mubr.bf16.gmra.mrb[0].mxu0 %v7788
      %v8114 = vpop.f32.mrb[0].mxu0
      %v8115 = vadd.f32 0.0, %v8114
      %v8116 = vpop.f32.mrb[0].mxu0
      %v8117 = vpop.f32.mrb[0].mxu0
      %v8118 = vadd.f32 0.0, %v8117
      %v8119 = vpop.f32.mrb[0].mxu0
      %8120 = vmatprep.mubr.bf16.mxu0 %v7796
      %8121 = vmatmul.mubr.bf16.gmra.mrb[0].mxu0 %v7795
      %v8122 = vpop.f32.mrb[0].mxu0
      %v8123 = vadd.f32 0.0, %v8122
      %v8124 = vpop.f32.mrb[0].mxu0
      %v8125 = vpop.f32.mrb[0].mxu0
      %v8126 = vadd.f32 0.0, %v8125
      %v8127 = vpop.f32.mrb[0].mxu0
      %8128 = vmatprep.mubr.bf16.mxu0 %v7803
      %8129 = vmatmul.mubr.bf16.gmra.mrb[0].mxu0 %v7802
      %v8130 = vpop.f32.mrb[0].mxu0
      %v8131 = vadd.f32 0.0, %v8130
      %v8132 = vpop.f32.mrb[0].mxu0
      %v8133 = vpop.f32.mrb[0].mxu0
      %v8134 = vadd.f32 0.0, %v8133
      %v8135 = vpop.f32.mrb[0].mxu0
      %8136 = vmatprep.mubr.bf16.mxu0 %v7810
      %8137 = vmatmul.mubr.bf16.gmra.mrb[0].mxu0 %v7809
      %v8138 = vpop.f32.mrb[0].mxu0
      %v8139 = vadd.f32 0.0, %v8138
      %v8140 = vpop.f32.mrb[0].mxu0
      %v8141 = vpop.f32.mrb[0].mxu0
      %v8142 = vpop.f32.mrb[0].mxu0
      %8143 = vdwg.mxu0
      %8144 = vmatprep.subr.bf16.mxu0 0
      %8145 = vmatpush1.bf16.msra.mxu0 %v7288
      %8146 = vmatprep.subr.bf16.mxu0 0
      %8147 = vmatpush1.bf16.msra.mxu0 %v7289
      %8148 = vmatprep.subr.bf16.mxu0 0
      %8149 = vmatpush1.bf16.msra.mxu0 %v7290
      %8150 = vmatprep.subr.bf16.mxu0 0
      %8151 = vmatpush1.bf16.msra.mxu0 %v7291
      %8152 = vmatprep.subr.bf16.mxu0 0
      %8153 = vmatpush1.bf16.msra.mxu0 %v7292
      %8154 = vmatprep.subr.bf16.mxu0 0
      %8155 = vmatpush1.bf16.msra.mxu0 %v7293
      %8156 = vmatprep.subr.bf16.mxu0 0
      %8157 = vmatpush1.bf16.msra.mxu0 %v7294
      %8158 = vmatprep.subr.bf16.mxu0 0
      %8159 = vmatpush1.bf16.msra.mxu0 %v7295
      %8160 = vmatprep.subr.bf16.mxu0 0
      %8161 = vmatpush1.bf16.msra.mxu0 %v7296
      %8162 = vmatprep.subr.bf16.mxu0 0
      %8163 = vmatpush1.bf16.msra.mxu0 %v7297
      %8164 = vmatprep.subr.bf16.mxu0 0
      %8165 = vmatpush1.bf16.msra.mxu0 %v7298
      %8166 = vmatprep.subr.bf16.mxu0 0
      %8167 = vmatpush1.bf16.msra.mxu0 %v7299
      %8168 = vmatprep.subr.bf16.mxu0 0
      %8169 = vmatpush1.bf16.msra.mxu0 %v7300
      %8170 = vmatprep.subr.bf16.mxu0 0
      %8171 = vmatpush1.bf16.msra.mxu0 %v7301
      %8172 = vmatprep.subr.bf16.mxu0 0
      %8173 = vmatpush1.bf16.msra.mxu0 %v7302
      %8174 = vmatprep.subr.bf16.mxu0 0
      %8175 = vmatpush1.bf16.msra.mxu0 %v7303
      %8176 = vmatprep.mubr.bf16.mxu0 %v7700
      %8177 = vmatmul.mubr.bf16.gmra.mrb[0].mxu0 %v7699
      %v8178 = vpop.f32.mrb[0].mxu0
      %v8179 = vadd.f32 %v8011, %v8178
      %v8180 = vpop.f32.mrb[0].mxu0
      %v8181 = vpop.f32.mrb[0].mxu0
      %v8182 = vadd.f32 %v8014, %v8181
      %v8183 = vpop.f32.mrb[0].mxu0
      %8184 = vmatprep.mubr.bf16.mxu0 %v7707
      %8185 = vmatmul.mubr.bf16.gmra.mrb[0].mxu0 %v7706
      %v8186 = vpop.f32.mrb[0].mxu0
      %v8187 = vadd.f32 %v8019, %v8186
      %v8188 = vpop.f32.mrb[0].mxu0
      %v8189 = vpop.f32.mrb[0].mxu0
      %v8190 = vadd.f32 %v8022, %v8189
      %v8191 = vpop.f32.mrb[0].mxu0
      %8192 = vmatprep.mubr.bf16.mxu0 %v7714
      %8193 = vmatmul.mubr.bf16.gmra.mrb[0].mxu0 %v7713
      %v8194 = vpop.f32.mrb[0].mxu0
      %v8195 = vadd.f32 %v8027, %v8194
      %v8196 = vpop.f32.mrb[0].mxu0
      %v8197 = vpop.f32.mrb[0].mxu0
      %v8198 = vadd.f32 %v8030, %v8197
      %v8199 = vpop.f32.mrb[0].mxu0
      %8200 = vmatprep.mubr.bf16.mxu0 %v7721
      %8201 = vmatmul.mubr.bf16.gmra.mrb[0].mxu0 %v7720
      %v8202 = vpop.f32.mrb[0].mxu0
      %v8203 = vadd.f32 %v8035, %v8202
      %v8204 = vpop.f32.mrb[0].mxu0
      %v8205 = vpop.f32.mrb[0].mxu0
      %v8206 = vadd.f32 %v8038, %v8205
      %v8207 = vpop.f32.mrb[0].mxu0
      %8208 = vmatprep.mubr.bf16.mxu0 %v7728
      %8209 = vmatmul.mubr.bf16.gmra.mrb[0].mxu0 %v7727
      %v8210 = vpop.f32.mrb[0].mxu0
      %v8211 = vadd.f32 %v8043, %v8210
      %v8212 = vpop.f32.mrb[0].mxu0
      %v8213 = vpop.f32.mrb[0].mxu0
      %v8214 = vadd.f32 %v8046, %v8213
      %v8215 = vpop.f32.mrb[0].mxu0
      %8216 = vmatprep.mubr.bf16.mxu0 %v7735
      %8217 = vmatmul.mubr.bf16.gmra.mrb[0].mxu0 %v7734
      %v8218 = vpop.f32.mrb[0].mxu0
      %v8219 = vadd.f32 %v8051, %v8218
      %v8220 = vpop.f32.mrb[0].mxu0
      %v8221 = vpop.f32.mrb[0].mxu0
      %v8222 = vadd.f32 %v8054, %v8221
      %v8223 = vpop.f32.mrb[0].mxu0
      %8224 = vmatprep.mubr.bf16.mxu0 %v7742
      %8225 = vmatmul.mubr.bf16.gmra.mrb[0].mxu0 %v7741
      %v8226 = vpop.f32.mrb[0].mxu0
      %v8227 = vadd.f32 %v8059, %v8226
      %v8228 = vpop.f32.mrb[0].mxu0
      %v8229 = vpop.f32.mrb[0].mxu0
      %v8230 = vadd.f32 %v8062, %v8229
      %v8231 = vpop.f32.mrb[0].mxu0
      %8232 = vmatprep.mubr.bf16.mxu0 %v7749
      %8233 = vmatmul.mubr.bf16.gmra.mrb[0].mxu0 %v7748
      %v8234 = vpop.f32.mrb[0].mxu0
      %v8235 = vadd.f32 %v8067, %v8234
      %v8236 = vpop.f32.mrb[0].mxu0
      %v8237 = vpop.f32.mrb[0].mxu0
      %v8238 = vadd.f32 %v8070, %v8237
      %v8239 = vpop.f32.mrb[0].mxu0
      %8240 = vmatprep.mubr.bf16.mxu0 %v7756
      %8241 = vmatmul.mubr.bf16.gmra.mrb[0].mxu0 %v7755
      %v8242 = vpop.f32.mrb[0].mxu0
      %v8243 = vadd.f32 %v8075, %v8242
      %v8244 = vpop.f32.mrb[0].mxu0
      %v8245 = vpop.f32.mrb[0].mxu0
      %v8246 = vadd.f32 %v8078, %v8245
      %v8247 = vpop.f32.mrb[0].mxu0
      %8248 = vmatprep.mubr.bf16.mxu0 %v7763
      %8249 = vmatmul.mubr.bf16.gmra.mrb[0].mxu0 %v7762
      %v8250 = vpop.f32.mrb[0].mxu0
      %v8251 = vadd.f32 %v8083, %v8250
      %v8252 = vpop.f32.mrb[0].mxu0
      %v8253 = vpop.f32.mrb[0].mxu0
      %v8254 = vadd.f32 %v8086, %v8253
      %v8255 = vpop.f32.mrb[0].mxu0
      %8256 = vmatprep.mubr.bf16.mxu0 %v7770
      %8257 = vmatmul.mubr.bf16.gmra.mrb[0].mxu0 %v7769
      %v8258 = vpop.f32.mrb[0].mxu0
      %v8259 = vadd.f32 %v8091, %v8258
      %v8260 = vpop.f32.mrb[0].mxu0
      %v8261 = vpop.f32.mrb[0].mxu0
      %v8262 = vadd.f32 %v8094, %v8261
      %v8263 = vpop.f32.mrb[0].mxu0
      %8264 = vmatprep.mubr.bf16.mxu0 %v7777
      %8265 = vmatmul.mubr.bf16.gmra.mrb[0].mxu0 %v7776
      %v8266 = vpop.f32.mrb[0].mxu0
      %v8267 = vadd.f32 %v8099, %v8266
      %v8268 = vpop.f32.mrb[0].mxu0
      %v8269 = vpop.f32.mrb[0].mxu0
      %v8270 = vadd.f32 %v8102, %v8269
      %v8271 = vpop.f32.mrb[0].mxu0
      %8272 = vmatprep.mubr.bf16.mxu0 %v7784
      %8273 = vmatmul.mubr.bf16.gmra.mrb[0].mxu0 %v7783
      %v8274 = vpop.f32.mrb[0].mxu0
      %v8275 = vadd.f32 %v8107, %v8274
      %v8276 = vpop.f32.mrb[0].mxu0
      %v8277 = vpop.f32.mrb[0].mxu0
      %v8278 = vadd.f32 %v8110, %v8277
      %v8279 = vpop.f32.mrb[0].mxu0
      %8280 = vmatprep.mubr.bf16.mxu0 %v7791
      %8281 = vmatmul.mubr.bf16.gmra.mrb[0].mxu0 %v7790
      %v8282 = vpop.f32.mrb[0].mxu0
      %v8283 = vadd.f32 %v8115, %v8282
      %v8284 = vpop.f32.mrb[0].mxu0
      %v8285 = vpop.f32.mrb[0].mxu0
      %v8286 = vadd.f32 %v8118, %v8285
      %v8287 = vpop.f32.mrb[0].mxu0
      %8288 = vmatprep.mubr.bf16.mxu0 %v7798
      %8289 = vmatmul.mubr.bf16.gmra.mrb[0].mxu0 %v7797
      %v8290 = vpop.f32.mrb[0].mxu0
      %v8291 = vadd.f32 %v8123, %v8290
      %v8292 = vpop.f32.mrb[0].mxu0
      %v8293 = vpop.f32.mrb[0].mxu0
      %v8294 = vadd.f32 %v8126, %v8293
      %v8295 = vpop.f32.mrb[0].mxu0
      %8296 = vmatprep.mubr.bf16.mxu0 %v7805
      %8297 = vmatmul.mubr.bf16.gmra.mrb[0].mxu0 %v7804
      %v8298 = vpop.f32.mrb[0].mxu0
      %v8299 = vadd.f32 %v8131, %v8298
      %v8300 = vpop.f32.mrb[0].mxu0
      %v8301 = vpop.f32.mrb[0].mxu0
      %v8302 = vadd.f32 %v8134, %v8301
      %v8303 = vpop.f32.mrb[0].mxu0
      %8304 = vmatprep.mubr.bf16.mxu0 %v7812
      %8305 = vmatmul.mubr.bf16.gmra.mrb[0].mxu0 %v7811
      %v8306 = vpop.f32.mrb[0].mxu0
      %v8307 = vadd.f32 %v8139, %v8306
      %v8308 = vpop.f32.mrb[0].mxu0
      %v8309 = vpop.f32.mrb[0].mxu0
      %v8310 = vpop.f32.mrb[0].mxu0
      %8311 = vdwg.mxu0
      %8312 = vmatprep.subr.bf16.mxu0 0
      %8313 = vmatpush1.bf16.msra.mxu0 %v7304
      %8314 = vmatprep.subr.bf16.mxu0 0
      %8315 = vmatpush1.bf16.msra.mxu0 %v7305
      %8316 = vmatprep.subr.bf16.mxu0 0
      %8317 = vmatpush1.bf16.msra.mxu0 %v7306
      %8318 = vmatprep.subr.bf16.mxu0 0
      %8319 = vmatpush1.bf16.msra.mxu0 %v7307
      %8320 = vmatprep.subr.bf16.mxu0 0
      %8321 = vmatpush1.bf16.msra.mxu0 %v7308
      %8322 = vmatprep.subr.bf16.mxu0 0
      %8323 = vmatpush1.bf16.msra.mxu0 %v7309
      %8324 = vmatprep.subr.bf16.mxu0 0
      %8325 = vmatpush1.bf16.msra.mxu0 %v7310
      %8326 = vmatprep.subr.bf16.mxu0 0
      %8327 = vmatpush1.bf16.msra.mxu0 %v7311
      %8328 = vmatprep.subr.bf16.mxu0 0
      %8329 = vmatpush1.bf16.msra.mxu0 %v7312
      %8330 = vmatprep.subr.bf16.mxu0 0
      %8331 = vmatpush1.bf16.msra.mxu0 %v7313
      %8332 = vmatprep.subr.bf16.mxu0 0
      %8333 = vmatpush1.bf16.msra.mxu0 %v7314
      %8334 = vmatprep.subr.bf16.mxu0 0
      %8335 = vmatpush1.bf16.msra.mxu0 %v7315
      %8336 = vmatprep.subr.bf16.mxu0 0
      %8337 = vmatpush1.bf16.msra.mxu0 %v7316
      %8338 = vmatprep.subr.bf16.mxu0 0
      %8339 = vmatpush1.bf16.msra.mxu0 %v7317
      %8340 = vmatprep.subr.bf16.mxu0 0
      %8341 = vmatpush1.bf16.msra.mxu0 %v7318
      %8342 = vmatprep.subr.bf16.mxu0 0
      %8343 = vmatpush1.bf16.msra.mxu0 %v7319
      %8344 = vmatprep.mubr.bf16.mxu0 %v7702
      %8345 = vmatmul.mubr.bf16.gmra.mrb[0].mxu0 %v7701
      %v8346 = vpop.f32.mrb[0].mxu0
      %v8347 = vadd.f32 %v8179, %v8346
      %v8348 = vpop.f32.mrb[0].mxu0
      %v8349 = vpop.f32.mrb[0].mxu0
      %v8350 = vadd.f32 %v8182, %v8349
      %v8351 = vpop.f32.mrb[0].mxu0
      %8352 = vmatprep.mubr.bf16.mxu0 %v7709
      %8353 = vmatmul.mubr.bf16.gmra.mrb[0].mxu0 %v7708
      %v8354 = vpop.f32.mrb[0].mxu0
      %v8355 = vadd.f32 %v8187, %v8354
      %v8356 = vpop.f32.mrb[0].mxu0
      %v8357 = vpop.f32.mrb[0].mxu0
      %v8358 = vadd.f32 %v8190, %v8357
      %v8359 = vpop.f32.mrb[0].mxu0
      %8360 = vmatprep.mubr.bf16.mxu0 %v7716
      %8361 = vmatmul.mubr.bf16.gmra.mrb[0].mxu0 %v7715
      %v8362 = vpop.f32.mrb[0].mxu0
      %v8363 = vadd.f32 %v8195, %v8362
      %v8364 = vpop.f32.mrb[0].mxu0
      %v8365 = vpop.f32.mrb[0].mxu0
      %v8366 = vadd.f32 %v8198, %v8365
      %v8367 = vpop.f32.mrb[0].mxu0
      %8368 = vmatprep.mubr.bf16.mxu0 %v7723
      %8369 = vmatmul.mubr.bf16.gmra.mrb[0].mxu0 %v7722
      %v8370 = vpop.f32.mrb[0].mxu0
      %v8371 = vadd.f32 %v8203, %v8370
      %v8372 = vpop.f32.mrb[0].mxu0
      %v8373 = vpop.f32.mrb[0].mxu0
      %v8374 = vadd.f32 %v8206, %v8373
      %v8375 = vpop.f32.mrb[0].mxu0
      %8376 = vmatprep.mubr.bf16.mxu0 %v7730
      %8377 = vmatmul.mubr.bf16.gmra.mrb[0].mxu0 %v7729
      %v8378 = vpop.f32.mrb[0].mxu0
      %v8379 = vadd.f32 %v8211, %v8378
      %v8380 = vpop.f32.mrb[0].mxu0
      %v8381 = vpop.f32.mrb[0].mxu0
      %v8382 = vadd.f32 %v8214, %v8381
      %v8383 = vpop.f32.mrb[0].mxu0
      %8384 = vmatprep.mubr.bf16.mxu0 %v7737
      %8385 = vmatmul.mubr.bf16.gmra.mrb[0].mxu0 %v7736
      %v8386 = vpop.f32.mrb[0].mxu0
      %v8387 = vadd.f32 %v8219, %v8386
      %v8388 = vpop.f32.mrb[0].mxu0
      %v8389 = vpop.f32.mrb[0].mxu0
      %v8390 = vadd.f32 %v8222, %v8389
      %v8391 = vpop.f32.mrb[0].mxu0
      %8392 = vmatprep.mubr.bf16.mxu0 %v7744
      %8393 = vmatmul.mubr.bf16.gmra.mrb[0].mxu0 %v7743
      %v8394 = vpop.f32.mrb[0].mxu0
      %v8395 = vadd.f32 %v8227, %v8394
      %v8396 = vpop.f32.mrb[0].mxu0
      %v8397 = vpop.f32.mrb[0].mxu0
      %v8398 = vadd.f32 %v8230, %v8397
      %v8399 = vpop.f32.mrb[0].mxu0
      %8400 = vmatprep.mubr.bf16.mxu0 %v7751
      %8401 = vmatmul.mubr.bf16.gmra.mrb[0].mxu0 %v7750
      %v8402 = vpop.f32.mrb[0].mxu0
      %v8403 = vadd.f32 %v8235, %v8402
      %v8404 = vpop.f32.mrb[0].mxu0
      %v8405 = vpop.f32.mrb[0].mxu0
      %v8406 = vadd.f32 %v8238, %v8405
      %v8407 = vpop.f32.mrb[0].mxu0
      %8408 = vmatprep.mubr.bf16.mxu0 %v7758
      %8409 = vmatmul.mubr.bf16.gmra.mrb[0].mxu0 %v7757
      %v8410 = vpop.f32.mrb[0].mxu0
      %v8411 = vadd.f32 %v8243, %v8410
      %v8412 = vpop.f32.mrb[0].mxu0
      %v8413 = vpop.f32.mrb[0].mxu0
      %v8414 = vadd.f32 %v8246, %v8413
      %v8415 = vpop.f32.mrb[0].mxu0
      %8416 = vmatprep.mubr.bf16.mxu0 %v7765
      %8417 = vmatmul.mubr.bf16.gmra.mrb[0].mxu0 %v7764
      %v8418 = vpop.f32.mrb[0].mxu0
      %v8419 = vadd.f32 %v8251, %v8418
      %v8420 = vpop.f32.mrb[0].mxu0
      %v8421 = vpop.f32.mrb[0].mxu0
      %v8422 = vadd.f32 %v8254, %v8421
      %v8423 = vpop.f32.mrb[0].mxu0
      %8424 = vmatprep.mubr.bf16.mxu0 %v7772
      %8425 = vmatmul.mubr.bf16.gmra.mrb[0].mxu0 %v7771
      %v8426 = vpop.f32.mrb[0].mxu0
      %v8427 = vadd.f32 %v8259, %v8426
      %v8428 = vpop.f32.mrb[0].mxu0
      %v8429 = vpop.f32.mrb[0].mxu0
      %v8430 = vadd.f32 %v8262, %v8429
      %v8431 = vpop.f32.mrb[0].mxu0
      %8432 = vmatprep.mubr.bf16.mxu0 %v7779
      %8433 = vmatmul.mubr.bf16.gmra.mrb[0].mxu0 %v7778
      %v8434 = vpop.f32.mrb[0].mxu0
      %v8435 = vadd.f32 %v8267, %v8434
      %v8436 = vpop.f32.mrb[0].mxu0
      %v8437 = vpop.f32.mrb[0].mxu0
      %v8438 = vadd.f32 %v8270, %v8437
      %v8439 = vpop.f32.mrb[0].mxu0
      %8440 = vmatprep.mubr.bf16.mxu0 %v7786
      %8441 = vmatmul.mubr.bf16.gmra.mrb[0].mxu0 %v7785
      %v8442 = vpop.f32.mrb[0].mxu0
      %v8443 = vadd.f32 %v8275, %v8442
      %v8444 = vpop.f32.mrb[0].mxu0
      %v8445 = vpop.f32.mrb[0].mxu0
      %v8446 = vadd.f32 %v8278, %v8445
      %v8447 = vpop.f32.mrb[0].mxu0
      %8448 = vmatprep.mubr.bf16.mxu0 %v7793
      %8449 = vmatmul.mubr.bf16.gmra.mrb[0].mxu0 %v7792
      %v8450 = vpop.f32.mrb[0].mxu0
      %v8451 = vadd.f32 %v8283, %v8450
      %v8452 = vpop.f32.mrb[0].mxu0
      %v8453 = vpop.f32.mrb[0].mxu0
      %v8454 = vadd.f32 %v8286, %v8453
      %v8455 = vpop.f32.mrb[0].mxu0
      %8456 = vmatprep.mubr.bf16.mxu0 %v7800
      %8457 = vmatmul.mubr.bf16.gmra.mrb[0].mxu0 %v7799
      %v8458 = vpop.f32.mrb[0].mxu0
      %v8459 = vadd.f32 %v8291, %v8458
      %v8460 = vpop.f32.mrb[0].mxu0
      %v8461 = vpop.f32.mrb[0].mxu0
      %v8462 = vadd.f32 %v8294, %v8461
      %v8463 = vpop.f32.mrb[0].mxu0
      %8464 = vmatprep.mubr.bf16.mxu0 %v7807
      %8465 = vmatmul.mubr.bf16.gmra.mrb[0].mxu0 %v7806
      %v8466 = vpop.f32.mrb[0].mxu0
      %v8467 = vadd.f32 %v8299, %v8466
      %v8468 = vpop.f32.mrb[0].mxu0
      %v8469 = vpop.f32.mrb[0].mxu0
      %v8470 = vadd.f32 %v8302, %v8469
      %v8471 = vpop.f32.mrb[0].mxu0
      %8472 = vmatprep.mubr.bf16.mxu0 %v7814
      %8473 = vmatmul.mubr.bf16.gmra.mrb[0].mxu0 %v7813
      %v8474 = vpop.f32.mrb[0].mxu0
      %v8475 = vadd.f32 %v8307, %v8474
      %v8476 = vpop.f32.mrb[0].mxu0
      %v8477 = vpop.f32.mrb[0].mxu0
      %v8478 = vpop.f32.mrb[0].mxu0
      %8479 = vdwg.mxu0
      %8480 = vmatprep.subr.bf16.mxu0 0
      %8481 = vmatpush1.bf16.msra.mxu0 %v7320
      %8482 = vmatprep.subr.bf16.mxu0 0
      %8483 = vmatpush1.bf16.msra.mxu0 %v7321
      %8484 = vmatprep.subr.bf16.mxu0 0
      %8485 = vmatpush1.bf16.msra.mxu0 %v7974
      %8486 = vmatprep.subr.bf16.mxu0 0
      %8487 = vmatpush1.bf16.msra.mxu0 0
      %8488 = vmatprep.subr.bf16.mxu0 0
      %8489 = vmatpush1.bf16.msra.mxu0 0
      %8490 = vmatprep.subr.bf16.mxu0 0
      %8491 = vmatpush1.bf16.msra.mxu0 0
      %8492 = vmatprep.subr.bf16.mxu0 0
      %8493 = vmatpush1.bf16.msra.mxu0 0
      %8494 = vmatprep.subr.bf16.mxu0 0
      %8495 = vmatpush1.bf16.msra.mxu0 0
      %8496 = vmatprep.subr.bf16.mxu0 0
      %8497 = vmatpush1.bf16.msra.mxu0 0
      %8498 = vmatprep.subr.bf16.mxu0 0
      %8499 = vmatpush1.bf16.msra.mxu0 0
      %8500 = vmatprep.subr.bf16.mxu0 0
      %8501 = vmatpush1.bf16.msra.mxu0 0
      %8502 = vmatprep.subr.bf16.mxu0 0
      %8503 = vmatpush1.bf16.msra.mxu0 0
      %8504 = vmatprep.subr.bf16.mxu0 0
      %8505 = vmatpush1.bf16.msra.mxu0 0
      %8506 = vmatprep.subr.bf16.mxu0 0
      %8507 = vmatpush1.bf16.msra.mxu0 0
      %8508 = vmatprep.subr.bf16.mxu0 0
      %8509 = vmatpush1.bf16.msra.mxu0 0
      %8510 = vmatprep.subr.bf16.mxu0 0
      %8511 = vmatpush1.bf16.msra.mxu0 0
      %8512 = vmatprep.mubr.bf16.mxu0 0
      %8513 = vmatmul.mubr.bf16.gmra.mrb[0].mxu0 %v7920
      %v8514 = vpop.f32.mrb[0].mxu0
      %v8515 = vadd.f32 %v8347, %v8514
      %v8516 = vpop.f32.mrb[0].mxu0
      %v8517 = vpop.f32.mrb[0].mxu0
      %v8518 = vadd.f32 %v8350, %v8517
      %v8519 = vpop.f32.mrb[0].mxu0
      %8520 = vmatprep.mubr.bf16.mxu0 0
      %8521 = vmatmul.mubr.bf16.gmra.mrb[0].mxu0 %v7923
      %v8522 = vpop.f32.mrb[0].mxu0
      %v8523 = vadd.f32 %v8355, %v8522
      %v8524 = vpop.f32.mrb[0].mxu0
      %v8525 = vpop.f32.mrb[0].mxu0
      %v8526 = vadd.f32 %v8358, %v8525
      %v8527 = vpop.f32.mrb[0].mxu0
      %8528 = vmatprep.mubr.bf16.mxu0 0
      %8529 = vmatmul.mubr.bf16.gmra.mrb[0].mxu0 %v7926
      %v8530 = vpop.f32.mrb[0].mxu0
      %v8531 = vadd.f32 %v8363, %v8530
      %v8532 = vpop.f32.mrb[0].mxu0
      %v8533 = vpop.f32.mrb[0].mxu0
      %v8534 = vadd.f32 %v8366, %v8533
      %v8535 = vpop.f32.mrb[0].mxu0
      %8536 = vmatprep.mubr.bf16.mxu0 0
      %8537 = vmatmul.mubr.bf16.gmra.mrb[0].mxu0 %v7929
      %v8538 = vpop.f32.mrb[0].mxu0
      %v8539 = vadd.f32 %v8371, %v8538
      %v8540 = vpop.f32.mrb[0].mxu0
      %v8541 = vpop.f32.mrb[0].mxu0
      %v8542 = vadd.f32 %v8374, %v8541
      %v8543 = vpop.f32.mrb[0].mxu0
      %8544 = vmatprep.mubr.bf16.mxu0 0
      %8545 = vmatmul.mubr.bf16.gmra.mrb[0].mxu0 %v7932
      %v8546 = vpop.f32.mrb[0].mxu0
      %v8547 = vadd.f32 %v8379, %v8546
      %v8548 = vpop.f32.mrb[0].mxu0
      %v8549 = vpop.f32.mrb[0].mxu0
      %v8550 = vadd.f32 %v8382, %v8549
      %v8551 = vpop.f32.mrb[0].mxu0
      %8552 = vmatprep.mubr.bf16.mxu0 0
      %8553 = vmatmul.mubr.bf16.gmra.mrb[0].mxu0 %v7935
      %v8554 = vpop.f32.mrb[0].mxu0
      %v8555 = vadd.f32 %v8387, %v8554
      %v8556 = vpop.f32.mrb[0].mxu0
      %v8557 = vpop.f32.mrb[0].mxu0
      %v8558 = vadd.f32 %v8390, %v8557
      %v8559 = vpop.f32.mrb[0].mxu0
      %8560 = vmatprep.mubr.bf16.mxu0 0
      %8561 = vmatmul.mubr.bf16.gmra.mrb[0].mxu0 %v7938
      %v8562 = vpop.f32.mrb[0].mxu0
      %v8563 = vadd.f32 %v8395, %v8562
      %v8564 = vpop.f32.mrb[0].mxu0
      %v8565 = vpop.f32.mrb[0].mxu0
      %v8566 = vadd.f32 %v8398, %v8565
      %v8567 = vpop.f32.mrb[0].mxu0
      %8568 = vmatprep.mubr.bf16.mxu0 0
      %8569 = vmatmul.mubr.bf16.gmra.mrb[0].mxu0 %v7941
      %v8570 = vpop.f32.mrb[0].mxu0
      %v8571 = vadd.f32 %v8403, %v8570
      %v8572 = vpop.f32.mrb[0].mxu0
      %v8573 = vpop.f32.mrb[0].mxu0
      %v8574 = vadd.f32 %v8406, %v8573
      %v8575 = vpop.f32.mrb[0].mxu0
      %8576 = vmatprep.mubr.bf16.mxu0 0
      %8577 = vmatmul.mubr.bf16.gmra.mrb[0].mxu0 %v7944
      %v8578 = vpop.f32.mrb[0].mxu0
      %v8579 = vadd.f32 %v8411, %v8578
      %v8580 = vpop.f32.mrb[0].mxu0
      %v8581 = vpop.f32.mrb[0].mxu0
      %v8582 = vadd.f32 %v8414, %v8581
      %v8583 = vpop.f32.mrb[0].mxu0
      %8584 = vmatprep.mubr.bf16.mxu0 0
      %8585 = vmatmul.mubr.bf16.gmra.mrb[0].mxu0 %v7947
      %v8586 = vpop.f32.mrb[0].mxu0
      %v8587 = vadd.f32 %v8419, %v8586
      %v8588 = vpop.f32.mrb[0].mxu0
      %v8589 = vpop.f32.mrb[0].mxu0
      %v8590 = vadd.f32 %v8422, %v8589
      %v8591 = vpop.f32.mrb[0].mxu0
      %8592 = vmatprep.mubr.bf16.mxu0 0
      %8593 = vmatmul.mubr.bf16.gmra.mrb[0].mxu0 %v7950
      %v8594 = vpop.f32.mrb[0].mxu0
      %v8595 = vadd.f32 %v8427, %v8594
      %v8596 = vpop.f32.mrb[0].mxu0
      %v8597 = vpop.f32.mrb[0].mxu0
      %v8598 = vadd.f32 %v8430, %v8597
      %v8599 = vpop.f32.mrb[0].mxu0
      %8600 = vmatprep.mubr.bf16.mxu0 0
      %8601 = vmatmul.mubr.bf16.gmra.mrb[0].mxu0 %v7953
      %v8602 = vpop.f32.mrb[0].mxu0
      %v8603 = vadd.f32 %v8435, %v8602
      %v8604 = vpop.f32.mrb[0].mxu0
      %v8605 = vpop.f32.mrb[0].mxu0
      %v8606 = vadd.f32 %v8438, %v8605
      %v8607 = vpop.f32.mrb[0].mxu0
      %8608 = vmatprep.mubr.bf16.mxu0 0
      %8609 = vmatmul.mubr.bf16.gmra.mrb[0].mxu0 %v7956
      %v8610 = vpop.f32.mrb[0].mxu0
      %v8611 = vadd.f32 %v8443, %v8610
      %v8612 = vpop.f32.mrb[0].mxu0
      %v8613 = vpop.f32.mrb[0].mxu0
      %v8614 = vadd.f32 %v8446, %v8613
      %v8615 = vpop.f32.mrb[0].mxu0
      %8616 = vmatprep.mubr.bf16.mxu0 0
      %8617 = vmatmul.mubr.bf16.gmra.mrb[0].mxu0 %v7959
      %v8618 = vpop.f32.mrb[0].mxu0
      %v8619 = vadd.f32 %v8451, %v8618
      %v8620 = vpop.f32.mrb[0].mxu0
      %v8621 = vpop.f32.mrb[0].mxu0
      %v8622 = vadd.f32 %v8454, %v8621
      %v8623 = vpop.f32.mrb[0].mxu0
      %8624 = vmatprep.mubr.bf16.mxu0 0
      %8625 = vmatmul.mubr.bf16.gmra.mrb[0].mxu0 %v7962
      %v8626 = vpop.f32.mrb[0].mxu0
      %v8627 = vadd.f32 %v8459, %v8626
      %v8628 = vpop.f32.mrb[0].mxu0
      %v8629 = vpop.f32.mrb[0].mxu0
      %v8630 = vadd.f32 %v8462, %v8629
      %v8631 = vpop.f32.mrb[0].mxu0
      %8632 = vmatprep.mubr.bf16.mxu0 0
      %8633 = vmatmul.mubr.bf16.gmra.mrb[0].mxu0 %v7965
      %v8634 = vpop.f32.mrb[0].mxu0
      %v8635 = vadd.f32 %v8467, %v8634
      %v8636 = vpop.f32.mrb[0].mxu0
      %v8637 = vpop.f32.mrb[0].mxu0
      %v8638 = vadd.f32 %v8470, %v8637
      %v8639 = vpop.f32.mrb[0].mxu0
      %8640 = vmatprep.mubr.bf16.mxu0 0
      %8641 = vmatmul.mubr.bf16.gmra.mrb[0].mxu0 %v7968
      %v8642 = vpop.f32.mrb[0].mxu0
      %v8643 = vadd.f32 %v8475, %v8642
      %v8644 = vpop.f32.mrb[0].mxu0
      %v8645 = vpop.f32.mrb[0].mxu0
      %v8646 = vpop.f32.mrb[0].mxu0
      %8647 = vdwg.mxu0
      %v8648 = vpack.c.bf16 %v8518, %v8515
      %v8649 = vpack.c.bf16 %v8526, %v8523
      %v8650 = vpack.c.bf16 %v8534, %v8531
      %v8651 = vpack.c.bf16 %v8542, %v8539
      %v8652 = vpack.c.bf16 %v8550, %v8547
      %v8653 = vpack.c.bf16 %v8558, %v8555
      %v8654 = vpack.c.bf16 %v8566, %v8563
      %v8655 = vpack.c.bf16 %v8574, %v8571
      %v8656 = vpack.c.bf16 %v8582, %v8579
      %v8657 = vpack.c.bf16 %v8590, %v8587
      %v8658 = vpack.c.bf16 %v8598, %v8595
      %v8659 = vpack.c.bf16 %v8606, %v8603
      %v8660 = vpack.c.bf16 %v8614, %v8611
      %v8661 = vpack.c.bf16 %v8622, %v8619
      %v8662 = vld [vmem:[%s4] sm:$0xf]
      %v8663 = vld [vmem:[%s4 + $0x4] sm:$0xf]
      %v8664 = vld [vmem:[%s4 + $0x8] sm:$0xf]
      %v8665 = vld [vmem:[%s4 + $0xc] sm:$0xf]
      %v8666 = vpack.c.bf16 %v8627, %v8627
      %s8667 = scalar_lea.vmem %s4, 16
      %v8668 = vld [vmem:[%s8667] sm:$0xf]
      %v8669 = vld [vmem:[%s8667 + $0x4] sm:$0xf]
      %v8670 = vld [vmem:[%s8667 + $0x8] sm:$0xf]
      %v8671 = vld [vmem:[%s8667 + $0xc] sm:$0xf]
      %vm8672 = vsmask.f32 7424
      %v8674 = vshrl.u32 %v8648, 16
      %v8676 = vshll.u32 %v8648, 16
      %v8678 = vrot.slane %v8676, 1
      %v8679 = vor.u32 %v8674, %v8678
      %v8681 = vshll.u32 %v8649, 16
      %v8683 = vrot.slane %v8681, 1
      %v8684 = vsel %vm8672, %v8679, %v8683
      %v8685 = vshrl.u32 %v8649, 16
      %v8687 = vor.u32 %v8685, %v8683
      %v8689 = vshll.u32 %v8650, 16
      %v8691 = vrot.slane %v8689, 1
      %v8692 = vsel %vm8672, %v8687, %v8691
      %v8693 = vshrl.u32 %v8650, 16
      %v8695 = vor.u32 %v8693, %v8691
      %v8697 = vshll.u32 %v8651, 16
      %v8699 = vrot.slane %v8697, 1
      %v8700 = vsel %vm8672, %v8695, %v8699
      %v8701 = vshrl.u32 %v8651, 16
      %v8703 = vor.u32 %v8701, %v8699
      %v8705 = vshll.u32 %v8652, 16
      %v8707 = vrot.slane %v8705, 1
      %v8708 = vsel %vm8672, %v8703, %v8707
      %v8709 = vshrl.u32 %v8652, 16
      %v8711 = vor.u32 %v8709, %v8707
      %v8713 = vshll.u32 %v8653, 16
      %v8715 = vrot.slane %v8713, 1
      %v8716 = vsel %vm8672, %v8711, %v8715
      %v8717 = vshrl.u32 %v8653, 16
      %v8719 = vor.u32 %v8717, %v8715
      %v8721 = vshll.u32 %v8654, 16
      %v8723 = vrot.slane %v8721, 1
      %v8724 = vsel %vm8672, %v8719, %v8723
      %v8725 = vshrl.u32 %v8654, 16
      %v8727 = vor.u32 %v8725, %v8723
      %v8729 = vshll.u32 %v8655, 16
      %v8731 = vrot.slane %v8729, 1
      %v8732 = vsel %vm8672, %v8727, %v8731
      %v8733 = vshrl.u32 %v8655, 16
      %v8735 = vor.u32 %v8733, %v8731
      %v8737 = vshll.u32 %v8656, 16
      %v8739 = vrot.slane %v8737, 1
      %v8740 = vsel %vm8672, %v8735, %v8739
      %v8741 = vshrl.u32 %v8656, 16
      %v8743 = vor.u32 %v8741, %v8739
      %v8745 = vshll.u32 %v8657, 16
      %v8747 = vrot.slane %v8745, 1
      %v8748 = vsel %vm8672, %v8743, %v8747
      %v8749 = vshrl.u32 %v8657, 16
      %v8751 = vor.u32 %v8749, %v8747
      %v8753 = vshll.u32 %v8658, 16
      %v8755 = vrot.slane %v8753, 1
      %v8756 = vsel %vm8672, %v8751, %v8755
      %v8757 = vshrl.u32 %v8658, 16
      %v8759 = vor.u32 %v8757, %v8755
      %v8761 = vshll.u32 %v8659, 16
      %v8763 = vrot.slane %v8761, 1
      %v8764 = vsel %vm8672, %v8759, %v8763
      %v8765 = vshrl.u32 %v8659, 16
      %v8767 = vor.u32 %v8765, %v8763
      %v8769 = vshll.u32 %v8660, 16
      %v8771 = vrot.slane %v8769, 1
      %v8772 = vsel %vm8672, %v8767, %v8771
      %v8773 = vshrl.u32 %v8660, 16
      %v8775 = vor.u32 %v8773, %v8771
      %v8777 = vshll.u32 %v8661, 16
      %v8779 = vrot.slane %v8777, 1
      %v8780 = vsel %vm8672, %v8775, %v8779
      %v8781 = vshrl.u32 %v8661, 16
      %v8783 = vor.u32 %v8781, %v8779
      %v8785 = vshll.u32 %v8666, 16
      %v8787 = vrot.slane %v8785, 1
      %v8788 = vsel %vm8672, %v8783, %v8787
      %v8793 = vunpack.c.l.b16 %v8668
      %v8794 = vunpack.c.l.b16 %v8669
      %v8795 = vunpack.c.l.b16 %v8670
      %v8796 = vunpack.c.l.b16 %v8671
      %v8797 = vpack.c.b16 %v8794, %v8793
      %v8798 = vpack.c.b16 %v8796, %v8795
      %vm8801 = vcmask 261120
      %v8803 = vsel %vm8801, %v8684, 0
      %v8806 = vsel %vm8801, %v8692, 0
      %v8809 = vsel %vm8801, %v8700, 0
      %v8812 = vsel %vm8801, %v8708, 0
      %v8815 = vsel %vm8801, %v8716, 0
      %v8818 = vsel %vm8801, %v8724, 0
      %v8821 = vsel %vm8801, %v8732, 0
      %v8824 = vsel %vm8801, %v8740, 0
      %v8827 = vsel %vm8801, %v8748, 0
      %v8830 = vsel %vm8801, %v8756, 0
      %v8833 = vsel %vm8801, %v8764, 0
      %v8836 = vsel %vm8801, %v8772, 0
      %v8839 = vsel %vm8801, %v8780, 0
      %v8842 = vsel %vm8801, %v8788, 0
      %8844 = vmatprep.subr.bf16.mxu0 0
      %8845 = vmatpush1.bf16.msra.mxu0 %v8797
      %8846 = vmatprep.subr.bf16.mxu0 0
      %8847 = vmatpush1.bf16.msra.mxu0 %v8798
      %8848 = vmatprep.subr.bf16.mxu0 0
      %8849 = vmatpush1.bf16.msra.mxu0 0
      %8850 = vmatprep.subr.bf16.mxu0 0
      %8851 = vmatpush1.bf16.msra.mxu0 0
      %8852 = vmatprep.subr.bf16.mxu0 0
      %8853 = vmatpush1.bf16.msra.mxu0 0
      %8854 = vmatprep.subr.bf16.mxu0 0
      %8855 = vmatpush1.bf16.msra.mxu0 0
      %8856 = vmatprep.subr.bf16.mxu0 0
      %8857 = vmatpush1.bf16.msra.mxu0 0
      %8858 = vmatprep.subr.bf16.mxu0 0
      %8859 = vmatpush1.bf16.msra.mxu0 0
      %8860 = vmatprep.subr.bf16.mxu0 0
      %8861 = vmatpush1.bf16.msra.mxu0 0
      %8862 = vmatprep.subr.bf16.mxu0 0
      %8863 = vmatpush1.bf16.msra.mxu0 0
      %8864 = vmatprep.subr.bf16.mxu0 0
      %8865 = vmatpush1.bf16.msra.mxu0 0
      %8866 = vmatprep.subr.bf16.mxu0 0
      %8867 = vmatpush1.bf16.msra.mxu0 0
      %8868 = vmatprep.subr.bf16.mxu0 0
      %8869 = vmatpush1.bf16.msra.mxu0 0
      %8870 = vmatprep.subr.bf16.mxu0 0
      %8871 = vmatpush1.bf16.msra.mxu0 0
      %8872 = vmatprep.subr.bf16.mxu0 0
      %8873 = vmatpush1.bf16.msra.mxu0 0
      %8874 = vmatprep.subr.bf16.mxu0 0
      %8875 = vmatpush1.bf16.msra.mxu0 0
      %8876 = vmatprep.mubr.bf16.mxu0 0
      %8877 = vmatmul.mubr.bf16.gmra.mrb[0].mxu0 %v8803
      %v8878 = vpop.f32.mrb[0].mxu0
      %v8879 = vadd.f32 0.0, %v8878
      %v8880 = vpop.f32.mrb[0].mxu0
      %v8881 = vpop.f32.mrb[0].mxu0
      %v8882 = vadd.f32 0.0, %v8881
      %v8883 = vpop.f32.mrb[0].mxu0
      %8884 = vmatprep.mubr.bf16.mxu0 0
      %8885 = vmatmul.mubr.bf16.gmra.mrb[0].mxu0 %v8806
      %v8886 = vpop.f32.mrb[0].mxu0
      %v8887 = vadd.f32 0.0, %v8886
      %v8888 = vpop.f32.mrb[0].mxu0
      %v8889 = vpop.f32.mrb[0].mxu0
      %v8890 = vadd.f32 0.0, %v8889
      %v8891 = vpop.f32.mrb[0].mxu0
      %8892 = vmatprep.mubr.bf16.mxu0 0
      %8893 = vmatmul.mubr.bf16.gmra.mrb[0].mxu0 %v8809
      %v8894 = vpop.f32.mrb[0].mxu0
      %v8895 = vadd.f32 0.0, %v8894
      %v8896 = vpop.f32.mrb[0].mxu0
      %v8897 = vpop.f32.mrb[0].mxu0
      %v8898 = vadd.f32 0.0, %v8897
      %v8899 = vpop.f32.mrb[0].mxu0
      %8900 = vmatprep.mubr.bf16.mxu0 0
      %8901 = vmatmul.mubr.bf16.gmra.mrb[0].mxu0 %v8812
      %v8902 = vpop.f32.mrb[0].mxu0
      %v8903 = vadd.f32 0.0, %v8902
      %v8904 = vpop.f32.mrb[0].mxu0
      %v8905 = vpop.f32.mrb[0].mxu0
      %v8906 = vadd.f32 0.0, %v8905
      %v8907 = vpop.f32.mrb[0].mxu0
      %8908 = vmatprep.mubr.bf16.mxu0 0
      %8909 = vmatmul.mubr.bf16.gmra.mrb[0].mxu0 %v8815
      %v8910 = vpop.f32.mrb[0].mxu0
      %v8911 = vadd.f32 0.0, %v8910
      %v8912 = vpop.f32.mrb[0].mxu0
      %v8913 = vpop.f32.mrb[0].mxu0
      %v8914 = vadd.f32 0.0, %v8913
      %v8915 = vpop.f32.mrb[0].mxu0
      %8916 = vmatprep.mubr.bf16.mxu0 0
      %8917 = vmatmul.mubr.bf16.gmra.mrb[0].mxu0 %v8818
      %v8918 = vpop.f32.mrb[0].mxu0
      %v8919 = vadd.f32 0.0, %v8918
      %v8920 = vpop.f32.mrb[0].mxu0
      %v8921 = vpop.f32.mrb[0].mxu0
      %v8922 = vadd.f32 0.0, %v8921
      %v8923 = vpop.f32.mrb[0].mxu0
      %8924 = vmatprep.mubr.bf16.mxu0 0
      %8925 = vmatmul.mubr.bf16.gmra.mrb[0].mxu0 %v8821
      %v8926 = vpop.f32.mrb[0].mxu0
      %v8927 = vadd.f32 0.0, %v8926
      %v8928 = vpop.f32.mrb[0].mxu0
      %v8929 = vpop.f32.mrb[0].mxu0
      %v8930 = vadd.f32 0.0, %v8929
      %v8931 = vpop.f32.mrb[0].mxu0
      %8932 = vmatprep.mubr.bf16.mxu0 0
      %8933 = vmatmul.mubr.bf16.gmra.mrb[0].mxu0 %v8824
      %v8934 = vpop.f32.mrb[0].mxu0
      %v8935 = vadd.f32 0.0, %v8934
      %v8936 = vpop.f32.mrb[0].mxu0
      %v8937 = vpop.f32.mrb[0].mxu0
      %v8938 = vadd.f32 0.0, %v8937
      %v8939 = vpop.f32.mrb[0].mxu0
      %8940 = vmatprep.mubr.bf16.mxu0 0
      %8941 = vmatmul.mubr.bf16.gmra.mrb[0].mxu0 %v8827
      %v8942 = vpop.f32.mrb[0].mxu0
      %v8943 = vadd.f32 0.0, %v8942
      %v8944 = vpop.f32.mrb[0].mxu0
      %v8945 = vpop.f32.mrb[0].mxu0
      %v8946 = vadd.f32 0.0, %v8945
      %v8947 = vpop.f32.mrb[0].mxu0
      %8948 = vmatprep.mubr.bf16.mxu0 0
      %8949 = vmatmul.mubr.bf16.gmra.mrb[0].mxu0 %v8830
      %v8950 = vpop.f32.mrb[0].mxu0
      %v8951 = vadd.f32 0.0, %v8950
      %v8952 = vpop.f32.mrb[0].mxu0
      %v8953 = vpop.f32.mrb[0].mxu0
      %v8954 = vadd.f32 0.0, %v8953
      %v8955 = vpop.f32.mrb[0].mxu0
      %8956 = vmatprep.mubr.bf16.mxu0 0
      %8957 = vmatmul.mubr.bf16.gmra.mrb[0].mxu0 %v8833
      %v8958 = vpop.f32.mrb[0].mxu0
      %v8959 = vadd.f32 0.0, %v8958
      %v8960 = vpop.f32.mrb[0].mxu0
      %v8961 = vpop.f32.mrb[0].mxu0
      %v8962 = vadd.f32 0.0, %v8961
      %v8963 = vpop.f32.mrb[0].mxu0
      %8964 = vmatprep.mubr.bf16.mxu0 0
      %8965 = vmatmul.mubr.bf16.gmra.mrb[0].mxu0 %v8836
      %v8966 = vpop.f32.mrb[0].mxu0
      %v8967 = vadd.f32 0.0, %v8966
      %v8968 = vpop.f32.mrb[0].mxu0
      %v8969 = vpop.f32.mrb[0].mxu0
      %v8970 = vadd.f32 0.0, %v8969
      %v8971 = vpop.f32.mrb[0].mxu0
      %8972 = vmatprep.mubr.bf16.mxu0 0
      %8973 = vmatmul.mubr.bf16.gmra.mrb[0].mxu0 %v8839
      %v8974 = vpop.f32.mrb[0].mxu0
      %v8975 = vadd.f32 0.0, %v8974
      %v8976 = vpop.f32.mrb[0].mxu0
      %v8977 = vpop.f32.mrb[0].mxu0
      %v8978 = vadd.f32 0.0, %v8977
      %v8979 = vpop.f32.mrb[0].mxu0
      %8980 = vmatprep.mubr.bf16.mxu0 0
      %8981 = vmatmul.mubr.bf16.gmra.mrb[0].mxu0 %v8842
      %v8982 = vpop.f32.mrb[0].mxu0
      %v8983 = vadd.f32 0.0, %v8982
      %v8984 = vpop.f32.mrb[0].mxu0
      %v8985 = vpop.f32.mrb[0].mxu0
      %v8986 = vadd.f32 0.0, %v8985
      %v8987 = vpop.f32.mrb[0].mxu0
      %8988 = vdwg.mxu0
      %v8993 = vunpack.c.l.b16 %v8662
      %v8994 = vunpack.c.l.b16 %v8663
      %v8995 = vunpack.c.l.b16 %v8664
      %v8996 = vunpack.c.l.b16 %v8665
      %v8997 = vpack.c.b16 %v8994, %v8993
      %v8998 = vpack.c.b16 %v8996, %v8995
      %v9001 = vsel %vm8801, %v8648, 0
      %v9003 = vsel %vm8801, %v8649, 0
      %v9005 = vsel %vm8801, %v8650, 0
      %v9007 = vsel %vm8801, %v8651, 0
      %v9009 = vsel %vm8801, %v8652, 0
      %v9011 = vsel %vm8801, %v8653, 0
      %v9013 = vsel %vm8801, %v8654, 0
      %v9015 = vsel %vm8801, %v8655, 0
      %v9017 = vsel %vm8801, %v8656, 0
      %v9019 = vsel %vm8801, %v8657, 0
      %v9021 = vsel %vm8801, %v8658, 0
      %v9023 = vsel %vm8801, %v8659, 0
      %v9025 = vsel %vm8801, %v8660, 0
      %v9027 = vsel %vm8801, %v8661, 0
      %9029 = vmatprep.subr.bf16.mxu0 0
      %9030 = vmatpush1.bf16.msra.mxu0 %v8997
      %9031 = vmatprep.subr.bf16.mxu0 0
      %9032 = vmatpush1.bf16.msra.mxu0 %v8998
      %9033 = vmatprep.subr.bf16.mxu0 0
      %9034 = vmatpush1.bf16.msra.mxu0 0
      %9035 = vmatprep.subr.bf16.mxu0 0
      %9036 = vmatpush1.bf16.msra.mxu0 0
      %9037 = vmatprep.subr.bf16.mxu0 0
      %9038 = vmatpush1.bf16.msra.mxu0 0
      %9039 = vmatprep.subr.bf16.mxu0 0
      %9040 = vmatpush1.bf16.msra.mxu0 0
      %9041 = vmatprep.subr.bf16.mxu0 0
      %9042 = vmatpush1.bf16.msra.mxu0 0
      %9043 = vmatprep.subr.bf16.mxu0 0
      %9044 = vmatpush1.bf16.msra.mxu0 0
      %9045 = vmatprep.subr.bf16.mxu0 0
      %9046 = vmatpush1.bf16.msra.mxu0 0
      %9047 = vmatprep.subr.bf16.mxu0 0
      %9048 = vmatpush1.bf16.msra.mxu0 0
      %9049 = vmatprep.subr.bf16.mxu0 0
      %9050 = vmatpush1.bf16.msra.mxu0 0
      %9051 = vmatprep.subr.bf16.mxu0 0
      %9052 = vmatpush1.bf16.msra.mxu0 0
      %9053 = vmatprep.subr.bf16.mxu0 0
      %9054 = vmatpush1.bf16.msra.mxu0 0
      %9055 = vmatprep.subr.bf16.mxu0 0
      %9056 = vmatpush1.bf16.msra.mxu0 0
      %9057 = vmatprep.subr.bf16.mxu0 0
      %9058 = vmatpush1.bf16.msra.mxu0 0
      %9059 = vmatprep.subr.bf16.mxu0 0
      %9060 = vmatpush1.bf16.msra.mxu0 0
      %9061 = vmatprep.mubr.bf16.mxu0 0
      %9062 = vmatmul.mubr.bf16.gmra.mrb[0].mxu0 %v9001
      %v9063 = vpop.f32.mrb[0].mxu0
      %v9064 = vadd.f32 %v8879, %v9063
      %v9065 = vpop.f32.mrb[0].mxu0
      %v9066 = vpop.f32.mrb[0].mxu0
      %v9067 = vadd.f32 %v8882, %v9066
      %v9068 = vpop.f32.mrb[0].mxu0
      %9069 = vmatprep.mubr.bf16.mxu0 0
      %9070 = vmatmul.mubr.bf16.gmra.mrb[0].mxu0 %v9003
      %v9071 = vpop.f32.mrb[0].mxu0
      %v9072 = vadd.f32 %v8887, %v9071
      %v9073 = vpop.f32.mrb[0].mxu0
      %v9074 = vpop.f32.mrb[0].mxu0
      %v9075 = vadd.f32 %v8890, %v9074
      %v9076 = vpop.f32.mrb[0].mxu0
      %9077 = vmatprep.mubr.bf16.mxu0 0
      %9078 = vmatmul.mubr.bf16.gmra.mrb[0].mxu0 %v9005
      %v9079 = vpop.f32.mrb[0].mxu0
      %v9080 = vadd.f32 %v8895, %v9079
      %v9081 = vpop.f32.mrb[0].mxu0
      %v9082 = vpop.f32.mrb[0].mxu0
      %v9083 = vadd.f32 %v8898, %v9082
      %v9084 = vpop.f32.mrb[0].mxu0
      %9085 = vmatprep.mubr.bf16.mxu0 0
      %9086 = vmatmul.mubr.bf16.gmra.mrb[0].mxu0 %v9007
      %v9087 = vpop.f32.mrb[0].mxu0
      %v9088 = vadd.f32 %v8903, %v9087
      %v9089 = vpop.f32.mrb[0].mxu0
      %v9090 = vpop.f32.mrb[0].mxu0
      %v9091 = vadd.f32 %v8906, %v9090
      %v9092 = vpop.f32.mrb[0].mxu0
      %9093 = vmatprep.mubr.bf16.mxu0 0
      %9094 = vmatmul.mubr.bf16.gmra.mrb[0].mxu0 %v9009
      %v9095 = vpop.f32.mrb[0].mxu0
      %v9096 = vadd.f32 %v8911, %v9095
      %v9097 = vpop.f32.mrb[0].mxu0
      %v9098 = vpop.f32.mrb[0].mxu0
      %v9099 = vadd.f32 %v8914, %v9098
      %v9100 = vpop.f32.mrb[0].mxu0
      %9101 = vmatprep.mubr.bf16.mxu0 0
      %9102 = vmatmul.mubr.bf16.gmra.mrb[0].mxu0 %v9011
      %v9103 = vpop.f32.mrb[0].mxu0
      %v9104 = vadd.f32 %v8919, %v9103
      %v9105 = vpop.f32.mrb[0].mxu0
      %v9106 = vpop.f32.mrb[0].mxu0
      %v9107 = vadd.f32 %v8922, %v9106
      %v9108 = vpop.f32.mrb[0].mxu0
      %9109 = vmatprep.mubr.bf16.mxu0 0
      %9110 = vmatmul.mubr.bf16.gmra.mrb[0].mxu0 %v9013
      %v9111 = vpop.f32.mrb[0].mxu0
      %v9112 = vadd.f32 %v8927, %v9111
      %v9113 = vpop.f32.mrb[0].mxu0
      %v9114 = vpop.f32.mrb[0].mxu0
      %v9115 = vadd.f32 %v8930, %v9114
      %v9116 = vpop.f32.mrb[0].mxu0
      %9117 = vmatprep.mubr.bf16.mxu0 0
      %9118 = vmatmul.mubr.bf16.gmra.mrb[0].mxu0 %v9015
      %v9119 = vpop.f32.mrb[0].mxu0
      %v9120 = vadd.f32 %v8935, %v9119
      %v9121 = vpop.f32.mrb[0].mxu0
      %v9122 = vpop.f32.mrb[0].mxu0
      %v9123 = vadd.f32 %v8938, %v9122
      %v9124 = vpop.f32.mrb[0].mxu0
      %9125 = vmatprep.mubr.bf16.mxu0 0
      %9126 = vmatmul.mubr.bf16.gmra.mrb[0].mxu0 %v9017
      %v9127 = vpop.f32.mrb[0].mxu0
      %v9128 = vadd.f32 %v8943, %v9127
      %v9129 = vpop.f32.mrb[0].mxu0
      %v9130 = vpop.f32.mrb[0].mxu0
      %v9131 = vadd.f32 %v8946, %v9130
      %v9132 = vpop.f32.mrb[0].mxu0
      %9133 = vmatprep.mubr.bf16.mxu0 0
      %9134 = vmatmul.mubr.bf16.gmra.mrb[0].mxu0 %v9019
      %v9135 = vpop.f32.mrb[0].mxu0
      %v9136 = vadd.f32 %v8951, %v9135
      %v9137 = vpop.f32.mrb[0].mxu0
      %v9138 = vpop.f32.mrb[0].mxu0
      %v9139 = vadd.f32 %v8954, %v9138
      %v9140 = vpop.f32.mrb[0].mxu0
      %9141 = vmatprep.mubr.bf16.mxu0 0
      %9142 = vmatmul.mubr.bf16.gmra.mrb[0].mxu0 %v9021
      %v9143 = vpop.f32.mrb[0].mxu0
      %v9144 = vadd.f32 %v8959, %v9143
      %v9145 = vpop.f32.mrb[0].mxu0
      %v9146 = vpop.f32.mrb[0].mxu0
      %v9147 = vadd.f32 %v8962, %v9146
      %v9148 = vpop.f32.mrb[0].mxu0
      %9149 = vmatprep.mubr.bf16.mxu0 0
      %9150 = vmatmul.mubr.bf16.gmra.mrb[0].mxu0 %v9023
      %v9151 = vpop.f32.mrb[0].mxu0
      %v9152 = vadd.f32 %v8967, %v9151
      %v9153 = vpop.f32.mrb[0].mxu0
      %v9154 = vpop.f32.mrb[0].mxu0
      %v9155 = vadd.f32 %v8970, %v9154
      %v9156 = vpop.f32.mrb[0].mxu0
      %9157 = vmatprep.mubr.bf16.mxu0 0
      %9158 = vmatmul.mubr.bf16.gmra.mrb[0].mxu0 %v9025
      %v9159 = vpop.f32.mrb[0].mxu0
      %v9160 = vadd.f32 %v8975, %v9159
      %v9161 = vpop.f32.mrb[0].mxu0
      %v9162 = vpop.f32.mrb[0].mxu0
      %v9163 = vadd.f32 %v8978, %v9162
      %v9164 = vpop.f32.mrb[0].mxu0
      %9165 = vmatprep.mubr.bf16.mxu0 0
      %9166 = vmatmul.mubr.bf16.gmra.mrb[0].mxu0 %v9027
      %v9167 = vpop.f32.mrb[0].mxu0
      %v9168 = vadd.f32 %v8983, %v9167
      %v9169 = vpop.f32.mrb[0].mxu0
      %v9170 = vpop.f32.mrb[0].mxu0
      %v9171 = vadd.f32 %v8986, %v9170
      %v9172 = vpop.f32.mrb[0].mxu0
      %9173 = vdwg.mxu0
      %s9174 = scalar_lea.vmem %s4, 32
      %v9175 = vld [vmem:[%s9174] sm:$0xf]
      %v9176 = vld [vmem:[%s9174 + $0x4] sm:$0xf]
      %v9177 = vld [vmem:[%s9174 + $0x8] sm:$0xf]
      %v9178 = vld [vmem:[%s9174 + $0xc] sm:$0xf]
      %vm9194 = vcmask 1046528
      %v9195 = vrot.slane %v8648, 1
      %v9196 = vrot.slane %v8649, 1
      %v9197 = vsel %vm9194, %v9195, %v9196
      %v9198 = vrot.slane %v8650, 1
      %v9199 = vsel %vm9194, %v9196, %v9198
      %v9200 = vrot.slane %v8651, 1
      %v9201 = vsel %vm9194, %v9198, %v9200
      %v9202 = vrot.slane %v8652, 1
      %v9203 = vsel %vm9194, %v9200, %v9202
      %v9204 = vrot.slane %v8653, 1
      %v9205 = vsel %vm9194, %v9202, %v9204
      %v9206 = vrot.slane %v8654, 1
      %v9207 = vsel %vm9194, %v9204, %v9206
      %v9208 = vrot.slane %v8655, 1
      %v9209 = vsel %vm9194, %v9206, %v9208
      %v9210 = vrot.slane %v8656, 1
      %v9211 = vsel %vm9194, %v9208, %v9210
      %v9212 = vrot.slane %v8657, 1
      %v9213 = vsel %vm9194, %v9210, %v9212
      %v9214 = vrot.slane %v8658, 1
      %v9215 = vsel %vm9194, %v9212, %v9214
      %v9216 = vrot.slane %v8659, 1
      %v9217 = vsel %vm9194, %v9214, %v9216
      %v9218 = vrot.slane %v8660, 1
      %v9219 = vsel %vm9194, %v9216, %v9218
      %v9220 = vrot.slane %v8661, 1
      %v9221 = vsel %vm9194, %v9218, %v9220
      %v9222 = vrot.slane %v8666, 1
      %v9223 = vsel %vm9194, %v9220, %v9222
      %v9228 = vunpack.c.l.b16 %v9175
      %v9229 = vunpack.c.l.b16 %v9176
      %v9230 = vunpack.c.l.b16 %v9177
      %v9231 = vunpack.c.l.b16 %v9178
      %v9232 = vpack.c.b16 %v9229, %v9228
      %v9233 = vpack.c.b16 %v9231, %v9230
      %v9237 = vsel %vm8801, %v9197, 0
      %v9240 = vsel %vm8801, %v9199, 0
      %v9243 = vsel %vm8801, %v9201, 0
      %v9246 = vsel %vm8801, %v9203, 0
      %v9249 = vsel %vm8801, %v9205, 0
      %v9252 = vsel %vm8801, %v9207, 0
      %v9255 = vsel %vm8801, %v9209, 0
      %v9258 = vsel %vm8801, %v9211, 0
      %v9261 = vsel %vm8801, %v9213, 0
      %v9264 = vsel %vm8801, %v9215, 0
      %v9267 = vsel %vm8801, %v9217, 0
      %v9270 = vsel %vm8801, %v9219, 0
      %v9273 = vsel %vm8801, %v9221, 0
      %v9276 = vsel %vm8801, %v9223, 0
      %9278 = vmatprep.subr.bf16.mxu0 0
      %9279 = vmatpush1.bf16.msra.mxu0 %v9232
      %9280 = vmatprep.subr.bf16.mxu0 0
      %9281 = vmatpush1.bf16.msra.mxu0 %v9233
      %9282 = vmatprep.subr.bf16.mxu0 0
      %9283 = vmatpush1.bf16.msra.mxu0 0
      %9284 = vmatprep.subr.bf16.mxu0 0
      %9285 = vmatpush1.bf16.msra.mxu0 0
      %9286 = vmatprep.subr.bf16.mxu0 0
      %9287 = vmatpush1.bf16.msra.mxu0 0
      %9288 = vmatprep.subr.bf16.mxu0 0
      %9289 = vmatpush1.bf16.msra.mxu0 0
      %9290 = vmatprep.subr.bf16.mxu0 0
      %9291 = vmatpush1.bf16.msra.mxu0 0
      %9292 = vmatprep.subr.bf16.mxu0 0
      %9293 = vmatpush1.bf16.msra.mxu0 0
      %9294 = vmatprep.subr.bf16.mxu0 0
      %9295 = vmatpush1.bf16.msra.mxu0 0
      %9296 = vmatprep.subr.bf16.mxu0 0
      %9297 = vmatpush1.bf16.msra.mxu0 0
      %9298 = vmatprep.subr.bf16.mxu0 0
      %9299 = vmatpush1.bf16.msra.mxu0 0
      %9300 = vmatprep.subr.bf16.mxu0 0
      %9301 = vmatpush1.bf16.msra.mxu0 0
      %9302 = vmatprep.subr.bf16.mxu0 0
      %9303 = vmatpush1.bf16.msra.mxu0 0
      %9304 = vmatprep.subr.bf16.mxu0 0
      %9305 = vmatpush1.bf16.msra.mxu0 0
      %9306 = vmatprep.subr.bf16.mxu0 0
      %9307 = vmatpush1.bf16.msra.mxu0 0
      %9308 = vmatprep.subr.bf16.mxu0 0
      %9309 = vmatpush1.bf16.msra.mxu0 0
      %9310 = vmatprep.mubr.bf16.mxu0 0
      %9311 = vmatmul.mubr.bf16.gmra.mrb[0].mxu0 %v9237
      %v9312 = vpop.f32.mrb[0].mxu0
      %v9313 = vadd.f32 0.0, %v9312
      %v9314 = vpop.f32.mrb[0].mxu0
      %v9315 = vpop.f32.mrb[0].mxu0
      %v9316 = vadd.f32 0.0, %v9315
      %v9317 = vpop.f32.mrb[0].mxu0
      %9318 = vmatprep.mubr.bf16.mxu0 0
      %9319 = vmatmul.mubr.bf16.gmra.mrb[0].mxu0 %v9240
      %v9320 = vpop.f32.mrb[0].mxu0
      %v9321 = vadd.f32 0.0, %v9320
      %v9322 = vpop.f32.mrb[0].mxu0
      %v9323 = vpop.f32.mrb[0].mxu0
      %v9324 = vadd.f32 0.0, %v9323
      %v9325 = vpop.f32.mrb[0].mxu0
      %9326 = vmatprep.mubr.bf16.mxu0 0
      %9327 = vmatmul.mubr.bf16.gmra.mrb[0].mxu0 %v9243
      %v9328 = vpop.f32.mrb[0].mxu0
      %v9329 = vadd.f32 0.0, %v9328
      %v9330 = vpop.f32.mrb[0].mxu0
      %v9331 = vpop.f32.mrb[0].mxu0
      %v9332 = vadd.f32 0.0, %v9331
      %v9333 = vpop.f32.mrb[0].mxu0
      %9334 = vmatprep.mubr.bf16.mxu0 0
      %9335 = vmatmul.mubr.bf16.gmra.mrb[0].mxu0 %v9246
      %v9336 = vpop.f32.mrb[0].mxu0
      %v9337 = vadd.f32 0.0, %v9336
      %v9338 = vpop.f32.mrb[0].mxu0
      %v9339 = vpop.f32.mrb[0].mxu0
      %v9340 = vadd.f32 0.0, %v9339
      %v9341 = vpop.f32.mrb[0].mxu0
      %9342 = vmatprep.mubr.bf16.mxu0 0
      %9343 = vmatmul.mubr.bf16.gmra.mrb[0].mxu0 %v9249
      %v9344 = vpop.f32.mrb[0].mxu0
      %v9345 = vadd.f32 0.0, %v9344
      %v9346 = vpop.f32.mrb[0].mxu0
      %v9347 = vpop.f32.mrb[0].mxu0
      %v9348 = vadd.f32 0.0, %v9347
      %v9349 = vpop.f32.mrb[0].mxu0
      %9350 = vmatprep.mubr.bf16.mxu0 0
      %9351 = vmatmul.mubr.bf16.gmra.mrb[0].mxu0 %v9252
      %v9352 = vpop.f32.mrb[0].mxu0
      %v9353 = vadd.f32 0.0, %v9352
      %v9354 = vpop.f32.mrb[0].mxu0
      %v9355 = vpop.f32.mrb[0].mxu0
      %v9356 = vadd.f32 0.0, %v9355
      %v9357 = vpop.f32.mrb[0].mxu0
      %9358 = vmatprep.mubr.bf16.mxu0 0
      %9359 = vmatmul.mubr.bf16.gmra.mrb[0].mxu0 %v9255
      %v9360 = vpop.f32.mrb[0].mxu0
      %v9361 = vadd.f32 0.0, %v9360
      %v9362 = vpop.f32.mrb[0].mxu0
      %v9363 = vpop.f32.mrb[0].mxu0
      %v9364 = vadd.f32 0.0, %v9363
      %v9365 = vpop.f32.mrb[0].mxu0
      %9366 = vmatprep.mubr.bf16.mxu0 0
      %9367 = vmatmul.mubr.bf16.gmra.mrb[0].mxu0 %v9258
      %v9368 = vpop.f32.mrb[0].mxu0
      %v9369 = vadd.f32 0.0, %v9368
      %v9370 = vpop.f32.mrb[0].mxu0
      %v9371 = vpop.f32.mrb[0].mxu0
      %v9372 = vadd.f32 0.0, %v9371
      %v9373 = vpop.f32.mrb[0].mxu0
      %9374 = vmatprep.mubr.bf16.mxu0 0
      %9375 = vmatmul.mubr.bf16.gmra.mrb[0].mxu0 %v9261
      %v9376 = vpop.f32.mrb[0].mxu0
      %v9377 = vadd.f32 0.0, %v9376
      %v9378 = vpop.f32.mrb[0].mxu0
      %v9379 = vpop.f32.mrb[0].mxu0
      %v9380 = vadd.f32 0.0, %v9379
      %v9381 = vpop.f32.mrb[0].mxu0
      %9382 = vmatprep.mubr.bf16.mxu0 0
      %9383 = vmatmul.mubr.bf16.gmra.mrb[0].mxu0 %v9264
      %v9384 = vpop.f32.mrb[0].mxu0
      %v9385 = vadd.f32 0.0, %v9384
      %v9386 = vpop.f32.mrb[0].mxu0
      %v9387 = vpop.f32.mrb[0].mxu0
      %v9388 = vadd.f32 0.0, %v9387
      %v9389 = vpop.f32.mrb[0].mxu0
      %9390 = vmatprep.mubr.bf16.mxu0 0
      %9391 = vmatmul.mubr.bf16.gmra.mrb[0].mxu0 %v9267
      %v9392 = vpop.f32.mrb[0].mxu0
      %v9393 = vadd.f32 0.0, %v9392
      %v9394 = vpop.f32.mrb[0].mxu0
      %v9395 = vpop.f32.mrb[0].mxu0
      %v9396 = vadd.f32 0.0, %v9395
      %v9397 = vpop.f32.mrb[0].mxu0
      %9398 = vmatprep.mubr.bf16.mxu0 0
      %9399 = vmatmul.mubr.bf16.gmra.mrb[0].mxu0 %v9270
      %v9400 = vpop.f32.mrb[0].mxu0
      %v9401 = vadd.f32 0.0, %v9400
      %v9402 = vpop.f32.mrb[0].mxu0
      %v9403 = vpop.f32.mrb[0].mxu0
      %v9404 = vadd.f32 0.0, %v9403
      %v9405 = vpop.f32.mrb[0].mxu0
      %9406 = vmatprep.mubr.bf16.mxu0 0
      %9407 = vmatmul.mubr.bf16.gmra.mrb[0].mxu0 %v9273
      %v9408 = vpop.f32.mrb[0].mxu0
      %v9409 = vadd.f32 0.0, %v9408
      %v9410 = vpop.f32.mrb[0].mxu0
      %v9411 = vpop.f32.mrb[0].mxu0
      %v9412 = vadd.f32 0.0, %v9411
      %v9413 = vpop.f32.mrb[0].mxu0
      %9414 = vmatprep.mubr.bf16.mxu0 0
      %9415 = vmatmul.mubr.bf16.gmra.mrb[0].mxu0 %v9276
      %v9416 = vpop.f32.mrb[0].mxu0
      %v9417 = vadd.f32 0.0, %v9416
      %v9418 = vpop.f32.mrb[0].mxu0
      %v9419 = vpop.f32.mrb[0].mxu0
      %v9420 = vadd.f32 0.0, %v9419
      %v9421 = vpop.f32.mrb[0].mxu0
      %9422 = vdwg.mxu0
      %v9423 = vadd.f32 %v9064, %v9313
      %v9424 = vadd.f32 %v9067, %v9316
      %v9425 = vadd.f32 %v9072, %v9321
      %v9426 = vadd.f32 %v9075, %v9324
      %v9427 = vadd.f32 %v9080, %v9329
      %v9428 = vadd.f32 %v9083, %v9332
      %v9429 = vadd.f32 %v9088, %v9337
      %v9430 = vadd.f32 %v9091, %v9340
      %v9431 = vadd.f32 %v9096, %v9345
      %v9432 = vadd.f32 %v9099, %v9348
      %v9433 = vadd.f32 %v9104, %v9353
      %v9434 = vadd.f32 %v9107, %v9356
      %v9435 = vadd.f32 %v9112, %v9361
      %v9436 = vadd.f32 %v9115, %v9364
      %v9437 = vadd.f32 %v9120, %v9369
      %v9438 = vadd.f32 %v9123, %v9372
      %v9439 = vadd.f32 %v9128, %v9377
      %v9440 = vadd.f32 %v9131, %v9380
      %v9441 = vadd.f32 %v9136, %v9385
      %v9442 = vadd.f32 %v9139, %v9388
      %v9443 = vadd.f32 %v9144, %v9393
      %v9444 = vadd.f32 %v9147, %v9396
      %v9445 = vadd.f32 %v9152, %v9401
      %v9446 = vadd.f32 %v9155, %v9404
      %v9447 = vadd.f32 %v9160, %v9409
      %v9448 = vadd.f32 %v9163, %v9412
      %v9449 = vadd.f32 %v9168, %v9417
      %v9450 = vadd.f32 %v9171, %v9420
      %v9451 = vpack.c.bf16 %v8630, %v8627
      %s9452 = scalar_lea.vmem %s4, 48
      %v9453 = vld [vmem:[%s9452] sm:$0xf]
      %v9454 = vld [vmem:[%s9452 + $0x4] sm:$0xf]
      %v9455 = vld [vmem:[%s9452 + $0x8] sm:$0xf]
      %v9456 = vld [vmem:[%s9452 + $0xc] sm:$0xf]
      %v9461 = vunpack.c.l.b16 %v9453
      %v9462 = vunpack.c.l.b16 %v9454
      %v9463 = vunpack.c.l.b16 %v9455
      %v9464 = vunpack.c.l.b16 %v9456
      %v9465 = vpack.c.b16 %v9462, %v9461
      %v9466 = vpack.c.b16 %v9464, %v9463
      %v9470 = vsel %vm8801, %v9451, 0
      %9472 = vmatprep.subr.bf16.mxu0 0
      %9473 = vmatpush1.bf16.msra.mxu0 %v9465
      %9474 = vmatprep.subr.bf16.mxu0 0
      %9475 = vmatpush1.bf16.msra.mxu0 %v9466
      %9476 = vmatprep.subr.bf16.mxu0 0
      %9477 = vmatpush1.bf16.msra.mxu0 0
      %9478 = vmatprep.subr.bf16.mxu0 0
      %9479 = vmatpush1.bf16.msra.mxu0 0
      %9480 = vmatprep.subr.bf16.mxu0 0
      %9481 = vmatpush1.bf16.msra.mxu0 0
      %9482 = vmatprep.subr.bf16.mxu0 0
      %9483 = vmatpush1.bf16.msra.mxu0 0
      %9484 = vmatprep.subr.bf16.mxu0 0
      %9485 = vmatpush1.bf16.msra.mxu0 0
      %9486 = vmatprep.subr.bf16.mxu0 0
      %9487 = vmatpush1.bf16.msra.mxu0 0
      %9488 = vmatprep.subr.bf16.mxu0 0
      %9489 = vmatpush1.bf16.msra.mxu0 0
      %9490 = vmatprep.subr.bf16.mxu0 0
      %9491 = vmatpush1.bf16.msra.mxu0 0
      %9492 = vmatprep.subr.bf16.mxu0 0
      %9493 = vmatpush1.bf16.msra.mxu0 0
      %9494 = vmatprep.subr.bf16.mxu0 0
      %9495 = vmatpush1.bf16.msra.mxu0 0
      %9496 = vmatprep.subr.bf16.mxu0 0
      %9497 = vmatpush1.bf16.msra.mxu0 0
      %9498 = vmatprep.subr.bf16.mxu0 0
      %9499 = vmatpush1.bf16.msra.mxu0 0
      %9500 = vmatprep.subr.bf16.mxu0 0
      %9501 = vmatpush1.bf16.msra.mxu0 0
      %9502 = vmatprep.subr.bf16.mxu0 0
      %9503 = vmatpush1.bf16.msra.mxu0 0
      %9504 = vmatprep.mubr.bf16.mxu0 0
      %9505 = vmatmul.mubr.bf16.gmra.mrb[0].mxu0 %v9003
      %v9506 = vpop.f32.mrb[0].mxu0
      %v9507 = vadd.f32 0.0, %v9506
      %v9508 = vpop.f32.mrb[0].mxu0
      %v9509 = vpop.f32.mrb[0].mxu0
      %v9510 = vadd.f32 0.0, %v9509
      %v9511 = vpop.f32.mrb[0].mxu0
      %9512 = vmatprep.mubr.bf16.mxu0 0
      %9513 = vmatmul.mubr.bf16.gmra.mrb[0].mxu0 %v9005
      %v9514 = vpop.f32.mrb[0].mxu0
      %v9515 = vadd.f32 0.0, %v9514
      %v9516 = vpop.f32.mrb[0].mxu0
      %v9517 = vpop.f32.mrb[0].mxu0
      %v9518 = vadd.f32 0.0, %v9517
      %v9519 = vpop.f32.mrb[0].mxu0
      %9520 = vmatprep.mubr.bf16.mxu0 0
      %9521 = vmatmul.mubr.bf16.gmra.mrb[0].mxu0 %v9007
      %v9522 = vpop.f32.mrb[0].mxu0
      %v9523 = vadd.f32 0.0, %v9522
      %v9524 = vpop.f32.mrb[0].mxu0
      %v9525 = vpop.f32.mrb[0].mxu0
      %v9526 = vadd.f32 0.0, %v9525
      %v9527 = vpop.f32.mrb[0].mxu0
      %9528 = vmatprep.mubr.bf16.mxu0 0
      %9529 = vmatmul.mubr.bf16.gmra.mrb[0].mxu0 %v9009
      %v9530 = vpop.f32.mrb[0].mxu0
      %v9531 = vadd.f32 0.0, %v9530
      %v9532 = vpop.f32.mrb[0].mxu0
      %v9533 = vpop.f32.mrb[0].mxu0
      %v9534 = vadd.f32 0.0, %v9533
      %v9535 = vpop.f32.mrb[0].mxu0
      %9536 = vmatprep.mubr.bf16.mxu0 0
      %9537 = vmatmul.mubr.bf16.gmra.mrb[0].mxu0 %v9011
      %v9538 = vpop.f32.mrb[0].mxu0
      %v9539 = vadd.f32 0.0, %v9538
      %v9540 = vpop.f32.mrb[0].mxu0
      %v9541 = vpop.f32.mrb[0].mxu0
      %v9542 = vadd.f32 0.0, %v9541
      %v9543 = vpop.f32.mrb[0].mxu0
      %9544 = vmatprep.mubr.bf16.mxu0 0
      %9545 = vmatmul.mubr.bf16.gmra.mrb[0].mxu0 %v9013
      %v9546 = vpop.f32.mrb[0].mxu0
      %v9547 = vadd.f32 0.0, %v9546
      %v9548 = vpop.f32.mrb[0].mxu0
      %v9549 = vpop.f32.mrb[0].mxu0
      %v9550 = vadd.f32 0.0, %v9549
      %v9551 = vpop.f32.mrb[0].mxu0
      %9552 = vmatprep.mubr.bf16.mxu0 0
      %9553 = vmatmul.mubr.bf16.gmra.mrb[0].mxu0 %v9015
      %v9554 = vpop.f32.mrb[0].mxu0
      %v9555 = vadd.f32 0.0, %v9554
      %v9556 = vpop.f32.mrb[0].mxu0
      %v9557 = vpop.f32.mrb[0].mxu0
      %v9558 = vadd.f32 0.0, %v9557
      %v9559 = vpop.f32.mrb[0].mxu0
      %9560 = vmatprep.mubr.bf16.mxu0 0
      %9561 = vmatmul.mubr.bf16.gmra.mrb[0].mxu0 %v9017
      %v9562 = vpop.f32.mrb[0].mxu0
      %v9563 = vadd.f32 0.0, %v9562
      %v9564 = vpop.f32.mrb[0].mxu0
      %v9565 = vpop.f32.mrb[0].mxu0
      %v9566 = vadd.f32 0.0, %v9565
      %v9567 = vpop.f32.mrb[0].mxu0
      %9568 = vmatprep.mubr.bf16.mxu0 0
      %9569 = vmatmul.mubr.bf16.gmra.mrb[0].mxu0 %v9019
      %v9570 = vpop.f32.mrb[0].mxu0
      %v9571 = vadd.f32 0.0, %v9570
      %v9572 = vpop.f32.mrb[0].mxu0
      %v9573 = vpop.f32.mrb[0].mxu0
      %v9574 = vadd.f32 0.0, %v9573
      %v9575 = vpop.f32.mrb[0].mxu0
      %9576 = vmatprep.mubr.bf16.mxu0 0
      %9577 = vmatmul.mubr.bf16.gmra.mrb[0].mxu0 %v9021
      %v9578 = vpop.f32.mrb[0].mxu0
      %v9579 = vadd.f32 0.0, %v9578
      %v9580 = vpop.f32.mrb[0].mxu0
      %v9581 = vpop.f32.mrb[0].mxu0
      %v9582 = vadd.f32 0.0, %v9581
      %v9583 = vpop.f32.mrb[0].mxu0
      %9584 = vmatprep.mubr.bf16.mxu0 0
      %9585 = vmatmul.mubr.bf16.gmra.mrb[0].mxu0 %v9023
      %v9586 = vpop.f32.mrb[0].mxu0
      %v9587 = vadd.f32 0.0, %v9586
      %v9588 = vpop.f32.mrb[0].mxu0
      %v9589 = vpop.f32.mrb[0].mxu0
      %v9590 = vadd.f32 0.0, %v9589
      %v9591 = vpop.f32.mrb[0].mxu0
      %9592 = vmatprep.mubr.bf16.mxu0 0
      %9593 = vmatmul.mubr.bf16.gmra.mrb[0].mxu0 %v9025
      %v9594 = vpop.f32.mrb[0].mxu0
      %v9595 = vadd.f32 0.0, %v9594
      %v9596 = vpop.f32.mrb[0].mxu0
      %v9597 = vpop.f32.mrb[0].mxu0
      %v9598 = vadd.f32 0.0, %v9597
      %v9599 = vpop.f32.mrb[0].mxu0
      %9600 = vmatprep.mubr.bf16.mxu0 0
      %9601 = vmatmul.mubr.bf16.gmra.mrb[0].mxu0 %v9027
      %v9602 = vpop.f32.mrb[0].mxu0
      %v9603 = vadd.f32 0.0, %v9602
      %v9604 = vpop.f32.mrb[0].mxu0
      %v9605 = vpop.f32.mrb[0].mxu0
      %v9606 = vadd.f32 0.0, %v9605
      %v9607 = vpop.f32.mrb[0].mxu0
      %9608 = vmatprep.mubr.bf16.mxu0 0
      %9609 = vmatmul.mubr.bf16.gmra.mrb[0].mxu0 %v9470
      %v9610 = vpop.f32.mrb[0].mxu0
      %v9611 = vadd.f32 0.0, %v9610
      %v9612 = vpop.f32.mrb[0].mxu0
      %v9613 = vpop.f32.mrb[0].mxu0
      %v9614 = vadd.f32 0.0, %v9613
      %v9615 = vpop.f32.mrb[0].mxu0
      %9616 = vdwg.mxu0
      %v9617 = vadd.f32 %v9423, %v9507
      %v9618 = vadd.f32 %v9424, %v9510
      %v9619 = vadd.f32 %v9425, %v9515
      %v9620 = vadd.f32 %v9426, %v9518
      %v9621 = vadd.f32 %v9427, %v9523
      %v9622 = vadd.f32 %v9428, %v9526
      %v9623 = vadd.f32 %v9429, %v9531
      %v9624 = vadd.f32 %v9430, %v9534
      %v9625 = vadd.f32 %v9431, %v9539
      %v9626 = vadd.f32 %v9432, %v9542
      %v9627 = vadd.f32 %v9433, %v9547
      %v9628 = vadd.f32 %v9434, %v9550
      %v9629 = vadd.f32 %v9435, %v9555
      %v9630 = vadd.f32 %v9436, %v9558
      %v9631 = vadd.f32 %v9437, %v9563
      %v9632 = vadd.f32 %v9438, %v9566
      %v9633 = vadd.f32 %v9439, %v9571
      %v9634 = vadd.f32 %v9440, %v9574
      %v9635 = vadd.f32 %v9441, %v9579
      %v9636 = vadd.f32 %v9442, %v9582
      %v9637 = vadd.f32 %v9443, %v9587
      %v9638 = vadd.f32 %v9444, %v9590
      %v9639 = vadd.f32 %v9445, %v9595
      %v9640 = vadd.f32 %v9446, %v9598
      %v9641 = vadd.f32 %v9447, %v9603
      %v9642 = vadd.f32 %v9448, %v9606
      %v9643 = vadd.f32 %v9449, %v9611
      %v9644 = vadd.f32 %v9450, %v9614
      %v9645 = vpack.c.bf16 %v8635, %v8635
      %s9646 = scalar_lea.vmem %s4, 64
      %v9647 = vld [vmem:[%s9646] sm:$0xf]
      %v9648 = vld [vmem:[%s9646 + $0x4] sm:$0xf]
      %v9649 = vld [vmem:[%s9646 + $0x8] sm:$0xf]
      %v9650 = vld [vmem:[%s9646 + $0xc] sm:$0xf]
      %v9651 = vshll.u32 %v9451, 16
      %v9653 = vrot.slane %v9651, 1
      %v9654 = vsel %vm8672, %v8783, %v9653
      %v9655 = vshrl.u32 %v9451, 16
      %v9657 = vor.u32 %v9655, %v9653
      %v9659 = vshll.u32 %v9645, 16
      %v9661 = vrot.slane %v9659, 1
      %v9662 = vsel %vm8672, %v9657, %v9661
      %v9667 = vunpack.c.l.b16 %v9647
      %v9668 = vunpack.c.l.b16 %v9648
      %v9669 = vunpack.c.l.b16 %v9649
      %v9670 = vunpack.c.l.b16 %v9650
      %v9671 = vpack.c.b16 %v9668, %v9667
      %v9672 = vpack.c.b16 %v9670, %v9669
      %v9676 = vsel %vm8801, %v9654, 0
      %v9679 = vsel %vm8801, %v9662, 0
      %9681 = vmatprep.subr.bf16.mxu0 0
      %9682 = vmatpush1.bf16.msra.mxu0 %v9671
      %9683 = vmatprep.subr.bf16.mxu0 0
      %9684 = vmatpush1.bf16.msra.mxu0 %v9672
      %9685 = vmatprep.subr.bf16.mxu0 0
      %9686 = vmatpush1.bf16.msra.mxu0 0
      %9687 = vmatprep.subr.bf16.mxu0 0
      %9688 = vmatpush1.bf16.msra.mxu0 0
      %9689 = vmatprep.subr.bf16.mxu0 0
      %9690 = vmatpush1.bf16.msra.mxu0 0
      %9691 = vmatprep.subr.bf16.mxu0 0
      %9692 = vmatpush1.bf16.msra.mxu0 0
      %9693 = vmatprep.subr.bf16.mxu0 0
      %9694 = vmatpush1.bf16.msra.mxu0 0
      %9695 = vmatprep.subr.bf16.mxu0 0
      %9696 = vmatpush1.bf16.msra.mxu0 0
      %9697 = vmatprep.subr.bf16.mxu0 0
      %9698 = vmatpush1.bf16.msra.mxu0 0
      %9699 = vmatprep.subr.bf16.mxu0 0
      %9700 = vmatpush1.bf16.msra.mxu0 0
      %9701 = vmatprep.subr.bf16.mxu0 0
      %9702 = vmatpush1.bf16.msra.mxu0 0
      %9703 = vmatprep.subr.bf16.mxu0 0
      %9704 = vmatpush1.bf16.msra.mxu0 0
      %9705 = vmatprep.subr.bf16.mxu0 0
      %9706 = vmatpush1.bf16.msra.mxu0 0
      %9707 = vmatprep.subr.bf16.mxu0 0
      %9708 = vmatpush1.bf16.msra.mxu0 0
      %9709 = vmatprep.subr.bf16.mxu0 0
      %9710 = vmatpush1.bf16.msra.mxu0 0
      %9711 = vmatprep.subr.bf16.mxu0 0
      %9712 = vmatpush1.bf16.msra.mxu0 0
      %9713 = vmatprep.mubr.bf16.mxu0 0
      %9714 = vmatmul.mubr.bf16.gmra.mrb[0].mxu0 %v8806
      %v9715 = vpop.f32.mrb[0].mxu0
      %v9716 = vadd.f32 0.0, %v9715
      %v9717 = vpop.f32.mrb[0].mxu0
      %v9718 = vpop.f32.mrb[0].mxu0
      %v9719 = vadd.f32 0.0, %v9718
      %v9720 = vpop.f32.mrb[0].mxu0
      %9721 = vmatprep.mubr.bf16.mxu0 0
      %9722 = vmatmul.mubr.bf16.gmra.mrb[0].mxu0 %v8809
      %v9723 = vpop.f32.mrb[0].mxu0
      %v9724 = vadd.f32 0.0, %v9723
      %v9725 = vpop.f32.mrb[0].mxu0
      %v9726 = vpop.f32.mrb[0].mxu0
      %v9727 = vadd.f32 0.0, %v9726
      %v9728 = vpop.f32.mrb[0].mxu0
      %9729 = vmatprep.mubr.bf16.mxu0 0
      %9730 = vmatmul.mubr.bf16.gmra.mrb[0].mxu0 %v8812
      %v9731 = vpop.f32.mrb[0].mxu0
      %v9732 = vadd.f32 0.0, %v9731
      %v9733 = vpop.f32.mrb[0].mxu0
      %v9734 = vpop.f32.mrb[0].mxu0
      %v9735 = vadd.f32 0.0, %v9734
      %v9736 = vpop.f32.mrb[0].mxu0
      %9737 = vmatprep.mubr.bf16.mxu0 0
      %9738 = vmatmul.mubr.bf16.gmra.mrb[0].mxu0 %v8815
      %v9739 = vpop.f32.mrb[0].mxu0
      %v9740 = vadd.f32 0.0, %v9739
      %v9741 = vpop.f32.mrb[0].mxu0
      %v9742 = vpop.f32.mrb[0].mxu0
      %v9743 = vadd.f32 0.0, %v9742
      %v9744 = vpop.f32.mrb[0].mxu0
      %9745 = vmatprep.mubr.bf16.mxu0 0
      %9746 = vmatmul.mubr.bf16.gmra.mrb[0].mxu0 %v8818
      %v9747 = vpop.f32.mrb[0].mxu0
      %v9748 = vadd.f32 0.0, %v9747
      %v9749 = vpop.f32.mrb[0].mxu0
      %v9750 = vpop.f32.mrb[0].mxu0
      %v9751 = vadd.f32 0.0, %v9750
      %v9752 = vpop.f32.mrb[0].mxu0
      %9753 = vmatprep.mubr.bf16.mxu0 0
      %9754 = vmatmul.mubr.bf16.gmra.mrb[0].mxu0 %v8821
      %v9755 = vpop.f32.mrb[0].mxu0
      %v9756 = vadd.f32 0.0, %v9755
      %v9757 = vpop.f32.mrb[0].mxu0
      %v9758 = vpop.f32.mrb[0].mxu0
      %v9759 = vadd.f32 0.0, %v9758
      %v9760 = vpop.f32.mrb[0].mxu0
      %9761 = vmatprep.mubr.bf16.mxu0 0
      %9762 = vmatmul.mubr.bf16.gmra.mrb[0].mxu0 %v8824
      %v9763 = vpop.f32.mrb[0].mxu0
      %v9764 = vadd.f32 0.0, %v9763
      %v9765 = vpop.f32.mrb[0].mxu0
      %v9766 = vpop.f32.mrb[0].mxu0
      %v9767 = vadd.f32 0.0, %v9766
      %v9768 = vpop.f32.mrb[0].mxu0
      %9769 = vmatprep.mubr.bf16.mxu0 0
      %9770 = vmatmul.mubr.bf16.gmra.mrb[0].mxu0 %v8827
      %v9771 = vpop.f32.mrb[0].mxu0
      %v9772 = vadd.f32 0.0, %v9771
      %v9773 = vpop.f32.mrb[0].mxu0
      %v9774 = vpop.f32.mrb[0].mxu0
      %v9775 = vadd.f32 0.0, %v9774
      %v9776 = vpop.f32.mrb[0].mxu0
      %9777 = vmatprep.mubr.bf16.mxu0 0
      %9778 = vmatmul.mubr.bf16.gmra.mrb[0].mxu0 %v8830
      %v9779 = vpop.f32.mrb[0].mxu0
      %v9780 = vadd.f32 0.0, %v9779
      %v9781 = vpop.f32.mrb[0].mxu0
      %v9782 = vpop.f32.mrb[0].mxu0
      %v9783 = vadd.f32 0.0, %v9782
      %v9784 = vpop.f32.mrb[0].mxu0
      %9785 = vmatprep.mubr.bf16.mxu0 0
      %9786 = vmatmul.mubr.bf16.gmra.mrb[0].mxu0 %v8833
      %v9787 = vpop.f32.mrb[0].mxu0
      %v9788 = vadd.f32 0.0, %v9787
      %v9789 = vpop.f32.mrb[0].mxu0
      %v9790 = vpop.f32.mrb[0].mxu0
      %v9791 = vadd.f32 0.0, %v9790
      %v9792 = vpop.f32.mrb[0].mxu0
      %9793 = vmatprep.mubr.bf16.mxu0 0
      %9794 = vmatmul.mubr.bf16.gmra.mrb[0].mxu0 %v8836
      %v9795 = vpop.f32.mrb[0].mxu0
      %v9796 = vadd.f32 0.0, %v9795
      %v9797 = vpop.f32.mrb[0].mxu0
      %v9798 = vpop.f32.mrb[0].mxu0
      %v9799 = vadd.f32 0.0, %v9798
      %v9800 = vpop.f32.mrb[0].mxu0
      %9801 = vmatprep.mubr.bf16.mxu0 0
      %9802 = vmatmul.mubr.bf16.gmra.mrb[0].mxu0 %v8839
      %v9803 = vpop.f32.mrb[0].mxu0
      %v9804 = vadd.f32 0.0, %v9803
      %v9805 = vpop.f32.mrb[0].mxu0
      %v9806 = vpop.f32.mrb[0].mxu0
      %v9807 = vadd.f32 0.0, %v9806
      %v9808 = vpop.f32.mrb[0].mxu0
      %9809 = vmatprep.mubr.bf16.mxu0 0
      %9810 = vmatmul.mubr.bf16.gmra.mrb[0].mxu0 %v9676
      %v9811 = vpop.f32.mrb[0].mxu0
      %v9812 = vadd.f32 0.0, %v9811
      %v9813 = vpop.f32.mrb[0].mxu0
      %v9814 = vpop.f32.mrb[0].mxu0
      %v9815 = vadd.f32 0.0, %v9814
      %v9816 = vpop.f32.mrb[0].mxu0
      %9817 = vmatprep.mubr.bf16.mxu0 0
      %9818 = vmatmul.mubr.bf16.gmra.mrb[0].mxu0 %v9679
      %v9819 = vpop.f32.mrb[0].mxu0
      %v9820 = vadd.f32 0.0, %v9819
      %v9821 = vpop.f32.mrb[0].mxu0
      %v9822 = vpop.f32.mrb[0].mxu0
      %v9823 = vadd.f32 0.0, %v9822
      %v9824 = vpop.f32.mrb[0].mxu0
      %9825 = vdwg.mxu0
      %v9826 = vadd.f32 %v9617, %v9716
      %v9827 = vadd.f32 %v9618, %v9719
      %v9828 = vadd.f32 %v9619, %v9724
      %v9829 = vadd.f32 %v9620, %v9727
      %v9830 = vadd.f32 %v9621, %v9732
      %v9831 = vadd.f32 %v9622, %v9735
      %v9832 = vadd.f32 %v9623, %v9740
      %v9833 = vadd.f32 %v9624, %v9743
      %v9834 = vadd.f32 %v9625, %v9748
      %v9835 = vadd.f32 %v9626, %v9751
      %v9836 = vadd.f32 %v9627, %v9756
      %v9837 = vadd.f32 %v9628, %v9759
      %v9838 = vadd.f32 %v9629, %v9764
      %v9839 = vadd.f32 %v9630, %v9767
      %v9840 = vadd.f32 %v9631, %v9772
      %v9841 = vadd.f32 %v9632, %v9775
      %v9842 = vadd.f32 %v9633, %v9780
      %v9843 = vadd.f32 %v9634, %v9783
      %v9844 = vadd.f32 %v9635, %v9788
      %v9845 = vadd.f32 %v9636, %v9791
      %v9846 = vadd.f32 %v9637, %v9796
      %v9847 = vadd.f32 %v9638, %v9799
      %v9848 = vadd.f32 %v9639, %v9804
      %v9849 = vadd.f32 %v9640, %v9807
      %v9850 = vadd.f32 %v9641, %v9812
      %v9851 = vadd.f32 %v9642, %v9815
      %v9852 = vadd.f32 %v9643, %v9820
      %v9853 = vadd.f32 %v9644, %v9823
      %s9854 = scalar_lea.vmem %s4, 80
      %v9855 = vld [vmem:[%s9854] sm:$0xf]
      %v9856 = vld [vmem:[%s9854 + $0x4] sm:$0xf]
      %v9857 = vld [vmem:[%s9854 + $0x8] sm:$0xf]
      %v9858 = vld [vmem:[%s9854 + $0xc] sm:$0xf]
      %v9861 = vrot.slane %v9451, 1
      %v9862 = vsel %vm9194, %v9220, %v9861
      %v9863 = vrot.slane %v9645, 1
      %v9864 = vsel %vm9194, %v9861, %v9863
      %v9869 = vunpack.c.l.b16 %v9855
      %v9870 = vunpack.c.l.b16 %v9856
      %v9871 = vunpack.c.l.b16 %v9857
      %v9872 = vunpack.c.l.b16 %v9858
      %v9873 = vpack.c.b16 %v9870, %v9869
      %v9874 = vpack.c.b16 %v9872, %v9871
      %v9878 = vsel %vm8801, %v9862, 0
      %v9881 = vsel %vm8801, %v9864, 0
      %9883 = vmatprep.subr.bf16.mxu0 0
      %9884 = vmatpush1.bf16.msra.mxu0 %v9873
      %9885 = vmatprep.subr.bf16.mxu0 0
      %9886 = vmatpush1.bf16.msra.mxu0 %v9874
      %9887 = vmatprep.subr.bf16.mxu0 0
      %9888 = vmatpush1.bf16.msra.mxu0 0
      %9889 = vmatprep.subr.bf16.mxu0 0
      %9890 = vmatpush1.bf16.msra.mxu0 0
      %9891 = vmatprep.subr.bf16.mxu0 0
      %9892 = vmatpush1.bf16.msra.mxu0 0
      %9893 = vmatprep.subr.bf16.mxu0 0
      %9894 = vmatpush1.bf16.msra.mxu0 0
      %9895 = vmatprep.subr.bf16.mxu0 0
      %9896 = vmatpush1.bf16.msra.mxu0 0
      %9897 = vmatprep.subr.bf16.mxu0 0
      %9898 = vmatpush1.bf16.msra.mxu0 0
      %9899 = vmatprep.subr.bf16.mxu0 0
      %9900 = vmatpush1.bf16.msra.mxu0 0
      %9901 = vmatprep.subr.bf16.mxu0 0
      %9902 = vmatpush1.bf16.msra.mxu0 0
      %9903 = vmatprep.subr.bf16.mxu0 0
      %9904 = vmatpush1.bf16.msra.mxu0 0
      %9905 = vmatprep.subr.bf16.mxu0 0
      %9906 = vmatpush1.bf16.msra.mxu0 0
      %9907 = vmatprep.subr.bf16.mxu0 0
      %9908 = vmatpush1.bf16.msra.mxu0 0
      %9909 = vmatprep.subr.bf16.mxu0 0
      %9910 = vmatpush1.bf16.msra.mxu0 0
      %9911 = vmatprep.subr.bf16.mxu0 0
      %9912 = vmatpush1.bf16.msra.mxu0 0
      %9913 = vmatprep.subr.bf16.mxu0 0
      %9914 = vmatpush1.bf16.msra.mxu0 0
      %9915 = vmatprep.mubr.bf16.mxu0 0
      %9916 = vmatmul.mubr.bf16.gmra.mrb[0].mxu0 %v9240
      %v9917 = vpop.f32.mrb[0].mxu0
      %v9918 = vadd.f32 0.0, %v9917
      %v9919 = vpop.f32.mrb[0].mxu0
      %v9920 = vpop.f32.mrb[0].mxu0
      %v9921 = vadd.f32 0.0, %v9920
      %v9922 = vpop.f32.mrb[0].mxu0
      %9923 = vmatprep.mubr.bf16.mxu0 0
      %9924 = vmatmul.mubr.bf16.gmra.mrb[0].mxu0 %v9243
      %v9925 = vpop.f32.mrb[0].mxu0
      %v9926 = vadd.f32 0.0, %v9925
      %v9927 = vpop.f32.mrb[0].mxu0
      %v9928 = vpop.f32.mrb[0].mxu0
      %v9929 = vadd.f32 0.0, %v9928
      %v9930 = vpop.f32.mrb[0].mxu0
      %9931 = vmatprep.mubr.bf16.mxu0 0
      %9932 = vmatmul.mubr.bf16.gmra.mrb[0].mxu0 %v9246
      %v9933 = vpop.f32.mrb[0].mxu0
      %v9934 = vadd.f32 0.0, %v9933
      %v9935 = vpop.f32.mrb[0].mxu0
      %v9936 = vpop.f32.mrb[0].mxu0
      %v9937 = vadd.f32 0.0, %v9936
      %v9938 = vpop.f32.mrb[0].mxu0
      %9939 = vmatprep.mubr.bf16.mxu0 0
      %9940 = vmatmul.mubr.bf16.gmra.mrb[0].mxu0 %v9249
      %v9941 = vpop.f32.mrb[0].mxu0
      %v9942 = vadd.f32 0.0, %v9941
      %v9943 = vpop.f32.mrb[0].mxu0
      %v9944 = vpop.f32.mrb[0].mxu0
      %v9945 = vadd.f32 0.0, %v9944
      %v9946 = vpop.f32.mrb[0].mxu0
      %9947 = vmatprep.mubr.bf16.mxu0 0
      %9948 = vmatmul.mubr.bf16.gmra.mrb[0].mxu0 %v9252
      %v9949 = vpop.f32.mrb[0].mxu0
      %v9950 = vadd.f32 0.0, %v9949
      %v9951 = vpop.f32.mrb[0].mxu0
      %v9952 = vpop.f32.mrb[0].mxu0
      %v9953 = vadd.f32 0.0, %v9952
      %v9954 = vpop.f32.mrb[0].mxu0
      %9955 = vmatprep.mubr.bf16.mxu0 0
      %9956 = vmatmul.mubr.bf16.gmra.mrb[0].mxu0 %v9255
      %v9957 = vpop.f32.mrb[0].mxu0
      %v9958 = vadd.f32 0.0, %v9957
      %v9959 = vpop.f32.mrb[0].mxu0
      %v9960 = vpop.f32.mrb[0].mxu0
      %v9961 = vadd.f32 0.0, %v9960
      %v9962 = vpop.f32.mrb[0].mxu0
      %9963 = vmatprep.mubr.bf16.mxu0 0
      %9964 = vmatmul.mubr.bf16.gmra.mrb[0].mxu0 %v9258
      %v9965 = vpop.f32.mrb[0].mxu0
      %v9966 = vadd.f32 0.0, %v9965
      %v9967 = vpop.f32.mrb[0].mxu0
      %v9968 = vpop.f32.mrb[0].mxu0
      %v9969 = vadd.f32 0.0, %v9968
      %v9970 = vpop.f32.mrb[0].mxu0
      %9971 = vmatprep.mubr.bf16.mxu0 0
      %9972 = vmatmul.mubr.bf16.gmra.mrb[0].mxu0 %v9261
      %v9973 = vpop.f32.mrb[0].mxu0
      %v9974 = vadd.f32 0.0, %v9973
      %v9975 = vpop.f32.mrb[0].mxu0
      %v9976 = vpop.f32.mrb[0].mxu0
      %v9977 = vadd.f32 0.0, %v9976
      %v9978 = vpop.f32.mrb[0].mxu0
      %9979 = vmatprep.mubr.bf16.mxu0 0
      %9980 = vmatmul.mubr.bf16.gmra.mrb[0].mxu0 %v9264
      %v9981 = vpop.f32.mrb[0].mxu0
      %v9982 = vadd.f32 0.0, %v9981
      %v9983 = vpop.f32.mrb[0].mxu0
      %v9984 = vpop.f32.mrb[0].mxu0
      %v9985 = vadd.f32 0.0, %v9984
      %v9986 = vpop.f32.mrb[0].mxu0
      %9987 = vmatprep.mubr.bf16.mxu0 0
      %9988 = vmatmul.mubr.bf16.gmra.mrb[0].mxu0 %v9267
      %v9989 = vpop.f32.mrb[0].mxu0
      %v9990 = vadd.f32 0.0, %v9989
      %v9991 = vpop.f32.mrb[0].mxu0
      %v9992 = vpop.f32.mrb[0].mxu0
      %v9993 = vadd.f32 0.0, %v9992
      %v9994 = vpop.f32.mrb[0].mxu0
      %9995 = vmatprep.mubr.bf16.mxu0 0
      %9996 = vmatmul.mubr.bf16.gmra.mrb[0].mxu0 %v9270
      %v9997 = vpop.f32.mrb[0].mxu0
      %v9998 = vadd.f32 0.0, %v9997
      %v9999 = vpop.f32.mrb[0].mxu0
      %v10000 = vpop.f32.mrb[0].mxu0
      %v10001 = vadd.f32 0.0, %v10000
      %v10002 = vpop.f32.mrb[0].mxu0
      %10003 = vmatprep.mubr.bf16.mxu0 0
      %10004 = vmatmul.mubr.bf16.gmra.mrb[0].mxu0 %v9273
      %v10005 = vpop.f32.mrb[0].mxu0
      %v10006 = vadd.f32 0.0, %v10005
      %v10007 = vpop.f32.mrb[0].mxu0
      %v10008 = vpop.f32.mrb[0].mxu0
      %v10009 = vadd.f32 0.0, %v10008
      %v10010 = vpop.f32.mrb[0].mxu0
      %10011 = vmatprep.mubr.bf16.mxu0 0
      %10012 = vmatmul.mubr.bf16.gmra.mrb[0].mxu0 %v9878
      %v10013 = vpop.f32.mrb[0].mxu0
      %v10014 = vadd.f32 0.0, %v10013
      %v10015 = vpop.f32.mrb[0].mxu0
      %v10016 = vpop.f32.mrb[0].mxu0
      %v10017 = vadd.f32 0.0, %v10016
      %v10018 = vpop.f32.mrb[0].mxu0
      %10019 = vmatprep.mubr.bf16.mxu0 0
      %10020 = vmatmul.mubr.bf16.gmra.mrb[0].mxu0 %v9881
      %v10021 = vpop.f32.mrb[0].mxu0
      %v10022 = vadd.f32 0.0, %v10021
      %v10023 = vpop.f32.mrb[0].mxu0
      %v10024 = vpop.f32.mrb[0].mxu0
      %v10025 = vadd.f32 0.0, %v10024
      %v10026 = vpop.f32.mrb[0].mxu0
      %10027 = vdwg.mxu0
      %v10028 = vadd.f32 %v9826, %v9918
      %v10029 = vadd.f32 %v9827, %v9921
      %v10030 = vadd.f32 %v9828, %v9926
      %v10031 = vadd.f32 %v9829, %v9929
      %v10032 = vadd.f32 %v9830, %v9934
      %v10033 = vadd.f32 %v9831, %v9937
      %v10034 = vadd.f32 %v9832, %v9942
      %v10035 = vadd.f32 %v9833, %v9945
      %v10036 = vadd.f32 %v9834, %v9950
      %v10037 = vadd.f32 %v9835, %v9953
      %v10038 = vadd.f32 %v9836, %v9958
      %v10039 = vadd.f32 %v9837, %v9961
      %v10040 = vadd.f32 %v9838, %v9966
      %v10041 = vadd.f32 %v9839, %v9969
      %v10042 = vadd.f32 %v9840, %v9974
      %v10043 = vadd.f32 %v9841, %v9977
      %v10044 = vadd.f32 %v9842, %v9982
      %v10045 = vadd.f32 %v9843, %v9985
      %v10046 = vadd.f32 %v9844, %v9990
      %v10047 = vadd.f32 %v9845, %v9993
      %v10048 = vadd.f32 %v9846, %v9998
      %v10049 = vadd.f32 %v9847, %v10001
      %v10050 = vadd.f32 %v9848, %v10006
      %v10051 = vadd.f32 %v9849, %v10009
      %v10052 = vadd.f32 %v9850, %v10014
      %v10053 = vadd.f32 %v9851, %v10017
      %v10054 = vadd.f32 %v9852, %v10022
      %v10055 = vadd.f32 %v9853, %v10025
      %v10056 = vpack.c.bf16 %v8638, %v8635
      %s10057 = scalar_lea.vmem %s4, 96
      %v10058 = vld [vmem:[%s10057] sm:$0xf]
      %v10059 = vld [vmem:[%s10057 + $0x4] sm:$0xf]
      %v10060 = vld [vmem:[%s10057 + $0x8] sm:$0xf]
      %v10061 = vld [vmem:[%s10057 + $0xc] sm:$0xf]
      %v10066 = vunpack.c.l.b16 %v10058
      %v10067 = vunpack.c.l.b16 %v10059
      %v10068 = vunpack.c.l.b16 %v10060
      %v10069 = vunpack.c.l.b16 %v10061
      %v10070 = vpack.c.b16 %v10067, %v10066
      %v10071 = vpack.c.b16 %v10069, %v10068
      %v10075 = vsel %vm8801, %v10056, 0
      %10077 = vmatprep.subr.bf16.mxu0 0
      %10078 = vmatpush1.bf16.msra.mxu0 %v10070
      %10079 = vmatprep.subr.bf16.mxu0 0
      %10080 = vmatpush1.bf16.msra.mxu0 %v10071
      %10081 = vmatprep.subr.bf16.mxu0 0
      %10082 = vmatpush1.bf16.msra.mxu0 0
      %10083 = vmatprep.subr.bf16.mxu0 0
      %10084 = vmatpush1.bf16.msra.mxu0 0
      %10085 = vmatprep.subr.bf16.mxu0 0
      %10086 = vmatpush1.bf16.msra.mxu0 0
      %10087 = vmatprep.subr.bf16.mxu0 0
      %10088 = vmatpush1.bf16.msra.mxu0 0
      %10089 = vmatprep.subr.bf16.mxu0 0
      %10090 = vmatpush1.bf16.msra.mxu0 0
      %10091 = vmatprep.subr.bf16.mxu0 0
      %10092 = vmatpush1.bf16.msra.mxu0 0
      %10093 = vmatprep.subr.bf16.mxu0 0
      %10094 = vmatpush1.bf16.msra.mxu0 0
      %10095 = vmatprep.subr.bf16.mxu0 0
      %10096 = vmatpush1.bf16.msra.mxu0 0
      %10097 = vmatprep.subr.bf16.mxu0 0
      %10098 = vmatpush1.bf16.msra.mxu0 0
      %10099 = vmatprep.subr.bf16.mxu0 0
      %10100 = vmatpush1.bf16.msra.mxu0 0
      %10101 = vmatprep.subr.bf16.mxu0 0
      %10102 = vmatpush1.bf16.msra.mxu0 0
      %10103 = vmatprep.subr.bf16.mxu0 0
      %10104 = vmatpush1.bf16.msra.mxu0 0
      %10105 = vmatprep.subr.bf16.mxu0 0
      %10106 = vmatpush1.bf16.msra.mxu0 0
      %10107 = vmatprep.subr.bf16.mxu0 0
      %10108 = vmatpush1.bf16.msra.mxu0 0
      %10109 = vmatprep.mubr.bf16.mxu0 0
      %10110 = vmatmul.mubr.bf16.gmra.mrb[0].mxu0 %v9005
      %v10111 = vpop.f32.mrb[0].mxu0
      %v10112 = vadd.f32 0.0, %v10111
      %v10113 = vpop.f32.mrb[0].mxu0
      %v10114 = vpop.f32.mrb[0].mxu0
      %v10115 = vadd.f32 0.0, %v10114
      %v10116 = vpop.f32.mrb[0].mxu0
      %10117 = vmatprep.mubr.bf16.mxu0 0
      %10118 = vmatmul.mubr.bf16.gmra.mrb[0].mxu0 %v9007
      %v10119 = vpop.f32.mrb[0].mxu0
      %v10120 = vadd.f32 0.0, %v10119
      %v10121 = vpop.f32.mrb[0].mxu0
      %v10122 = vpop.f32.mrb[0].mxu0
      %v10123 = vadd.f32 0.0, %v10122
      %v10124 = vpop.f32.mrb[0].mxu0
      %10125 = vmatprep.mubr.bf16.mxu0 0
      %10126 = vmatmul.mubr.bf16.gmra.mrb[0].mxu0 %v9009
      %v10127 = vpop.f32.mrb[0].mxu0
      %v10128 = vadd.f32 0.0, %v10127
      %v10129 = vpop.f32.mrb[0].mxu0
      %v10130 = vpop.f32.mrb[0].mxu0
      %v10131 = vadd.f32 0.0, %v10130
      %v10132 = vpop.f32.mrb[0].mxu0
      %10133 = vmatprep.mubr.bf16.mxu0 0
      %10134 = vmatmul.mubr.bf16.gmra.mrb[0].mxu0 %v9011
      %v10135 = vpop.f32.mrb[0].mxu0
      %v10136 = vadd.f32 0.0, %v10135
      %v10137 = vpop.f32.mrb[0].mxu0
      %v10138 = vpop.f32.mrb[0].mxu0
      %v10139 = vadd.f32 0.0, %v10138
      %v10140 = vpop.f32.mrb[0].mxu0
      %10141 = vmatprep.mubr.bf16.mxu0 0
      %10142 = vmatmul.mubr.bf16.gmra.mrb[0].mxu0 %v9013
      %v10143 = vpop.f32.mrb[0].mxu0
      %v10144 = vadd.f32 0.0, %v10143
      %v10145 = vpop.f32.mrb[0].mxu0
      %v10146 = vpop.f32.mrb[0].mxu0
      %v10147 = vadd.f32 0.0, %v10146
      %v10148 = vpop.f32.mrb[0].mxu0
      %10149 = vmatprep.mubr.bf16.mxu0 0
      %10150 = vmatmul.mubr.bf16.gmra.mrb[0].mxu0 %v9015
      %v10151 = vpop.f32.mrb[0].mxu0
      %v10152 = vadd.f32 0.0, %v10151
      %v10153 = vpop.f32.mrb[0].mxu0
      %v10154 = vpop.f32.mrb[0].mxu0
      %v10155 = vadd.f32 0.0, %v10154
      %v10156 = vpop.f32.mrb[0].mxu0
      %10157 = vmatprep.mubr.bf16.mxu0 0
      %10158 = vmatmul.mubr.bf16.gmra.mrb[0].mxu0 %v9017
      %v10159 = vpop.f32.mrb[0].mxu0
      %v10160 = vadd.f32 0.0, %v10159
      %v10161 = vpop.f32.mrb[0].mxu0
      %v10162 = vpop.f32.mrb[0].mxu0
      %v10163 = vadd.f32 0.0, %v10162
      %v10164 = vpop.f32.mrb[0].mxu0
      %10165 = vmatprep.mubr.bf16.mxu0 0
      %10166 = vmatmul.mubr.bf16.gmra.mrb[0].mxu0 %v9019
      %v10167 = vpop.f32.mrb[0].mxu0
      %v10168 = vadd.f32 0.0, %v10167
      %v10169 = vpop.f32.mrb[0].mxu0
      %v10170 = vpop.f32.mrb[0].mxu0
      %v10171 = vadd.f32 0.0, %v10170
      %v10172 = vpop.f32.mrb[0].mxu0
      %10173 = vmatprep.mubr.bf16.mxu0 0
      %10174 = vmatmul.mubr.bf16.gmra.mrb[0].mxu0 %v9021
      %v10175 = vpop.f32.mrb[0].mxu0
      %v10176 = vadd.f32 0.0, %v10175
      %v10177 = vpop.f32.mrb[0].mxu0
      %v10178 = vpop.f32.mrb[0].mxu0
      %v10179 = vadd.f32 0.0, %v10178
      %v10180 = vpop.f32.mrb[0].mxu0
      %10181 = vmatprep.mubr.bf16.mxu0 0
      %10182 = vmatmul.mubr.bf16.gmra.mrb[0].mxu0 %v9023
      %v10183 = vpop.f32.mrb[0].mxu0
      %v10184 = vadd.f32 0.0, %v10183
      %v10185 = vpop.f32.mrb[0].mxu0
      %v10186 = vpop.f32.mrb[0].mxu0
      %v10187 = vadd.f32 0.0, %v10186
      %v10188 = vpop.f32.mrb[0].mxu0
      %10189 = vmatprep.mubr.bf16.mxu0 0
      %10190 = vmatmul.mubr.bf16.gmra.mrb[0].mxu0 %v9025
      %v10191 = vpop.f32.mrb[0].mxu0
      %v10192 = vadd.f32 0.0, %v10191
      %v10193 = vpop.f32.mrb[0].mxu0
      %v10194 = vpop.f32.mrb[0].mxu0
      %v10195 = vadd.f32 0.0, %v10194
      %v10196 = vpop.f32.mrb[0].mxu0
      %10197 = vmatprep.mubr.bf16.mxu0 0
      %10198 = vmatmul.mubr.bf16.gmra.mrb[0].mxu0 %v9027
      %v10199 = vpop.f32.mrb[0].mxu0
      %v10200 = vadd.f32 0.0, %v10199
      %v10201 = vpop.f32.mrb[0].mxu0
      %v10202 = vpop.f32.mrb[0].mxu0
      %v10203 = vadd.f32 0.0, %v10202
      %v10204 = vpop.f32.mrb[0].mxu0
      %10205 = vmatprep.mubr.bf16.mxu0 0
      %10206 = vmatmul.mubr.bf16.gmra.mrb[0].mxu0 %v9470
      %v10207 = vpop.f32.mrb[0].mxu0
      %v10208 = vadd.f32 0.0, %v10207
      %v10209 = vpop.f32.mrb[0].mxu0
      %v10210 = vpop.f32.mrb[0].mxu0
      %v10211 = vadd.f32 0.0, %v10210
      %v10212 = vpop.f32.mrb[0].mxu0
      %10213 = vmatprep.mubr.bf16.mxu0 0
      %10214 = vmatmul.mubr.bf16.gmra.mrb[0].mxu0 %v10075
      %v10215 = vpop.f32.mrb[0].mxu0
      %v10216 = vadd.f32 0.0, %v10215
      %v10217 = vpop.f32.mrb[0].mxu0
      %v10218 = vpop.f32.mrb[0].mxu0
      %v10219 = vadd.f32 0.0, %v10218
      %v10220 = vpop.f32.mrb[0].mxu0
      %10221 = vdwg.mxu0
      %v10222 = vadd.f32 %v10028, %v10112
      %v10223 = vadd.f32 %v10029, %v10115
      %v10224 = vadd.f32 %v10030, %v10120
      %v10225 = vadd.f32 %v10031, %v10123
      %v10226 = vadd.f32 %v10032, %v10128
      %v10227 = vadd.f32 %v10033, %v10131
      %v10228 = vadd.f32 %v10034, %v10136
      %v10229 = vadd.f32 %v10035, %v10139
      %v10230 = vadd.f32 %v10036, %v10144
      %v10231 = vadd.f32 %v10037, %v10147
      %v10232 = vadd.f32 %v10038, %v10152
      %v10233 = vadd.f32 %v10039, %v10155
      %v10234 = vadd.f32 %v10040, %v10160
      %v10235 = vadd.f32 %v10041, %v10163
      %v10236 = vadd.f32 %v10042, %v10168
      %v10237 = vadd.f32 %v10043, %v10171
      %v10238 = vadd.f32 %v10044, %v10176
      %v10239 = vadd.f32 %v10045, %v10179
      %v10240 = vadd.f32 %v10046, %v10184
      %v10241 = vadd.f32 %v10047, %v10187
      %v10242 = vadd.f32 %v10048, %v10192
      %v10243 = vadd.f32 %v10049, %v10195
      %v10244 = vadd.f32 %v10050, %v10200
      %v10245 = vadd.f32 %v10051, %v10203
      %v10246 = vadd.f32 %v10052, %v10208
      %v10247 = vadd.f32 %v10053, %v10211
      %v10248 = vadd.f32 %v10054, %v10216
      %v10249 = vadd.f32 %v10055, %v10219
      %v10250 = vpack.c.bf16 %v8643, %v8643
      %s10251 = scalar_lea.vmem %s4, 112
      %v10252 = vld [vmem:[%s10251] sm:$0xf]
      %v10253 = vld [vmem:[%s10251 + $0x4] sm:$0xf]
      %v10254 = vld [vmem:[%s10251 + $0x8] sm:$0xf]
      %v10255 = vld [vmem:[%s10251 + $0xc] sm:$0xf]
      %v10256 = vshll.u32 %v10056, 16
      %v10258 = vrot.slane %v10256, 1
      %v10259 = vsel %vm8672, %v9657, %v10258
      %v10260 = vshrl.u32 %v10056, 16
      %v10262 = vor.u32 %v10260, %v10258
      %v10264 = vshll.u32 %v10250, 16
      %v10266 = vrot.slane %v10264, 1
      %v10267 = vsel %vm8672, %v10262, %v10266
      %v10272 = vunpack.c.l.b16 %v10252
      %v10273 = vunpack.c.l.b16 %v10253
      %v10274 = vunpack.c.l.b16 %v10254
      %v10275 = vunpack.c.l.b16 %v10255
      %v10276 = vpack.c.b16 %v10273, %v10272
      %v10277 = vpack.c.b16 %v10275, %v10274
      %v10281 = vsel %vm8801, %v10259, 0
      %v10284 = vsel %vm8801, %v10267, 0
      %10286 = vmatprep.subr.bf16.mxu0 0
      %10287 = vmatpush1.bf16.msra.mxu0 %v10276
      %10288 = vmatprep.subr.bf16.mxu0 0
      %10289 = vmatpush1.bf16.msra.mxu0 %v10277
      %10290 = vmatprep.subr.bf16.mxu0 0
      %10291 = vmatpush1.bf16.msra.mxu0 0
      %10292 = vmatprep.subr.bf16.mxu0 0
      %10293 = vmatpush1.bf16.msra.mxu0 0
      %10294 = vmatprep.subr.bf16.mxu0 0
      %10295 = vmatpush1.bf16.msra.mxu0 0
      %10296 = vmatprep.subr.bf16.mxu0 0
      %10297 = vmatpush1.bf16.msra.mxu0 0
      %10298 = vmatprep.subr.bf16.mxu0 0
      %10299 = vmatpush1.bf16.msra.mxu0 0
      %10300 = vmatprep.subr.bf16.mxu0 0
      %10301 = vmatpush1.bf16.msra.mxu0 0
      %10302 = vmatprep.subr.bf16.mxu0 0
      %10303 = vmatpush1.bf16.msra.mxu0 0
      %10304 = vmatprep.subr.bf16.mxu0 0
      %10305 = vmatpush1.bf16.msra.mxu0 0
      %10306 = vmatprep.subr.bf16.mxu0 0
      %10307 = vmatpush1.bf16.msra.mxu0 0
      %10308 = vmatprep.subr.bf16.mxu0 0
      %10309 = vmatpush1.bf16.msra.mxu0 0
      %10310 = vmatprep.subr.bf16.mxu0 0
      %10311 = vmatpush1.bf16.msra.mxu0 0
      %10312 = vmatprep.subr.bf16.mxu0 0
      %10313 = vmatpush1.bf16.msra.mxu0 0
      %10314 = vmatprep.subr.bf16.mxu0 0
      %10315 = vmatpush1.bf16.msra.mxu0 0
      %10316 = vmatprep.subr.bf16.mxu0 0
      %10317 = vmatpush1.bf16.msra.mxu0 0
      %10318 = vmatprep.mubr.bf16.mxu0 0
      %10319 = vmatmul.mubr.bf16.gmra.mrb[0].mxu0 %v8809
      %v10320 = vpop.f32.mrb[0].mxu0
      %v10321 = vadd.f32 0.0, %v10320
      %v10322 = vpop.f32.mrb[0].mxu0
      %v10323 = vpop.f32.mrb[0].mxu0
      %v10324 = vadd.f32 0.0, %v10323
      %v10325 = vpop.f32.mrb[0].mxu0
      %10326 = vmatprep.mubr.bf16.mxu0 0
      %10327 = vmatmul.mubr.bf16.gmra.mrb[0].mxu0 %v8812
      %v10328 = vpop.f32.mrb[0].mxu0
      %v10329 = vadd.f32 0.0, %v10328
      %v10330 = vpop.f32.mrb[0].mxu0
      %v10331 = vpop.f32.mrb[0].mxu0
      %v10332 = vadd.f32 0.0, %v10331
      %v10333 = vpop.f32.mrb[0].mxu0
      %10334 = vmatprep.mubr.bf16.mxu0 0
      %10335 = vmatmul.mubr.bf16.gmra.mrb[0].mxu0 %v8815
      %v10336 = vpop.f32.mrb[0].mxu0
      %v10337 = vadd.f32 0.0, %v10336
      %v10338 = vpop.f32.mrb[0].mxu0
      %v10339 = vpop.f32.mrb[0].mxu0
      %v10340 = vadd.f32 0.0, %v10339
      %v10341 = vpop.f32.mrb[0].mxu0
      %10342 = vmatprep.mubr.bf16.mxu0 0
      %10343 = vmatmul.mubr.bf16.gmra.mrb[0].mxu0 %v8818
      %v10344 = vpop.f32.mrb[0].mxu0
      %v10345 = vadd.f32 0.0, %v10344
      %v10346 = vpop.f32.mrb[0].mxu0
      %v10347 = vpop.f32.mrb[0].mxu0
      %v10348 = vadd.f32 0.0, %v10347
      %v10349 = vpop.f32.mrb[0].mxu0
      %10350 = vmatprep.mubr.bf16.mxu0 0
      %10351 = vmatmul.mubr.bf16.gmra.mrb[0].mxu0 %v8821
      %v10352 = vpop.f32.mrb[0].mxu0
      %v10353 = vadd.f32 0.0, %v10352
      %v10354 = vpop.f32.mrb[0].mxu0
      %v10355 = vpop.f32.mrb[0].mxu0
      %v10356 = vadd.f32 0.0, %v10355
      %v10357 = vpop.f32.mrb[0].mxu0
      %10358 = vmatprep.mubr.bf16.mxu0 0
      %10359 = vmatmul.mubr.bf16.gmra.mrb[0].mxu0 %v8824
      %v10360 = vpop.f32.mrb[0].mxu0
      %v10361 = vadd.f32 0.0, %v10360
      %v10362 = vpop.f32.mrb[0].mxu0
      %v10363 = vpop.f32.mrb[0].mxu0
      %v10364 = vadd.f32 0.0, %v10363
      %v10365 = vpop.f32.mrb[0].mxu0
      %10366 = vmatprep.mubr.bf16.mxu0 0
      %10367 = vmatmul.mubr.bf16.gmra.mrb[0].mxu0 %v8827
      %v10368 = vpop.f32.mrb[0].mxu0
      %v10369 = vadd.f32 0.0, %v10368
      %v10370 = vpop.f32.mrb[0].mxu0
      %v10371 = vpop.f32.mrb[0].mxu0
      %v10372 = vadd.f32 0.0, %v10371
      %v10373 = vpop.f32.mrb[0].mxu0
      %10374 = vmatprep.mubr.bf16.mxu0 0
      %10375 = vmatmul.mubr.bf16.gmra.mrb[0].mxu0 %v8830
      %v10376 = vpop.f32.mrb[0].mxu0
      %v10377 = vadd.f32 0.0, %v10376
      %v10378 = vpop.f32.mrb[0].mxu0
      %v10379 = vpop.f32.mrb[0].mxu0
      %v10380 = vadd.f32 0.0, %v10379
      %v10381 = vpop.f32.mrb[0].mxu0
      %10382 = vmatprep.mubr.bf16.mxu0 0
      %10383 = vmatmul.mubr.bf16.gmra.mrb[0].mxu0 %v8833
      %v10384 = vpop.f32.mrb[0].mxu0
      %v10385 = vadd.f32 0.0, %v10384
      %v10386 = vpop.f32.mrb[0].mxu0
      %v10387 = vpop.f32.mrb[0].mxu0
      %v10388 = vadd.f32 0.0, %v10387
      %v10389 = vpop.f32.mrb[0].mxu0
      %10390 = vmatprep.mubr.bf16.mxu0 0
      %10391 = vmatmul.mubr.bf16.gmra.mrb[0].mxu0 %v8836
      %v10392 = vpop.f32.mrb[0].mxu0
      %v10393 = vadd.f32 0.0, %v10392
      %v10394 = vpop.f32.mrb[0].mxu0
      %v10395 = vpop.f32.mrb[0].mxu0
      %v10396 = vadd.f32 0.0, %v10395
      %v10397 = vpop.f32.mrb[0].mxu0
      %10398 = vmatprep.mubr.bf16.mxu0 0
      %10399 = vmatmul.mubr.bf16.gmra.mrb[0].mxu0 %v8839
      %v10400 = vpop.f32.mrb[0].mxu0
      %v10401 = vadd.f32 0.0, %v10400
      %v10402 = vpop.f32.mrb[0].mxu0
      %v10403 = vpop.f32.mrb[0].mxu0
      %v10404 = vadd.f32 0.0, %v10403
      %v10405 = vpop.f32.mrb[0].mxu0
      %10406 = vmatprep.mubr.bf16.mxu0 0
      %10407 = vmatmul.mubr.bf16.gmra.mrb[0].mxu0 %v9676
      %v10408 = vpop.f32.mrb[0].mxu0
      %v10409 = vadd.f32 0.0, %v10408
      %v10410 = vpop.f32.mrb[0].mxu0
      %v10411 = vpop.f32.mrb[0].mxu0
      %v10412 = vadd.f32 0.0, %v10411
      %v10413 = vpop.f32.mrb[0].mxu0
      %10414 = vmatprep.mubr.bf16.mxu0 0
      %10415 = vmatmul.mubr.bf16.gmra.mrb[0].mxu0 %v10281
      %v10416 = vpop.f32.mrb[0].mxu0
      %v10417 = vadd.f32 0.0, %v10416
      %v10418 = vpop.f32.mrb[0].mxu0
      %v10419 = vpop.f32.mrb[0].mxu0
      %v10420 = vadd.f32 0.0, %v10419
      %v10421 = vpop.f32.mrb[0].mxu0
      %10422 = vmatprep.mubr.bf16.mxu0 0
      %10423 = vmatmul.mubr.bf16.gmra.mrb[0].mxu0 %v10284
      %v10424 = vpop.f32.mrb[0].mxu0
      %v10425 = vadd.f32 0.0, %v10424
      %v10426 = vpop.f32.mrb[0].mxu0
      %v10427 = vpop.f32.mrb[0].mxu0
      %v10428 = vadd.f32 0.0, %v10427
      %v10429 = vpop.f32.mrb[0].mxu0
      %10430 = vdwg.mxu0
      %v10431 = vadd.f32 %v10222, %v10321
      %v10432 = vadd.f32 %v10223, %v10324
      %v10433 = vadd.f32 %v10224, %v10329
      %v10434 = vadd.f32 %v10225, %v10332
      %v10435 = vadd.f32 %v10226, %v10337
      %v10436 = vadd.f32 %v10227, %v10340
      %v10437 = vadd.f32 %v10228, %v10345
      %v10438 = vadd.f32 %v10229, %v10348
      %v10439 = vadd.f32 %v10230, %v10353
      %v10440 = vadd.f32 %v10231, %v10356
      %v10441 = vadd.f32 %v10232, %v10361
      %v10442 = vadd.f32 %v10233, %v10364
      %v10443 = vadd.f32 %v10234, %v10369
      %v10444 = vadd.f32 %v10235, %v10372
      %v10445 = vadd.f32 %v10236, %v10377
      %v10446 = vadd.f32 %v10237, %v10380
      %v10447 = vadd.f32 %v10238, %v10385
      %v10448 = vadd.f32 %v10239, %v10388
      %v10449 = vadd.f32 %v10240, %v10393
      %v10450 = vadd.f32 %v10241, %v10396
      %v10451 = vadd.f32 %v10242, %v10401
      %v10452 = vadd.f32 %v10243, %v10404
      %v10453 = vadd.f32 %v10244, %v10409
      %v10454 = vadd.f32 %v10245, %v10412
      %v10455 = vadd.f32 %v10246, %v10417
      %v10456 = vadd.f32 %v10247, %v10420
      %v10457 = vadd.f32 %v10248, %v10425
      %v10458 = vadd.f32 %v10249, %v10428
      %s10459 = scalar_lea.vmem %s4, 128
      %v10460 = vld [vmem:[%s10459] sm:$0xf]
      %v10461 = vld [vmem:[%s10459 + $0x4] sm:$0xf]
      %v10462 = vld [vmem:[%s10459 + $0x8] sm:$0xf]
      %v10463 = vld [vmem:[%s10459 + $0xc] sm:$0xf]
      %v10466 = vrot.slane %v10056, 1
      %v10467 = vsel %vm9194, %v9861, %v10466
      %v10468 = vrot.slane %v10250, 1
      %v10469 = vsel %vm9194, %v10466, %v10468
      %v10474 = vunpack.c.l.b16 %v10460
      %v10475 = vunpack.c.l.b16 %v10461
      %v10476 = vunpack.c.l.b16 %v10462
      %v10477 = vunpack.c.l.b16 %v10463
      %v10478 = vpack.c.b16 %v10475, %v10474
      %v10479 = vpack.c.b16 %v10477, %v10476
      %v10483 = vsel %vm8801, %v10467, 0
      %v10486 = vsel %vm8801, %v10469, 0
      %10488 = vmatprep.subr.bf16.mxu0 0
      %10489 = vmatpush1.bf16.msra.mxu0 %v10478
      %10490 = vmatprep.subr.bf16.mxu0 0
      %10491 = vmatpush1.bf16.msra.mxu0 %v10479
      %10492 = vmatprep.subr.bf16.mxu0 0
      %10493 = vmatpush1.bf16.msra.mxu0 0
      %10494 = vmatprep.subr.bf16.mxu0 0
      %10495 = vmatpush1.bf16.msra.mxu0 0
      %10496 = vmatprep.subr.bf16.mxu0 0
      %10497 = vmatpush1.bf16.msra.mxu0 0
      %10498 = vmatprep.subr.bf16.mxu0 0
      %10499 = vmatpush1.bf16.msra.mxu0 0
      %10500 = vmatprep.subr.bf16.mxu0 0
      %10501 = vmatpush1.bf16.msra.mxu0 0
      %10502 = vmatprep.subr.bf16.mxu0 0
      %10503 = vmatpush1.bf16.msra.mxu0 0
      %10504 = vmatprep.subr.bf16.mxu0 0
      %10505 = vmatpush1.bf16.msra.mxu0 0
      %10506 = vmatprep.subr.bf16.mxu0 0
      %10507 = vmatpush1.bf16.msra.mxu0 0
      %10508 = vmatprep.subr.bf16.mxu0 0
      %10509 = vmatpush1.bf16.msra.mxu0 0
      %10510 = vmatprep.subr.bf16.mxu0 0
      %10511 = vmatpush1.bf16.msra.mxu0 0
      %10512 = vmatprep.subr.bf16.mxu0 0
      %10513 = vmatpush1.bf16.msra.mxu0 0
      %10514 = vmatprep.subr.bf16.mxu0 0
      %10515 = vmatpush1.bf16.msra.mxu0 0
      %10516 = vmatprep.subr.bf16.mxu0 0
      %10517 = vmatpush1.bf16.msra.mxu0 0
      %10518 = vmatprep.subr.bf16.mxu0 0
      %10519 = vmatpush1.bf16.msra.mxu0 0
      %10520 = vmatprep.mubr.bf16.mxu0 0
      %10521 = vmatmul.mubr.bf16.gmra.mrb[0].mxu0 %v9243
      %v10522 = vpop.f32.mrb[0].mxu0
      %v10523 = vadd.f32 0.0, %v10522
      %v10524 = vpop.f32.mrb[0].mxu0
      %v10525 = vpop.f32.mrb[0].mxu0
      %v10526 = vadd.f32 0.0, %v10525
      %v10527 = vpop.f32.mrb[0].mxu0
      %10528 = vmatprep.mubr.bf16.mxu0 0
      %10529 = vmatmul.mubr.bf16.gmra.mrb[0].mxu0 %v9246
      %v10530 = vpop.f32.mrb[0].mxu0
      %v10531 = vadd.f32 0.0, %v10530
      %v10532 = vpop.f32.mrb[0].mxu0
      %v10533 = vpop.f32.mrb[0].mxu0
      %v10534 = vadd.f32 0.0, %v10533
      %v10535 = vpop.f32.mrb[0].mxu0
      %10536 = vmatprep.mubr.bf16.mxu0 0
      %10537 = vmatmul.mubr.bf16.gmra.mrb[0].mxu0 %v9249
      %v10538 = vpop.f32.mrb[0].mxu0
      %v10539 = vadd.f32 0.0, %v10538
      %v10540 = vpop.f32.mrb[0].mxu0
      %v10541 = vpop.f32.mrb[0].mxu0
      %v10542 = vadd.f32 0.0, %v10541
      %v10543 = vpop.f32.mrb[0].mxu0
      %10544 = vmatprep.mubr.bf16.mxu0 0
      %10545 = vmatmul.mubr.bf16.gmra.mrb[0].mxu0 %v9252
      %v10546 = vpop.f32.mrb[0].mxu0
      %v10547 = vadd.f32 0.0, %v10546
      %v10548 = vpop.f32.mrb[0].mxu0
      %v10549 = vpop.f32.mrb[0].mxu0
      %v10550 = vadd.f32 0.0, %v10549
      %v10551 = vpop.f32.mrb[0].mxu0
      %10552 = vmatprep.mubr.bf16.mxu0 0
      %10553 = vmatmul.mubr.bf16.gmra.mrb[0].mxu0 %v9255
      %v10554 = vpop.f32.mrb[0].mxu0
      %v10555 = vadd.f32 0.0, %v10554
      %v10556 = vpop.f32.mrb[0].mxu0
      %v10557 = vpop.f32.mrb[0].mxu0
      %v10558 = vadd.f32 0.0, %v10557
      %v10559 = vpop.f32.mrb[0].mxu0
      %10560 = vmatprep.mubr.bf16.mxu0 0
      %10561 = vmatmul.mubr.bf16.gmra.mrb[0].mxu0 %v9258
      %v10562 = vpop.f32.mrb[0].mxu0
      %v10563 = vadd.f32 0.0, %v10562
      %v10564 = vpop.f32.mrb[0].mxu0
      %v10565 = vpop.f32.mrb[0].mxu0
      %v10566 = vadd.f32 0.0, %v10565
      %v10567 = vpop.f32.mrb[0].mxu0
      %10568 = vmatprep.mubr.bf16.mxu0 0
      %10569 = vmatmul.mubr.bf16.gmra.mrb[0].mxu0 %v9261
      %v10570 = vpop.f32.mrb[0].mxu0
      %v10571 = vadd.f32 0.0, %v10570
      %v10572 = vpop.f32.mrb[0].mxu0
      %v10573 = vpop.f32.mrb[0].mxu0
      %v10574 = vadd.f32 0.0, %v10573
      %v10575 = vpop.f32.mrb[0].mxu0
      %10576 = vmatprep.mubr.bf16.mxu0 0
      %10577 = vmatmul.mubr.bf16.gmra.mrb[0].mxu0 %v9264
      %v10578 = vpop.f32.mrb[0].mxu0
      %v10579 = vadd.f32 0.0, %v10578
      %v10580 = vpop.f32.mrb[0].mxu0
      %v10581 = vpop.f32.mrb[0].mxu0
      %v10582 = vadd.f32 0.0, %v10581
      %v10583 = vpop.f32.mrb[0].mxu0
      %10584 = vmatprep.mubr.bf16.mxu0 0
      %10585 = vmatmul.mubr.bf16.gmra.mrb[0].mxu0 %v9267
      %v10586 = vpop.f32.mrb[0].mxu0
      %v10587 = vadd.f32 0.0, %v10586
      %v10588 = vpop.f32.mrb[0].mxu0
      %v10589 = vpop.f32.mrb[0].mxu0
      %v10590 = vadd.f32 0.0, %v10589
      %v10591 = vpop.f32.mrb[0].mxu0
      %10592 = vmatprep.mubr.bf16.mxu0 0
      %10593 = vmatmul.mubr.bf16.gmra.mrb[0].mxu0 %v9270
      %v10594 = vpop.f32.mrb[0].mxu0
      %v10595 = vadd.f32 0.0, %v10594
      %v10596 = vpop.f32.mrb[0].mxu0
      %v10597 = vpop.f32.mrb[0].mxu0
      %v10598 = vadd.f32 0.0, %v10597
      %v10599 = vpop.f32.mrb[0].mxu0
      %10600 = vmatprep.mubr.bf16.mxu0 0
      %10601 = vmatmul.mubr.bf16.gmra.mrb[0].mxu0 %v9273
      %v10602 = vpop.f32.mrb[0].mxu0
      %v10603 = vadd.f32 0.0, %v10602
      %v10604 = vpop.f32.mrb[0].mxu0
      %v10605 = vpop.f32.mrb[0].mxu0
      %v10606 = vadd.f32 0.0, %v10605
      %v10607 = vpop.f32.mrb[0].mxu0
      %10608 = vmatprep.mubr.bf16.mxu0 0
      %10609 = vmatmul.mubr.bf16.gmra.mrb[0].mxu0 %v9878
      %v10610 = vpop.f32.mrb[0].mxu0
      %v10611 = vadd.f32 0.0, %v10610
      %v10612 = vpop.f32.mrb[0].mxu0
      %v10613 = vpop.f32.mrb[0].mxu0
      %v10614 = vadd.f32 0.0, %v10613
      %v10615 = vpop.f32.mrb[0].mxu0
      %10616 = vmatprep.mubr.bf16.mxu0 0
      %10617 = vmatmul.mubr.bf16.gmra.mrb[0].mxu0 %v10483
      %v10618 = vpop.f32.mrb[0].mxu0
      %v10619 = vadd.f32 0.0, %v10618
      %v10620 = vpop.f32.mrb[0].mxu0
      %v10621 = vpop.f32.mrb[0].mxu0
      %v10622 = vadd.f32 0.0, %v10621
      %v10623 = vpop.f32.mrb[0].mxu0
      %10624 = vmatprep.mubr.bf16.mxu0 0
      %10625 = vmatmul.mubr.bf16.gmra.mrb[0].mxu0 %v10486
      %v10626 = vpop.f32.mrb[0].mxu0
      %v10627 = vadd.f32 0.0, %v10626
      %v10628 = vpop.f32.mrb[0].mxu0
      %v10629 = vpop.f32.mrb[0].mxu0
      %v10630 = vadd.f32 0.0, %v10629
      %v10631 = vpop.f32.mrb[0].mxu0
      %10632 = vdwg.mxu0
      %v10633 = vadd.f32 %v10431, %v10523
      %v10634 = vadd.f32 %v10432, %v10526
      %v10635 = vadd.f32 %v10433, %v10531
      %v10636 = vadd.f32 %v10434, %v10534
      %v10637 = vadd.f32 %v10435, %v10539
      %v10638 = vadd.f32 %v10436, %v10542
      %v10639 = vadd.f32 %v10437, %v10547
      %v10640 = vadd.f32 %v10438, %v10550
      %v10641 = vadd.f32 %v10439, %v10555
      %v10642 = vadd.f32 %v10440, %v10558
      %v10643 = vadd.f32 %v10441, %v10563
      %v10644 = vadd.f32 %v10442, %v10566
      %v10645 = vadd.f32 %v10443, %v10571
      %v10646 = vadd.f32 %v10444, %v10574
      %v10647 = vadd.f32 %v10445, %v10579
      %v10648 = vadd.f32 %v10446, %v10582
      %v10649 = vadd.f32 %v10447, %v10587
      %v10650 = vadd.f32 %v10448, %v10590
      %v10651 = vadd.f32 %v10449, %v10595
      %v10652 = vadd.f32 %v10450, %v10598
      %v10653 = vadd.f32 %v10451, %v10603
      %v10654 = vadd.f32 %v10452, %v10606
      %v10655 = vadd.f32 %v10453, %v10611
      %v10656 = vadd.f32 %v10454, %v10614
      %v10657 = vadd.f32 %v10455, %v10619
      %v10658 = vadd.f32 %v10456, %v10622
      %v10659 = vadd.f32 %v10457, %v10627
      %v10660 = vadd.f32 %v10458, %v10630
      %v10661 = vld [vmem:[%s5] sm:$0x1]
      %v10663 = vlaneseq
      %v10664 = vshrl.u32 %v10663, 7
      %v10665 = vsub.s32 0, %v10664
      %v10666 = vrot.slane %v10661, %v10665
      %v10668 = vadd.f32 %v10633, %v10666
      %v10669 = vadd.f32 %v10634, %v10666
      %v10670 = vadd.f32 %v10635, %v10666
      %v10671 = vadd.f32 %v10636, %v10666
      %v10672 = vadd.f32 %v10637, %v10666
      %v10673 = vadd.f32 %v10638, %v10666
      %v10674 = vadd.f32 %v10639, %v10666
      %v10675 = vadd.f32 %v10640, %v10666
      %v10676 = vadd.f32 %v10641, %v10666
      %v10677 = vadd.f32 %v10642, %v10666
      %v10678 = vadd.f32 %v10643, %v10666
      %v10679 = vadd.f32 %v10644, %v10666
      %v10680 = vadd.f32 %v10645, %v10666
      %v10681 = vadd.f32 %v10646, %v10666
      %v10682 = vadd.f32 %v10647, %v10666
      %v10683 = vadd.f32 %v10648, %v10666
      %v10684 = vadd.f32 %v10649, %v10666
      %v10685 = vadd.f32 %v10650, %v10666
      %v10686 = vadd.f32 %v10651, %v10666
      %v10687 = vadd.f32 %v10652, %v10666
      %v10688 = vadd.f32 %v10653, %v10666
      %v10689 = vadd.f32 %v10654, %v10666
      %v10690 = vadd.f32 %v10655, %v10666
      %v10691 = vadd.f32 %v10656, %v10666
      %v10692 = vadd.f32 %v10657, %v10666
      %v10693 = vadd.f32 %v10658, %v10666
      %v10694 = vadd.f32 %v10659, %v10666
      %v10695 = vadd.f32 %v10660, %v10666
      %v10696 = vmax.f32 %v10668, 0.0
      %v10697 = vmax.f32 %v10669, 0.0
      %v10698 = vmax.f32 %v10670, 0.0
      %v10699 = vmax.f32 %v10671, 0.0
      %v10700 = vmax.f32 %v10672, 0.0
      %v10701 = vmax.f32 %v10673, 0.0
      %v10702 = vmax.f32 %v10674, 0.0
      %v10703 = vmax.f32 %v10675, 0.0
      %v10704 = vmax.f32 %v10676, 0.0
      %v10705 = vmax.f32 %v10677, 0.0
      %v10706 = vmax.f32 %v10678, 0.0
      %v10707 = vmax.f32 %v10679, 0.0
      %v10708 = vmax.f32 %v10680, 0.0
      %v10709 = vmax.f32 %v10681, 0.0
      %v10710 = vmax.f32 %v10682, 0.0
      %v10711 = vmax.f32 %v10683, 0.0
      %v10712 = vmax.f32 %v10684, 0.0
      %v10713 = vmax.f32 %v10685, 0.0
      %v10714 = vmax.f32 %v10686, 0.0
      %v10715 = vmax.f32 %v10687, 0.0
      %v10716 = vmax.f32 %v10688, 0.0
      %v10717 = vmax.f32 %v10689, 0.0
      %v10718 = vmax.f32 %v10690, 0.0
      %v10719 = vmax.f32 %v10691, 0.0
      %v10720 = vmax.f32 %v10692, 0.0
      %v10721 = vmax.f32 %v10693, 0.0
      %v10722 = vmax.f32 %v10694, 0.0
      %v10723 = vmax.f32 %v10695, 0.0
      %v10752 = vrot.slane %v10696, 1
      %v10753 = vrot.slane %v10697, 1
      %v10754 = vsel %vm1360, %v10752, %v10753
      %v10755 = vrot.slane %v10698, 1
      %v10756 = vsel %vm1360, %v10753, %v10755
      %v10757 = vrot.slane %v10699, 1
      %v10758 = vsel %vm1360, %v10755, %v10757
      %v10759 = vrot.slane %v10700, 1
      %v10760 = vsel %vm1360, %v10757, %v10759
      %v10761 = vrot.slane %v10701, 1
      %v10762 = vsel %vm1360, %v10759, %v10761
      %v10763 = vrot.slane %v10702, 1
      %v10764 = vsel %vm1360, %v10761, %v10763
      %v10765 = vrot.slane %v10703, 1
      %v10766 = vsel %vm1360, %v10763, %v10765
      %v10767 = vrot.slane %v10704, 1
      %v10768 = vsel %vm1360, %v10765, %v10767
      %v10769 = vrot.slane %v10705, 1
      %v10770 = vsel %vm1360, %v10767, %v10769
      %v10771 = vrot.slane %v10706, 1
      %v10772 = vsel %vm1360, %v10769, %v10771
      %v10773 = vrot.slane %v10707, 1
      %v10774 = vsel %vm1360, %v10771, %v10773
      %v10775 = vrot.slane %v10708, 1
      %v10776 = vsel %vm1360, %v10773, %v10775
      %v10777 = vrot.slane %v10709, 1
      %v10778 = vsel %vm1360, %v10775, %v10777
      %v10779 = vrot.slane %v10710, 1
      %v10780 = vsel %vm1360, %v10777, %v10779
      %v10781 = vrot.slane %v10711, 1
      %v10782 = vsel %vm1360, %v10779, %v10781
      %v10783 = vrot.slane %v10712, 1
      %v10784 = vsel %vm1360, %v10781, %v10783
      %v10785 = vrot.slane %v10713, 1
      %v10786 = vsel %vm1360, %v10783, %v10785
      %v10787 = vrot.slane %v10714, 1
      %v10788 = vsel %vm1360, %v10785, %v10787
      %v10789 = vrot.slane %v10715, 1
      %v10790 = vsel %vm1360, %v10787, %v10789
      %v10791 = vrot.slane %v10716, 1
      %v10792 = vsel %vm1360, %v10789, %v10791
      %v10793 = vrot.slane %v10717, 1
      %v10794 = vsel %vm1360, %v10791, %v10793
      %v10795 = vrot.slane %v10718, 1
      %v10796 = vsel %vm1360, %v10793, %v10795
      %v10797 = vrot.slane %v10719, 1
      %v10798 = vsel %vm1360, %v10795, %v10797
      %v10799 = vrot.slane %v10720, 1
      %v10800 = vsel %vm1360, %v10797, %v10799
      %v10801 = vrot.slane %v10721, 1
      %v10802 = vsel %vm1360, %v10799, %v10801
      %v10803 = vrot.slane %v10722, 1
      %v10804 = vsel %vm1360, %v10801, %v10803
      %v10805 = vrot.slane %v10723, 1
      %v10806 = vsel %vm1360, %v10803, %v10805
      %v10835 = vmax.f32 %v10696, %v10754
      %v10836 = vmax.f32 %v10697, %v10756
      %v10837 = vmax.f32 %v10698, %v10758
      %v10838 = vmax.f32 %v10699, %v10760
      %v10839 = vmax.f32 %v10700, %v10762
      %v10840 = vmax.f32 %v10701, %v10764
      %v10841 = vmax.f32 %v10702, %v10766
      %v10842 = vmax.f32 %v10703, %v10768
      %v10843 = vmax.f32 %v10704, %v10770
      %v10844 = vmax.f32 %v10705, %v10772
      %v10845 = vmax.f32 %v10706, %v10774
      %v10846 = vmax.f32 %v10707, %v10776
      %v10847 = vmax.f32 %v10708, %v10778
      %v10848 = vmax.f32 %v10709, %v10780
      %v10849 = vmax.f32 %v10710, %v10782
      %v10850 = vmax.f32 %v10711, %v10784
      %v10851 = vmax.f32 %v10712, %v10786
      %v10852 = vmax.f32 %v10713, %v10788
      %v10853 = vmax.f32 %v10714, %v10790
      %v10854 = vmax.f32 %v10715, %v10792
      %v10855 = vmax.f32 %v10716, %v10794
      %v10856 = vmax.f32 %v10717, %v10796
      %v10857 = vmax.f32 %v10718, %v10798
      %v10858 = vmax.f32 %v10719, %v10800
      %v10859 = vmax.f32 %v10720, %v10802
      %v10860 = vmax.f32 %v10721, %v10804
      %v10861 = vmax.f32 %v10722, %v10806
      %v10862 = vmax.f32 %v10723, %v10805
      %v10863 = vmax.f32 %v10835, %v10837
      %v10864 = vmax.f32 %v10836, %v10838
      %v10865 = vmax.f32 %v10837, %v10839
      %v10866 = vmax.f32 %v10838, %v10840
      %v10867 = vmax.f32 %v10839, %v10841
      %v10868 = vmax.f32 %v10840, %v10842
      %v10869 = vmax.f32 %v10841, %v10843
      %v10870 = vmax.f32 %v10842, %v10844
      %v10871 = vmax.f32 %v10843, %v10845
      %v10872 = vmax.f32 %v10844, %v10846
      %v10873 = vmax.f32 %v10845, %v10847
      %v10874 = vmax.f32 %v10846, %v10848
      %v10875 = vmax.f32 %v10847, %v10849
      %v10876 = vmax.f32 %v10848, %v10850
      %v10877 = vmax.f32 %v10849, %v10851
      %v10878 = vmax.f32 %v10850, %v10852
      %v10879 = vmax.f32 %v10851, %v10853
      %v10880 = vmax.f32 %v10852, %v10854
      %v10881 = vmax.f32 %v10853, %v10855
      %v10882 = vmax.f32 %v10854, %v10856
      %v10883 = vmax.f32 %v10855, %v10857
      %v10884 = vmax.f32 %v10856, %v10858
      %v10885 = vmax.f32 %v10857, %v10859
      %v10886 = vmax.f32 %v10858, %v10860
      %v10887 = vmax.f32 %v10859, %v10861
      %v10888 = vmax.f32 %v10860, %v10862
      %v10889 = vld [vmem:[%s6] sm:$0xff]
      %v10890 = vld [vmem:[%s6 + $0x8] sm:$0xff]
      %v10891 = vld [vmem:[%s6 + $0x10] sm:$0xff]
      %v10892 = vld [vmem:[%s6 + $0x18] sm:$0xff]
      %v10893 = vld [vmem:[%s6 + $0x20] sm:$0xff]
      %v10894 = vld [vmem:[%s6 + $0x28] sm:$0xff]
      %v10895 = vld [vmem:[%s6 + $0x30] sm:$0x11]
      %v10896 = vpack.c.bf16 %v10864, %v10863
      %v10897 = vpack.c.bf16 %v10866, %v10865
      %v10898 = vpack.c.bf16 %v10868, %v10867
      %v10899 = vpack.c.bf16 %v10870, %v10869
      %v10900 = vpack.c.bf16 %v10872, %v10871
      %v10901 = vpack.c.bf16 %v10874, %v10873
      %v10902 = vpack.c.bf16 %v10876, %v10875
      %v10903 = vpack.c.bf16 %v10878, %v10877
      %v10904 = vpack.c.bf16 %v10880, %v10879
      %v10905 = vpack.c.bf16 %v10882, %v10881
      %v10906 = vpack.c.bf16 %v10884, %v10883
      %v10907 = vpack.c.bf16 %v10886, %v10885
      %v10908 = vpack.c.bf16 %v10888, %v10887
      %v10916 = vunpack.c.l.b16 %v10889
      %v10917 = vunpack.c.h.b16 %v10889
      %v10918 = vunpack.c.l.b16 %v10890
      %v10919 = vunpack.c.h.b16 %v10890
      %v10920 = vunpack.c.l.b16 %v10891
      %v10921 = vunpack.c.h.b16 %v10891
      %v10922 = vunpack.c.l.b16 %v10892
      %v10923 = vunpack.c.h.b16 %v10892
      %v10924 = vunpack.c.l.b16 %v10893
      %v10925 = vunpack.c.h.b16 %v10893
      %v10926 = vunpack.c.l.b16 %v10894
      %v10927 = vunpack.c.h.b16 %v10894
      %v10928 = vunpack.c.l.b16 %v10895
      %v10929 = vunpack.c.h.b16 %v10895
      %v10930 = vpack.c.b16 %v10918, %v10916
      %v10931 = vpack.c.b16 %v10919, %v10917
      %v10932 = vpack.c.b16 %v10922, %v10920
      %v10933 = vpack.c.b16 %v10923, %v10921
      %v10934 = vpack.c.b16 %v10926, %v10924
      %v10935 = vpack.c.b16 %v10927, %v10925
      %v10936 = vpack.c.b16 %v10928, %v10928
      %v10937 = vpack.c.b16 %v10929, %v10929
      %vm10942 = vcmask 646144
      %v10944 = vsel %vm10942, %v10931, 0
      %v10947 = vsel %vm10942, %v10933, 0
      %v10950 = vsel %vm10942, %v10935, 0
      %v10953 = vsel %vm10942, %v10937, 0
      %vm10955 = vcmask 1047552
      %v10956 = vsel %vm1360, 4294967295, 65535
      %v10957 = vsel %vm10955, %v10956, 0
      %v10959 = vand.u32 %v10908, %v10957
      %10961 = vmatprep.subr.bf16.mxu0 0
      %10962 = vmatpush1.bf16.msra.mxu0 %v10896
      %10963 = vmatprep.subr.bf16.mxu0 0
      %10964 = vmatpush1.bf16.msra.mxu0 %v10897
      %10965 = vmatprep.subr.bf16.mxu0 0
      %10966 = vmatpush1.bf16.msra.mxu0 %v10898
      %10967 = vmatprep.subr.bf16.mxu0 0
      %10968 = vmatpush1.bf16.msra.mxu0 %v10899
      %10969 = vmatprep.subr.bf16.mxu0 0
      %10970 = vmatpush1.bf16.msra.mxu0 %v10900
      %10971 = vmatprep.subr.bf16.mxu0 0
      %10972 = vmatpush1.bf16.msra.mxu0 %v10901
      %10973 = vmatprep.subr.bf16.mxu0 0
      %10974 = vmatpush1.bf16.msra.mxu0 %v10902
      %10975 = vmatprep.subr.bf16.mxu0 0
      %10976 = vmatpush1.bf16.msra.mxu0 %v10903
      %10977 = vmatprep.subr.bf16.mxu0 0
      %10978 = vmatpush1.bf16.msra.mxu0 %v10904
      %10979 = vmatprep.subr.bf16.mxu0 0
      %10980 = vmatpush1.bf16.msra.mxu0 %v10905
      %10981 = vmatprep.subr.bf16.mxu0 0
      %10982 = vmatpush1.bf16.msra.mxu0 %v10906
      %10983 = vmatprep.subr.bf16.mxu0 0
      %10984 = vmatpush1.bf16.msra.mxu0 %v10907
      %10985 = vmatprep.subr.bf16.mxu0 0
      %10986 = vmatpush1.bf16.msra.mxu0 %v10959
      %10987 = vmatprep.subr.bf16.mxu0 0
      %10988 = vmatpush1.bf16.msra.mxu0 0
      %10989 = vmatprep.subr.bf16.mxu0 0
      %10990 = vmatpush1.bf16.msra.mxu0 0
      %10991 = vmatprep.subr.bf16.mxu0 0
      %10992 = vmatpush1.bf16.msra.mxu0 0
      %10993 = vmatprep.mubr.bf16.mxu0 %v10944
      %10994 = vmatmul.mubr.bf16.gmra.mrb[0].mxu0 %v10930
      %v10995 = vpop.f32.mrb[0].mxu0
      %v10996 = vadd.f32 0.0, %v10995
      %v10997 = vpop.f32.mrb[0].mxu0
      %v10998 = vpop.f32.mrb[0].mxu0
      %v10999 = vadd.f32 0.0, %v10998
      %v11000 = vpop.f32.mrb[0].mxu0
      %11001 = vmatprep.mubr.bf16.mxu0 %v10947
      %11002 = vmatmul.mubr.bf16.gmra.mrb[0].mxu0 %v10932
      %v11003 = vpop.f32.mrb[0].mxu0
      %v11004 = vadd.f32 0.0, %v11003
      %v11005 = vpop.f32.mrb[0].mxu0
      %v11006 = vpop.f32.mrb[0].mxu0
      %v11007 = vadd.f32 0.0, %v11006
      %v11008 = vpop.f32.mrb[0].mxu0
      %11009 = vmatprep.mubr.bf16.mxu0 %v10950
      %11010 = vmatmul.mubr.bf16.gmra.mrb[0].mxu0 %v10934
      %v11011 = vpop.f32.mrb[0].mxu0
      %v11012 = vadd.f32 0.0, %v11011
      %v11013 = vpop.f32.mrb[0].mxu0
      %v11014 = vpop.f32.mrb[0].mxu0
      %v11015 = vadd.f32 0.0, %v11014
      %v11016 = vpop.f32.mrb[0].mxu0
      %11017 = vmatprep.mubr.bf16.mxu0 %v10953
      %11018 = vmatmul.mubr.bf16.gmra.mrb[0].mxu0 %v10936
      %v11019 = vpop.f32.mrb[0].mxu0
      %v11020 = vadd.f32 0.0, %v11019
      %v11021 = vpop.f32.mrb[0].mxu0
      %v11022 = vpop.f32.mrb[0].mxu0
      %v11023 = vpop.f32.mrb[0].mxu0
      %11024 = vdwg.mxu0
      %v11025 = vpack.c.bf16 %v10999, %v10996
      %v11026 = vpack.c.bf16 %v11007, %v11004
      %v11027 = vpack.c.bf16 %v11015, %v11012
      %v11028 = vpack.c.bf16 %v11020, %v11020
      %v11033 = vunpack.c.l.b16 %v11025
      %v11034 = vunpack.c.h.b16 %v11025
      %v11035 = vunpack.c.l.b16 %v11026
      %v11036 = vunpack.c.h.b16 %v11026
      %v11037 = vunpack.c.l.b16 %v11027
      %v11038 = vunpack.c.h.b16 %v11027
      %v11039 = vunpack.c.l.b16 %v11028
      %v11040 = vpack.c.b16 %v11033, %v11033
      %v11041 = vpack.c.b16 %v11034, %v11034
      %v11042 = vpack.c.b16 %v11035, %v11035
      %v11043 = vpack.c.b16 %v11036, %v11036
      %v11044 = vpack.c.b16 %v11037, %v11037
      %v11045 = vpack.c.b16 %v11038, %v11038
      %v11046 = vpack.c.b16 %v11039, %v11039
      %vm11054 = vcmask 519168
      %11055 = vst.msk [vmem:[%s278] sm:$0xf] %vm11054, %v11040
      %11056 = vst.msk [vmem:[%s278 + $0x4] sm:$0xf] %vm11054, %v11041
      %11057 = vst.msk [vmem:[%s278 + $0x8] sm:$0xf] %vm11054, %v11042
      %11058 = vst.msk [vmem:[%s278 + $0xc] sm:$0xf] %vm11054, %v11043
      %11059 = vst.msk [vmem:[%s278 + $0x10] sm:$0xf] %vm11054, %v11044
      %11060 = vst.msk [vmem:[%s278 + $0x14] sm:$0xf] %vm11054, %v11045
      %vm11061 = vcmask 516096
      %vm11062 = vsmask.f32 256
      %vm11063 = vmand %vm11061, %vm11062
      %v11064 = vld [vmem:[%s278 + $0x18] sm:$0x1]
      %v11065 = vsel %vm11063, %v11046, %v11064
      %11066 = vst [vmem:[%s278 + $0x18] sm:$0x1] %v11065
      %p11067 = scmp.lt.s32.totalorder %s18, 1
      %s11068 = scalar_select %p11067, %s18, 1
      %s11069 = smul.addr %s11068, 7
      %s11070 = smul.addr %s11069, 4
      %s11071 = scalar_lea.vmem %s7, %s11070
      // Predicated region
      $region49: #{cnn_forward.2} parent=47 // pred_check
        %p11072 = pneg %p188
      $region50: #{cnn_forward.2} parent=47 // pred_check_branch
        %11074 = sbr.rel (%p11072) target = $region52
      $region51: #{cnn_forward.2} parent=47 // pred_region
        _
      $region52: #{cnn_forward.2} parent=47 // pred_fallthru
        _
    $region48: #{cnn_forward.2} parent=5 // pred_fallthru
      _
    %p11075 = scmp.le.s32.totalorder 2, %s13
    // Predicated region
    $region53: #{cnn_forward.2} parent=5 // pred_check
      %p11076 = pneg %p11075
    $region54: #{cnn_forward.2} parent=5 // pred_check_branch
      %11078 = sbr.rel (%p11076) target = $region56
    $region55: #{cnn_forward.2} parent=5 // pred_region
      %s11079 = ssub.s32 %s13, 2
      // Predicated region
      $region57: #{cnn_forward.2} parent=55 // pred_check
        %p11080 = pneg %p194
      $region58: #{cnn_forward.2} parent=55 // pred_check_branch
        %11082 = sbr.rel (%p11080) target = $region60
      $region59: #{cnn_forward.2} parent=55 // pred_region
        %p11083 = scmp.lt.s32.totalorder %s19, 1
        %s11084 = scalar_select %p11083, %s19, 1
        %s11085 = smul.addr %s11084, 7
        %s11086 = smul.addr %s11085, 4
        %s11087 = scalar_lea.vmem %s7, %s11086
      $region60: #{cnn_forward.2} parent=55 // pred_fallthru
        _
    $region56: #{cnn_forward.2} parent=5 // pred_fallthru
      _
  $region6: #{cnn_forward.2} parent=0 // loop_footer
    %s17 = sadd.s32 1, %s13
  $region7: #{cnn_forward.2} parent=0 // loop_footer_branch
    %12 = sbr.rel target = $region3
  $region8: #{cnn_forward.2} parent=0 // loop_exit
    _

</llo_original>
